<compile_context>
chip_gen: v7x
topology: tpu7x:2x2x1
jax: 0.10.0
libtpu: 0.0.40
codegen_flags: <defaults>
</compile_context>

<pallas_src>
import math
from functools import partial

import numpy as np
import jax
import jax.numpy as jnp
from jax.experimental import pallas as pl
from jax.experimental.pallas import tpu as pltpu

BOARD_SIZE = 9
HW = BOARD_SIZE * BOARD_SIZE            # 81 board positions
BN_EPS = 1e-5
PAD = 16                                # halo rows (>= max |tap offset| = 10, 8-aligned)
TAP_OFFSETS = tuple((kh - 1) * BOARD_SIZE + (kw - 1)
                    for kh in range(3) for kw in range(3))


def _round_up(x, m):
    return (x + m - 1) // m * m


# ----------------------------------------------------------------------------
# Fused Pallas kernel: full PPONetwork forward
# ----------------------------------------------------------------------------
def _ppo_fused_kernel(x_col_ref, w0_ref, w_res_ref, gt_ref, bt_ref,
                      masks_ref, rowmask_ref,
                      whp0_ref, whp1_ref, whv_ref,
                      gp0_ref, bp0_ref, gp1_ref, bp1_ref, gv_ref, bvv_ref,
                      a0_ref, a1_ref, pb_ref, bfc_ref, vb1_ref,
                      vw2_ref, vb2_ref, s_ref,
                      policy_ref, value_ref,
                      act_ref, col_ref,
                      *, num_res_blocks, m_real):
    m_pad = x_col_ref.shape[0]
    f = w0_ref.shape[1]
    inv_m = 1.0 / m_real
    rowmask = rowmask_ref[...]                      # (m_pad, 1) f32, 1 on real rows

    def batchnorm(y, gamma, beta):
        # PyTorch train-mode BN over the M real rows (dummy rows contribute
        # exact zeros to the sums).  Two-pass centered variance in f32 to avoid
        # the E[y^2] - mean^2 cancellation (review correctness concern).
        mean = jnp.sum(y, axis=0, keepdims=True) * inv_m
        cent = (y - mean) * rowmask
        var = jnp.sum(cent * cent, axis=0, keepdims=True) * inv_m
        return (y - mean) * jax.lax.rsqrt(var + BN_EPS) * gamma + beta

    def conv3x3(h, w):
        # 3x3 SAME conv over the flattened (M, F) activation:
        #   * write h into the halo'd f32 scratch,
        #   * each of the 9 shifted patches is a plain VMEM load at a static
        #     row offset (halo slicing == roll with no wrap to worry about),
        #   * a 0/1 boundary mask (VPU) zeroes out-of-board / dummy-row taps,
        #   * the 9 masked patches concatenate along lanes in col_ref and are
        #     contracted in ONE K = 9*F bf16 matmul (f32 accumulation).
        act_ref[pl.ds(PAD, m_pad), :] = h
        for k, off in enumerate(TAP_OFFSETS):
            patch = act_ref[pl.ds(PAD + off, m_pad), :]
            col_ref[:, k * f:(k + 1) * f] = (patch * masks_ref[k]).astype(jnp.bfloat16)
        return jnp.dot(col_ref[...], w, preferred_element_type=jnp.float32)

    # Zero the halo once so masked taps never multiply NaN/Inf garbage.
    act_ref[pl.ds(0, PAD), :] = jnp.zeros((PAD, f), jnp.float32)
    act_ref[pl.ds(PAD + m_pad, PAD), :] = jnp.zeros((PAD, f), jnp.float32)

    # ---- initial conv + BN + ReLU (K = 9*Cin padded to 128, im2col in wrapper)
    h = jnp.dot(x_col_ref[...], w0_ref[...], preferred_element_type=jnp.float32)
    h = jnp.maximum(batchnorm(h, gt_ref[0], bt_ref[0]), 0.0)

    # ---- residual tower: fori_loop bounds live ranges, dynamic layer indexing
    def res_block(blk, h):
        l = 2 * blk
        out = conv3x3(h, w_res_ref[l])
        out = jnp.maximum(batchnorm(out, gt_ref[1 + l], bt_ref[1 + l]), 0.0)
        out = conv3x3(out, w_res_ref[l + 1])
        out = batchnorm(out, gt_ref[2 + l], bt_ref[2 + l]) + h
        return jnp.maximum(out, 0.0)

    h = jax.lax.fori_loop(0, num_res_blocks, res_block, h)

    # ---- heads: 1x1 convs as lane-broadcast columns (no XLU channel extract).
    # Conv biases are dropped: train-mode BN mean subtraction cancels them.
    hm = (h * rowmask).astype(jnp.bfloat16)   # zero dummy rows -> exact BN stats
    p0 = jnp.maximum(batchnorm(
        jnp.dot(hm, whp0_ref[...], preferred_element_type=jnp.float32),
        gp0_ref[...], bp0_ref[...]), 0.0)                       # (m_pad, 128)
    p1 = jnp.maximum(batchnorm(
        jnp.dot(hm, whp1_ref[...], preferred_element_type=jnp.float32),
        gp1_ref[...], bp1_ref[...]), 0.0)                       # (m_pad, 128)
    vv = jnp.maximum(batchnorm(
        jnp.dot(hm, whv_ref[...], preferred_element_type=jnp.float32),
        gv_ref[...], bvv_ref[...]), 0.0)                        # (m_pad, 256)

    # ---- FC layers folded into one row->sample selector matmul each ----------
    s = s_ref[...]                                              # (n_pad, m_pad) bf16
    z_pol = (p0 * a0_ref[...] + p1 * a1_ref[...]).astype(jnp.bfloat16)
    policy_ref[...] = (jnp.dot(s, z_pol, preferred_element_type=jnp.float32)
                       + pb_ref[...])                           # (n_pad, 128) logits
    z_val = (vv * bfc_ref[...]).astype(jnp.bfloat16)
    v1 = jnp.maximum(jnp.dot(s, z_val, preferred_element_type=jnp.float32)
                     + vb1_ref[...], 0.0)                       # (n_pad, 256)
    v2 = jnp.dot(v1.astype(jnp.bfloat16), vw2_ref[...],
                 preferred_element_type=jnp.float32) + vb2_ref[...]
    value_ref[...] = jnp.tanh(v2)                               # (n_pad, 128), lanes equal


# ----------------------------------------------------------------------------
# Host-side constant builders (batch-size dependent, tiny)
# ----------------------------------------------------------------------------
def _tap_masks(n_batch, m_pad):
    """(9, m_pad, 1) 0/1 masks: valid board-interior taps on real rows only."""
    m = n_batch * HW
    r = np.arange(m_pad)
    hh = (r % HW) // BOARD_SIZE
    ww = r % BOARD_SIZE
    real = r < m
    out = np.zeros((9, m_pad, 1), np.float32)
    for kh in range(3):
        for kw in range(3):
            dh, dw = kh - 1, kw - 1
            valid = (real & (hh + dh >= 0) & (hh + dh < BOARD_SIZE)
                     & (ww + dw >= 0) & (ww + dw < BOARD_SIZE))
            out[kh * 3 + kw, :, 0] = valid
    return out


def _row_mask(n_batch, m_pad):
    return (np.arange(m_pad) < n_batch * HW).astype(np.float32).reshape(m_pad, 1)


def _sample_selector(n_batch, n_pad, m_pad):
    """(n_pad, m_pad) one-hot: row n picks the 81 rows of batch sample n."""
    s = np.zeros((n_pad, m_pad), np.float32)
    r = np.arange(n_batch * HW)
    s[r // HW, r] = 1.0
    return s


# ----------------------------------------------------------------------------
# Parameters (synthetic, orthogonal init gain=sqrt(2), biases zero)
# ----------------------------------------------------------------------------
def init_params(key, input_channels=5, num_res_blocks=4, num_filters=128):
    assert 9 * input_channels <= 128
    ortho = jax.nn.initializers.orthogonal(math.sqrt(2))
    f = num_filters
    n_layers = 1 + 2 * num_res_blocks
    ki = iter(jax.random.split(key, 6 + 2 * num_res_blocks))

    # initial conv: rows = (tap, in-channel) flattened, zero-padded to 128.
    w0 = ortho(next(ki), (9 * input_channels, f), jnp.float32)
    w0 = jnp.pad(w0, ((0, 128 - 9 * input_channels), (0, 0))).astype(jnp.bfloat16)

    # residual tower convs: one (9*F, F) matrix per layer (taps stacked on rows).
    w_res = jnp.stack([ortho(next(ki), (9 * f, f), jnp.float32)
                       for _ in range(2 * num_res_blocks)]).astype(jnp.bfloat16)

    bn_g = jnp.ones((n_layers, 1, f), jnp.float32)
    bn_b = jnp.zeros((n_layers, 1, f), jnp.float32)

    pconv_w = ortho(next(ki), (f, 2), jnp.float32)   # policy 1x1 conv (bias dropped)
    vconv_w = ortho(next(ki), (f, 1), jnp.float32)   # value 1x1 conv (bias dropped)
    pbn_g = jnp.ones((2,), jnp.float32)
    pbn_b = jnp.zeros((2,), jnp.float32)
    vbn_g = jnp.ones((1,), jnp.float32)
    vbn_b = jnp.zeros((1,), jnp.float32)

    pfc_w = ortho(next(ki), (2 * HW, HW), jnp.float32)   # policy_fc weight (transposed)
    pfc_b = jnp.zeros((HW,), jnp.float32)
    vfc1_w = ortho(next(ki), (HW, 256), jnp.float32)
    vfc1_b = jnp.zeros((256,), jnp.float32)
    vfc2_w = ortho(next(ki), (256, 1), jnp.float32)
    vfc2_b = jnp.zeros((1,), jnp.float32)

    return dict(w0=w0, w_res=w_res, bn_g=bn_g, bn_b=bn_b,
                pconv_w=pconv_w, vconv_w=vconv_w,
                pbn_g=pbn_g, pbn_b=pbn_b, vbn_g=vbn_g, vbn_b=vbn_b,
                pfc_w0=pfc_w[:HW], pfc_w1=pfc_w[HW:], pfc_b=pfc_b,
                vfc1_w=vfc1_w, vfc1_b=vfc1_b, vfc2_w=vfc2_w, vfc2_b=vfc2_b)


# ----------------------------------------------------------------------------
# Wrapper
# ----------------------------------------------------------------------------
def ppo_forward(params, x):
    """x: NCHW float32 (like the PyTorch module). Returns (policy, value)."""
    if x.ndim == 3:
        x = x[None]
    x = jnp.asarray(x, jnp.float32)
    n, c = int(x.shape[0]), int(x.shape[1])
    f = params["w0"].shape[1]
    num_res_blocks = params["w_res"].shape[0] // 2
    num_layers = 1 + 2 * num_res_blocks
    m = n * HW
    m_pad = _round_up(m, 8)
    n_pad = max(8, _round_up(n, 8))

    # Layer-0 im2col in XLA (input is tiny): (M, 9*Cin) zero-padded to
    # (m_pad, 128).  The tower's im2col happens inside the kernel.
    xp = jnp.pad(x, ((0, 0), (0, 0), (1, 1), (1, 1)))
    taps = [xp[:, :, kh:kh + BOARD_SIZE, kw:kw + BOARD_SIZE]
            for kh in range(3) for kw in range(3)]
    x_col = jnp.stack(taps, axis=1)                              # (n, 9, c, 9, 9)
    x_col = jnp.transpose(x_col, (0, 3, 4, 1, 2)).reshape(m, 9 * c)
    x_col = jnp.pad(x_col, ((0, m_pad - m), (0, 128 - 9 * c))).astype(jnp.bfloat16)

    # Batch-size-dependent constants: tap masks, row mask, sample selector.
    masks = jnp.asarray(_tap_masks(n, m_pad))
    rowmask = jnp.asarray(_row_mask(n, m_pad))
    sel = jnp.asarray(_sample_selector(n, n_pad, m_pad), jnp.bfloat16)

    # Head 1x1-conv weights as lane-broadcast columns; per-channel BN affines
    # broadcast to full lane width (keeps the epilogue MXU/VPU-only).
    whp0 = jnp.tile(params["pconv_w"][:, 0:1], (1, 128)).astype(jnp.bfloat16)
    whp1 = jnp.tile(params["pconv_w"][:, 1:2], (1, 128)).astype(jnp.bfloat16)
    whv = jnp.tile(params["vconv_w"], (1, 256)).astype(jnp.bfloat16)
    gp0 = jnp.full((1, 128), params["pbn_g"][0], jnp.float32)
    bp0 = jnp.full((1, 128), params["pbn_b"][0], jnp.float32)
    gp1 = jnp.full((1, 128), params["pbn_g"][1], jnp.float32)
    bp1 = jnp.full((1, 128), params["pbn_b"][1], jnp.float32)
    gv = jnp.full((1, 256), params["vbn_g"][0], jnp.float32)
    bvv = jnp.full((1, 256), params["vbn_b"][0], jnp.float32)

    # policy_fc / value_fc1 weights tiled per board row so the (c,h,w) flatten
    # folds into a single selector matmul (lanes padded to 128 / 256).
    a0 = jnp.zeros((m_pad, 128), jnp.float32).at[:m, :HW].set(
        jnp.tile(params["pfc_w0"], (n, 1)))
    a1 = jnp.zeros((m_pad, 128), jnp.float32).at[:m, :HW].set(
        jnp.tile(params["pfc_w1"], (n, 1)))
    pb = jnp.zeros((1, 128), jnp.float32).at[0, :HW].set(params["pfc_b"])
    bfc = jnp.zeros((m_pad, 256), jnp.float32).at[:m, :].set(
        jnp.tile(params["vfc1_w"], (n, 1)))
    vb1 = params["vfc1_b"].reshape(1, 256)
    vw2 = jnp.tile(params["vfc2_w"], (1, 128)).astype(jnp.bfloat16)
    vb2 = jnp.tile(params["vfc2_b"].reshape(1, 1), (1, 128))

    operands = (x_col, params["w0"], params["w_res"], params["bn_g"], params["bn_b"],
                masks, rowmask, whp0, whp1, whv,
                gp0, bp0, gp1, bp1, gv, bvv,
                a0, a1, pb, bfc, vb1, vw2, vb2, sel)

    flops = (2 * m_pad * 128 * f
             + 2 * num_res_blocks * 2 * m_pad * (9 * f) * f
             + 2 * m_pad * f * (128 + 128 + 256)
             + 2 * n_pad * m_pad * (128 + 256)
             + 2 * n_pad * 256 * 128)
    transcendentals = num_layers * f + (128 + 128 + 256) + n_pad * 128
    out_bytes = 2 * n_pad * 128 * 4
    in_bytes = int(sum(op.size * op.dtype.itemsize for op in operands))
    scratch_bytes = (2 * PAD + m_pad) * f * 4 + m_pad * 9 * f * 2
    # Residency-based scoped-VMEM budget, capped at v7x's 64 MiB physical VMEM.
    vmem_limit = int(min(64 * 2 ** 20,
                         max(32 * 2 ** 20,
                             4 * (in_bytes + out_bytes + scratch_bytes))))

    vmem = lambda: pl.BlockSpec(memory_space=pltpu.MemorySpace.VMEM)
    policy, value = pl.pallas_call(
        partial(_ppo_fused_kernel, num_res_blocks=num_res_blocks, m_real=m),
        out_shape=(jax.ShapeDtypeStruct((n_pad, 128), jnp.float32),
                   jax.ShapeDtypeStruct((n_pad, 128), jnp.float32)),
        in_specs=[vmem() for _ in operands],
        out_specs=(vmem(), vmem()),
        scratch_shapes=[pltpu.VMEM((2 * PAD + m_pad, f), jnp.float32),   # halo'd act
                        pltpu.VMEM((m_pad, 9 * f), jnp.bfloat16)],       # im2col buf
        compiler_params=pltpu.CompilerParams(vmem_limit_bytes=vmem_limit),
        cost_estimate=pl.CostEstimate(flops=int(flops),
                                      transcendentals=int(transcendentals),
                                      bytes_accessed=int(in_bytes + out_bytes)),
    )(*operands)

    # Lane-dense kernel outputs; slice to the module's shapes here.
    return policy[:n, :HW], value[:n, :1]


if __name__ == "__main__":
    key = jax.random.PRNGKey(0)
    k_param, k_x = jax.random.split(key)

    # small configuration consistent with the module (board fixed at 9x9)
    BATCH, IN_CH, NUM_FILTERS, NUM_RES_BLOCKS = 2, 5, 128, 2

    params = init_params(k_param, input_channels=IN_CH,
                         num_res_blocks=NUM_RES_BLOCKS, num_filters=NUM_FILTERS)
    x = jax.random.normal(k_x, (BATCH, IN_CH, BOARD_SIZE, BOARD_SIZE), jnp.float32)

    policy, value = jax.jit(ppo_forward)(params, x)
    policy = jax.block_until_ready(policy)
    value = jax.block_until_ready(value)

    assert policy.shape == (BATCH, BOARD_SIZE * BOARD_SIZE)
    assert value.shape == (BATCH, 1)
    assert bool(jnp.all(jnp.isfinite(policy))) and bool(jnp.all(jnp.isfinite(value)))
    print("KERNEL_OK")
</pallas_src>

<mosaic_0001>
module attributes {stable_mosaic.version = 11 : i64} {
  func.func @_ppo_fused_kernel(%arg0: memref<168x128xbf16, #tpu.memory_space<vmem>>, %arg1: memref<128x128xbf16, #tpu.memory_space<vmem>>, %arg2: memref<4x1152x128xbf16, #tpu.memory_space<vmem>>, %arg3: memref<5x1x128xf32, #tpu.memory_space<vmem>>, %arg4: memref<5x1x128xf32, #tpu.memory_space<vmem>>, %arg5: memref<9x168x1xf32, #tpu.memory_space<vmem>>, %arg6: memref<168x1xf32, #tpu.memory_space<vmem>>, %arg7: memref<128x128xbf16, #tpu.memory_space<vmem>>, %arg8: memref<128x128xbf16, #tpu.memory_space<vmem>>, %arg9: memref<128x256xbf16, #tpu.memory_space<vmem>>, %arg10: memref<1x128xf32, #tpu.memory_space<vmem>>, %arg11: memref<1x128xf32, #tpu.memory_space<vmem>>, %arg12: memref<1x128xf32, #tpu.memory_space<vmem>>, %arg13: memref<1x128xf32, #tpu.memory_space<vmem>>, %arg14: memref<1x256xf32, #tpu.memory_space<vmem>>, %arg15: memref<1x256xf32, #tpu.memory_space<vmem>>, %arg16: memref<168x128xf32, #tpu.memory_space<vmem>>, %arg17: memref<168x128xf32, #tpu.memory_space<vmem>>, %arg18: memref<1x128xf32, #tpu.memory_space<vmem>>, %arg19: memref<168x256xf32, #tpu.memory_space<vmem>>, %arg20: memref<1x256xf32, #tpu.memory_space<vmem>>, %arg21: memref<256x128xbf16, #tpu.memory_space<vmem>>, %arg22: memref<1x128xf32, #tpu.memory_space<vmem>>, %arg23: memref<8x168xbf16, #tpu.memory_space<vmem>>, %arg24: memref<8x128xf32, #tpu.memory_space<vmem>>, %arg25: memref<8x128xf32, #tpu.memory_space<vmem>>, %arg26: memref<200x128xf32, #tpu.memory_space<vmem>>, %arg27: memref<168x1152xbf16, #tpu.memory_space<vmem>>) attributes {dimension_semantics = [], scalar_prefetch = 0 : i64, scratch_operands = 2 : i64, tpu.core_type = #tpu.core_type<tc>} {
    %c0 = arith.constant 0 : index
    %c0_0 = arith.constant 0 : index
    %0 = vector.load %arg6[%c0, %c0_0] : memref<168x1xf32, #tpu.memory_space<vmem>>, vector<168x1xf32>
    %cst = arith.constant 0.000000e+00 : f32
    %1 = vector.broadcast %cst : f32 to vector<16x128xf32>
    %c0_1 = arith.constant 0 : index
    %c0_2 = arith.constant 0 : index
    %2 = vector.load %arg26[%c0_1, %c0_2] : memref<200x128xf32, #tpu.memory_space<vmem>>, vector<16x128xf32>
    tpu.vector_store %arg26[%c0_1, %c0_2], %1 {strides = array<i32>} : memref<200x128xf32, #tpu.memory_space<vmem>>, vector<16x128xf32>,
    %cst_3 = arith.constant 0.000000e+00 : f32
    %3 = vector.broadcast %cst_3 : f32 to vector<16x128xf32>
    %c184 = arith.constant 184 : index
    %c0_4 = arith.constant 0 : index
    %4 = vector.load %arg26[%c184, %c0_4] : memref<200x128xf32, #tpu.memory_space<vmem>>, vector<16x128xf32>
    tpu.vector_store %arg26[%c184, %c0_4], %3 {strides = array<i32>} : memref<200x128xf32, #tpu.memory_space<vmem>>, vector<16x128xf32>,
    %c0_5 = arith.constant 0 : index
    %c0_6 = arith.constant 0 : index
    %5 = vector.load %arg0[%c0_5, %c0_6] : memref<168x128xbf16, #tpu.memory_space<vmem>>, vector<168x128xbf16>
    %c0_7 = arith.constant 0 : index
    %c0_8 = arith.constant 0 : index
    %6 = vector.load %arg1[%c0_7, %c0_8] : memref<128x128xbf16, #tpu.memory_space<vmem>>, vector<128x128xbf16>
    %cst_9 = arith.constant dense<0.000000e+00> : vector<168x128xf32>
    %7 = tpu.matmul %5, %6, %cst_9 {dimension_numbers = #tpu.dot_dimension_numbers<[1], [0], [0], [1], [0, 0, 1, 1], [], []>} : vector<168x128xbf16>, vector<128x128xbf16>, vector<168x128xf32> -> vector<168x128xf32>
    %c0_10 = arith.constant 0 : index
    %c0_11 = arith.constant 0 : index
    %c0_12 = arith.constant 0 : index
    %8 = vector.load %arg3[%c0_10, %c0_11, %c0_12] : memref<5x1x128xf32, #tpu.memory_space<vmem>>, vector<1x1x128xf32>
    %9 = vector.shape_cast %8 : vector<1x1x128xf32> to vector<1x128xf32>
    %c0_13 = arith.constant 0 : index
    %c0_14 = arith.constant 0 : index
    %c0_15 = arith.constant 0 : index
    %10 = vector.load %arg4[%c0_13, %c0_14, %c0_15] : memref<5x1x128xf32, #tpu.memory_space<vmem>>, vector<1x1x128xf32>
    %11 = vector.shape_cast %10 : vector<1x1x128xf32> to vector<1x128xf32>
    %cst_16 = arith.constant dense<0.000000e+00> : vector<128xf32>
    %12 = vector.multi_reduction <add>, %7, %cst_16 [0] : vector<168x128xf32> to vector<128xf32>
    %13 = vector.shape_cast %12 : vector<128xf32> to vector<1x128xf32>
    %cst_17 = arith.constant 0.00617283955 : f32
    %14 = vector.broadcast %cst_17 : f32 to vector<1x128xf32>
    %15 = arith.mulf %13, %14 : vector<1x128xf32>
    %16 = vector.broadcast %15 : vector<1x128xf32> to vector<168x128xf32>
    %17 = arith.subf %7, %16 : vector<168x128xf32>
    %18 = vector.broadcast %0 : vector<168x1xf32> to vector<168x128xf32>
    %19 = arith.mulf %17, %18 : vector<168x128xf32>
    %20 = arith.mulf %19, %19 : vector<168x128xf32>
    %cst_18 = arith.constant dense<0.000000e+00> : vector<128xf32>
    %21 = vector.multi_reduction <add>, %20, %cst_18 [0] : vector<168x128xf32> to vector<128xf32>
    %22 = vector.shape_cast %21 : vector<128xf32> to vector<1x128xf32>
    %cst_19 = arith.constant 0.00617283955 : f32
    %23 = vector.broadcast %cst_19 : f32 to vector<1x128xf32>
    %24 = arith.mulf %22, %23 : vector<1x128xf32>
    %25 = vector.broadcast %15 : vector<1x128xf32> to vector<168x128xf32>
    %26 = arith.subf %7, %25 : vector<168x128xf32>
    %cst_20 = arith.constant 9.99999974E-6 : f32
    %27 = vector.broadcast %cst_20 : f32 to vector<1x128xf32>
    %28 = arith.addf %24, %27 : vector<1x128xf32>
    %29 = math.rsqrt %28 : vector<1x128xf32>
    %30 = vector.broadcast %29 : vector<1x128xf32> to vector<168x128xf32>
    %31 = arith.mulf %26, %30 : vector<168x128xf32>
    %32 = vector.broadcast %9 : vector<1x128xf32> to vector<168x128xf32>
    %33 = arith.mulf %31, %32 : vector<168x128xf32>
    %34 = vector.broadcast %11 : vector<1x128xf32> to vector<168x128xf32>
    %35 = arith.addf %33, %34 : vector<168x128xf32>
    %cst_21 = arith.constant 0.000000e+00 : f32
    %36 = vector.broadcast %cst_21 : f32 to vector<168x128xf32>
    %37 = arith.maximumf %35, %36 : vector<168x128xf32>
    %c0_i32 = arith.constant 0 : i32
    %c2_i32 = arith.constant 2 : i32
    %38 = arith.addi %c0_i32, %c2_i32 : i32
    %c1_i32 = arith.constant 1 : i32
    %39 = scf.for %arg28 = %c0_i32 to %38 step %c1_i32 iter_args(%arg29 = %37) -> (vector<168x128xf32>)  : i32 {
      %c2_i32_86 = arith.constant 2 : i32
      %162 = arith.muli %c2_i32_86, %arg28 : i32
      %163 = arith.index_cast %162 : i32 to index
      %c0_87 = arith.constant 0 : index
      %c0_88 = arith.constant 0 : index
      %164 = vector.load %arg2[%163, %c0_87, %c0_88] : memref<4x1152x128xbf16, #tpu.memory_space<vmem>>, vector<1x1152x128xbf16>
      %165 = vector.shape_cast %164 : vector<1x1152x128xbf16> to vector<1152x128xbf16>
      %c16 = arith.constant 16 : index
      %c0_89 = arith.constant 0 : index
      %166 = vector.load %arg26[%c16, %c0_89] : memref<200x128xf32, #tpu.memory_space<vmem>>, vector<168x128xf32>
      tpu.vector_store %arg26[%c16, %c0_89], %arg29 {strides = array<i32>} : memref<200x128xf32, #tpu.memory_space<vmem>>, vector<168x128xf32>,
      %c6 = arith.constant 6 : index
      %c0_90 = arith.constant 0 : index
      %167 = vector.load %arg26[%c6, %c0_90] : memref<200x128xf32, #tpu.memory_space<vmem>>, vector<168x128xf32>
      %c0_91 = arith.constant 0 : index
      %c0_92 = arith.constant 0 : index
      %c0_93 = arith.constant 0 : index
      %168 = vector.load %arg5[%c0_91, %c0_92, %c0_93] : memref<9x168x1xf32, #tpu.memory_space<vmem>>, vector<1x168x1xf32>
      %169 = vector.shape_cast %168 : vector<1x168x1xf32> to vector<168x1xf32>
      %170 = vector.broadcast %169 : vector<168x1xf32> to vector<168x128xf32>
      %171 = arith.mulf %167, %170 : vector<168x128xf32>
      %172 = arith.truncf %171 : vector<168x128xf32> to vector<168x128xbf16>
      %c0_94 = arith.constant 0 : index
      %c0_95 = arith.constant 0 : index
      %173 = vector.load %arg27[%c0_94, %c0_95] : memref<168x1152xbf16, #tpu.memory_space<vmem>>, vector<168x128xbf16>
      tpu.vector_store %arg27[%c0_94, %c0_95], %172 {strides = array<i32>} : memref<168x1152xbf16, #tpu.memory_space<vmem>>, vector<168x128xbf16>,
      %c7 = arith.constant 7 : index
      %c0_96 = arith.constant 0 : index
      %174 = vector.load %arg26[%c7, %c0_96] : memref<200x128xf32, #tpu.memory_space<vmem>>, vector<168x128xf32>
      %c1 = arith.constant 1 : index
      %c0_97 = arith.constant 0 : index
      %c0_98 = arith.constant 0 : index
      %175 = vector.load %arg5[%c1, %c0_97, %c0_98] : memref<9x168x1xf32, #tpu.memory_space<vmem>>, vector<1x168x1xf32>
      %176 = vector.shape_cast %175 : vector<1x168x1xf32> to vector<168x1xf32>
      %177 = vector.broadcast %176 : vector<168x1xf32> to vector<168x128xf32>
      %178 = arith.mulf %174, %177 : vector<168x128xf32>
      %179 = arith.truncf %178 : vector<168x128xf32> to vector<168x128xbf16>
      %c0_99 = arith.constant 0 : index
      %c128 = arith.constant 128 : index
      %180 = vector.load %arg27[%c0_99, %c128] : memref<168x1152xbf16, #tpu.memory_space<vmem>>, vector<168x128xbf16>
      tpu.vector_store %arg27[%c0_99, %c128], %179 {strides = array<i32>} : memref<168x1152xbf16, #tpu.memory_space<vmem>>, vector<168x128xbf16>,
      %c8 = arith.constant 8 : index
      %c0_100 = arith.constant 0 : index
      %181 = vector.load %arg26[%c8, %c0_100] : memref<200x128xf32, #tpu.memory_space<vmem>>, vector<168x128xf32>
      %c2 = arith.constant 2 : index
      %c0_101 = arith.constant 0 : index
      %c0_102 = arith.constant 0 : index
      %182 = vector.load %arg5[%c2, %c0_101, %c0_102] : memref<9x168x1xf32, #tpu.memory_space<vmem>>, vector<1x168x1xf32>
      %183 = vector.shape_cast %182 : vector<1x168x1xf32> to vector<168x1xf32>
      %184 = vector.broadcast %183 : vector<168x1xf32> to vector<168x128xf32>
      %185 = arith.mulf %181, %184 : vector<168x128xf32>
      %186 = arith.truncf %185 : vector<168x128xf32> to vector<168x128xbf16>
      %c0_103 = arith.constant 0 : index
      %c256 = arith.constant 256 : index
      %187 = vector.load %arg27[%c0_103, %c256] : memref<168x1152xbf16, #tpu.memory_space<vmem>>, vector<168x128xbf16>
      tpu.vector_store %arg27[%c0_103, %c256], %186 {strides = array<i32>} : memref<168x1152xbf16, #tpu.memory_space<vmem>>, vector<168x128xbf16>,
      %c15 = arith.constant 15 : index
      %c0_104 = arith.constant 0 : index
      %188 = vector.load %arg26[%c15, %c0_104] : memref<200x128xf32, #tpu.memory_space<vmem>>, vector<168x128xf32>
      %c3 = arith.constant 3 : index
      %c0_105 = arith.constant 0 : index
      %c0_106 = arith.constant 0 : index
      %189 = vector.load %arg5[%c3, %c0_105, %c0_106] : memref<9x168x1xf32, #tpu.memory_space<vmem>>, vector<1x168x1xf32>
      %190 = vector.shape_cast %189 : vector<1x168x1xf32> to vector<168x1xf32>
      %191 = vector.broadcast %190 : vector<168x1xf32> to vector<168x128xf32>
      %192 = arith.mulf %188, %191 : vector<168x128xf32>
      %193 = arith.truncf %192 : vector<168x128xf32> to vector<168x128xbf16>
      %c0_107 = arith.constant 0 : index
      %c384 = arith.constant 384 : index
      %194 = vector.load %arg27[%c0_107, %c384] : memref<168x1152xbf16, #tpu.memory_space<vmem>>, vector<168x128xbf16>
      tpu.vector_store %arg27[%c0_107, %c384], %193 {strides = array<i32>} : memref<168x1152xbf16, #tpu.memory_space<vmem>>, vector<168x128xbf16>,
      %c16_108 = arith.constant 16 : index
      %c0_109 = arith.constant 0 : index
      %195 = vector.load %arg26[%c16_108, %c0_109] : memref<200x128xf32, #tpu.memory_space<vmem>>, vector<168x128xf32>
      %c4 = arith.constant 4 : index
      %c0_110 = arith.constant 0 : index
      %c0_111 = arith.constant 0 : index
      %196 = vector.load %arg5[%c4, %c0_110, %c0_111] : memref<9x168x1xf32, #tpu.memory_space<vmem>>, vector<1x168x1xf32>
      %197 = vector.shape_cast %196 : vector<1x168x1xf32> to vector<168x1xf32>
      %198 = vector.broadcast %197 : vector<168x1xf32> to vector<168x128xf32>
      %199 = arith.mulf %195, %198 : vector<168x128xf32>
      %200 = arith.truncf %199 : vector<168x128xf32> to vector<168x128xbf16>
      %c0_112 = arith.constant 0 : index
      %c512 = arith.constant 512 : index
      %201 = vector.load %arg27[%c0_112, %c512] : memref<168x1152xbf16, #tpu.memory_space<vmem>>, vector<168x128xbf16>
      tpu.vector_store %arg27[%c0_112, %c512], %200 {strides = array<i32>} : memref<168x1152xbf16, #tpu.memory_space<vmem>>, vector<168x128xbf16>,
      %c17 = arith.constant 17 : index
      %c0_113 = arith.constant 0 : index
      %202 = vector.load %arg26[%c17, %c0_113] : memref<200x128xf32, #tpu.memory_space<vmem>>, vector<168x128xf32>
      %c5 = arith.constant 5 : index
      %c0_114 = arith.constant 0 : index
      %c0_115 = arith.constant 0 : index
      %203 = vector.load %arg5[%c5, %c0_114, %c0_115] : memref<9x168x1xf32, #tpu.memory_space<vmem>>, vector<1x168x1xf32>
      %204 = vector.shape_cast %203 : vector<1x168x1xf32> to vector<168x1xf32>
      %205 = vector.broadcast %204 : vector<168x1xf32> to vector<168x128xf32>
      %206 = arith.mulf %202, %205 : vector<168x128xf32>
      %207 = arith.truncf %206 : vector<168x128xf32> to vector<168x128xbf16>
      %c0_116 = arith.constant 0 : index
      %c640 = arith.constant 640 : index
      %208 = vector.load %arg27[%c0_116, %c640] : memref<168x1152xbf16, #tpu.memory_space<vmem>>, vector<168x128xbf16>
      tpu.vector_store %arg27[%c0_116, %c640], %207 {strides = array<i32>} : memref<168x1152xbf16, #tpu.memory_space<vmem>>, vector<168x128xbf16>,
      %c24 = arith.constant 24 : index
      %c0_117 = arith.constant 0 : index
      %209 = vector.load %arg26[%c24, %c0_117] : memref<200x128xf32, #tpu.memory_space<vmem>>, vector<168x128xf32>
      %c6_118 = arith.constant 6 : index
      %c0_119 = arith.constant 0 : index
      %c0_120 = arith.constant 0 : index
      %210 = vector.load %arg5[%c6_118, %c0_119, %c0_120] : memref<9x168x1xf32, #tpu.memory_space<vmem>>, vector<1x168x1xf32>
      %211 = vector.shape_cast %210 : vector<1x168x1xf32> to vector<168x1xf32>
      %212 = vector.broadcast %211 : vector<168x1xf32> to vector<168x128xf32>
      %213 = arith.mulf %209, %212 : vector<168x128xf32>
      %214 = arith.truncf %213 : vector<168x128xf32> to vector<168x128xbf16>
      %c0_121 = arith.constant 0 : index
      %c768 = arith.constant 768 : index
      %215 = vector.load %arg27[%c0_121, %c768] : memref<168x1152xbf16, #tpu.memory_space<vmem>>, vector<168x128xbf16>
      tpu.vector_store %arg27[%c0_121, %c768], %214 {strides = array<i32>} : memref<168x1152xbf16, #tpu.memory_space<vmem>>, vector<168x128xbf16>,
      %c25 = arith.constant 25 : index
      %c0_122 = arith.constant 0 : index
      %216 = vector.load %arg26[%c25, %c0_122] : memref<200x128xf32, #tpu.memory_space<vmem>>, vector<168x128xf32>
      %c7_123 = arith.constant 7 : index
      %c0_124 = arith.constant 0 : index
      %c0_125 = arith.constant 0 : index
      %217 = vector.load %arg5[%c7_123, %c0_124, %c0_125] : memref<9x168x1xf32, #tpu.memory_space<vmem>>, vector<1x168x1xf32>
      %218 = vector.shape_cast %217 : vector<1x168x1xf32> to vector<168x1xf32>
      %219 = vector.broadcast %218 : vector<168x1xf32> to vector<168x128xf32>
      %220 = arith.mulf %216, %219 : vector<168x128xf32>
      %221 = arith.truncf %220 : vector<168x128xf32> to vector<168x128xbf16>
      %c0_126 = arith.constant 0 : index
      %c896 = arith.constant 896 : index
      %222 = vector.load %arg27[%c0_126, %c896] : memref<168x1152xbf16, #tpu.memory_space<vmem>>, vector<168x128xbf16>
      tpu.vector_store %arg27[%c0_126, %c896], %221 {strides = array<i32>} : memref<168x1152xbf16, #tpu.memory_space<vmem>>, vector<168x128xbf16>,
      %c26 = arith.constant 26 : index
      %c0_127 = arith.constant 0 : index
      %223 = vector.load %arg26[%c26, %c0_127] : memref<200x128xf32, #tpu.memory_space<vmem>>, vector<168x128xf32>
      %c8_128 = arith.constant 8 : index
      %c0_129 = arith.constant 0 : index
      %c0_130 = arith.constant 0 : index
      %224 = vector.load %arg5[%c8_128, %c0_129, %c0_130] : memref<9x168x1xf32, #tpu.memory_space<vmem>>, vector<1x168x1xf32>
      %225 = vector.shape_cast %224 : vector<1x168x1xf32> to vector<168x1xf32>
      %226 = vector.broadcast %225 : vector<168x1xf32> to vector<168x128xf32>
      %227 = arith.mulf %223, %226 : vector<168x128xf32>
      %228 = arith.truncf %227 : vector<168x128xf32> to vector<168x128xbf16>
      %c0_131 = arith.constant 0 : index
      %c1024 = arith.constant 1024 : index
      %229 = vector.load %arg27[%c0_131, %c1024] : memref<168x1152xbf16, #tpu.memory_space<vmem>>, vector<168x128xbf16>
      tpu.vector_store %arg27[%c0_131, %c1024], %228 {strides = array<i32>} : memref<168x1152xbf16, #tpu.memory_space<vmem>>, vector<168x128xbf16>,
      %c0_132 = arith.constant 0 : index
      %c0_133 = arith.constant 0 : index
      %230 = vector.load %arg27[%c0_132, %c0_133] : memref<168x1152xbf16, #tpu.memory_space<vmem>>, vector<168x1152xbf16>
      %cst_134 = arith.constant dense<0.000000e+00> : vector<168x128xf32>
      %231 = tpu.matmul %230, %165, %cst_134 {dimension_numbers = #tpu.dot_dimension_numbers<[1], [0], [0], [1], [0, 0, 1, 1], [], []>} : vector<168x1152xbf16>, vector<1152x128xbf16>, vector<168x128xf32> -> vector<168x128xf32>
      %c1_i32_135 = arith.constant 1 : i32
      %232 = arith.addi %c1_i32_135, %162 : i32
      %233 = arith.index_cast %232 : i32 to index
      %c0_136 = arith.constant 0 : index
      %c0_137 = arith.constant 0 : index
      %234 = vector.load %arg3[%233, %c0_136, %c0_137] : memref<5x1x128xf32, #tpu.memory_space<vmem>>, vector<1x1x128xf32>
      %235 = vector.shape_cast %234 : vector<1x1x128xf32> to vector<1x128xf32>
      %c1_i32_138 = arith.constant 1 : i32
      %236 = arith.addi %c1_i32_138, %162 : i32
      %237 = arith.index_cast %236 : i32 to index
      %c0_139 = arith.constant 0 : index
      %c0_140 = arith.constant 0 : index
      %238 = vector.load %arg4[%237, %c0_139, %c0_140] : memref<5x1x128xf32, #tpu.memory_space<vmem>>, vector<1x1x128xf32>
      %239 = vector.shape_cast %238 : vector<1x1x128xf32> to vector<1x128xf32>
      %cst_141 = arith.constant dense<0.000000e+00> : vector<128xf32>
      %240 = vector.multi_reduction <add>, %231, %cst_141 [0] : vector<168x128xf32> to vector<128xf32>
      %241 = vector.shape_cast %240 : vector<128xf32> to vector<1x128xf32>
      %cst_142 = arith.constant 0.00617283955 : f32
      %242 = vector.broadcast %cst_142 : f32 to vector<1x128xf32>
      %243 = arith.mulf %241, %242 : vector<1x128xf32>
      %244 = vector.broadcast %243 : vector<1x128xf32> to vector<168x128xf32>
      %245 = arith.subf %231, %244 : vector<168x128xf32>
      %246 = vector.broadcast %0 : vector<168x1xf32> to vector<168x128xf32>
      %247 = arith.mulf %245, %246 : vector<168x128xf32>
      %248 = arith.mulf %247, %247 : vector<168x128xf32>
      %cst_143 = arith.constant dense<0.000000e+00> : vector<128xf32>
      %249 = vector.multi_reduction <add>, %248, %cst_143 [0] : vector<168x128xf32> to vector<128xf32>
      %250 = vector.shape_cast %249 : vector<128xf32> to vector<1x128xf32>
      %cst_144 = arith.constant 0.00617283955 : f32
      %251 = vector.broadcast %cst_144 : f32 to vector<1x128xf32>
      %252 = arith.mulf %250, %251 : vector<1x128xf32>
      %253 = vector.broadcast %243 : vector<1x128xf32> to vector<168x128xf32>
      %254 = arith.subf %231, %253 : vector<168x128xf32>
      %cst_145 = arith.constant 9.99999974E-6 : f32
      %255 = vector.broadcast %cst_145 : f32 to vector<1x128xf32>
      %256 = arith.addf %252, %255 : vector<1x128xf32>
      %257 = math.rsqrt %256 : vector<1x128xf32>
      %258 = vector.broadcast %257 : vector<1x128xf32> to vector<168x128xf32>
      %259 = arith.mulf %254, %258 : vector<168x128xf32>
      %260 = vector.broadcast %235 : vector<1x128xf32> to vector<168x128xf32>
      %261 = arith.mulf %259, %260 : vector<168x128xf32>
      %262 = vector.broadcast %239 : vector<1x128xf32> to vector<168x128xf32>
      %263 = arith.addf %261, %262 : vector<168x128xf32>
      %cst_146 = arith.constant 0.000000e+00 : f32
      %264 = vector.broadcast %cst_146 : f32 to vector<168x128xf32>
      %265 = arith.maximumf %263, %264 : vector<168x128xf32>
      %c1_i32_147 = arith.constant 1 : i32
      %266 = arith.addi %162, %c1_i32_147 : i32
      %267 = arith.index_cast %266 : i32 to index
      %c0_148 = arith.constant 0 : index
      %c0_149 = arith.constant 0 : index
      %268 = vector.load %arg2[%267, %c0_148, %c0_149] : memref<4x1152x128xbf16, #tpu.memory_space<vmem>>, vector<1x1152x128xbf16>
      %269 = vector.shape_cast %268 : vector<1x1152x128xbf16> to vector<1152x128xbf16>
      %c16_150 = arith.constant 16 : index
      %c0_151 = arith.constant 0 : index
      %270 = vector.load %arg26[%c16_150, %c0_151] : memref<200x128xf32, #tpu.memory_space<vmem>>, vector<168x128xf32>
      tpu.vector_store %arg26[%c16_150, %c0_151], %265 {strides = array<i32>} : memref<200x128xf32, #tpu.memory_space<vmem>>, vector<168x128xf32>,
      %c6_152 = arith.constant 6 : index
      %c0_153 = arith.constant 0 : index
      %271 = vector.load %arg26[%c6_152, %c0_153] : memref<200x128xf32, #tpu.memory_space<vmem>>, vector<168x128xf32>
      %c0_154 = arith.constant 0 : index
      %c0_155 = arith.constant 0 : index
      %c0_156 = arith.constant 0 : index
      %272 = vector.load %arg5[%c0_154, %c0_155, %c0_156] : memref<9x168x1xf32, #tpu.memory_space<vmem>>, vector<1x168x1xf32>
      %273 = vector.shape_cast %272 : vector<1x168x1xf32> to vector<168x1xf32>
      %274 = vector.broadcast %273 : vector<168x1xf32> to vector<168x128xf32>
      %275 = arith.mulf %271, %274 : vector<168x128xf32>
      %276 = arith.truncf %275 : vector<168x128xf32> to vector<168x128xbf16>
      %c0_157 = arith.constant 0 : index
      %c0_158 = arith.constant 0 : index
      %277 = vector.load %arg27[%c0_157, %c0_158] : memref<168x1152xbf16, #tpu.memory_space<vmem>>, vector<168x128xbf16>
      tpu.vector_store %arg27[%c0_157, %c0_158], %276 {strides = array<i32>} : memref<168x1152xbf16, #tpu.memory_space<vmem>>, vector<168x128xbf16>,
      %c7_159 = arith.constant 7 : index
      %c0_160 = arith.constant 0 : index
      %278 = vector.load %arg26[%c7_159, %c0_160] : memref<200x128xf32, #tpu.memory_space<vmem>>, vector<168x128xf32>
      %c1_161 = arith.constant 1 : index
      %c0_162 = arith.constant 0 : index
      %c0_163 = arith.constant 0 : index
      %279 = vector.load %arg5[%c1_161, %c0_162, %c0_163] : memref<9x168x1xf32, #tpu.memory_space<vmem>>, vector<1x168x1xf32>
      %280 = vector.shape_cast %279 : vector<1x168x1xf32> to vector<168x1xf32>
      %281 = vector.broadcast %280 : vector<168x1xf32> to vector<168x128xf32>
      %282 = arith.mulf %278, %281 : vector<168x128xf32>
      %283 = arith.truncf %282 : vector<168x128xf32> to vector<168x128xbf16>
      %c0_164 = arith.constant 0 : index
      %c128_165 = arith.constant 128 : index
      %284 = vector.load %arg27[%c0_164, %c128_165] : memref<168x1152xbf16, #tpu.memory_space<vmem>>, vector<168x128xbf16>
      tpu.vector_store %arg27[%c0_164, %c128_165], %283 {strides = array<i32>} : memref<168x1152xbf16, #tpu.memory_space<vmem>>, vector<168x128xbf16>,
      %c8_166 = arith.constant 8 : index
      %c0_167 = arith.constant 0 : index
      %285 = vector.load %arg26[%c8_166, %c0_167] : memref<200x128xf32, #tpu.memory_space<vmem>>, vector<168x128xf32>
      %c2_168 = arith.constant 2 : index
      %c0_169 = arith.constant 0 : index
      %c0_170 = arith.constant 0 : index
      %286 = vector.load %arg5[%c2_168, %c0_169, %c0_170] : memref<9x168x1xf32, #tpu.memory_space<vmem>>, vector<1x168x1xf32>
      %287 = vector.shape_cast %286 : vector<1x168x1xf32> to vector<168x1xf32>
      %288 = vector.broadcast %287 : vector<168x1xf32> to vector<168x128xf32>
      %289 = arith.mulf %285, %288 : vector<168x128xf32>
      %290 = arith.truncf %289 : vector<168x128xf32> to vector<168x128xbf16>
      %c0_171 = arith.constant 0 : index
      %c256_172 = arith.constant 256 : index
      %291 = vector.load %arg27[%c0_171, %c256_172] : memref<168x1152xbf16, #tpu.memory_space<vmem>>, vector<168x128xbf16>
      tpu.vector_store %arg27[%c0_171, %c256_172], %290 {strides = array<i32>} : memref<168x1152xbf16, #tpu.memory_space<vmem>>, vector<168x128xbf16>,
      %c15_173 = arith.constant 15 : index
      %c0_174 = arith.constant 0 : index
      %292 = vector.load %arg26[%c15_173, %c0_174] : memref<200x128xf32, #tpu.memory_space<vmem>>, vector<168x128xf32>
      %c3_175 = arith.constant 3 : index
      %c0_176 = arith.constant 0 : index
      %c0_177 = arith.constant 0 : index
      %293 = vector.load %arg5[%c3_175, %c0_176, %c0_177] : memref<9x168x1xf32, #tpu.memory_space<vmem>>, vector<1x168x1xf32>
      %294 = vector.shape_cast %293 : vector<1x168x1xf32> to vector<168x1xf32>
      %295 = vector.broadcast %294 : vector<168x1xf32> to vector<168x128xf32>
      %296 = arith.mulf %292, %295 : vector<168x128xf32>
      %297 = arith.truncf %296 : vector<168x128xf32> to vector<168x128xbf16>
      %c0_178 = arith.constant 0 : index
      %c384_179 = arith.constant 384 : index
      %298 = vector.load %arg27[%c0_178, %c384_179] : memref<168x1152xbf16, #tpu.memory_space<vmem>>, vector<168x128xbf16>
      tpu.vector_store %arg27[%c0_178, %c384_179], %297 {strides = array<i32>} : memref<168x1152xbf16, #tpu.memory_space<vmem>>, vector<168x128xbf16>,
      %c16_180 = arith.constant 16 : index
      %c0_181 = arith.constant 0 : index
      %299 = vector.load %arg26[%c16_180, %c0_181] : memref<200x128xf32, #tpu.memory_space<vmem>>, vector<168x128xf32>
      %c4_182 = arith.constant 4 : index
      %c0_183 = arith.constant 0 : index
      %c0_184 = arith.constant 0 : index
      %300 = vector.load %arg5[%c4_182, %c0_183, %c0_184] : memref<9x168x1xf32, #tpu.memory_space<vmem>>, vector<1x168x1xf32>
      %301 = vector.shape_cast %300 : vector<1x168x1xf32> to vector<168x1xf32>
      %302 = vector.broadcast %301 : vector<168x1xf32> to vector<168x128xf32>
      %303 = arith.mulf %299, %302 : vector<168x128xf32>
      %304 = arith.truncf %303 : vector<168x128xf32> to vector<168x128xbf16>
      %c0_185 = arith.constant 0 : index
      %c512_186 = arith.constant 512 : index
      %305 = vector.load %arg27[%c0_185, %c512_186] : memref<168x1152xbf16, #tpu.memory_space<vmem>>, vector<168x128xbf16>
      tpu.vector_store %arg27[%c0_185, %c512_186], %304 {strides = array<i32>} : memref<168x1152xbf16, #tpu.memory_space<vmem>>, vector<168x128xbf16>,
      %c17_187 = arith.constant 17 : index
      %c0_188 = arith.constant 0 : index
      %306 = vector.load %arg26[%c17_187, %c0_188] : memref<200x128xf32, #tpu.memory_space<vmem>>, vector<168x128xf32>
      %c5_189 = arith.constant 5 : index
      %c0_190 = arith.constant 0 : index
      %c0_191 = arith.constant 0 : index
      %307 = vector.load %arg5[%c5_189, %c0_190, %c0_191] : memref<9x168x1xf32, #tpu.memory_space<vmem>>, vector<1x168x1xf32>
      %308 = vector.shape_cast %307 : vector<1x168x1xf32> to vector<168x1xf32>
      %309 = vector.broadcast %308 : vector<168x1xf32> to vector<168x128xf32>
      %310 = arith.mulf %306, %309 : vector<168x128xf32>
      %311 = arith.truncf %310 : vector<168x128xf32> to vector<168x128xbf16>
      %c0_192 = arith.constant 0 : index
      %c640_193 = arith.constant 640 : index
      %312 = vector.load %arg27[%c0_192, %c640_193] : memref<168x1152xbf16, #tpu.memory_space<vmem>>, vector<168x128xbf16>
      tpu.vector_store %arg27[%c0_192, %c640_193], %311 {strides = array<i32>} : memref<168x1152xbf16, #tpu.memory_space<vmem>>, vector<168x128xbf16>,
      %c24_194 = arith.constant 24 : index
      %c0_195 = arith.constant 0 : index
      %313 = vector.load %arg26[%c24_194, %c0_195] : memref<200x128xf32, #tpu.memory_space<vmem>>, vector<168x128xf32>
      %c6_196 = arith.constant 6 : index
      %c0_197 = arith.constant 0 : index
      %c0_198 = arith.constant 0 : index
      %314 = vector.load %arg5[%c6_196, %c0_197, %c0_198] : memref<9x168x1xf32, #tpu.memory_space<vmem>>, vector<1x168x1xf32>
      %315 = vector.shape_cast %314 : vector<1x168x1xf32> to vector<168x1xf32>
      %316 = vector.broadcast %315 : vector<168x1xf32> to vector<168x128xf32>
      %317 = arith.mulf %313, %316 : vector<168x128xf32>
      %318 = arith.truncf %317 : vector<168x128xf32> to vector<168x128xbf16>
      %c0_199 = arith.constant 0 : index
      %c768_200 = arith.constant 768 : index
      %319 = vector.load %arg27[%c0_199, %c768_200] : memref<168x1152xbf16, #tpu.memory_space<vmem>>, vector<168x128xbf16>
      tpu.vector_store %arg27[%c0_199, %c768_200], %318 {strides = array<i32>} : memref<168x1152xbf16, #tpu.memory_space<vmem>>, vector<168x128xbf16>,
      %c25_201 = arith.constant 25 : index
      %c0_202 = arith.constant 0 : index
      %320 = vector.load %arg26[%c25_201, %c0_202] : memref<200x128xf32, #tpu.memory_space<vmem>>, vector<168x128xf32>
      %c7_203 = arith.constant 7 : index
      %c0_204 = arith.constant 0 : index
      %c0_205 = arith.constant 0 : index
      %321 = vector.load %arg5[%c7_203, %c0_204, %c0_205] : memref<9x168x1xf32, #tpu.memory_space<vmem>>, vector<1x168x1xf32>
      %322 = vector.shape_cast %321 : vector<1x168x1xf32> to vector<168x1xf32>
      %323 = vector.broadcast %322 : vector<168x1xf32> to vector<168x128xf32>
      %324 = arith.mulf %320, %323 : vector<168x128xf32>
      %325 = arith.truncf %324 : vector<168x128xf32> to vector<168x128xbf16>
      %c0_206 = arith.constant 0 : index
      %c896_207 = arith.constant 896 : index
      %326 = vector.load %arg27[%c0_206, %c896_207] : memref<168x1152xbf16, #tpu.memory_space<vmem>>, vector<168x128xbf16>
      tpu.vector_store %arg27[%c0_206, %c896_207], %325 {strides = array<i32>} : memref<168x1152xbf16, #tpu.memory_space<vmem>>, vector<168x128xbf16>,
      %c26_208 = arith.constant 26 : index
      %c0_209 = arith.constant 0 : index
      %327 = vector.load %arg26[%c26_208, %c0_209] : memref<200x128xf32, #tpu.memory_space<vmem>>, vector<168x128xf32>
      %c8_210 = arith.constant 8 : index
      %c0_211 = arith.constant 0 : index
      %c0_212 = arith.constant 0 : index
      %328 = vector.load %arg5[%c8_210, %c0_211, %c0_212] : memref<9x168x1xf32, #tpu.memory_space<vmem>>, vector<1x168x1xf32>
      %329 = vector.shape_cast %328 : vector<1x168x1xf32> to vector<168x1xf32>
      %330 = vector.broadcast %329 : vector<168x1xf32> to vector<168x128xf32>
      %331 = arith.mulf %327, %330 : vector<168x128xf32>
      %332 = arith.truncf %331 : vector<168x128xf32> to vector<168x128xbf16>
      %c0_213 = arith.constant 0 : index
      %c1024_214 = arith.constant 1024 : index
      %333 = vector.load %arg27[%c0_213, %c1024_214] : memref<168x1152xbf16, #tpu.memory_space<vmem>>, vector<168x128xbf16>
      tpu.vector_store %arg27[%c0_213, %c1024_214], %332 {strides = array<i32>} : memref<168x1152xbf16, #tpu.memory_space<vmem>>, vector<168x128xbf16>,
      %c0_215 = arith.constant 0 : index
      %c0_216 = arith.constant 0 : index
      %334 = vector.load %arg27[%c0_215, %c0_216] : memref<168x1152xbf16, #tpu.memory_space<vmem>>, vector<168x1152xbf16>
      %cst_217 = arith.constant dense<0.000000e+00> : vector<168x128xf32>
      %335 = tpu.matmul %334, %269, %cst_217 {dimension_numbers = #tpu.dot_dimension_numbers<[1], [0], [0], [1], [0, 0, 1, 1], [], []>} : vector<168x1152xbf16>, vector<1152x128xbf16>, vector<168x128xf32> -> vector<168x128xf32>
      %c2_i32_218 = arith.constant 2 : i32
      %336 = arith.addi %c2_i32_218, %162 : i32
      %337 = arith.index_cast %336 : i32 to index
      %c0_219 = arith.constant 0 : index
      %c0_220 = arith.constant 0 : index
      %338 = vector.load %arg3[%337, %c0_219, %c0_220] : memref<5x1x128xf32, #tpu.memory_space<vmem>>, vector<1x1x128xf32>
      %339 = vector.shape_cast %338 : vector<1x1x128xf32> to vector<1x128xf32>
      %c2_i32_221 = arith.constant 2 : i32
      %340 = arith.addi %c2_i32_221, %162 : i32
      %341 = arith.index_cast %340 : i32 to index
      %c0_222 = arith.constant 0 : index
      %c0_223 = arith.constant 0 : index
      %342 = vector.load %arg4[%341, %c0_222, %c0_223] : memref<5x1x128xf32, #tpu.memory_space<vmem>>, vector<1x1x128xf32>
      %343 = vector.shape_cast %342 : vector<1x1x128xf32> to vector<1x128xf32>
      %cst_224 = arith.constant dense<0.000000e+00> : vector<128xf32>
      %344 = vector.multi_reduction <add>, %335, %cst_224 [0] : vector<168x128xf32> to vector<128xf32>
      %345 = vector.shape_cast %344 : vector<128xf32> to vector<1x128xf32>
      %cst_225 = arith.constant 0.00617283955 : f32
      %346 = vector.broadcast %cst_225 : f32 to vector<1x128xf32>
      %347 = arith.mulf %345, %346 : vector<1x128xf32>
      %348 = vector.broadcast %347 : vector<1x128xf32> to vector<168x128xf32>
      %349 = arith.subf %335, %348 : vector<168x128xf32>
      %350 = vector.broadcast %0 : vector<168x1xf32> to vector<168x128xf32>
      %351 = arith.mulf %349, %350 : vector<168x128xf32>
      %352 = arith.mulf %351, %351 : vector<168x128xf32>
      %cst_226 = arith.constant dense<0.000000e+00> : vector<128xf32>
      %353 = vector.multi_reduction <add>, %352, %cst_226 [0] : vector<168x128xf32> to vector<128xf32>
      %354 = vector.shape_cast %353 : vector<128xf32> to vector<1x128xf32>
      %cst_227 = arith.constant 0.00617283955 : f32
      %355 = vector.broadcast %cst_227 : f32 to vector<1x128xf32>
      %356 = arith.mulf %354, %355 : vector<1x128xf32>
      %357 = vector.broadcast %347 : vector<1x128xf32> to vector<168x128xf32>
      %358 = arith.subf %335, %357 : vector<168x128xf32>
      %cst_228 = arith.constant 9.99999974E-6 : f32
      %359 = vector.broadcast %cst_228 : f32 to vector<1x128xf32>
      %360 = arith.addf %356, %359 : vector<1x128xf32>
      %361 = math.rsqrt %360 : vector<1x128xf32>
      %362 = vector.broadcast %361 : vector<1x128xf32> to vector<168x128xf32>
      %363 = arith.mulf %358, %362 : vector<168x128xf32>
      %364 = vector.broadcast %339 : vector<1x128xf32> to vector<168x128xf32>
      %365 = arith.mulf %363, %364 : vector<168x128xf32>
      %366 = vector.broadcast %343 : vector<1x128xf32> to vector<168x128xf32>
      %367 = arith.addf %365, %366 : vector<168x128xf32>
      %368 = arith.addf %367, %arg29 : vector<168x128xf32>
      %cst_229 = arith.constant 0.000000e+00 : f32
      %369 = vector.broadcast %cst_229 : f32 to vector<168x128xf32>
      %370 = arith.maximumf %368, %369 : vector<168x128xf32>
      scf.yield %370 : vector<168x128xf32>
    }
    %c2_i32_22 = arith.constant 2 : i32
    %40 = vector.broadcast %0 : vector<168x1xf32> to vector<168x128xf32>
    %41 = arith.mulf %39, %40 : vector<168x128xf32>
    %42 = arith.truncf %41 : vector<168x128xf32> to vector<168x128xbf16>
    %c0_23 = arith.constant 0 : index
    %c0_24 = arith.constant 0 : index
    %43 = vector.load %arg7[%c0_23, %c0_24] : memref<128x128xbf16, #tpu.memory_space<vmem>>, vector<128x128xbf16>
    %cst_25 = arith.constant dense<0.000000e+00> : vector<168x128xf32>
    %44 = tpu.matmul %42, %43, %cst_25 {dimension_numbers = #tpu.dot_dimension_numbers<[1], [0], [0], [1], [0, 0, 1, 1], [], []>} : vector<168x128xbf16>, vector<128x128xbf16>, vector<168x128xf32> -> vector<168x128xf32>
    %c0_26 = arith.constant 0 : index
    %c0_27 = arith.constant 0 : index
    %45 = vector.load %arg10[%c0_26, %c0_27] : memref<1x128xf32, #tpu.memory_space<vmem>>, vector<1x128xf32>
    %c0_28 = arith.constant 0 : index
    %c0_29 = arith.constant 0 : index
    %46 = vector.load %arg11[%c0_28, %c0_29] : memref<1x128xf32, #tpu.memory_space<vmem>>, vector<1x128xf32>
    %cst_30 = arith.constant dense<0.000000e+00> : vector<128xf32>
    %47 = vector.multi_reduction <add>, %44, %cst_30 [0] : vector<168x128xf32> to vector<128xf32>
    %48 = vector.shape_cast %47 : vector<128xf32> to vector<1x128xf32>
    %cst_31 = arith.constant 0.00617283955 : f32
    %49 = vector.broadcast %cst_31 : f32 to vector<1x128xf32>
    %50 = arith.mulf %48, %49 : vector<1x128xf32>
    %51 = vector.broadcast %50 : vector<1x128xf32> to vector<168x128xf32>
    %52 = arith.subf %44, %51 : vector<168x128xf32>
    %53 = vector.broadcast %0 : vector<168x1xf32> to vector<168x128xf32>
    %54 = arith.mulf %52, %53 : vector<168x128xf32>
    %55 = arith.mulf %54, %54 : vector<168x128xf32>
    %cst_32 = arith.constant dense<0.000000e+00> : vector<128xf32>
    %56 = vector.multi_reduction <add>, %55, %cst_32 [0] : vector<168x128xf32> to vector<128xf32>
    %57 = vector.shape_cast %56 : vector<128xf32> to vector<1x128xf32>
    %cst_33 = arith.constant 0.00617283955 : f32
    %58 = vector.broadcast %cst_33 : f32 to vector<1x128xf32>
    %59 = arith.mulf %57, %58 : vector<1x128xf32>
    %60 = vector.broadcast %50 : vector<1x128xf32> to vector<168x128xf32>
    %61 = arith.subf %44, %60 : vector<168x128xf32>
    %cst_34 = arith.constant 9.99999974E-6 : f32
    %62 = vector.broadcast %cst_34 : f32 to vector<1x128xf32>
    %63 = arith.addf %59, %62 : vector<1x128xf32>
    %64 = math.rsqrt %63 : vector<1x128xf32>
    %65 = vector.broadcast %64 : vector<1x128xf32> to vector<168x128xf32>
    %66 = arith.mulf %61, %65 : vector<168x128xf32>
    %67 = vector.broadcast %45 : vector<1x128xf32> to vector<168x128xf32>
    %68 = arith.mulf %66, %67 : vector<168x128xf32>
    %69 = vector.broadcast %46 : vector<1x128xf32> to vector<168x128xf32>
    %70 = arith.addf %68, %69 : vector<168x128xf32>
    %cst_35 = arith.constant 0.000000e+00 : f32
    %71 = vector.broadcast %cst_35 : f32 to vector<168x128xf32>
    %72 = arith.maximumf %70, %71 : vector<168x128xf32>
    %c0_36 = arith.constant 0 : index
    %c0_37 = arith.constant 0 : index
    %73 = vector.load %arg8[%c0_36, %c0_37] : memref<128x128xbf16, #tpu.memory_space<vmem>>, vector<128x128xbf16>
    %cst_38 = arith.constant dense<0.000000e+00> : vector<168x128xf32>
    %74 = tpu.matmul %42, %73, %cst_38 {dimension_numbers = #tpu.dot_dimension_numbers<[1], [0], [0], [1], [0, 0, 1, 1], [], []>} : vector<168x128xbf16>, vector<128x128xbf16>, vector<168x128xf32> -> vector<168x128xf32>
    %c0_39 = arith.constant 0 : index
    %c0_40 = arith.constant 0 : index
    %75 = vector.load %arg12[%c0_39, %c0_40] : memref<1x128xf32, #tpu.memory_space<vmem>>, vector<1x128xf32>
    %c0_41 = arith.constant 0 : index
    %c0_42 = arith.constant 0 : index
    %76 = vector.load %arg13[%c0_41, %c0_42] : memref<1x128xf32, #tpu.memory_space<vmem>>, vector<1x128xf32>
    %cst_43 = arith.constant dense<0.000000e+00> : vector<128xf32>
    %77 = vector.multi_reduction <add>, %74, %cst_43 [0] : vector<168x128xf32> to vector<128xf32>
    %78 = vector.shape_cast %77 : vector<128xf32> to vector<1x128xf32>
    %cst_44 = arith.constant 0.00617283955 : f32
    %79 = vector.broadcast %cst_44 : f32 to vector<1x128xf32>
    %80 = arith.mulf %78, %79 : vector<1x128xf32>
    %81 = vector.broadcast %80 : vector<1x128xf32> to vector<168x128xf32>
    %82 = arith.subf %74, %81 : vector<168x128xf32>
    %83 = vector.broadcast %0 : vector<168x1xf32> to vector<168x128xf32>
    %84 = arith.mulf %82, %83 : vector<168x128xf32>
    %85 = arith.mulf %84, %84 : vector<168x128xf32>
    %cst_45 = arith.constant dense<0.000000e+00> : vector<128xf32>
    %86 = vector.multi_reduction <add>, %85, %cst_45 [0] : vector<168x128xf32> to vector<128xf32>
    %87 = vector.shape_cast %86 : vector<128xf32> to vector<1x128xf32>
    %cst_46 = arith.constant 0.00617283955 : f32
    %88 = vector.broadcast %cst_46 : f32 to vector<1x128xf32>
    %89 = arith.mulf %87, %88 : vector<1x128xf32>
    %90 = vector.broadcast %80 : vector<1x128xf32> to vector<168x128xf32>
    %91 = arith.subf %74, %90 : vector<168x128xf32>
    %cst_47 = arith.constant 9.99999974E-6 : f32
    %92 = vector.broadcast %cst_47 : f32 to vector<1x128xf32>
    %93 = arith.addf %89, %92 : vector<1x128xf32>
    %94 = math.rsqrt %93 : vector<1x128xf32>
    %95 = vector.broadcast %94 : vector<1x128xf32> to vector<168x128xf32>
    %96 = arith.mulf %91, %95 : vector<168x128xf32>
    %97 = vector.broadcast %75 : vector<1x128xf32> to vector<168x128xf32>
    %98 = arith.mulf %96, %97 : vector<168x128xf32>
    %99 = vector.broadcast %76 : vector<1x128xf32> to vector<168x128xf32>
    %100 = arith.addf %98, %99 : vector<168x128xf32>
    %cst_48 = arith.constant 0.000000e+00 : f32
    %101 = vector.broadcast %cst_48 : f32 to vector<168x128xf32>
    %102 = arith.maximumf %100, %101 : vector<168x128xf32>
    %c0_49 = arith.constant 0 : index
    %c0_50 = arith.constant 0 : index
    %103 = vector.load %arg9[%c0_49, %c0_50] : memref<128x256xbf16, #tpu.memory_space<vmem>>, vector<128x256xbf16>
    %cst_51 = arith.constant dense<0.000000e+00> : vector<168x256xf32>
    %104 = tpu.matmul %42, %103, %cst_51 {dimension_numbers = #tpu.dot_dimension_numbers<[1], [0], [0], [1], [0, 0, 1, 1], [], []>} : vector<168x128xbf16>, vector<128x256xbf16>, vector<168x256xf32> -> vector<168x256xf32>
    %c0_52 = arith.constant 0 : index
    %c0_53 = arith.constant 0 : index
    %105 = vector.load %arg14[%c0_52, %c0_53] : memref<1x256xf32, #tpu.memory_space<vmem>>, vector<1x256xf32>
    %c0_54 = arith.constant 0 : index
    %c0_55 = arith.constant 0 : index
    %106 = vector.load %arg15[%c0_54, %c0_55] : memref<1x256xf32, #tpu.memory_space<vmem>>, vector<1x256xf32>
    %cst_56 = arith.constant dense<0.000000e+00> : vector<256xf32>
    %107 = vector.multi_reduction <add>, %104, %cst_56 [0] : vector<168x256xf32> to vector<256xf32>
    %108 = vector.shape_cast %107 : vector<256xf32> to vector<1x256xf32>
    %cst_57 = arith.constant 0.00617283955 : f32
    %109 = vector.broadcast %cst_57 : f32 to vector<1x256xf32>
    %110 = arith.mulf %108, %109 : vector<1x256xf32>
    %111 = vector.broadcast %110 : vector<1x256xf32> to vector<168x256xf32>
    %112 = arith.subf %104, %111 : vector<168x256xf32>
    %113 = vector.broadcast %0 : vector<168x1xf32> to vector<168x256xf32>
    %114 = arith.mulf %112, %113 : vector<168x256xf32>
    %115 = arith.mulf %114, %114 : vector<168x256xf32>
    %cst_58 = arith.constant dense<0.000000e+00> : vector<256xf32>
    %116 = vector.multi_reduction <add>, %115, %cst_58 [0] : vector<168x256xf32> to vector<256xf32>
    %117 = vector.shape_cast %116 : vector<256xf32> to vector<1x256xf32>
    %cst_59 = arith.constant 0.00617283955 : f32
    %118 = vector.broadcast %cst_59 : f32 to vector<1x256xf32>
    %119 = arith.mulf %117, %118 : vector<1x256xf32>
    %120 = vector.broadcast %110 : vector<1x256xf32> to vector<168x256xf32>
    %121 = arith.subf %104, %120 : vector<168x256xf32>
    %cst_60 = arith.constant 9.99999974E-6 : f32
    %122 = vector.broadcast %cst_60 : f32 to vector<1x256xf32>
    %123 = arith.addf %119, %122 : vector<1x256xf32>
    %124 = math.rsqrt %123 : vector<1x256xf32>
    %125 = vector.broadcast %124 : vector<1x256xf32> to vector<168x256xf32>
    %126 = arith.mulf %121, %125 : vector<168x256xf32>
    %127 = vector.broadcast %105 : vector<1x256xf32> to vector<168x256xf32>
    %128 = arith.mulf %126, %127 : vector<168x256xf32>
    %129 = vector.broadcast %106 : vector<1x256xf32> to vector<168x256xf32>
    %130 = arith.addf %128, %129 : vector<168x256xf32>
    %cst_61 = arith.constant 0.000000e+00 : f32
    %131 = vector.broadcast %cst_61 : f32 to vector<168x256xf32>
    %132 = arith.maximumf %130, %131 : vector<168x256xf32>
    %c0_62 = arith.constant 0 : index
    %c0_63 = arith.constant 0 : index
    %133 = vector.load %arg23[%c0_62, %c0_63] : memref<8x168xbf16, #tpu.memory_space<vmem>>, vector<8x168xbf16>
    %c0_64 = arith.constant 0 : index
    %c0_65 = arith.constant 0 : index
    %134 = vector.load %arg16[%c0_64, %c0_65] : memref<168x128xf32, #tpu.memory_space<vmem>>, vector<168x128xf32>
    %135 = arith.mulf %72, %134 : vector<168x128xf32>
    %c0_66 = arith.constant 0 : index
    %c0_67 = arith.constant 0 : index
    %136 = vector.load %arg17[%c0_66, %c0_67] : memref<168x128xf32, #tpu.memory_space<vmem>>, vector<168x128xf32>
    %137 = arith.mulf %102, %136 : vector<168x128xf32>
    %138 = arith.addf %135, %137 : vector<168x128xf32>
    %139 = arith.truncf %138 : vector<168x128xf32> to vector<168x128xbf16>
    %cst_68 = arith.constant dense<0.000000e+00> : vector<8x128xf32>
    %140 = tpu.matmul %133, %139, %cst_68 {dimension_numbers = #tpu.dot_dimension_numbers<[1], [0], [0], [1], [0, 0, 1, 1], [], []>} : vector<8x168xbf16>, vector<168x128xbf16>, vector<8x128xf32> -> vector<8x128xf32>
    %c0_69 = arith.constant 0 : index
    %c0_70 = arith.constant 0 : index
    %141 = vector.load %arg18[%c0_69, %c0_70] : memref<1x128xf32, #tpu.memory_space<vmem>>, vector<1x128xf32>
    %142 = vector.broadcast %141 : vector<1x128xf32> to vector<8x128xf32>
    %143 = arith.addf %140, %142 : vector<8x128xf32>
    %c0_71 = arith.constant 0 : index
    %c0_72 = arith.constant 0 : index
    %144 = vector.load %arg24[%c0_71, %c0_72] : memref<8x128xf32, #tpu.memory_space<vmem>>, vector<8x128xf32>
    tpu.vector_store %arg24[%c0_71, %c0_72], %143 {strides = array<i32>} : memref<8x128xf32, #tpu.memory_space<vmem>>, vector<8x128xf32>,
    %c0_73 = arith.constant 0 : index
    %c0_74 = arith.constant 0 : index
    %145 = vector.load %arg19[%c0_73, %c0_74] : memref<168x256xf32, #tpu.memory_space<vmem>>, vector<168x256xf32>
    %146 = arith.mulf %132, %145 : vector<168x256xf32>
    %147 = arith.truncf %146 : vector<168x256xf32> to vector<168x256xbf16>
    %cst_75 = arith.constant dense<0.000000e+00> : vector<8x256xf32>
    %148 = tpu.matmul %133, %147, %cst_75 {dimension_numbers = #tpu.dot_dimension_numbers<[1], [0], [0], [1], [0, 0, 1, 1], [], []>} : vector<8x168xbf16>, vector<168x256xbf16>, vector<8x256xf32> -> vector<8x256xf32>
    %c0_76 = arith.constant 0 : index
    %c0_77 = arith.constant 0 : index
    %149 = vector.load %arg20[%c0_76, %c0_77] : memref<1x256xf32, #tpu.memory_space<vmem>>, vector<1x256xf32>
    %150 = vector.broadcast %149 : vector<1x256xf32> to vector<8x256xf32>
    %151 = arith.addf %148, %150 : vector<8x256xf32>
    %cst_78 = arith.constant 0.000000e+00 : f32
    %152 = vector.broadcast %cst_78 : f32 to vector<8x256xf32>
    %153 = arith.maximumf %151, %152 : vector<8x256xf32>
    %154 = arith.truncf %153 : vector<8x256xf32> to vector<8x256xbf16>
    %c0_79 = arith.constant 0 : index
    %c0_80 = arith.constant 0 : index
    %155 = vector.load %arg21[%c0_79, %c0_80] : memref<256x128xbf16, #tpu.memory_space<vmem>>, vector<256x128xbf16>
    %cst_81 = arith.constant dense<0.000000e+00> : vector<8x128xf32>
    %156 = tpu.matmul %154, %155, %cst_81 {dimension_numbers = #tpu.dot_dimension_numbers<[1], [0], [0], [1], [0, 0, 1, 1], [], []>} : vector<8x256xbf16>, vector<256x128xbf16>, vector<8x128xf32> -> vector<8x128xf32>
    %c0_82 = arith.constant 0 : index
    %c0_83 = arith.constant 0 : index
    %157 = vector.load %arg22[%c0_82, %c0_83] : memref<1x128xf32, #tpu.memory_space<vmem>>, vector<1x128xf32>
    %158 = vector.broadcast %157 : vector<1x128xf32> to vector<8x128xf32>
    %159 = arith.addf %156, %158 : vector<8x128xf32>
    %160 = math.tanh %159 : vector<8x128xf32>
    %c0_84 = arith.constant 0 : index
    %c0_85 = arith.constant 0 : index
    %161 = vector.load %arg25[%c0_84, %c0_85] : memref<8x128xf32, #tpu.memory_space<vmem>>, vector<8x128xf32>
    tpu.vector_store %arg25[%c0_84, %c0_85], %160 {strides = array<i32>} : memref<8x128xf32, #tpu.memory_space<vmem>>, vector<8x128xf32>,
    return
  }
}

</mosaic_0001>

<llo_original>
// kernel: ppo_forward.1
$region0: #{ppo_forward.1}
  #allocation0 [shape = 'u32[]', space=smem, size = 0x4, offset = 0x4, fixed_abs, tag = 'smem constant byte address 0x4 - core index']
  #allocation1 [shape = 'u32[144,128]{1,0:T(1,128)}', space=vmem, size = 0x12000, scoped, tag = 'internal scratch']
  #allocation2 [shape = 'f32[200,128]{1,0:T(8,128)}', space=vmem, size = 0x19000, scoped, tag = 'scratch operand']
  #allocation3 [shape = 'bf16[168,1152]{1,0:T(8,128)(2,1)}', space=vmem, size = 0x5e800, scoped, tag = 'scratch operand']
  %s0 = inlined_call_operand.vmem [shape: bf16[168,128], index: 0, kind: input, shape index: {}]
  %s1 = inlined_call_operand.vmem [shape: bf16[128,128], index: 1, kind: input, shape index: {}]
  %s2 = inlined_call_operand.vmem [shape: bf16[4,1152,128], index: 2, kind: input, shape index: {}]
  %s3 = inlined_call_operand.vmem [shape: f32[5,1,128], index: 3, kind: input, shape index: {}]
  %s4 = inlined_call_operand.vmem [shape: f32[5,1,128], index: 4, kind: input, shape index: {}]
  %s5 = inlined_call_operand.vmem [shape: f32[9,168,1], index: 5, kind: input, shape index: {}]
  %s6 = inlined_call_operand.vmem [shape: f32[168,1], index: 6, kind: input, shape index: {}]
  %s7 = inlined_call_operand.vmem [shape: bf16[128,128], index: 7, kind: input, shape index: {}]
  %s8 = inlined_call_operand.vmem [shape: bf16[128,128], index: 8, kind: input, shape index: {}]
  %s9 = inlined_call_operand.vmem [shape: bf16[128,256], index: 9, kind: input, shape index: {}]
  %s10 = inlined_call_operand.vmem [shape: f32[1,128], index: 10, kind: input, shape index: {}]
  %s11 = inlined_call_operand.vmem [shape: f32[1,128], index: 11, kind: input, shape index: {}]
  %s12 = inlined_call_operand.vmem [shape: f32[1,128], index: 12, kind: input, shape index: {}]
  %s13 = inlined_call_operand.vmem [shape: f32[1,128], index: 13, kind: input, shape index: {}]
  %s14 = inlined_call_operand.vmem [shape: f32[1,256], index: 14, kind: input, shape index: {}]
  %s15 = inlined_call_operand.vmem [shape: f32[1,256], index: 15, kind: input, shape index: {}]
  %s16 = inlined_call_operand.vmem [shape: f32[168,128], index: 16, kind: input, shape index: {}]
  %s17 = inlined_call_operand.vmem [shape: f32[168,128], index: 17, kind: input, shape index: {}]
  %s18 = inlined_call_operand.vmem [shape: f32[1,128], index: 18, kind: input, shape index: {}]
  %s19 = inlined_call_operand.vmem [shape: f32[168,256], index: 19, kind: input, shape index: {}]
  %s20 = inlined_call_operand.vmem [shape: f32[1,256], index: 20, kind: input, shape index: {}]
  %s21 = inlined_call_operand.vmem [shape: bf16[256,128], index: 21, kind: input, shape index: {}]
  %s22 = inlined_call_operand.vmem [shape: f32[1,128], index: 22, kind: input, shape index: {}]
  %s23 = inlined_call_operand.vmem [shape: bf16[8,168], index: 23, kind: input, shape index: {}]
  %s24 = inlined_call_operand.vmem [shape: f32[8,128], index: 24, kind: output, shape index: {0}]
  %s25 = inlined_call_operand.vmem [shape: f32[8,128], index: 25, kind: output, shape index: {1}]
  %26 = xla_tuple %s24, %s25
  %s27 = sld [smem:[#allocation0]]
  $region121: #{ppo_forward.1} parent=0
    _
  %s29 = ssub.s32 1, %s27
  %s30 = scalar_select 0, %s29, %s27
  // Predicated region
  $region2: #{ppo_forward.1} parent=0 // pred_check
    _
  $region3: #{ppo_forward.1} parent=0 // pred_check_branch
    %32 = sbr.rel (0) target = $region5
  $region4: #{ppo_forward.1} parent=0 // pred_region
    _
  $region5: #{ppo_forward.1} parent=0 // pred_fallthru
    _
  // Predicated region
  $region6: #{ppo_forward.1} parent=0 // pred_check
    _
  $region7: #{ppo_forward.1} parent=0 // pred_check_branch
    %34 = sbr.rel (0) target = $region9
  $region8: #{ppo_forward.1} parent=0 // pred_region
    _
  $region9: #{ppo_forward.1} parent=0 // pred_fallthru
    _
  // Predicated region
  $region10: #{ppo_forward.1} parent=0 // pred_check
    _
  $region11: #{ppo_forward.1} parent=0 // pred_check_branch
    %36 = sbr.rel (0) target = $region13
  $region12: #{ppo_forward.1} parent=0 // pred_region
    _
  $region13: #{ppo_forward.1} parent=0 // pred_fallthru
    _
  // Predicated region
  $region14: #{ppo_forward.1} parent=0 // pred_check
    _
  $region15: #{ppo_forward.1} parent=0 // pred_check_branch
    %38 = sbr.rel (0) target = $region17
  $region16: #{ppo_forward.1} parent=0 // pred_region
    _
  $region17: #{ppo_forward.1} parent=0 // pred_fallthru
    _
  // Predicated region
  $region18: #{ppo_forward.1} parent=0 // pred_check
    _
  $region19: #{ppo_forward.1} parent=0 // pred_check_branch
    %40 = sbr.rel (0) target = $region21
  $region20: #{ppo_forward.1} parent=0 // pred_region
    _
  $region21: #{ppo_forward.1} parent=0 // pred_fallthru
    _
  // Predicated region
  $region22: #{ppo_forward.1} parent=0 // pred_check
    _
  $region23: #{ppo_forward.1} parent=0 // pred_check_branch
    %42 = sbr.rel (0) target = $region25
  $region24: #{ppo_forward.1} parent=0 // pred_region
    _
  $region25: #{ppo_forward.1} parent=0 // pred_fallthru
    _
  // Predicated region
  $region26: #{ppo_forward.1} parent=0 // pred_check
    _
  $region27: #{ppo_forward.1} parent=0 // pred_check_branch
    %44 = sbr.rel (0) target = $region29
  $region28: #{ppo_forward.1} parent=0 // pred_region
    _
  $region29: #{ppo_forward.1} parent=0 // pred_fallthru
    _
  // Predicated region
  $region30: #{ppo_forward.1} parent=0 // pred_check
    _
  $region31: #{ppo_forward.1} parent=0 // pred_check_branch
    %46 = sbr.rel (0) target = $region33
  $region32: #{ppo_forward.1} parent=0 // pred_region
    _
  $region33: #{ppo_forward.1} parent=0 // pred_fallthru
    _
  // Predicated region
  $region34: #{ppo_forward.1} parent=0 // pred_check
    _
  $region35: #{ppo_forward.1} parent=0 // pred_check_branch
    %48 = sbr.rel (0) target = $region37
  $region36: #{ppo_forward.1} parent=0 // pred_region
    _
  $region37: #{ppo_forward.1} parent=0 // pred_fallthru
    _
  // Predicated region
  $region38: #{ppo_forward.1} parent=0 // pred_check
    _
  $region39: #{ppo_forward.1} parent=0 // pred_check_branch
    %50 = sbr.rel (0) target = $region41
  $region40: #{ppo_forward.1} parent=0 // pred_region
    _
  $region41: #{ppo_forward.1} parent=0 // pred_fallthru
    _
  // Predicated region
  $region42: #{ppo_forward.1} parent=0 // pred_check
    _
  $region43: #{ppo_forward.1} parent=0 // pred_check_branch
    %52 = sbr.rel (0) target = $region45
  $region44: #{ppo_forward.1} parent=0 // pred_region
    _
  $region45: #{ppo_forward.1} parent=0 // pred_fallthru
    _
  // Predicated region
  $region46: #{ppo_forward.1} parent=0 // pred_check
    _
  $region47: #{ppo_forward.1} parent=0 // pred_check_branch
    %54 = sbr.rel (0) target = $region49
  $region48: #{ppo_forward.1} parent=0 // pred_region
    _
  $region49: #{ppo_forward.1} parent=0 // pred_fallthru
    _
  // Predicated region
  $region50: #{ppo_forward.1} parent=0 // pred_check
    _
  $region51: #{ppo_forward.1} parent=0 // pred_check_branch
    %56 = sbr.rel (0) target = $region53
  $region52: #{ppo_forward.1} parent=0 // pred_region
    _
  $region53: #{ppo_forward.1} parent=0 // pred_fallthru
    _
  // Predicated region
  $region54: #{ppo_forward.1} parent=0 // pred_check
    _
  $region55: #{ppo_forward.1} parent=0 // pred_check_branch
    %58 = sbr.rel (0) target = $region57
  $region56: #{ppo_forward.1} parent=0 // pred_region
    _
  $region57: #{ppo_forward.1} parent=0 // pred_fallthru
    _
  // Predicated region
  $region58: #{ppo_forward.1} parent=0 // pred_check
    _
  $region59: #{ppo_forward.1} parent=0 // pred_check_branch
    %60 = sbr.rel (0) target = $region61
  $region60: #{ppo_forward.1} parent=0 // pred_region
    _
  $region61: #{ppo_forward.1} parent=0 // pred_fallthru
    _
  // Predicated region
  $region62: #{ppo_forward.1} parent=0 // pred_check
    _
  $region63: #{ppo_forward.1} parent=0 // pred_check_branch
    %62 = sbr.rel (0) target = $region65
  $region64: #{ppo_forward.1} parent=0 // pred_region
    _
  $region65: #{ppo_forward.1} parent=0 // pred_fallthru
    _
  // Predicated region
  $region66: #{ppo_forward.1} parent=0 // pred_check
    _
  $region67: #{ppo_forward.1} parent=0 // pred_check_branch
    %64 = sbr.rel (0) target = $region69
  $region68: #{ppo_forward.1} parent=0 // pred_region
    _
  $region69: #{ppo_forward.1} parent=0 // pred_fallthru
    _
  // Predicated region
  $region70: #{ppo_forward.1} parent=0 // pred_check
    _
  $region71: #{ppo_forward.1} parent=0 // pred_check_branch
    %66 = sbr.rel (0) target = $region73
  $region72: #{ppo_forward.1} parent=0 // pred_region
    _
  $region73: #{ppo_forward.1} parent=0 // pred_fallthru
    _
  // Predicated region
  $region74: #{ppo_forward.1} parent=0 // pred_check
    _
  $region75: #{ppo_forward.1} parent=0 // pred_check_branch
    %68 = sbr.rel (0) target = $region77
  $region76: #{ppo_forward.1} parent=0 // pred_region
    _
  $region77: #{ppo_forward.1} parent=0 // pred_fallthru
    _
  // Predicated region
  $region78: #{ppo_forward.1} parent=0 // pred_check
    _
  $region79: #{ppo_forward.1} parent=0 // pred_check_branch
    %70 = sbr.rel (0) target = $region81
  $region80: #{ppo_forward.1} parent=0 // pred_region
    _
  $region81: #{ppo_forward.1} parent=0 // pred_fallthru
    _
  // Predicated region
  $region82: #{ppo_forward.1} parent=0 // pred_check
    _
  $region83: #{ppo_forward.1} parent=0 // pred_check_branch
    %72 = sbr.rel (0) target = $region85
  $region84: #{ppo_forward.1} parent=0 // pred_region
    _
  $region85: #{ppo_forward.1} parent=0 // pred_fallthru
    _
  // Predicated region
  $region86: #{ppo_forward.1} parent=0 // pred_check
    _
  $region87: #{ppo_forward.1} parent=0 // pred_check_branch
    %74 = sbr.rel (0) target = $region89
  $region88: #{ppo_forward.1} parent=0 // pred_region
    _
  $region89: #{ppo_forward.1} parent=0 // pred_fallthru
    _
  // Predicated region
  $region90: #{ppo_forward.1} parent=0 // pred_check
    _
  $region91: #{ppo_forward.1} parent=0 // pred_check_branch
    %76 = sbr.rel (0) target = $region93
  $region92: #{ppo_forward.1} parent=0 // pred_region
    _
  $region93: #{ppo_forward.1} parent=0 // pred_fallthru
    _
  // Predicated region
  $region94: #{ppo_forward.1} parent=0 // pred_check
    _
  $region95: #{ppo_forward.1} parent=0 // pred_check_branch
    %78 = sbr.rel (0) target = $region97
  $region96: #{ppo_forward.1} parent=0 // pred_region
    _
  $region97: #{ppo_forward.1} parent=0 // pred_fallthru
    _
  %v80 = vld [vmem:[%s6] sm:$0xff]
  %v81 = vld [vmem:[%s6 + $0x8] sm:$0xff]
  %v82 = vld [vmem:[%s6 + $0x10] sm:$0xff]
  %v83 = vld [vmem:[%s6 + $0x18] sm:$0xff]
  %v84 = vld [vmem:[%s6 + $0x20] sm:$0xff]
  %v85 = vld [vmem:[%s6 + $0x28] sm:$0xff]
  %v86 = vld [vmem:[%s6 + $0x30] sm:$0xff]
  %v87 = vld [vmem:[%s6 + $0x38] sm:$0xff]
  %v88 = vld [vmem:[%s6 + $0x40] sm:$0xff]
  %v89 = vld [vmem:[%s6 + $0x48] sm:$0xff]
  %v90 = vld [vmem:[%s6 + $0x50] sm:$0xff]
  %v91 = vld [vmem:[%s6 + $0x58] sm:$0xff]
  %v92 = vld [vmem:[%s6 + $0x60] sm:$0xff]
  %v93 = vld [vmem:[%s6 + $0x68] sm:$0xff]
  %v94 = vld [vmem:[%s6 + $0x70] sm:$0xff]
  %v95 = vld [vmem:[%s6 + $0x78] sm:$0xff]
  %v96 = vld [vmem:[%s6 + $0x80] sm:$0xff]
  %v97 = vld [vmem:[%s6 + $0x88] sm:$0xff]
  %v98 = vld [vmem:[%s6 + $0x90] sm:$0xff]
  %v99 = vld [vmem:[%s6 + $0x98] sm:$0xff]
  %v100 = vld [vmem:[%s6 + $0xa0] sm:$0xff]
  %101 = vst [vmem:[#allocation2] sm:$0xff] 0.0
  %102 = vst [vmem:[#allocation2 + $0x8] sm:$0xff] 0.0
  %103 = vst [vmem:[#allocation2 + $0xb8] sm:$0xff] 0.0
  %104 = vst [vmem:[#allocation2 + $0xc0] sm:$0xff] 0.0
  %v105 = vld [vmem:[%s0] sm:$0xf]
  %v106 = vld [vmem:[%s0 + $0x4] sm:$0xf]
  %v107 = vld [vmem:[%s0 + $0x8] sm:$0xf]
  %v108 = vld [vmem:[%s0 + $0xc] sm:$0xf]
  %v109 = vld [vmem:[%s0 + $0x10] sm:$0xf]
  %v110 = vld [vmem:[%s0 + $0x14] sm:$0xf]
  %v111 = vld [vmem:[%s0 + $0x18] sm:$0xf]
  %v112 = vld [vmem:[%s0 + $0x1c] sm:$0xf]
  %v113 = vld [vmem:[%s0 + $0x20] sm:$0xf]
  %v114 = vld [vmem:[%s0 + $0x24] sm:$0xf]
  %v115 = vld [vmem:[%s0 + $0x28] sm:$0xf]
  %v116 = vld [vmem:[%s0 + $0x2c] sm:$0xf]
  %v117 = vld [vmem:[%s0 + $0x30] sm:$0xf]
  %v118 = vld [vmem:[%s0 + $0x34] sm:$0xf]
  %v119 = vld [vmem:[%s0 + $0x38] sm:$0xf]
  %v120 = vld [vmem:[%s0 + $0x3c] sm:$0xf]
  %v121 = vld [vmem:[%s0 + $0x40] sm:$0xf]
  %v122 = vld [vmem:[%s0 + $0x44] sm:$0xf]
  %v123 = vld [vmem:[%s0 + $0x48] sm:$0xf]
  %v124 = vld [vmem:[%s0 + $0x4c] sm:$0xf]
  %v125 = vld [vmem:[%s0 + $0x50] sm:$0xf]
  %v126 = vld [vmem:[%s1] sm:$0xf]
  %v127 = vld [vmem:[%s1 + $0x4] sm:$0xf]
  %v128 = vld [vmem:[%s1 + $0x8] sm:$0xf]
  %v129 = vld [vmem:[%s1 + $0xc] sm:$0xf]
  %v130 = vld [vmem:[%s1 + $0x10] sm:$0xf]
  %v131 = vld [vmem:[%s1 + $0x14] sm:$0xf]
  %v132 = vld [vmem:[%s1 + $0x18] sm:$0xf]
  %v133 = vld [vmem:[%s1 + $0x1c] sm:$0xf]
  %v134 = vld [vmem:[%s1 + $0x20] sm:$0xf]
  %v135 = vld [vmem:[%s1 + $0x24] sm:$0xf]
  %v136 = vld [vmem:[%s1 + $0x28] sm:$0xf]
  %v137 = vld [vmem:[%s1 + $0x2c] sm:$0xf]
  %v138 = vld [vmem:[%s1 + $0x30] sm:$0xf]
  %v139 = vld [vmem:[%s1 + $0x34] sm:$0xf]
  %v140 = vld [vmem:[%s1 + $0x38] sm:$0xf]
  %v141 = vld [vmem:[%s1 + $0x3c] sm:$0xf]
  %v163 = vunpack.c.l.b16 %v105
  %v164 = vunpack.c.l.b16 %v106
  %v165 = vunpack.c.l.b16 %v107
  %v166 = vunpack.c.l.b16 %v108
  %v167 = vunpack.c.l.b16 %v109
  %v168 = vunpack.c.l.b16 %v110
  %v169 = vunpack.c.l.b16 %v111
  %v170 = vunpack.c.l.b16 %v112
  %v171 = vunpack.c.l.b16 %v113
  %v172 = vunpack.c.l.b16 %v114
  %v173 = vunpack.c.l.b16 %v115
  %v174 = vunpack.c.l.b16 %v116
  %v175 = vunpack.c.l.b16 %v117
  %v176 = vunpack.c.l.b16 %v118
  %v177 = vunpack.c.l.b16 %v119
  %v178 = vunpack.c.l.b16 %v120
  %v179 = vunpack.c.l.b16 %v121
  %v180 = vunpack.c.l.b16 %v122
  %v181 = vunpack.c.l.b16 %v123
  %v182 = vunpack.c.l.b16 %v124
  %v183 = vunpack.c.l.b16 %v125
  %v184 = vpack.c.b16 %v164, %v163
  %v185 = vpack.c.b16 %v166, %v165
  %v186 = vpack.c.b16 %v168, %v167
  %v187 = vpack.c.b16 %v170, %v169
  %v188 = vpack.c.b16 %v172, %v171
  %v189 = vpack.c.b16 %v174, %v173
  %v190 = vpack.c.b16 %v176, %v175
  %v191 = vpack.c.b16 %v178, %v177
  %v192 = vpack.c.b16 %v180, %v179
  %v193 = vpack.c.b16 %v182, %v181
  %v194 = vpack.c.b16 %v183, %v183
  %v222 = vunpack.c.l.b16 %v126
  %v223 = vunpack.c.l.b16 %v127
  %v224 = vunpack.c.l.b16 %v128
  %v225 = vunpack.c.l.b16 %v129
  %v226 = vunpack.c.l.b16 %v130
  %v227 = vunpack.c.l.b16 %v131
  %v228 = vunpack.c.l.b16 %v132
  %v229 = vunpack.c.l.b16 %v133
  %v230 = vunpack.c.l.b16 %v134
  %v231 = vunpack.c.l.b16 %v135
  %v232 = vunpack.c.l.b16 %v136
  %v233 = vunpack.c.l.b16 %v137
  %v234 = vunpack.c.l.b16 %v138
  %v235 = vunpack.c.l.b16 %v139
  %v236 = vunpack.c.l.b16 %v140
  %v237 = vunpack.c.l.b16 %v141
  %v238 = vpack.c.b16 %v223, %v222
  %v239 = vpack.c.b16 %v225, %v224
  %v240 = vpack.c.b16 %v227, %v226
  %v241 = vpack.c.b16 %v229, %v228
  %v242 = vpack.c.b16 %v231, %v230
  %v243 = vpack.c.b16 %v233, %v232
  %v244 = vpack.c.b16 %v235, %v234
  %v245 = vpack.c.b16 %v237, %v236
  %254 = vmatprep.subr.bf16.mxu0 0
  %255 = vmatpush1.bf16.msra.mxu0 %v238
  %256 = vmatprep.subr.bf16.mxu0 0
  %257 = vmatpush1.bf16.msra.mxu0 %v239
  %258 = vmatprep.subr.bf16.mxu0 0
  %259 = vmatpush1.bf16.msra.mxu0 %v240
  %260 = vmatprep.subr.bf16.mxu0 0
  %261 = vmatpush1.bf16.msra.mxu0 %v241
  %262 = vmatprep.subr.bf16.mxu0 0
  %263 = vmatpush1.bf16.msra.mxu0 %v242
  %264 = vmatprep.subr.bf16.mxu0 0
  %265 = vmatpush1.bf16.msra.mxu0 %v243
  %266 = vmatprep.subr.bf16.mxu0 0
  %267 = vmatpush1.bf16.msra.mxu0 %v244
  %268 = vmatprep.subr.bf16.mxu0 0
  %269 = vmatpush1.bf16.msra.mxu0 %v245
  %270 = vmatprep.subr.bf16.mxu0 0
  %271 = vmatpush1.bf16.msra.mxu0 0
  %272 = vmatprep.subr.bf16.mxu0 0
  %273 = vmatpush1.bf16.msra.mxu0 0
  %274 = vmatprep.subr.bf16.mxu0 0
  %275 = vmatpush1.bf16.msra.mxu0 0
  %276 = vmatprep.subr.bf16.mxu0 0
  %277 = vmatpush1.bf16.msra.mxu0 0
  %278 = vmatprep.subr.bf16.mxu0 0
  %279 = vmatpush1.bf16.msra.mxu0 0
  %280 = vmatprep.subr.bf16.mxu0 0
  %281 = vmatpush1.bf16.msra.mxu0 0
  %282 = vmatprep.subr.bf16.mxu0 0
  %283 = vmatpush1.bf16.msra.mxu0 0
  %284 = vmatprep.subr.bf16.mxu0 0
  %285 = vmatpush1.bf16.msra.mxu0 0
  %286 = vmatprep.mubr.bf16.mxu0 0
  %287 = vmatmul.mubr.bf16.gmra.mrb[0].mxu0 %v184
  %v288 = vpop.f32.mrb[0].mxu0
  %v289 = vadd.f32 0.0, %v288
  %v290 = vpop.f32.mrb[0].mxu0
  %v291 = vpop.f32.mrb[0].mxu0
  %v292 = vadd.f32 0.0, %v291
  %v293 = vpop.f32.mrb[0].mxu0
  %294 = vmatprep.mubr.bf16.mxu0 0
  %295 = vmatmul.mubr.bf16.gmra.mrb[0].mxu0 %v185
  %v296 = vpop.f32.mrb[0].mxu0
  %v297 = vadd.f32 0.0, %v296
  %v298 = vpop.f32.mrb[0].mxu0
  %v299 = vpop.f32.mrb[0].mxu0
  %v300 = vadd.f32 0.0, %v299
  %v301 = vpop.f32.mrb[0].mxu0
  %302 = vmatprep.mubr.bf16.mxu0 0
  %303 = vmatmul.mubr.bf16.gmra.mrb[0].mxu0 %v186
  %v304 = vpop.f32.mrb[0].mxu0
  %v305 = vadd.f32 0.0, %v304
  %v306 = vpop.f32.mrb[0].mxu0
  %v307 = vpop.f32.mrb[0].mxu0
  %v308 = vadd.f32 0.0, %v307
  %v309 = vpop.f32.mrb[0].mxu0
  %310 = vmatprep.mubr.bf16.mxu0 0
  %311 = vmatmul.mubr.bf16.gmra.mrb[0].mxu0 %v187
  %v312 = vpop.f32.mrb[0].mxu0
  %v313 = vadd.f32 0.0, %v312
  %v314 = vpop.f32.mrb[0].mxu0
  %v315 = vpop.f32.mrb[0].mxu0
  %v316 = vadd.f32 0.0, %v315
  %v317 = vpop.f32.mrb[0].mxu0
  %318 = vmatprep.mubr.bf16.mxu0 0
  %319 = vmatmul.mubr.bf16.gmra.mrb[0].mxu0 %v188
  %v320 = vpop.f32.mrb[0].mxu0
  %v321 = vadd.f32 0.0, %v320
  %v322 = vpop.f32.mrb[0].mxu0
  %v323 = vpop.f32.mrb[0].mxu0
  %v324 = vadd.f32 0.0, %v323
  %v325 = vpop.f32.mrb[0].mxu0
  %326 = vmatprep.mubr.bf16.mxu0 0
  %327 = vmatmul.mubr.bf16.gmra.mrb[0].mxu0 %v189
  %v328 = vpop.f32.mrb[0].mxu0
  %v329 = vadd.f32 0.0, %v328
  %v330 = vpop.f32.mrb[0].mxu0
  %v331 = vpop.f32.mrb[0].mxu0
  %v332 = vadd.f32 0.0, %v331
  %v333 = vpop.f32.mrb[0].mxu0
  %334 = vmatprep.mubr.bf16.mxu0 0
  %335 = vmatmul.mubr.bf16.gmra.mrb[0].mxu0 %v190
  %v336 = vpop.f32.mrb[0].mxu0
  %v337 = vadd.f32 0.0, %v336
  %v338 = vpop.f32.mrb[0].mxu0
  %v339 = vpop.f32.mrb[0].mxu0
  %v340 = vadd.f32 0.0, %v339
  %v341 = vpop.f32.mrb[0].mxu0
  %342 = vmatprep.mubr.bf16.mxu0 0
  %343 = vmatmul.mubr.bf16.gmra.mrb[0].mxu0 %v191
  %v344 = vpop.f32.mrb[0].mxu0
  %v345 = vadd.f32 0.0, %v344
  %v346 = vpop.f32.mrb[0].mxu0
  %v347 = vpop.f32.mrb[0].mxu0
  %v348 = vadd.f32 0.0, %v347
  %v349 = vpop.f32.mrb[0].mxu0
  %350 = vmatprep.mubr.bf16.mxu0 0
  %351 = vmatmul.mubr.bf16.gmra.mrb[0].mxu0 %v192
  %v352 = vpop.f32.mrb[0].mxu0
  %v353 = vadd.f32 0.0, %v352
  %v354 = vpop.f32.mrb[0].mxu0
  %v355 = vpop.f32.mrb[0].mxu0
  %v356 = vadd.f32 0.0, %v355
  %v357 = vpop.f32.mrb[0].mxu0
  %358 = vmatprep.mubr.bf16.mxu0 0
  %359 = vmatmul.mubr.bf16.gmra.mrb[0].mxu0 %v193
  %v360 = vpop.f32.mrb[0].mxu0
  %v361 = vadd.f32 0.0, %v360
  %v362 = vpop.f32.mrb[0].mxu0
  %v363 = vpop.f32.mrb[0].mxu0
  %v364 = vadd.f32 0.0, %v363
  %v365 = vpop.f32.mrb[0].mxu0
  %366 = vmatprep.mubr.bf16.mxu0 0
  %367 = vmatmul.mubr.bf16.gmra.mrb[0].mxu0 %v194
  %v368 = vpop.f32.mrb[0].mxu0
  %v369 = vadd.f32 0.0, %v368
  %v370 = vpop.f32.mrb[0].mxu0
  %v371 = vpop.f32.mrb[0].mxu0
  %v372 = vpop.f32.mrb[0].mxu0
  %373 = vdwg.mxu0
  %v374 = vld [vmem:[%s3] sm:$0x1]
  %v375 = vld [vmem:[%s4] sm:$0x1]
  %v376 = vadd.f32 %v289, %v292
  %v377 = vadd.f32 %v376, %v297
  %v378 = vadd.f32 %v377, %v300
  %v379 = vadd.f32 %v378, %v305
  %v380 = vadd.f32 %v379, %v308
  %v381 = vadd.f32 %v380, %v313
  %v382 = vadd.f32 %v381, %v316
  %v383 = vadd.f32 %v382, %v321
  %v384 = vadd.f32 %v383, %v324
  %v385 = vadd.f32 %v384, %v329
  %v386 = vadd.f32 %v385, %v332
  %v387 = vadd.f32 %v386, %v337
  %v388 = vadd.f32 %v387, %v340
  %v389 = vadd.f32 %v388, %v345
  %v390 = vadd.f32 %v389, %v348
  %v391 = vadd.f32 %v390, %v353
  %v392 = vadd.f32 %v391, %v356
  %v393 = vadd.f32 %v392, %v361
  %v394 = vadd.f32 %v393, %v364
  %v395 = vadd.f32 %v394, %v369
  %v396 = vrot.slane %v395, 4
  %v397 = vadd.f32 %v395, %v396
  %v398 = vrot.slane %v397, 2
  %v399 = vadd.f32 %v397, %v398
  %v400 = vrot.slane %v399, 1
  %v401 = vadd.f32 %v399, %v400
  %v402 = vmul.f32 %v401, 0.0061728396
  %v403 = vsub.f32 %v289, %v402
  %v404 = vsub.f32 %v292, %v402
  %v405 = vsub.f32 %v297, %v402
  %v406 = vsub.f32 %v300, %v402
  %v407 = vsub.f32 %v305, %v402
  %v408 = vsub.f32 %v308, %v402
  %v409 = vsub.f32 %v313, %v402
  %v410 = vsub.f32 %v316, %v402
  %v411 = vsub.f32 %v321, %v402
  %v412 = vsub.f32 %v324, %v402
  %v413 = vsub.f32 %v329, %v402
  %v414 = vsub.f32 %v332, %v402
  %v415 = vsub.f32 %v337, %v402
  %v416 = vsub.f32 %v340, %v402
  %v417 = vsub.f32 %v345, %v402
  %v418 = vsub.f32 %v348, %v402
  %v419 = vsub.f32 %v353, %v402
  %v420 = vsub.f32 %v356, %v402
  %v421 = vsub.f32 %v361, %v402
  %v422 = vsub.f32 %v364, %v402
  %v423 = vsub.f32 %v369, %v402
  %425 = vset.pattern.permute.xlu0 0
  %426 = vperm.xlu0 %425, %v80
  %v427 = vpop.permute.xlu0 %426
  %430 = vset.pattern.permute.xlu0 0
  %431 = vperm.xlu0 %430, %v81
  %v432 = vpop.permute.xlu0 %431
  %435 = vset.pattern.permute.xlu0 0
  %436 = vperm.xlu0 %435, %v82
  %v437 = vpop.permute.xlu0 %436
  %440 = vset.pattern.permute.xlu0 0
  %441 = vperm.xlu0 %440, %v83
  %v442 = vpop.permute.xlu0 %441
  %445 = vset.pattern.permute.xlu0 0
  %446 = vperm.xlu0 %445, %v84
  %v447 = vpop.permute.xlu0 %446
  %450 = vset.pattern.permute.xlu0 0
  %451 = vperm.xlu0 %450, %v85
  %v452 = vpop.permute.xlu0 %451
  %455 = vset.pattern.permute.xlu0 0
  %456 = vperm.xlu0 %455, %v86
  %v457 = vpop.permute.xlu0 %456
  %460 = vset.pattern.permute.xlu0 0
  %461 = vperm.xlu0 %460, %v87
  %v462 = vpop.permute.xlu0 %461
  %465 = vset.pattern.permute.xlu0 0
  %466 = vperm.xlu0 %465, %v88
  %v467 = vpop.permute.xlu0 %466
  %470 = vset.pattern.permute.xlu0 0
  %471 = vperm.xlu0 %470, %v89
  %v472 = vpop.permute.xlu0 %471
  %475 = vset.pattern.permute.xlu0 0
  %476 = vperm.xlu0 %475, %v90
  %v477 = vpop.permute.xlu0 %476
  %480 = vset.pattern.permute.xlu0 0
  %481 = vperm.xlu0 %480, %v91
  %v482 = vpop.permute.xlu0 %481
  %485 = vset.pattern.permute.xlu0 0
  %486 = vperm.xlu0 %485, %v92
  %v487 = vpop.permute.xlu0 %486
  %490 = vset.pattern.permute.xlu0 0
  %491 = vperm.xlu0 %490, %v93
  %v492 = vpop.permute.xlu0 %491
  %495 = vset.pattern.permute.xlu0 0
  %496 = vperm.xlu0 %495, %v94
  %v497 = vpop.permute.xlu0 %496
  %500 = vset.pattern.permute.xlu0 0
  %501 = vperm.xlu0 %500, %v95
  %v502 = vpop.permute.xlu0 %501
  %505 = vset.pattern.permute.xlu0 0
  %506 = vperm.xlu0 %505, %v96
  %v507 = vpop.permute.xlu0 %506
  %510 = vset.pattern.permute.xlu0 0
  %511 = vperm.xlu0 %510, %v97
  %v512 = vpop.permute.xlu0 %511
  %515 = vset.pattern.permute.xlu0 0
  %516 = vperm.xlu0 %515, %v98
  %v517 = vpop.permute.xlu0 %516
  %520 = vset.pattern.permute.xlu0 0
  %521 = vperm.xlu0 %520, %v99
  %v522 = vpop.permute.xlu0 %521
  %525 = vset.pattern.permute.xlu0 0
  %526 = vperm.xlu0 %525, %v100
  %v527 = vpop.permute.xlu0 %526
  %v529 = vmul.f32 %v403, %v427
  %v530 = vmul.f32 %v404, %v432
  %v531 = vmul.f32 %v405, %v437
  %v532 = vmul.f32 %v406, %v442
  %v533 = vmul.f32 %v407, %v447
  %v534 = vmul.f32 %v408, %v452
  %v535 = vmul.f32 %v409, %v457
  %v536 = vmul.f32 %v410, %v462
  %v537 = vmul.f32 %v411, %v467
  %v538 = vmul.f32 %v412, %v472
  %v539 = vmul.f32 %v413, %v477
  %v540 = vmul.f32 %v414, %v482
  %v541 = vmul.f32 %v415, %v487
  %v542 = vmul.f32 %v416, %v492
  %v543 = vmul.f32 %v417, %v497
  %v544 = vmul.f32 %v418, %v502
  %v545 = vmul.f32 %v419, %v507
  %v546 = vmul.f32 %v420, %v512
  %v547 = vmul.f32 %v421, %v517
  %v548 = vmul.f32 %v422, %v522
  %v549 = vmul.f32 %v423, %v527
  %v550 = vmul.f32 %v529, %v529
  %v551 = vmul.f32 %v530, %v530
  %v552 = vmul.f32 %v531, %v531
  %v553 = vmul.f32 %v532, %v532
  %v554 = vmul.f32 %v533, %v533
  %v555 = vmul.f32 %v534, %v534
  %v556 = vmul.f32 %v535, %v535
  %v557 = vmul.f32 %v536, %v536
  %v558 = vmul.f32 %v537, %v537
  %v559 = vmul.f32 %v538, %v538
  %v560 = vmul.f32 %v539, %v539
  %v561 = vmul.f32 %v540, %v540
  %v562 = vmul.f32 %v541, %v541
  %v563 = vmul.f32 %v542, %v542
  %v564 = vmul.f32 %v543, %v543
  %v565 = vmul.f32 %v544, %v544
  %v566 = vmul.f32 %v545, %v545
  %v567 = vmul.f32 %v546, %v546
  %v568 = vmul.f32 %v547, %v547
  %v569 = vmul.f32 %v548, %v548
  %v570 = vmul.f32 %v549, %v549
  %v571 = vadd.f32 %v550, %v551
  %v572 = vadd.f32 %v571, %v552
  %v573 = vadd.f32 %v572, %v553
  %v574 = vadd.f32 %v573, %v554
  %v575 = vadd.f32 %v574, %v555
  %v576 = vadd.f32 %v575, %v556
  %v577 = vadd.f32 %v576, %v557
  %v578 = vadd.f32 %v577, %v558
  %v579 = vadd.f32 %v578, %v559
  %v580 = vadd.f32 %v579, %v560
  %v581 = vadd.f32 %v580, %v561
  %v582 = vadd.f32 %v581, %v562
  %v583 = vadd.f32 %v582, %v563
  %v584 = vadd.f32 %v583, %v564
  %v585 = vadd.f32 %v584, %v565
  %v586 = vadd.f32 %v585, %v566
  %v587 = vadd.f32 %v586, %v567
  %v588 = vadd.f32 %v587, %v568
  %v589 = vadd.f32 %v588, %v569
  %v590 = vadd.f32 %v589, %v570
  %v591 = vrot.slane %v590, 4
  %v592 = vadd.f32 %v590, %v591
  %v593 = vrot.slane %v592, 2
  %v594 = vadd.f32 %v592, %v593
  %v595 = vrot.slane %v594, 1
  %v596 = vadd.f32 %v594, %v595
  %v597 = vmul.f32 %v596, 0.0061728396
  %v598 = vadd.f32 %v597, 1e-05
  %v599 = vrsqrt.pop %v598
  %v600 = vmul.f32 %v403, %v599
  %v601 = vmul.f32 %v404, %v599
  %v602 = vmul.f32 %v405, %v599
  %v603 = vmul.f32 %v406, %v599
  %v604 = vmul.f32 %v407, %v599
  %v605 = vmul.f32 %v408, %v599
  %v606 = vmul.f32 %v409, %v599
  %v607 = vmul.f32 %v410, %v599
  %v608 = vmul.f32 %v411, %v599
  %v609 = vmul.f32 %v412, %v599
  %v610 = vmul.f32 %v413, %v599
  %v611 = vmul.f32 %v414, %v599
  %v612 = vmul.f32 %v415, %v599
  %v613 = vmul.f32 %v416, %v599
  %v614 = vmul.f32 %v417, %v599
  %v615 = vmul.f32 %v418, %v599
  %v616 = vmul.f32 %v419, %v599
  %v617 = vmul.f32 %v420, %v599
  %v618 = vmul.f32 %v421, %v599
  %v619 = vmul.f32 %v422, %v599
  %v620 = vmul.f32 %v423, %v599
  %v622 = vlaneseq
  %v623 = vshrl.u32 %v622, 7
  %v624 = vsub.s32 0, %v623
  %v625 = vrot.slane %v374, %v624
  %v627 = vmul.f32 %v600, %v625
  %v628 = vmul.f32 %v601, %v625
  %v629 = vmul.f32 %v602, %v625
  %v630 = vmul.f32 %v603, %v625
  %v631 = vmul.f32 %v604, %v625
  %v632 = vmul.f32 %v605, %v625
  %v633 = vmul.f32 %v606, %v625
  %v634 = vmul.f32 %v607, %v625
  %v635 = vmul.f32 %v608, %v625
  %v636 = vmul.f32 %v609, %v625
  %v637 = vmul.f32 %v610, %v625
  %v638 = vmul.f32 %v611, %v625
  %v639 = vmul.f32 %v612, %v625
  %v640 = vmul.f32 %v613, %v625
  %v641 = vmul.f32 %v614, %v625
  %v642 = vmul.f32 %v615, %v625
  %v643 = vmul.f32 %v616, %v625
  %v644 = vmul.f32 %v617, %v625
  %v645 = vmul.f32 %v618, %v625
  %v646 = vmul.f32 %v619, %v625
  %v647 = vmul.f32 %v620, %v625
  %v649 = vlaneseq
  %v650 = vshrl.u32 %v649, 7
  %v651 = vsub.s32 0, %v650
  %v652 = vrot.slane %v375, %v651
  %v654 = vadd.f32 %v627, %v652
  %v655 = vadd.f32 %v628, %v652
  %v656 = vadd.f32 %v629, %v652
  %v657 = vadd.f32 %v630, %v652
  %v658 = vadd.f32 %v631, %v652
  %v659 = vadd.f32 %v632, %v652
  %v660 = vadd.f32 %v633, %v652
  %v661 = vadd.f32 %v634, %v652
  %v662 = vadd.f32 %v635, %v652
  %v663 = vadd.f32 %v636, %v652
  %v664 = vadd.f32 %v637, %v652
  %v665 = vadd.f32 %v638, %v652
  %v666 = vadd.f32 %v639, %v652
  %v667 = vadd.f32 %v640, %v652
  %v668 = vadd.f32 %v641, %v652
  %v669 = vadd.f32 %v642, %v652
  %v670 = vadd.f32 %v643, %v652
  %v671 = vadd.f32 %v644, %v652
  %v672 = vadd.f32 %v645, %v652
  %v673 = vadd.f32 %v646, %v652
  %v674 = vadd.f32 %v647, %v652
  %v675 = vmax.f32 %v654, 0.0
  %v676 = vmax.f32 %v655, 0.0
  %v677 = vmax.f32 %v656, 0.0
  %v678 = vmax.f32 %v657, 0.0
  %v679 = vmax.f32 %v658, 0.0
  %v680 = vmax.f32 %v659, 0.0
  %v681 = vmax.f32 %v660, 0.0
  %v682 = vmax.f32 %v661, 0.0
  %v683 = vmax.f32 %v662, 0.0
  %v684 = vmax.f32 %v663, 0.0
  %v685 = vmax.f32 %v664, 0.0
  %v686 = vmax.f32 %v665, 0.0
  %v687 = vmax.f32 %v666, 0.0
  %v688 = vmax.f32 %v667, 0.0
  %v689 = vmax.f32 %v668, 0.0
  %v690 = vmax.f32 %v669, 0.0
  %v691 = vmax.f32 %v670, 0.0
  %v692 = vmax.f32 %v671, 0.0
  %v693 = vmax.f32 %v672, 0.0
  %v694 = vmax.f32 %v673, 0.0
  %v695 = vmax.f32 %v674, 0.0
  loop: start=0, step=1, limit=2
  $region98: #{ppo_forward.1} parent=0 // loop_pre_header
    _
  $region99: #{ppo_forward.1} parent=0 // loop_header
    %s697 = sphi 0, %s701
    %p698 = scmp.ge.s32.totalorder %s697, 2
    %v702 = vphi %v675, %v9698
    %v703 = vphi %v676, %v9699
    %v704 = vphi %v677, %v9700
    %v705 = vphi %v678, %v9701
    %v706 = vphi %v679, %v9702
    %v707 = vphi %v680, %v9703
    %v708 = vphi %v681, %v9704
    %v709 = vphi %v682, %v9705
    %v710 = vphi %v683, %v9706
    %v711 = vphi %v684, %v9707
    %v712 = vphi %v685, %v9708
    %v713 = vphi %v686, %v9709
    %v714 = vphi %v687, %v9710
    %v715 = vphi %v688, %v9711
    %v716 = vphi %v689, %v9712
    %v717 = vphi %v690, %v9713
    %v718 = vphi %v691, %v9714
    %v719 = vphi %v692, %v9715
    %v720 = vphi %v693, %v9716
    %v721 = vphi %v694, %v9717
    %v722 = vphi %v695, %v9718
  $region100: #{ppo_forward.1} parent=0 // loop_header_branch
    %700 = sbr.rel (%p698) target = $region104
  $region101: #{ppo_forward.1} parent=0 // loop_body
    %s723 = smul.u32 %s697, 2
    %s724 = smul.u32 %s723, 144
    %s725 = smul.addr %s724, 4
    %s726 = scalar_lea.vmem %s2, %s725
    %v727 = vld [vmem:[%s726] sm:$0xf]
    %v728 = vld [vmem:[%s726 + $0x4] sm:$0xf]
    %v729 = vld [vmem:[%s726 + $0x8] sm:$0xf]
    %v730 = vld [vmem:[%s726 + $0xc] sm:$0xf]
    %v731 = vld [vmem:[%s726 + $0x10] sm:$0xf]
    %v732 = vld [vmem:[%s726 + $0x14] sm:$0xf]
    %v733 = vld [vmem:[%s726 + $0x18] sm:$0xf]
    %v734 = vld [vmem:[%s726 + $0x1c] sm:$0xf]
    %v735 = vld [vmem:[%s726 + $0x20] sm:$0xf]
    %v736 = vld [vmem:[%s726 + $0x24] sm:$0xf]
    %v737 = vld [vmem:[%s726 + $0x28] sm:$0xf]
    %v738 = vld [vmem:[%s726 + $0x2c] sm:$0xf]
    %v739 = vld [vmem:[%s726 + $0x30] sm:$0xf]
    %v740 = vld [vmem:[%s726 + $0x34] sm:$0xf]
    %v741 = vld [vmem:[%s726 + $0x38] sm:$0xf]
    %v742 = vld [vmem:[%s726 + $0x3c] sm:$0xf]
    %v743 = vld [vmem:[%s726 + $0x40] sm:$0xf]
    %v744 = vld [vmem:[%s726 + $0x44] sm:$0xf]
    %v745 = vld [vmem:[%s726 + $0x48] sm:$0xf]
    %v746 = vld [vmem:[%s726 + $0x4c] sm:$0xf]
    %v747 = vld [vmem:[%s726 + $0x50] sm:$0xf]
    %v748 = vld [vmem:[%s726 + $0x54] sm:$0xf]
    %v749 = vld [vmem:[%s726 + $0x58] sm:$0xf]
    %v750 = vld [vmem:[%s726 + $0x5c] sm:$0xf]
    %v751 = vld [vmem:[%s726 + $0x60] sm:$0xf]
    %v752 = vld [vmem:[%s726 + $0x64] sm:$0xf]
    %v753 = vld [vmem:[%s726 + $0x68] sm:$0xf]
    %v754 = vld [vmem:[%s726 + $0x6c] sm:$0xf]
    %v755 = vld [vmem:[%s726 + $0x70] sm:$0xf]
    %v756 = vld [vmem:[%s726 + $0x74] sm:$0xf]
    %v757 = vld [vmem:[%s726 + $0x78] sm:$0xf]
    %v758 = vld [vmem:[%s726 + $0x7c] sm:$0xf]
    %v759 = vld [vmem:[%s726 + $0x80] sm:$0xf]
    %v760 = vld [vmem:[%s726 + $0x84] sm:$0xf]
    %v761 = vld [vmem:[%s726 + $0x88] sm:$0xf]
    %v762 = vld [vmem:[%s726 + $0x8c] sm:$0xf]
    %v763 = vld [vmem:[%s726 + $0x90] sm:$0xf]
    %v764 = vld [vmem:[%s726 + $0x94] sm:$0xf]
    %v765 = vld [vmem:[%s726 + $0x98] sm:$0xf]
    %v766 = vld [vmem:[%s726 + $0x9c] sm:$0xf]
    %v767 = vld [vmem:[%s726 + $0xa0] sm:$0xf]
    %v768 = vld [vmem:[%s726 + $0xa4] sm:$0xf]
    %v769 = vld [vmem:[%s726 + $0xa8] sm:$0xf]
    %v770 = vld [vmem:[%s726 + $0xac] sm:$0xf]
    %v771 = vld [vmem:[%s726 + $0xb0] sm:$0xf]
    %v772 = vld [vmem:[%s726 + $0xb4] sm:$0xf]
    %v773 = vld [vmem:[%s726 + $0xb8] sm:$0xf]
    %v774 = vld [vmem:[%s726 + $0xbc] sm:$0xf]
    %v775 = vld [vmem:[%s726 + $0xc0] sm:$0xf]
    %v776 = vld [vmem:[%s726 + $0xc4] sm:$0xf]
    %v777 = vld [vmem:[%s726 + $0xc8] sm:$0xf]
    %v778 = vld [vmem:[%s726 + $0xcc] sm:$0xf]
    %v779 = vld [vmem:[%s726 + $0xd0] sm:$0xf]
    %v780 = vld [vmem:[%s726 + $0xd4] sm:$0xf]
    %v781 = vld [vmem:[%s726 + $0xd8] sm:$0xf]
    %v782 = vld [vmem:[%s726 + $0xdc] sm:$0xf]
    %v783 = vld [vmem:[%s726 + $0xe0] sm:$0xf]
    %v784 = vld [vmem:[%s726 + $0xe4] sm:$0xf]
    %v785 = vld [vmem:[%s726 + $0xe8] sm:$0xf]
    %v786 = vld [vmem:[%s726 + $0xec] sm:$0xf]
    %v787 = vld [vmem:[%s726 + $0xf0] sm:$0xf]
    %v788 = vld [vmem:[%s726 + $0xf4] sm:$0xf]
    %v789 = vld [vmem:[%s726 + $0xf8] sm:$0xf]
    %v790 = vld [vmem:[%s726 + $0xfc] sm:$0xf]
    %v791 = vld [vmem:[%s726 + $0x100] sm:$0xf]
    %v792 = vld [vmem:[%s726 + $0x104] sm:$0xf]
    %v793 = vld [vmem:[%s726 + $0x108] sm:$0xf]
    %v794 = vld [vmem:[%s726 + $0x10c] sm:$0xf]
    %v795 = vld [vmem:[%s726 + $0x110] sm:$0xf]
    %v796 = vld [vmem:[%s726 + $0x114] sm:$0xf]
    %v797 = vld [vmem:[%s726 + $0x118] sm:$0xf]
    %v798 = vld [vmem:[%s726 + $0x11c] sm:$0xf]
    %v799 = vld [vmem:[%s726 + $0x120] sm:$0xf]
    %v800 = vld [vmem:[%s726 + $0x124] sm:$0xf]
    %v801 = vld [vmem:[%s726 + $0x128] sm:$0xf]
    %v802 = vld [vmem:[%s726 + $0x12c] sm:$0xf]
    %v803 = vld [vmem:[%s726 + $0x130] sm:$0xf]
    %v804 = vld [vmem:[%s726 + $0x134] sm:$0xf]
    %v805 = vld [vmem:[%s726 + $0x138] sm:$0xf]
    %v806 = vld [vmem:[%s726 + $0x13c] sm:$0xf]
    %v807 = vld [vmem:[%s726 + $0x140] sm:$0xf]
    %v808 = vld [vmem:[%s726 + $0x144] sm:$0xf]
    %v809 = vld [vmem:[%s726 + $0x148] sm:$0xf]
    %v810 = vld [vmem:[%s726 + $0x14c] sm:$0xf]
    %v811 = vld [vmem:[%s726 + $0x150] sm:$0xf]
    %v812 = vld [vmem:[%s726 + $0x154] sm:$0xf]
    %v813 = vld [vmem:[%s726 + $0x158] sm:$0xf]
    %v814 = vld [vmem:[%s726 + $0x15c] sm:$0xf]
    %v815 = vld [vmem:[%s726 + $0x160] sm:$0xf]
    %v816 = vld [vmem:[%s726 + $0x164] sm:$0xf]
    %v817 = vld [vmem:[%s726 + $0x168] sm:$0xf]
    %v818 = vld [vmem:[%s726 + $0x16c] sm:$0xf]
    %v819 = vld [vmem:[%s726 + $0x170] sm:$0xf]
    %v820 = vld [vmem:[%s726 + $0x174] sm:$0xf]
    %v821 = vld [vmem:[%s726 + $0x178] sm:$0xf]
    %v822 = vld [vmem:[%s726 + $0x17c] sm:$0xf]
    %v823 = vld [vmem:[%s726 + $0x180] sm:$0xf]
    %v824 = vld [vmem:[%s726 + $0x184] sm:$0xf]
    %v825 = vld [vmem:[%s726 + $0x188] sm:$0xf]
    %v826 = vld [vmem:[%s726 + $0x18c] sm:$0xf]
    %v827 = vld [vmem:[%s726 + $0x190] sm:$0xf]
    %v828 = vld [vmem:[%s726 + $0x194] sm:$0xf]
    %v829 = vld [vmem:[%s726 + $0x198] sm:$0xf]
    %v830 = vld [vmem:[%s726 + $0x19c] sm:$0xf]
    %v831 = vld [vmem:[%s726 + $0x1a0] sm:$0xf]
    %v832 = vld [vmem:[%s726 + $0x1a4] sm:$0xf]
    %v833 = vld [vmem:[%s726 + $0x1a8] sm:$0xf]
    %v834 = vld [vmem:[%s726 + $0x1ac] sm:$0xf]
    %v835 = vld [vmem:[%s726 + $0x1b0] sm:$0xf]
    %v836 = vld [vmem:[%s726 + $0x1b4] sm:$0xf]
    %v837 = vld [vmem:[%s726 + $0x1b8] sm:$0xf]
    %v838 = vld [vmem:[%s726 + $0x1bc] sm:$0xf]
    %v839 = vld [vmem:[%s726 + $0x1c0] sm:$0xf]
    %v840 = vld [vmem:[%s726 + $0x1c4] sm:$0xf]
    %v841 = vld [vmem:[%s726 + $0x1c8] sm:$0xf]
    %v842 = vld [vmem:[%s726 + $0x1cc] sm:$0xf]
    %v843 = vld [vmem:[%s726 + $0x1d0] sm:$0xf]
    %v844 = vld [vmem:[%s726 + $0x1d4] sm:$0xf]
    %v845 = vld [vmem:[%s726 + $0x1d8] sm:$0xf]
    %v846 = vld [vmem:[%s726 + $0x1dc] sm:$0xf]
    %v847 = vld [vmem:[%s726 + $0x1e0] sm:$0xf]
    %v848 = vld [vmem:[%s726 + $0x1e4] sm:$0xf]
    %v849 = vld [vmem:[%s726 + $0x1e8] sm:$0xf]
    %v850 = vld [vmem:[%s726 + $0x1ec] sm:$0xf]
    %v851 = vld [vmem:[%s726 + $0x1f0] sm:$0xf]
    %v852 = vld [vmem:[%s726 + $0x1f4] sm:$0xf]
    %v853 = vld [vmem:[%s726 + $0x1f8] sm:$0xf]
    %v854 = vld [vmem:[%s726 + $0x1fc] sm:$0xf]
    %v855 = vld [vmem:[%s726 + $0x200] sm:$0xf]
    %v856 = vld [vmem:[%s726 + $0x204] sm:$0xf]
    %v857 = vld [vmem:[%s726 + $0x208] sm:$0xf]
    %v858 = vld [vmem:[%s726 + $0x20c] sm:$0xf]
    %v859 = vld [vmem:[%s726 + $0x210] sm:$0xf]
    %v860 = vld [vmem:[%s726 + $0x214] sm:$0xf]
    %v861 = vld [vmem:[%s726 + $0x218] sm:$0xf]
    %v862 = vld [vmem:[%s726 + $0x21c] sm:$0xf]
    %v863 = vld [vmem:[%s726 + $0x220] sm:$0xf]
    %v864 = vld [vmem:[%s726 + $0x224] sm:$0xf]
    %v865 = vld [vmem:[%s726 + $0x228] sm:$0xf]
    %v866 = vld [vmem:[%s726 + $0x22c] sm:$0xf]
    %v867 = vld [vmem:[%s726 + $0x230] sm:$0xf]
    %v868 = vld [vmem:[%s726 + $0x234] sm:$0xf]
    %v869 = vld [vmem:[%s726 + $0x238] sm:$0xf]
    %v870 = vld [vmem:[%s726 + $0x23c] sm:$0xf]
    %871 = vst [vmem:[#allocation2 + $0x10] sm:$0xff] %v702
    %872 = vst [vmem:[#allocation2 + $0x18] sm:$0xff] %v703
    %873 = vst [vmem:[#allocation2 + $0x20] sm:$0xff] %v704
    %874 = vst [vmem:[#allocation2 + $0x28] sm:$0xff] %v705
    %875 = vst [vmem:[#allocation2 + $0x30] sm:$0xff] %v706
    %876 = vst [vmem:[#allocation2 + $0x38] sm:$0xff] %v707
    %877 = vst [vmem:[#allocation2 + $0x40] sm:$0xff] %v708
    %878 = vst [vmem:[#allocation2 + $0x48] sm:$0xff] %v709
    %879 = vst [vmem:[#allocation2 + $0x50] sm:$0xff] %v710
    %880 = vst [vmem:[#allocation2 + $0x58] sm:$0xff] %v711
    %881 = vst [vmem:[#allocation2 + $0x60] sm:$0xff] %v712
    %882 = vst [vmem:[#allocation2 + $0x68] sm:$0xff] %v713
    %883 = vst [vmem:[#allocation2 + $0x70] sm:$0xff] %v714
    %884 = vst [vmem:[#allocation2 + $0x78] sm:$0xff] %v715
    %885 = vst [vmem:[#allocation2 + $0x80] sm:$0xff] %v716
    %886 = vst [vmem:[#allocation2 + $0x88] sm:$0xff] %v717
    %887 = vst [vmem:[#allocation2 + $0x90] sm:$0xff] %v718
    %888 = vst [vmem:[#allocation2 + $0x98] sm:$0xff] %v719
    %889 = vst [vmem:[#allocation2 + $0xa0] sm:$0xff] %v720
    %890 = vst [vmem:[#allocation2 + $0xa8] sm:$0xff] %v721
    %891 = vst [vmem:[#allocation2 + $0xb0] sm:$0xff] %v722
    %v892 = vld [vmem:[#allocation2 + $0x6] sm:$0xff]
    %v893 = vld [vmem:[#allocation2 + $0xe] sm:$0xff]
    %v894 = vld [vmem:[#allocation2 + $0x16] sm:$0xff]
    %v895 = vld [vmem:[#allocation2 + $0x1e] sm:$0xff]
    %v896 = vld [vmem:[#allocation2 + $0x26] sm:$0xff]
    %v897 = vld [vmem:[#allocation2 + $0x2e] sm:$0xff]
    %v898 = vld [vmem:[#allocation2 + $0x36] sm:$0xff]
    %v899 = vld [vmem:[#allocation2 + $0x3e] sm:$0xff]
    %v900 = vld [vmem:[#allocation2 + $0x46] sm:$0xff]
    %v901 = vld [vmem:[#allocation2 + $0x4e] sm:$0xff]
    %v902 = vld [vmem:[#allocation2 + $0x56] sm:$0xff]
    %v903 = vld [vmem:[#allocation2 + $0x5e] sm:$0xff]
    %v904 = vld [vmem:[#allocation2 + $0x66] sm:$0xff]
    %v905 = vld [vmem:[#allocation2 + $0x6e] sm:$0xff]
    %v906 = vld [vmem:[#allocation2 + $0x76] sm:$0xff]
    %v907 = vld [vmem:[#allocation2 + $0x7e] sm:$0xff]
    %v908 = vld [vmem:[#allocation2 + $0x86] sm:$0xff]
    %v909 = vld [vmem:[#allocation2 + $0x8e] sm:$0xff]
    %v910 = vld [vmem:[#allocation2 + $0x96] sm:$0xff]
    %v911 = vld [vmem:[#allocation2 + $0x9e] sm:$0xff]
    %v912 = vld [vmem:[#allocation2 + $0xa6] sm:$0xff]
    %v913 = vld [vmem:[%s5] sm:$0xff]
    %v914 = vld [vmem:[%s5 + $0x8] sm:$0xff]
    %v915 = vld [vmem:[%s5 + $0x10] sm:$0xff]
    %v916 = vld [vmem:[%s5 + $0x18] sm:$0xff]
    %v917 = vld [vmem:[%s5 + $0x20] sm:$0xff]
    %v918 = vld [vmem:[%s5 + $0x28] sm:$0xff]
    %v919 = vld [vmem:[%s5 + $0x30] sm:$0xff]
    %v920 = vld [vmem:[%s5 + $0x38] sm:$0xff]
    %v921 = vld [vmem:[%s5 + $0x40] sm:$0xff]
    %v922 = vld [vmem:[%s5 + $0x48] sm:$0xff]
    %v923 = vld [vmem:[%s5 + $0x50] sm:$0xff]
    %v924 = vld [vmem:[%s5 + $0x58] sm:$0xff]
    %v925 = vld [vmem:[%s5 + $0x60] sm:$0xff]
    %v926 = vld [vmem:[%s5 + $0x68] sm:$0xff]
    %v927 = vld [vmem:[%s5 + $0x70] sm:$0xff]
    %v928 = vld [vmem:[%s5 + $0x78] sm:$0xff]
    %v929 = vld [vmem:[%s5 + $0x80] sm:$0xff]
    %v930 = vld [vmem:[%s5 + $0x88] sm:$0xff]
    %v931 = vld [vmem:[%s5 + $0x90] sm:$0xff]
    %v932 = vld [vmem:[%s5 + $0x98] sm:$0xff]
    %v933 = vld [vmem:[%s5 + $0xa0] sm:$0xff]
    %935 = vset.pattern.permute.xlu0 0
    %936 = vperm.xlu0 %935, %v913
    %v937 = vpop.permute.xlu0 %936
    %940 = vset.pattern.permute.xlu0 0
    %941 = vperm.xlu0 %940, %v914
    %v942 = vpop.permute.xlu0 %941
    %945 = vset.pattern.permute.xlu0 0
    %946 = vperm.xlu0 %945, %v915
    %v947 = vpop.permute.xlu0 %946
    %950 = vset.pattern.permute.xlu0 0
    %951 = vperm.xlu0 %950, %v916
    %v952 = vpop.permute.xlu0 %951
    %955 = vset.pattern.permute.xlu0 0
    %956 = vperm.xlu0 %955, %v917
    %v957 = vpop.permute.xlu0 %956
    %960 = vset.pattern.permute.xlu0 0
    %961 = vperm.xlu0 %960, %v918
    %v962 = vpop.permute.xlu0 %961
    %965 = vset.pattern.permute.xlu0 0
    %966 = vperm.xlu0 %965, %v919
    %v967 = vpop.permute.xlu0 %966
    %970 = vset.pattern.permute.xlu0 0
    %971 = vperm.xlu0 %970, %v920
    %v972 = vpop.permute.xlu0 %971
    %975 = vset.pattern.permute.xlu0 0
    %976 = vperm.xlu0 %975, %v921
    %v977 = vpop.permute.xlu0 %976
    %980 = vset.pattern.permute.xlu0 0
    %981 = vperm.xlu0 %980, %v922
    %v982 = vpop.permute.xlu0 %981
    %985 = vset.pattern.permute.xlu0 0
    %986 = vperm.xlu0 %985, %v923
    %v987 = vpop.permute.xlu0 %986
    %990 = vset.pattern.permute.xlu0 0
    %991 = vperm.xlu0 %990, %v924
    %v992 = vpop.permute.xlu0 %991
    %995 = vset.pattern.permute.xlu0 0
    %996 = vperm.xlu0 %995, %v925
    %v997 = vpop.permute.xlu0 %996
    %1000 = vset.pattern.permute.xlu0 0
    %1001 = vperm.xlu0 %1000, %v926
    %v1002 = vpop.permute.xlu0 %1001
    %1005 = vset.pattern.permute.xlu0 0
    %1006 = vperm.xlu0 %1005, %v927
    %v1007 = vpop.permute.xlu0 %1006
    %1010 = vset.pattern.permute.xlu0 0
    %1011 = vperm.xlu0 %1010, %v928
    %v1012 = vpop.permute.xlu0 %1011
    %1015 = vset.pattern.permute.xlu0 0
    %1016 = vperm.xlu0 %1015, %v929
    %v1017 = vpop.permute.xlu0 %1016
    %1020 = vset.pattern.permute.xlu0 0
    %1021 = vperm.xlu0 %1020, %v930
    %v1022 = vpop.permute.xlu0 %1021
    %1025 = vset.pattern.permute.xlu0 0
    %1026 = vperm.xlu0 %1025, %v931
    %v1027 = vpop.permute.xlu0 %1026
    %1030 = vset.pattern.permute.xlu0 0
    %1031 = vperm.xlu0 %1030, %v932
    %v1032 = vpop.permute.xlu0 %1031
    %1035 = vset.pattern.permute.xlu0 0
    %1036 = vperm.xlu0 %1035, %v933
    %v1037 = vpop.permute.xlu0 %1036
    %v1039 = vmul.f32 %v892, %v937
    %v1040 = vmul.f32 %v893, %v942
    %v1041 = vmul.f32 %v894, %v947
    %v1042 = vmul.f32 %v895, %v952
    %v1043 = vmul.f32 %v896, %v957
    %v1044 = vmul.f32 %v897, %v962
    %v1045 = vmul.f32 %v898, %v967
    %v1046 = vmul.f32 %v899, %v972
    %v1047 = vmul.f32 %v900, %v977
    %v1048 = vmul.f32 %v901, %v982
    %v1049 = vmul.f32 %v902, %v987
    %v1050 = vmul.f32 %v903, %v992
    %v1051 = vmul.f32 %v904, %v997
    %v1052 = vmul.f32 %v905, %v1002
    %v1053 = vmul.f32 %v906, %v1007
    %v1054 = vmul.f32 %v907, %v1012
    %v1055 = vmul.f32 %v908, %v1017
    %v1056 = vmul.f32 %v909, %v1022
    %v1057 = vmul.f32 %v910, %v1027
    %v1058 = vmul.f32 %v911, %v1032
    %v1059 = vmul.f32 %v912, %v1037
    %v1060 = vpack.c.bf16 %v1040, %v1039
    %v1061 = vpack.c.bf16 %v1042, %v1041
    %v1062 = vpack.c.bf16 %v1044, %v1043
    %v1063 = vpack.c.bf16 %v1046, %v1045
    %v1064 = vpack.c.bf16 %v1048, %v1047
    %v1065 = vpack.c.bf16 %v1050, %v1049
    %v1066 = vpack.c.bf16 %v1052, %v1051
    %v1067 = vpack.c.bf16 %v1054, %v1053
    %v1068 = vpack.c.bf16 %v1056, %v1055
    %v1069 = vpack.c.bf16 %v1058, %v1057
    %v1070 = vpack.c.bf16 %v1059, %v1059
    %v1082 = vunpack.c.l.b16 %v1060
    %v1083 = vunpack.c.h.b16 %v1060
    %v1084 = vunpack.c.l.b16 %v1061
    %v1085 = vunpack.c.h.b16 %v1061
    %v1086 = vunpack.c.l.b16 %v1062
    %v1087 = vunpack.c.h.b16 %v1062
    %v1088 = vunpack.c.l.b16 %v1063
    %v1089 = vunpack.c.h.b16 %v1063
    %v1090 = vunpack.c.l.b16 %v1064
    %v1091 = vunpack.c.h.b16 %v1064
    %v1092 = vunpack.c.l.b16 %v1065
    %v1093 = vunpack.c.h.b16 %v1065
    %v1094 = vunpack.c.l.b16 %v1066
    %v1095 = vunpack.c.h.b16 %v1066
    %v1096 = vunpack.c.l.b16 %v1067
    %v1097 = vunpack.c.h.b16 %v1067
    %v1098 = vunpack.c.l.b16 %v1068
    %v1099 = vunpack.c.h.b16 %v1068
    %v1100 = vunpack.c.l.b16 %v1069
    %v1101 = vunpack.c.h.b16 %v1069
    %v1102 = vunpack.c.l.b16 %v1070
    %v1103 = vpack.c.b16 %v1082, %v1082
    %v1104 = vpack.c.b16 %v1083, %v1083
    %v1105 = vpack.c.b16 %v1084, %v1084
    %v1106 = vpack.c.b16 %v1085, %v1085
    %v1107 = vpack.c.b16 %v1086, %v1086
    %v1108 = vpack.c.b16 %v1087, %v1087
    %v1109 = vpack.c.b16 %v1088, %v1088
    %v1110 = vpack.c.b16 %v1089, %v1089
    %v1111 = vpack.c.b16 %v1090, %v1090
    %v1112 = vpack.c.b16 %v1091, %v1091
    %v1113 = vpack.c.b16 %v1092, %v1092
    %v1114 = vpack.c.b16 %v1093, %v1093
    %v1115 = vpack.c.b16 %v1094, %v1094
    %v1116 = vpack.c.b16 %v1095, %v1095
    %v1117 = vpack.c.b16 %v1096, %v1096
    %v1118 = vpack.c.b16 %v1097, %v1097
    %v1119 = vpack.c.b16 %v1098, %v1098
    %v1120 = vpack.c.b16 %v1099, %v1099
    %v1121 = vpack.c.b16 %v1100, %v1100
    %v1122 = vpack.c.b16 %v1101, %v1101
    %v1123 = vpack.c.b16 %v1102, %v1102
    %1145 = vst [vmem:[#allocation3] sm:$0xf] %v1103
    %1146 = vst [vmem:[#allocation3 + $0x24] sm:$0xf] %v1104
    %1147 = vst [vmem:[#allocation3 + $0x48] sm:$0xf] %v1105
    %1148 = vst [vmem:[#allocation3 + $0x6c] sm:$0xf] %v1106
    %1149 = vst [vmem:[#allocation3 + $0x90] sm:$0xf] %v1107
    %1150 = vst [vmem:[#allocation3 + $0xb4] sm:$0xf] %v1108
    %1151 = vst [vmem:[#allocation3 + $0xd8] sm:$0xf] %v1109
    %1152 = vst [vmem:[#allocation3 + $0xfc] sm:$0xf] %v1110
    %1153 = vst [vmem:[#allocation3 + $0x120] sm:$0xf] %v1111
    %1154 = vst [vmem:[#allocation3 + $0x144] sm:$0xf] %v1112
    %1155 = vst [vmem:[#allocation3 + $0x168] sm:$0xf] %v1113
    %1156 = vst [vmem:[#allocation3 + $0x18c] sm:$0xf] %v1114
    %1157 = vst [vmem:[#allocation3 + $0x1b0] sm:$0xf] %v1115
    %1158 = vst [vmem:[#allocation3 + $0x1d4] sm:$0xf] %v1116
    %1159 = vst [vmem:[#allocation3 + $0x1f8] sm:$0xf] %v1117
    %1160 = vst [vmem:[#allocation3 + $0x21c] sm:$0xf] %v1118
    %1161 = vst [vmem:[#allocation3 + $0x240] sm:$0xf] %v1119
    %1162 = vst [vmem:[#allocation3 + $0x264] sm:$0xf] %v1120
    %1163 = vst [vmem:[#allocation3 + $0x288] sm:$0xf] %v1121
    %1164 = vst [vmem:[#allocation3 + $0x2ac] sm:$0xf] %v1122
    %1165 = vst [vmem:[#allocation3 + $0x2d0] sm:$0xf] %v1123
    %v1166 = vld [vmem:[#allocation2 + $0x7] sm:$0xff]
    %v1167 = vld [vmem:[#allocation2 + $0xf] sm:$0xff]
    %v1168 = vld [vmem:[#allocation2 + $0x17] sm:$0xff]
    %v1169 = vld [vmem:[#allocation2 + $0x1f] sm:$0xff]
    %v1170 = vld [vmem:[#allocation2 + $0x27] sm:$0xff]
    %v1171 = vld [vmem:[#allocation2 + $0x2f] sm:$0xff]
    %v1172 = vld [vmem:[#allocation2 + $0x37] sm:$0xff]
    %v1173 = vld [vmem:[#allocation2 + $0x3f] sm:$0xff]
    %v1174 = vld [vmem:[#allocation2 + $0x47] sm:$0xff]
    %v1175 = vld [vmem:[#allocation2 + $0x4f] sm:$0xff]
    %v1176 = vld [vmem:[#allocation2 + $0x57] sm:$0xff]
    %v1177 = vld [vmem:[#allocation2 + $0x5f] sm:$0xff]
    %v1178 = vld [vmem:[#allocation2 + $0x67] sm:$0xff]
    %v1179 = vld [vmem:[#allocation2 + $0x6f] sm:$0xff]
    %v1180 = vld [vmem:[#allocation2 + $0x77] sm:$0xff]
    %v1181 = vld [vmem:[#allocation2 + $0x7f] sm:$0xff]
    %v1182 = vld [vmem:[#allocation2 + $0x87] sm:$0xff]
    %v1183 = vld [vmem:[#allocation2 + $0x8f] sm:$0xff]
    %v1184 = vld [vmem:[#allocation2 + $0x97] sm:$0xff]
    %v1185 = vld [vmem:[#allocation2 + $0x9f] sm:$0xff]
    %v1186 = vld [vmem:[#allocation2 + $0xa7] sm:$0xff]
    %s1187 = scalar_lea.vmem %s5, 168
    %v1188 = vld [vmem:[%s1187] sm:$0xff]
    %v1189 = vld [vmem:[%s1187 + $0x8] sm:$0xff]
    %v1190 = vld [vmem:[%s1187 + $0x10] sm:$0xff]
    %v1191 = vld [vmem:[%s1187 + $0x18] sm:$0xff]
    %v1192 = vld [vmem:[%s1187 + $0x20] sm:$0xff]
    %v1193 = vld [vmem:[%s1187 + $0x28] sm:$0xff]
    %v1194 = vld [vmem:[%s1187 + $0x30] sm:$0xff]
    %v1195 = vld [vmem:[%s1187 + $0x38] sm:$0xff]
    %v1196 = vld [vmem:[%s1187 + $0x40] sm:$0xff]
    %v1197 = vld [vmem:[%s1187 + $0x48] sm:$0xff]
    %v1198 = vld [vmem:[%s1187 + $0x50] sm:$0xff]
    %v1199 = vld [vmem:[%s1187 + $0x58] sm:$0xff]
    %v1200 = vld [vmem:[%s1187 + $0x60] sm:$0xff]
    %v1201 = vld [vmem:[%s1187 + $0x68] sm:$0xff]
    %v1202 = vld [vmem:[%s1187 + $0x70] sm:$0xff]
    %v1203 = vld [vmem:[%s1187 + $0x78] sm:$0xff]
    %v1204 = vld [vmem:[%s1187 + $0x80] sm:$0xff]
    %v1205 = vld [vmem:[%s1187 + $0x88] sm:$0xff]
    %v1206 = vld [vmem:[%s1187 + $0x90] sm:$0xff]
    %v1207 = vld [vmem:[%s1187 + $0x98] sm:$0xff]
    %v1208 = vld [vmem:[%s1187 + $0xa0] sm:$0xff]
    %1210 = vset.pattern.permute.xlu0 0
    %1211 = vperm.xlu0 %1210, %v1188
    %v1212 = vpop.permute.xlu0 %1211
    %1215 = vset.pattern.permute.xlu0 0
    %1216 = vperm.xlu0 %1215, %v1189
    %v1217 = vpop.permute.xlu0 %1216
    %1220 = vset.pattern.permute.xlu0 0
    %1221 = vperm.xlu0 %1220, %v1190
    %v1222 = vpop.permute.xlu0 %1221
    %1225 = vset.pattern.permute.xlu0 0
    %1226 = vperm.xlu0 %1225, %v1191
    %v1227 = vpop.permute.xlu0 %1226
    %1230 = vset.pattern.permute.xlu0 0
    %1231 = vperm.xlu0 %1230, %v1192
    %v1232 = vpop.permute.xlu0 %1231
    %1235 = vset.pattern.permute.xlu0 0
    %1236 = vperm.xlu0 %1235, %v1193
    %v1237 = vpop.permute.xlu0 %1236
    %1240 = vset.pattern.permute.xlu0 0
    %1241 = vperm.xlu0 %1240, %v1194
    %v1242 = vpop.permute.xlu0 %1241
    %1245 = vset.pattern.permute.xlu0 0
    %1246 = vperm.xlu0 %1245, %v1195
    %v1247 = vpop.permute.xlu0 %1246
    %1250 = vset.pattern.permute.xlu0 0
    %1251 = vperm.xlu0 %1250, %v1196
    %v1252 = vpop.permute.xlu0 %1251
    %1255 = vset.pattern.permute.xlu0 0
    %1256 = vperm.xlu0 %1255, %v1197
    %v1257 = vpop.permute.xlu0 %1256
    %1260 = vset.pattern.permute.xlu0 0
    %1261 = vperm.xlu0 %1260, %v1198
    %v1262 = vpop.permute.xlu0 %1261
    %1265 = vset.pattern.permute.xlu0 0
    %1266 = vperm.xlu0 %1265, %v1199
    %v1267 = vpop.permute.xlu0 %1266
    %1270 = vset.pattern.permute.xlu0 0
    %1271 = vperm.xlu0 %1270, %v1200
    %v1272 = vpop.permute.xlu0 %1271
    %1275 = vset.pattern.permute.xlu0 0
    %1276 = vperm.xlu0 %1275, %v1201
    %v1277 = vpop.permute.xlu0 %1276
    %1280 = vset.pattern.permute.xlu0 0
    %1281 = vperm.xlu0 %1280, %v1202
    %v1282 = vpop.permute.xlu0 %1281
    %1285 = vset.pattern.permute.xlu0 0
    %1286 = vperm.xlu0 %1285, %v1203
    %v1287 = vpop.permute.xlu0 %1286
    %1290 = vset.pattern.permute.xlu0 0
    %1291 = vperm.xlu0 %1290, %v1204
    %v1292 = vpop.permute.xlu0 %1291
    %1295 = vset.pattern.permute.xlu0 0
    %1296 = vperm.xlu0 %1295, %v1205
    %v1297 = vpop.permute.xlu0 %1296
    %1300 = vset.pattern.permute.xlu0 0
    %1301 = vperm.xlu0 %1300, %v1206
    %v1302 = vpop.permute.xlu0 %1301
    %1305 = vset.pattern.permute.xlu0 0
    %1306 = vperm.xlu0 %1305, %v1207
    %v1307 = vpop.permute.xlu0 %1306
    %1310 = vset.pattern.permute.xlu0 0
    %1311 = vperm.xlu0 %1310, %v1208
    %v1312 = vpop.permute.xlu0 %1311
    %v1314 = vmul.f32 %v1166, %v1212
    %v1315 = vmul.f32 %v1167, %v1217
    %v1316 = vmul.f32 %v1168, %v1222
    %v1317 = vmul.f32 %v1169, %v1227
    %v1318 = vmul.f32 %v1170, %v1232
    %v1319 = vmul.f32 %v1171, %v1237
    %v1320 = vmul.f32 %v1172, %v1242
    %v1321 = vmul.f32 %v1173, %v1247
    %v1322 = vmul.f32 %v1174, %v1252
    %v1323 = vmul.f32 %v1175, %v1257
    %v1324 = vmul.f32 %v1176, %v1262
    %v1325 = vmul.f32 %v1177, %v1267
    %v1326 = vmul.f32 %v1178, %v1272
    %v1327 = vmul.f32 %v1179, %v1277
    %v1328 = vmul.f32 %v1180, %v1282
    %v1329 = vmul.f32 %v1181, %v1287
    %v1330 = vmul.f32 %v1182, %v1292
    %v1331 = vmul.f32 %v1183, %v1297
    %v1332 = vmul.f32 %v1184, %v1302
    %v1333 = vmul.f32 %v1185, %v1307
    %v1334 = vmul.f32 %v1186, %v1312
    %v1335 = vpack.c.bf16 %v1315, %v1314
    %v1336 = vpack.c.bf16 %v1317, %v1316
    %v1337 = vpack.c.bf16 %v1319, %v1318
    %v1338 = vpack.c.bf16 %v1321, %v1320
    %v1339 = vpack.c.bf16 %v1323, %v1322
    %v1340 = vpack.c.bf16 %v1325, %v1324
    %v1341 = vpack.c.bf16 %v1327, %v1326
    %v1342 = vpack.c.bf16 %v1329, %v1328
    %v1343 = vpack.c.bf16 %v1331, %v1330
    %v1344 = vpack.c.bf16 %v1333, %v1332
    %v1345 = vpack.c.bf16 %v1334, %v1334
    %v1357 = vunpack.c.l.b16 %v1335
    %v1358 = vunpack.c.h.b16 %v1335
    %v1359 = vunpack.c.l.b16 %v1336
    %v1360 = vunpack.c.h.b16 %v1336
    %v1361 = vunpack.c.l.b16 %v1337
    %v1362 = vunpack.c.h.b16 %v1337
    %v1363 = vunpack.c.l.b16 %v1338
    %v1364 = vunpack.c.h.b16 %v1338
    %v1365 = vunpack.c.l.b16 %v1339
    %v1366 = vunpack.c.h.b16 %v1339
    %v1367 = vunpack.c.l.b16 %v1340
    %v1368 = vunpack.c.h.b16 %v1340
    %v1369 = vunpack.c.l.b16 %v1341
    %v1370 = vunpack.c.h.b16 %v1341
    %v1371 = vunpack.c.l.b16 %v1342
    %v1372 = vunpack.c.h.b16 %v1342
    %v1373 = vunpack.c.l.b16 %v1343
    %v1374 = vunpack.c.h.b16 %v1343
    %v1375 = vunpack.c.l.b16 %v1344
    %v1376 = vunpack.c.h.b16 %v1344
    %v1377 = vunpack.c.l.b16 %v1345
    %v1378 = vpack.c.b16 %v1357, %v1357
    %v1379 = vpack.c.b16 %v1358, %v1358
    %v1380 = vpack.c.b16 %v1359, %v1359
    %v1381 = vpack.c.b16 %v1360, %v1360
    %v1382 = vpack.c.b16 %v1361, %v1361
    %v1383 = vpack.c.b16 %v1362, %v1362
    %v1384 = vpack.c.b16 %v1363, %v1363
    %v1385 = vpack.c.b16 %v1364, %v1364
    %v1386 = vpack.c.b16 %v1365, %v1365
    %v1387 = vpack.c.b16 %v1366, %v1366
    %v1388 = vpack.c.b16 %v1367, %v1367
    %v1389 = vpack.c.b16 %v1368, %v1368
    %v1390 = vpack.c.b16 %v1369, %v1369
    %v1391 = vpack.c.b16 %v1370, %v1370
    %v1392 = vpack.c.b16 %v1371, %v1371
    %v1393 = vpack.c.b16 %v1372, %v1372
    %v1394 = vpack.c.b16 %v1373, %v1373
    %v1395 = vpack.c.b16 %v1374, %v1374
    %v1396 = vpack.c.b16 %v1375, %v1375
    %v1397 = vpack.c.b16 %v1376, %v1376
    %v1398 = vpack.c.b16 %v1377, %v1377
    %1420 = vst [vmem:[#allocation3 + $0x4] sm:$0xf] %v1378
    %1421 = vst [vmem:[#allocation3 + $0x28] sm:$0xf] %v1379
    %1422 = vst [vmem:[#allocation3 + $0x4c] sm:$0xf] %v1380
    %1423 = vst [vmem:[#allocation3 + $0x70] sm:$0xf] %v1381
    %1424 = vst [vmem:[#allocation3 + $0x94] sm:$0xf] %v1382
    %1425 = vst [vmem:[#allocation3 + $0xb8] sm:$0xf] %v1383
    %1426 = vst [vmem:[#allocation3 + $0xdc] sm:$0xf] %v1384
    %1427 = vst [vmem:[#allocation3 + $0x100] sm:$0xf] %v1385
    %1428 = vst [vmem:[#allocation3 + $0x124] sm:$0xf] %v1386
    %1429 = vst [vmem:[#allocation3 + $0x148] sm:$0xf] %v1387
    %1430 = vst [vmem:[#allocation3 + $0x16c] sm:$0xf] %v1388
    %1431 = vst [vmem:[#allocation3 + $0x190] sm:$0xf] %v1389
    %1432 = vst [vmem:[#allocation3 + $0x1b4] sm:$0xf] %v1390
    %1433 = vst [vmem:[#allocation3 + $0x1d8] sm:$0xf] %v1391
    %1434 = vst [vmem:[#allocation3 + $0x1fc] sm:$0xf] %v1392
    %1435 = vst [vmem:[#allocation3 + $0x220] sm:$0xf] %v1393
    %1436 = vst [vmem:[#allocation3 + $0x244] sm:$0xf] %v1394
    %1437 = vst [vmem:[#allocation3 + $0x268] sm:$0xf] %v1395
    %1438 = vst [vmem:[#allocation3 + $0x28c] sm:$0xf] %v1396
    %1439 = vst [vmem:[#allocation3 + $0x2b0] sm:$0xf] %v1397
    %1440 = vst [vmem:[#allocation3 + $0x2d4] sm:$0xf] %v1398
    %v1441 = vld [vmem:[#allocation2 + $0x8] sm:$0xff]
    %v1442 = vld [vmem:[#allocation2 + $0x10] sm:$0xff]
    %v1443 = vld [vmem:[#allocation2 + $0x18] sm:$0xff]
    %v1444 = vld [vmem:[#allocation2 + $0x20] sm:$0xff]
    %v1445 = vld [vmem:[#allocation2 + $0x28] sm:$0xff]
    %v1446 = vld [vmem:[#allocation2 + $0x30] sm:$0xff]
    %v1447 = vld [vmem:[#allocation2 + $0x38] sm:$0xff]
    %v1448 = vld [vmem:[#allocation2 + $0x40] sm:$0xff]
    %v1449 = vld [vmem:[#allocation2 + $0x48] sm:$0xff]
    %v1450 = vld [vmem:[#allocation2 + $0x50] sm:$0xff]
    %v1451 = vld [vmem:[#allocation2 + $0x58] sm:$0xff]
    %v1452 = vld [vmem:[#allocation2 + $0x60] sm:$0xff]
    %v1453 = vld [vmem:[#allocation2 + $0x68] sm:$0xff]
    %v1454 = vld [vmem:[#allocation2 + $0x70] sm:$0xff]
    %v1455 = vld [vmem:[#allocation2 + $0x78] sm:$0xff]
    %v1456 = vld [vmem:[#allocation2 + $0x80] sm:$0xff]
    %v1457 = vld [vmem:[#allocation2 + $0x88] sm:$0xff]
    %v1458 = vld [vmem:[#allocation2 + $0x90] sm:$0xff]
    %v1459 = vld [vmem:[#allocation2 + $0x98] sm:$0xff]
    %v1460 = vld [vmem:[#allocation2 + $0xa0] sm:$0xff]
    %v1461 = vld [vmem:[#allocation2 + $0xa8] sm:$0xff]
    %s1462 = scalar_lea.vmem %s5, 336
    %v1463 = vld [vmem:[%s1462] sm:$0xff]
    %v1464 = vld [vmem:[%s1462 + $0x8] sm:$0xff]
    %v1465 = vld [vmem:[%s1462 + $0x10] sm:$0xff]
    %v1466 = vld [vmem:[%s1462 + $0x18] sm:$0xff]
    %v1467 = vld [vmem:[%s1462 + $0x20] sm:$0xff]
    %v1468 = vld [vmem:[%s1462 + $0x28] sm:$0xff]
    %v1469 = vld [vmem:[%s1462 + $0x30] sm:$0xff]
    %v1470 = vld [vmem:[%s1462 + $0x38] sm:$0xff]
    %v1471 = vld [vmem:[%s1462 + $0x40] sm:$0xff]
    %v1472 = vld [vmem:[%s1462 + $0x48] sm:$0xff]
    %v1473 = vld [vmem:[%s1462 + $0x50] sm:$0xff]
    %v1474 = vld [vmem:[%s1462 + $0x58] sm:$0xff]
    %v1475 = vld [vmem:[%s1462 + $0x60] sm:$0xff]
    %v1476 = vld [vmem:[%s1462 + $0x68] sm:$0xff]
    %v1477 = vld [vmem:[%s1462 + $0x70] sm:$0xff]
    %v1478 = vld [vmem:[%s1462 + $0x78] sm:$0xff]
    %v1479 = vld [vmem:[%s1462 + $0x80] sm:$0xff]
    %v1480 = vld [vmem:[%s1462 + $0x88] sm:$0xff]
    %v1481 = vld [vmem:[%s1462 + $0x90] sm:$0xff]
    %v1482 = vld [vmem:[%s1462 + $0x98] sm:$0xff]
    %v1483 = vld [vmem:[%s1462 + $0xa0] sm:$0xff]
    %1485 = vset.pattern.permute.xlu0 0
    %1486 = vperm.xlu0 %1485, %v1463
    %v1487 = vpop.permute.xlu0 %1486
    %1490 = vset.pattern.permute.xlu0 0
    %1491 = vperm.xlu0 %1490, %v1464
    %v1492 = vpop.permute.xlu0 %1491
    %1495 = vset.pattern.permute.xlu0 0
    %1496 = vperm.xlu0 %1495, %v1465
    %v1497 = vpop.permute.xlu0 %1496
    %1500 = vset.pattern.permute.xlu0 0
    %1501 = vperm.xlu0 %1500, %v1466
    %v1502 = vpop.permute.xlu0 %1501
    %1505 = vset.pattern.permute.xlu0 0
    %1506 = vperm.xlu0 %1505, %v1467
    %v1507 = vpop.permute.xlu0 %1506
    %1510 = vset.pattern.permute.xlu0 0
    %1511 = vperm.xlu0 %1510, %v1468
    %v1512 = vpop.permute.xlu0 %1511
    %1515 = vset.pattern.permute.xlu0 0
    %1516 = vperm.xlu0 %1515, %v1469
    %v1517 = vpop.permute.xlu0 %1516
    %1520 = vset.pattern.permute.xlu0 0
    %1521 = vperm.xlu0 %1520, %v1470
    %v1522 = vpop.permute.xlu0 %1521
    %1525 = vset.pattern.permute.xlu0 0
    %1526 = vperm.xlu0 %1525, %v1471
    %v1527 = vpop.permute.xlu0 %1526
    %1530 = vset.pattern.permute.xlu0 0
    %1531 = vperm.xlu0 %1530, %v1472
    %v1532 = vpop.permute.xlu0 %1531
    %1535 = vset.pattern.permute.xlu0 0
    %1536 = vperm.xlu0 %1535, %v1473
    %v1537 = vpop.permute.xlu0 %1536
    %1540 = vset.pattern.permute.xlu0 0
    %1541 = vperm.xlu0 %1540, %v1474
    %v1542 = vpop.permute.xlu0 %1541
    %1545 = vset.pattern.permute.xlu0 0
    %1546 = vperm.xlu0 %1545, %v1475
    %v1547 = vpop.permute.xlu0 %1546
    %1550 = vset.pattern.permute.xlu0 0
    %1551 = vperm.xlu0 %1550, %v1476
    %v1552 = vpop.permute.xlu0 %1551
    %1555 = vset.pattern.permute.xlu0 0
    %1556 = vperm.xlu0 %1555, %v1477
    %v1557 = vpop.permute.xlu0 %1556
    %1560 = vset.pattern.permute.xlu0 0
    %1561 = vperm.xlu0 %1560, %v1478
    %v1562 = vpop.permute.xlu0 %1561
    %1565 = vset.pattern.permute.xlu0 0
    %1566 = vperm.xlu0 %1565, %v1479
    %v1567 = vpop.permute.xlu0 %1566
    %1570 = vset.pattern.permute.xlu0 0
    %1571 = vperm.xlu0 %1570, %v1480
    %v1572 = vpop.permute.xlu0 %1571
    %1575 = vset.pattern.permute.xlu0 0
    %1576 = vperm.xlu0 %1575, %v1481
    %v1577 = vpop.permute.xlu0 %1576
    %1580 = vset.pattern.permute.xlu0 0
    %1581 = vperm.xlu0 %1580, %v1482
    %v1582 = vpop.permute.xlu0 %1581
    %1585 = vset.pattern.permute.xlu0 0
    %1586 = vperm.xlu0 %1585, %v1483
    %v1587 = vpop.permute.xlu0 %1586
    %v1589 = vmul.f32 %v1441, %v1487
    %v1590 = vmul.f32 %v1442, %v1492
    %v1591 = vmul.f32 %v1443, %v1497
    %v1592 = vmul.f32 %v1444, %v1502
    %v1593 = vmul.f32 %v1445, %v1507
    %v1594 = vmul.f32 %v1446, %v1512
    %v1595 = vmul.f32 %v1447, %v1517
    %v1596 = vmul.f32 %v1448, %v1522
    %v1597 = vmul.f32 %v1449, %v1527
    %v1598 = vmul.f32 %v1450, %v1532
    %v1599 = vmul.f32 %v1451, %v1537
    %v1600 = vmul.f32 %v1452, %v1542
    %v1601 = vmul.f32 %v1453, %v1547
    %v1602 = vmul.f32 %v1454, %v1552
    %v1603 = vmul.f32 %v1455, %v1557
    %v1604 = vmul.f32 %v1456, %v1562
    %v1605 = vmul.f32 %v1457, %v1567
    %v1606 = vmul.f32 %v1458, %v1572
    %v1607 = vmul.f32 %v1459, %v1577
    %v1608 = vmul.f32 %v1460, %v1582
    %v1609 = vmul.f32 %v1461, %v1587
    %v1610 = vpack.c.bf16 %v1590, %v1589
    %v1611 = vpack.c.bf16 %v1592, %v1591
    %v1612 = vpack.c.bf16 %v1594, %v1593
    %v1613 = vpack.c.bf16 %v1596, %v1595
    %v1614 = vpack.c.bf16 %v1598, %v1597
    %v1615 = vpack.c.bf16 %v1600, %v1599
    %v1616 = vpack.c.bf16 %v1602, %v1601
    %v1617 = vpack.c.bf16 %v1604, %v1603
    %v1618 = vpack.c.bf16 %v1606, %v1605
    %v1619 = vpack.c.bf16 %v1608, %v1607
    %v1620 = vpack.c.bf16 %v1609, %v1609
    %v1632 = vunpack.c.l.b16 %v1610
    %v1633 = vunpack.c.h.b16 %v1610
    %v1634 = vunpack.c.l.b16 %v1611
    %v1635 = vunpack.c.h.b16 %v1611
    %v1636 = vunpack.c.l.b16 %v1612
    %v1637 = vunpack.c.h.b16 %v1612
    %v1638 = vunpack.c.l.b16 %v1613
    %v1639 = vunpack.c.h.b16 %v1613
    %v1640 = vunpack.c.l.b16 %v1614
    %v1641 = vunpack.c.h.b16 %v1614
    %v1642 = vunpack.c.l.b16 %v1615
    %v1643 = vunpack.c.h.b16 %v1615
    %v1644 = vunpack.c.l.b16 %v1616
    %v1645 = vunpack.c.h.b16 %v1616
    %v1646 = vunpack.c.l.b16 %v1617
    %v1647 = vunpack.c.h.b16 %v1617
    %v1648 = vunpack.c.l.b16 %v1618
    %v1649 = vunpack.c.h.b16 %v1618
    %v1650 = vunpack.c.l.b16 %v1619
    %v1651 = vunpack.c.h.b16 %v1619
    %v1652 = vunpack.c.l.b16 %v1620
    %v1653 = vpack.c.b16 %v1632, %v1632
    %v1654 = vpack.c.b16 %v1633, %v1633
    %v1655 = vpack.c.b16 %v1634, %v1634
    %v1656 = vpack.c.b16 %v1635, %v1635
    %v1657 = vpack.c.b16 %v1636, %v1636
    %v1658 = vpack.c.b16 %v1637, %v1637
    %v1659 = vpack.c.b16 %v1638, %v1638
    %v1660 = vpack.c.b16 %v1639, %v1639
    %v1661 = vpack.c.b16 %v1640, %v1640
    %v1662 = vpack.c.b16 %v1641, %v1641
    %v1663 = vpack.c.b16 %v1642, %v1642
    %v1664 = vpack.c.b16 %v1643, %v1643
    %v1665 = vpack.c.b16 %v1644, %v1644
    %v1666 = vpack.c.b16 %v1645, %v1645
    %v1667 = vpack.c.b16 %v1646, %v1646
    %v1668 = vpack.c.b16 %v1647, %v1647
    %v1669 = vpack.c.b16 %v1648, %v1648
    %v1670 = vpack.c.b16 %v1649, %v1649
    %v1671 = vpack.c.b16 %v1650, %v1650
    %v1672 = vpack.c.b16 %v1651, %v1651
    %v1673 = vpack.c.b16 %v1652, %v1652
    %1695 = vst [vmem:[#allocation3 + $0x8] sm:$0xf] %v1653
    %1696 = vst [vmem:[#allocation3 + $0x2c] sm:$0xf] %v1654
    %1697 = vst [vmem:[#allocation3 + $0x50] sm:$0xf] %v1655
    %1698 = vst [vmem:[#allocation3 + $0x74] sm:$0xf] %v1656
    %1699 = vst [vmem:[#allocation3 + $0x98] sm:$0xf] %v1657
    %1700 = vst [vmem:[#allocation3 + $0xbc] sm:$0xf] %v1658
    %1701 = vst [vmem:[#allocation3 + $0xe0] sm:$0xf] %v1659
    %1702 = vst [vmem:[#allocation3 + $0x104] sm:$0xf] %v1660
    %1703 = vst [vmem:[#allocation3 + $0x128] sm:$0xf] %v1661
    %1704 = vst [vmem:[#allocation3 + $0x14c] sm:$0xf] %v1662
    %1705 = vst [vmem:[#allocation3 + $0x170] sm:$0xf] %v1663
    %1706 = vst [vmem:[#allocation3 + $0x194] sm:$0xf] %v1664
    %1707 = vst [vmem:[#allocation3 + $0x1b8] sm:$0xf] %v1665
    %1708 = vst [vmem:[#allocation3 + $0x1dc] sm:$0xf] %v1666
    %1709 = vst [vmem:[#allocation3 + $0x200] sm:$0xf] %v1667
    %1710 = vst [vmem:[#allocation3 + $0x224] sm:$0xf] %v1668
    %1711 = vst [vmem:[#allocation3 + $0x248] sm:$0xf] %v1669
    %1712 = vst [vmem:[#allocation3 + $0x26c] sm:$0xf] %v1670
    %1713 = vst [vmem:[#allocation3 + $0x290] sm:$0xf] %v1671
    %1714 = vst [vmem:[#allocation3 + $0x2b4] sm:$0xf] %v1672
    %1715 = vst [vmem:[#allocation3 + $0x2d8] sm:$0xf] %v1673
    %v1716 = vld [vmem:[#allocation2 + $0xf] sm:$0xff]
    %v1717 = vld [vmem:[#allocation2 + $0x17] sm:$0xff]
    %v1718 = vld [vmem:[#allocation2 + $0x1f] sm:$0xff]
    %v1719 = vld [vmem:[#allocation2 + $0x27] sm:$0xff]
    %v1720 = vld [vmem:[#allocation2 + $0x2f] sm:$0xff]
    %v1721 = vld [vmem:[#allocation2 + $0x37] sm:$0xff]
    %v1722 = vld [vmem:[#allocation2 + $0x3f] sm:$0xff]
    %v1723 = vld [vmem:[#allocation2 + $0x47] sm:$0xff]
    %v1724 = vld [vmem:[#allocation2 + $0x4f] sm:$0xff]
    %v1725 = vld [vmem:[#allocation2 + $0x57] sm:$0xff]
    %v1726 = vld [vmem:[#allocation2 + $0x5f] sm:$0xff]
    %v1727 = vld [vmem:[#allocation2 + $0x67] sm:$0xff]
    %v1728 = vld [vmem:[#allocation2 + $0x6f] sm:$0xff]
    %v1729 = vld [vmem:[#allocation2 + $0x77] sm:$0xff]
    %v1730 = vld [vmem:[#allocation2 + $0x7f] sm:$0xff]
    %v1731 = vld [vmem:[#allocation2 + $0x87] sm:$0xff]
    %v1732 = vld [vmem:[#allocation2 + $0x8f] sm:$0xff]
    %v1733 = vld [vmem:[#allocation2 + $0x97] sm:$0xff]
    %v1734 = vld [vmem:[#allocation2 + $0x9f] sm:$0xff]
    %v1735 = vld [vmem:[#allocation2 + $0xa7] sm:$0xff]
    %v1736 = vld [vmem:[#allocation2 + $0xaf] sm:$0xff]
    %s1737 = scalar_lea.vmem %s5, 504
    %v1738 = vld [vmem:[%s1737] sm:$0xff]
    %v1739 = vld [vmem:[%s1737 + $0x8] sm:$0xff]
    %v1740 = vld [vmem:[%s1737 + $0x10] sm:$0xff]
    %v1741 = vld [vmem:[%s1737 + $0x18] sm:$0xff]
    %v1742 = vld [vmem:[%s1737 + $0x20] sm:$0xff]
    %v1743 = vld [vmem:[%s1737 + $0x28] sm:$0xff]
    %v1744 = vld [vmem:[%s1737 + $0x30] sm:$0xff]
    %v1745 = vld [vmem:[%s1737 + $0x38] sm:$0xff]
    %v1746 = vld [vmem:[%s1737 + $0x40] sm:$0xff]
    %v1747 = vld [vmem:[%s1737 + $0x48] sm:$0xff]
    %v1748 = vld [vmem:[%s1737 + $0x50] sm:$0xff]
    %v1749 = vld [vmem:[%s1737 + $0x58] sm:$0xff]
    %v1750 = vld [vmem:[%s1737 + $0x60] sm:$0xff]
    %v1751 = vld [vmem:[%s1737 + $0x68] sm:$0xff]
    %v1752 = vld [vmem:[%s1737 + $0x70] sm:$0xff]
    %v1753 = vld [vmem:[%s1737 + $0x78] sm:$0xff]
    %v1754 = vld [vmem:[%s1737 + $0x80] sm:$0xff]
    %v1755 = vld [vmem:[%s1737 + $0x88] sm:$0xff]
    %v1756 = vld [vmem:[%s1737 + $0x90] sm:$0xff]
    %v1757 = vld [vmem:[%s1737 + $0x98] sm:$0xff]
    %v1758 = vld [vmem:[%s1737 + $0xa0] sm:$0xff]
    %1760 = vset.pattern.permute.xlu0 0
    %1761 = vperm.xlu0 %1760, %v1738
    %v1762 = vpop.permute.xlu0 %1761
    %1765 = vset.pattern.permute.xlu0 0
    %1766 = vperm.xlu0 %1765, %v1739
    %v1767 = vpop.permute.xlu0 %1766
    %1770 = vset.pattern.permute.xlu0 0
    %1771 = vperm.xlu0 %1770, %v1740
    %v1772 = vpop.permute.xlu0 %1771
    %1775 = vset.pattern.permute.xlu0 0
    %1776 = vperm.xlu0 %1775, %v1741
    %v1777 = vpop.permute.xlu0 %1776
    %1780 = vset.pattern.permute.xlu0 0
    %1781 = vperm.xlu0 %1780, %v1742
    %v1782 = vpop.permute.xlu0 %1781
    %1785 = vset.pattern.permute.xlu0 0
    %1786 = vperm.xlu0 %1785, %v1743
    %v1787 = vpop.permute.xlu0 %1786
    %1790 = vset.pattern.permute.xlu0 0
    %1791 = vperm.xlu0 %1790, %v1744
    %v1792 = vpop.permute.xlu0 %1791
    %1795 = vset.pattern.permute.xlu0 0
    %1796 = vperm.xlu0 %1795, %v1745
    %v1797 = vpop.permute.xlu0 %1796
    %1800 = vset.pattern.permute.xlu0 0
    %1801 = vperm.xlu0 %1800, %v1746
    %v1802 = vpop.permute.xlu0 %1801
    %1805 = vset.pattern.permute.xlu0 0
    %1806 = vperm.xlu0 %1805, %v1747
    %v1807 = vpop.permute.xlu0 %1806
    %1810 = vset.pattern.permute.xlu0 0
    %1811 = vperm.xlu0 %1810, %v1748
    %v1812 = vpop.permute.xlu0 %1811
    %1815 = vset.pattern.permute.xlu0 0
    %1816 = vperm.xlu0 %1815, %v1749
    %v1817 = vpop.permute.xlu0 %1816
    %1820 = vset.pattern.permute.xlu0 0
    %1821 = vperm.xlu0 %1820, %v1750
    %v1822 = vpop.permute.xlu0 %1821
    %1825 = vset.pattern.permute.xlu0 0
    %1826 = vperm.xlu0 %1825, %v1751
    %v1827 = vpop.permute.xlu0 %1826
    %1830 = vset.pattern.permute.xlu0 0
    %1831 = vperm.xlu0 %1830, %v1752
    %v1832 = vpop.permute.xlu0 %1831
    %1835 = vset.pattern.permute.xlu0 0
    %1836 = vperm.xlu0 %1835, %v1753
    %v1837 = vpop.permute.xlu0 %1836
    %1840 = vset.pattern.permute.xlu0 0
    %1841 = vperm.xlu0 %1840, %v1754
    %v1842 = vpop.permute.xlu0 %1841
    %1845 = vset.pattern.permute.xlu0 0
    %1846 = vperm.xlu0 %1845, %v1755
    %v1847 = vpop.permute.xlu0 %1846
    %1850 = vset.pattern.permute.xlu0 0
    %1851 = vperm.xlu0 %1850, %v1756
    %v1852 = vpop.permute.xlu0 %1851
    %1855 = vset.pattern.permute.xlu0 0
    %1856 = vperm.xlu0 %1855, %v1757
    %v1857 = vpop.permute.xlu0 %1856
    %1860 = vset.pattern.permute.xlu0 0
    %1861 = vperm.xlu0 %1860, %v1758
    %v1862 = vpop.permute.xlu0 %1861
    %v1864 = vmul.f32 %v1716, %v1762
    %v1865 = vmul.f32 %v1717, %v1767
    %v1866 = vmul.f32 %v1718, %v1772
    %v1867 = vmul.f32 %v1719, %v1777
    %v1868 = vmul.f32 %v1720, %v1782
    %v1869 = vmul.f32 %v1721, %v1787
    %v1870 = vmul.f32 %v1722, %v1792
    %v1871 = vmul.f32 %v1723, %v1797
    %v1872 = vmul.f32 %v1724, %v1802
    %v1873 = vmul.f32 %v1725, %v1807
    %v1874 = vmul.f32 %v1726, %v1812
    %v1875 = vmul.f32 %v1727, %v1817
    %v1876 = vmul.f32 %v1728, %v1822
    %v1877 = vmul.f32 %v1729, %v1827
    %v1878 = vmul.f32 %v1730, %v1832
    %v1879 = vmul.f32 %v1731, %v1837
    %v1880 = vmul.f32 %v1732, %v1842
    %v1881 = vmul.f32 %v1733, %v1847
    %v1882 = vmul.f32 %v1734, %v1852
    %v1883 = vmul.f32 %v1735, %v1857
    %v1884 = vmul.f32 %v1736, %v1862
    %v1885 = vpack.c.bf16 %v1865, %v1864
    %v1886 = vpack.c.bf16 %v1867, %v1866
    %v1887 = vpack.c.bf16 %v1869, %v1868
    %v1888 = vpack.c.bf16 %v1871, %v1870
    %v1889 = vpack.c.bf16 %v1873, %v1872
    %v1890 = vpack.c.bf16 %v1875, %v1874
    %v1891 = vpack.c.bf16 %v1877, %v1876
    %v1892 = vpack.c.bf16 %v1879, %v1878
    %v1893 = vpack.c.bf16 %v1881, %v1880
    %v1894 = vpack.c.bf16 %v1883, %v1882
    %v1895 = vpack.c.bf16 %v1884, %v1884
    %v1907 = vunpack.c.l.b16 %v1885
    %v1908 = vunpack.c.h.b16 %v1885
    %v1909 = vunpack.c.l.b16 %v1886
    %v1910 = vunpack.c.h.b16 %v1886
    %v1911 = vunpack.c.l.b16 %v1887
    %v1912 = vunpack.c.h.b16 %v1887
    %v1913 = vunpack.c.l.b16 %v1888
    %v1914 = vunpack.c.h.b16 %v1888
    %v1915 = vunpack.c.l.b16 %v1889
    %v1916 = vunpack.c.h.b16 %v1889
    %v1917 = vunpack.c.l.b16 %v1890
    %v1918 = vunpack.c.h.b16 %v1890
    %v1919 = vunpack.c.l.b16 %v1891
    %v1920 = vunpack.c.h.b16 %v1891
    %v1921 = vunpack.c.l.b16 %v1892
    %v1922 = vunpack.c.h.b16 %v1892
    %v1923 = vunpack.c.l.b16 %v1893
    %v1924 = vunpack.c.h.b16 %v1893
    %v1925 = vunpack.c.l.b16 %v1894
    %v1926 = vunpack.c.h.b16 %v1894
    %v1927 = vunpack.c.l.b16 %v1895
    %v1928 = vpack.c.b16 %v1907, %v1907
    %v1929 = vpack.c.b16 %v1908, %v1908
    %v1930 = vpack.c.b16 %v1909, %v1909
    %v1931 = vpack.c.b16 %v1910, %v1910
    %v1932 = vpack.c.b16 %v1911, %v1911
    %v1933 = vpack.c.b16 %v1912, %v1912
    %v1934 = vpack.c.b16 %v1913, %v1913
    %v1935 = vpack.c.b16 %v1914, %v1914
    %v1936 = vpack.c.b16 %v1915, %v1915
    %v1937 = vpack.c.b16 %v1916, %v1916
    %v1938 = vpack.c.b16 %v1917, %v1917
    %v1939 = vpack.c.b16 %v1918, %v1918
    %v1940 = vpack.c.b16 %v1919, %v1919
    %v1941 = vpack.c.b16 %v1920, %v1920
    %v1942 = vpack.c.b16 %v1921, %v1921
    %v1943 = vpack.c.b16 %v1922, %v1922
    %v1944 = vpack.c.b16 %v1923, %v1923
    %v1945 = vpack.c.b16 %v1924, %v1924
    %v1946 = vpack.c.b16 %v1925, %v1925
    %v1947 = vpack.c.b16 %v1926, %v1926
    %v1948 = vpack.c.b16 %v1927, %v1927
    %1970 = vst [vmem:[#allocation3 + $0xc] sm:$0xf] %v1928
    %1971 = vst [vmem:[#allocation3 + $0x30] sm:$0xf] %v1929
    %1972 = vst [vmem:[#allocation3 + $0x54] sm:$0xf] %v1930
    %1973 = vst [vmem:[#allocation3 + $0x78] sm:$0xf] %v1931
    %1974 = vst [vmem:[#allocation3 + $0x9c] sm:$0xf] %v1932
    %1975 = vst [vmem:[#allocation3 + $0xc0] sm:$0xf] %v1933
    %1976 = vst [vmem:[#allocation3 + $0xe4] sm:$0xf] %v1934
    %1977 = vst [vmem:[#allocation3 + $0x108] sm:$0xf] %v1935
    %1978 = vst [vmem:[#allocation3 + $0x12c] sm:$0xf] %v1936
    %1979 = vst [vmem:[#allocation3 + $0x150] sm:$0xf] %v1937
    %1980 = vst [vmem:[#allocation3 + $0x174] sm:$0xf] %v1938
    %1981 = vst [vmem:[#allocation3 + $0x198] sm:$0xf] %v1939
    %1982 = vst [vmem:[#allocation3 + $0x1bc] sm:$0xf] %v1940
    %1983 = vst [vmem:[#allocation3 + $0x1e0] sm:$0xf] %v1941
    %1984 = vst [vmem:[#allocation3 + $0x204] sm:$0xf] %v1942
    %1985 = vst [vmem:[#allocation3 + $0x228] sm:$0xf] %v1943
    %1986 = vst [vmem:[#allocation3 + $0x24c] sm:$0xf] %v1944
    %1987 = vst [vmem:[#allocation3 + $0x270] sm:$0xf] %v1945
    %1988 = vst [vmem:[#allocation3 + $0x294] sm:$0xf] %v1946
    %1989 = vst [vmem:[#allocation3 + $0x2b8] sm:$0xf] %v1947
    %1990 = vst [vmem:[#allocation3 + $0x2dc] sm:$0xf] %v1948
    %v1991 = vld [vmem:[#allocation2 + $0x10] sm:$0xff]
    %v1992 = vld [vmem:[#allocation2 + $0x18] sm:$0xff]
    %v1993 = vld [vmem:[#allocation2 + $0x20] sm:$0xff]
    %v1994 = vld [vmem:[#allocation2 + $0x28] sm:$0xff]
    %v1995 = vld [vmem:[#allocation2 + $0x30] sm:$0xff]
    %v1996 = vld [vmem:[#allocation2 + $0x38] sm:$0xff]
    %v1997 = vld [vmem:[#allocation2 + $0x40] sm:$0xff]
    %v1998 = vld [vmem:[#allocation2 + $0x48] sm:$0xff]
    %v1999 = vld [vmem:[#allocation2 + $0x50] sm:$0xff]
    %v2000 = vld [vmem:[#allocation2 + $0x58] sm:$0xff]
    %v2001 = vld [vmem:[#allocation2 + $0x60] sm:$0xff]
    %v2002 = vld [vmem:[#allocation2 + $0x68] sm:$0xff]
    %v2003 = vld [vmem:[#allocation2 + $0x70] sm:$0xff]
    %v2004 = vld [vmem:[#allocation2 + $0x78] sm:$0xff]
    %v2005 = vld [vmem:[#allocation2 + $0x80] sm:$0xff]
    %v2006 = vld [vmem:[#allocation2 + $0x88] sm:$0xff]
    %v2007 = vld [vmem:[#allocation2 + $0x90] sm:$0xff]
    %v2008 = vld [vmem:[#allocation2 + $0x98] sm:$0xff]
    %v2009 = vld [vmem:[#allocation2 + $0xa0] sm:$0xff]
    %v2010 = vld [vmem:[#allocation2 + $0xa8] sm:$0xff]
    %v2011 = vld [vmem:[#allocation2 + $0xb0] sm:$0xff]
    %s2012 = scalar_lea.vmem %s5, 672
    %v2013 = vld [vmem:[%s2012] sm:$0xff]
    %v2014 = vld [vmem:[%s2012 + $0x8] sm:$0xff]
    %v2015 = vld [vmem:[%s2012 + $0x10] sm:$0xff]
    %v2016 = vld [vmem:[%s2012 + $0x18] sm:$0xff]
    %v2017 = vld [vmem:[%s2012 + $0x20] sm:$0xff]
    %v2018 = vld [vmem:[%s2012 + $0x28] sm:$0xff]
    %v2019 = vld [vmem:[%s2012 + $0x30] sm:$0xff]
    %v2020 = vld [vmem:[%s2012 + $0x38] sm:$0xff]
    %v2021 = vld [vmem:[%s2012 + $0x40] sm:$0xff]
    %v2022 = vld [vmem:[%s2012 + $0x48] sm:$0xff]
    %v2023 = vld [vmem:[%s2012 + $0x50] sm:$0xff]
    %v2024 = vld [vmem:[%s2012 + $0x58] sm:$0xff]
    %v2025 = vld [vmem:[%s2012 + $0x60] sm:$0xff]
    %v2026 = vld [vmem:[%s2012 + $0x68] sm:$0xff]
    %v2027 = vld [vmem:[%s2012 + $0x70] sm:$0xff]
    %v2028 = vld [vmem:[%s2012 + $0x78] sm:$0xff]
    %v2029 = vld [vmem:[%s2012 + $0x80] sm:$0xff]
    %v2030 = vld [vmem:[%s2012 + $0x88] sm:$0xff]
    %v2031 = vld [vmem:[%s2012 + $0x90] sm:$0xff]
    %v2032 = vld [vmem:[%s2012 + $0x98] sm:$0xff]
    %v2033 = vld [vmem:[%s2012 + $0xa0] sm:$0xff]
    %2035 = vset.pattern.permute.xlu0 0
    %2036 = vperm.xlu0 %2035, %v2013
    %v2037 = vpop.permute.xlu0 %2036
    %2040 = vset.pattern.permute.xlu0 0
    %2041 = vperm.xlu0 %2040, %v2014
    %v2042 = vpop.permute.xlu0 %2041
    %2045 = vset.pattern.permute.xlu0 0
    %2046 = vperm.xlu0 %2045, %v2015
    %v2047 = vpop.permute.xlu0 %2046
    %2050 = vset.pattern.permute.xlu0 0
    %2051 = vperm.xlu0 %2050, %v2016
    %v2052 = vpop.permute.xlu0 %2051
    %2055 = vset.pattern.permute.xlu0 0
    %2056 = vperm.xlu0 %2055, %v2017
    %v2057 = vpop.permute.xlu0 %2056
    %2060 = vset.pattern.permute.xlu0 0
    %2061 = vperm.xlu0 %2060, %v2018
    %v2062 = vpop.permute.xlu0 %2061
    %2065 = vset.pattern.permute.xlu0 0
    %2066 = vperm.xlu0 %2065, %v2019
    %v2067 = vpop.permute.xlu0 %2066
    %2070 = vset.pattern.permute.xlu0 0
    %2071 = vperm.xlu0 %2070, %v2020
    %v2072 = vpop.permute.xlu0 %2071
    %2075 = vset.pattern.permute.xlu0 0
    %2076 = vperm.xlu0 %2075, %v2021
    %v2077 = vpop.permute.xlu0 %2076
    %2080 = vset.pattern.permute.xlu0 0
    %2081 = vperm.xlu0 %2080, %v2022
    %v2082 = vpop.permute.xlu0 %2081
    %2085 = vset.pattern.permute.xlu0 0
    %2086 = vperm.xlu0 %2085, %v2023
    %v2087 = vpop.permute.xlu0 %2086
    %2090 = vset.pattern.permute.xlu0 0
    %2091 = vperm.xlu0 %2090, %v2024
    %v2092 = vpop.permute.xlu0 %2091
    %2095 = vset.pattern.permute.xlu0 0
    %2096 = vperm.xlu0 %2095, %v2025
    %v2097 = vpop.permute.xlu0 %2096
    %2100 = vset.pattern.permute.xlu0 0
    %2101 = vperm.xlu0 %2100, %v2026
    %v2102 = vpop.permute.xlu0 %2101
    %2105 = vset.pattern.permute.xlu0 0
    %2106 = vperm.xlu0 %2105, %v2027
    %v2107 = vpop.permute.xlu0 %2106
    %2110 = vset.pattern.permute.xlu0 0
    %2111 = vperm.xlu0 %2110, %v2028
    %v2112 = vpop.permute.xlu0 %2111
    %2115 = vset.pattern.permute.xlu0 0
    %2116 = vperm.xlu0 %2115, %v2029
    %v2117 = vpop.permute.xlu0 %2116
    %2120 = vset.pattern.permute.xlu0 0
    %2121 = vperm.xlu0 %2120, %v2030
    %v2122 = vpop.permute.xlu0 %2121
    %2125 = vset.pattern.permute.xlu0 0
    %2126 = vperm.xlu0 %2125, %v2031
    %v2127 = vpop.permute.xlu0 %2126
    %2130 = vset.pattern.permute.xlu0 0
    %2131 = vperm.xlu0 %2130, %v2032
    %v2132 = vpop.permute.xlu0 %2131
    %2135 = vset.pattern.permute.xlu0 0
    %2136 = vperm.xlu0 %2135, %v2033
    %v2137 = vpop.permute.xlu0 %2136
    %v2139 = vmul.f32 %v1991, %v2037
    %v2140 = vmul.f32 %v1992, %v2042
    %v2141 = vmul.f32 %v1993, %v2047
    %v2142 = vmul.f32 %v1994, %v2052
    %v2143 = vmul.f32 %v1995, %v2057
    %v2144 = vmul.f32 %v1996, %v2062
    %v2145 = vmul.f32 %v1997, %v2067
    %v2146 = vmul.f32 %v1998, %v2072
    %v2147 = vmul.f32 %v1999, %v2077
    %v2148 = vmul.f32 %v2000, %v2082
    %v2149 = vmul.f32 %v2001, %v2087
    %v2150 = vmul.f32 %v2002, %v2092
    %v2151 = vmul.f32 %v2003, %v2097
    %v2152 = vmul.f32 %v2004, %v2102
    %v2153 = vmul.f32 %v2005, %v2107
    %v2154 = vmul.f32 %v2006, %v2112
    %v2155 = vmul.f32 %v2007, %v2117
    %v2156 = vmul.f32 %v2008, %v2122
    %v2157 = vmul.f32 %v2009, %v2127
    %v2158 = vmul.f32 %v2010, %v2132
    %v2159 = vmul.f32 %v2011, %v2137
    %v2160 = vpack.c.bf16 %v2140, %v2139
    %v2161 = vpack.c.bf16 %v2142, %v2141
    %v2162 = vpack.c.bf16 %v2144, %v2143
    %v2163 = vpack.c.bf16 %v2146, %v2145
    %v2164 = vpack.c.bf16 %v2148, %v2147
    %v2165 = vpack.c.bf16 %v2150, %v2149
    %v2166 = vpack.c.bf16 %v2152, %v2151
    %v2167 = vpack.c.bf16 %v2154, %v2153
    %v2168 = vpack.c.bf16 %v2156, %v2155
    %v2169 = vpack.c.bf16 %v2158, %v2157
    %v2170 = vpack.c.bf16 %v2159, %v2159
    %v2182 = vunpack.c.l.b16 %v2160
    %v2183 = vunpack.c.h.b16 %v2160
    %v2184 = vunpack.c.l.b16 %v2161
    %v2185 = vunpack.c.h.b16 %v2161
    %v2186 = vunpack.c.l.b16 %v2162
    %v2187 = vunpack.c.h.b16 %v2162
    %v2188 = vunpack.c.l.b16 %v2163
    %v2189 = vunpack.c.h.b16 %v2163
    %v2190 = vunpack.c.l.b16 %v2164
    %v2191 = vunpack.c.h.b16 %v2164
    %v2192 = vunpack.c.l.b16 %v2165
    %v2193 = vunpack.c.h.b16 %v2165
    %v2194 = vunpack.c.l.b16 %v2166
    %v2195 = vunpack.c.h.b16 %v2166
    %v2196 = vunpack.c.l.b16 %v2167
    %v2197 = vunpack.c.h.b16 %v2167
    %v2198 = vunpack.c.l.b16 %v2168
    %v2199 = vunpack.c.h.b16 %v2168
    %v2200 = vunpack.c.l.b16 %v2169
    %v2201 = vunpack.c.h.b16 %v2169
    %v2202 = vunpack.c.l.b16 %v2170
    %v2203 = vpack.c.b16 %v2182, %v2182
    %v2204 = vpack.c.b16 %v2183, %v2183
    %v2205 = vpack.c.b16 %v2184, %v2184
    %v2206 = vpack.c.b16 %v2185, %v2185
    %v2207 = vpack.c.b16 %v2186, %v2186
    %v2208 = vpack.c.b16 %v2187, %v2187
    %v2209 = vpack.c.b16 %v2188, %v2188
    %v2210 = vpack.c.b16 %v2189, %v2189
    %v2211 = vpack.c.b16 %v2190, %v2190
    %v2212 = vpack.c.b16 %v2191, %v2191
    %v2213 = vpack.c.b16 %v2192, %v2192
    %v2214 = vpack.c.b16 %v2193, %v2193
    %v2215 = vpack.c.b16 %v2194, %v2194
    %v2216 = vpack.c.b16 %v2195, %v2195
    %v2217 = vpack.c.b16 %v2196, %v2196
    %v2218 = vpack.c.b16 %v2197, %v2197
    %v2219 = vpack.c.b16 %v2198, %v2198
    %v2220 = vpack.c.b16 %v2199, %v2199
    %v2221 = vpack.c.b16 %v2200, %v2200
    %v2222 = vpack.c.b16 %v2201, %v2201
    %v2223 = vpack.c.b16 %v2202, %v2202
    %2245 = vst [vmem:[#allocation3 + $0x10] sm:$0xf] %v2203
    %2246 = vst [vmem:[#allocation3 + $0x34] sm:$0xf] %v2204
    %2247 = vst [vmem:[#allocation3 + $0x58] sm:$0xf] %v2205
    %2248 = vst [vmem:[#allocation3 + $0x7c] sm:$0xf] %v2206
    %2249 = vst [vmem:[#allocation3 + $0xa0] sm:$0xf] %v2207
    %2250 = vst [vmem:[#allocation3 + $0xc4] sm:$0xf] %v2208
    %2251 = vst [vmem:[#allocation3 + $0xe8] sm:$0xf] %v2209
    %2252 = vst [vmem:[#allocation3 + $0x10c] sm:$0xf] %v2210
    %2253 = vst [vmem:[#allocation3 + $0x130] sm:$0xf] %v2211
    %2254 = vst [vmem:[#allocation3 + $0x154] sm:$0xf] %v2212
    %2255 = vst [vmem:[#allocation3 + $0x178] sm:$0xf] %v2213
    %2256 = vst [vmem:[#allocation3 + $0x19c] sm:$0xf] %v2214
    %2257 = vst [vmem:[#allocation3 + $0x1c0] sm:$0xf] %v2215
    %2258 = vst [vmem:[#allocation3 + $0x1e4] sm:$0xf] %v2216
    %2259 = vst [vmem:[#allocation3 + $0x208] sm:$0xf] %v2217
    %2260 = vst [vmem:[#allocation3 + $0x22c] sm:$0xf] %v2218
    %2261 = vst [vmem:[#allocation3 + $0x250] sm:$0xf] %v2219
    %2262 = vst [vmem:[#allocation3 + $0x274] sm:$0xf] %v2220
    %2263 = vst [vmem:[#allocation3 + $0x298] sm:$0xf] %v2221
    %2264 = vst [vmem:[#allocation3 + $0x2bc] sm:$0xf] %v2222
    %2265 = vst [vmem:[#allocation3 + $0x2e0] sm:$0xf] %v2223
    %v2266 = vld [vmem:[#allocation2 + $0x11] sm:$0xff]
    %v2267 = vld [vmem:[#allocation2 + $0x19] sm:$0xff]
    %v2268 = vld [vmem:[#allocation2 + $0x21] sm:$0xff]
    %v2269 = vld [vmem:[#allocation2 + $0x29] sm:$0xff]
    %v2270 = vld [vmem:[#allocation2 + $0x31] sm:$0xff]
    %v2271 = vld [vmem:[#allocation2 + $0x39] sm:$0xff]
    %v2272 = vld [vmem:[#allocation2 + $0x41] sm:$0xff]
    %v2273 = vld [vmem:[#allocation2 + $0x49] sm:$0xff]
    %v2274 = vld [vmem:[#allocation2 + $0x51] sm:$0xff]
    %v2275 = vld [vmem:[#allocation2 + $0x59] sm:$0xff]
    %v2276 = vld [vmem:[#allocation2 + $0x61] sm:$0xff]
    %v2277 = vld [vmem:[#allocation2 + $0x69] sm:$0xff]
    %v2278 = vld [vmem:[#allocation2 + $0x71] sm:$0xff]
    %v2279 = vld [vmem:[#allocation2 + $0x79] sm:$0xff]
    %v2280 = vld [vmem:[#allocation2 + $0x81] sm:$0xff]
    %v2281 = vld [vmem:[#allocation2 + $0x89] sm:$0xff]
    %v2282 = vld [vmem:[#allocation2 + $0x91] sm:$0xff]
    %v2283 = vld [vmem:[#allocation2 + $0x99] sm:$0xff]
    %v2284 = vld [vmem:[#allocation2 + $0xa1] sm:$0xff]
    %v2285 = vld [vmem:[#allocation2 + $0xa9] sm:$0xff]
    %v2286 = vld [vmem:[#allocation2 + $0xb1] sm:$0xff]
    %s2287 = scalar_lea.vmem %s5, 840
    %v2288 = vld [vmem:[%s2287] sm:$0xff]
    %v2289 = vld [vmem:[%s2287 + $0x8] sm:$0xff]
    %v2290 = vld [vmem:[%s2287 + $0x10] sm:$0xff]
    %v2291 = vld [vmem:[%s2287 + $0x18] sm:$0xff]
    %v2292 = vld [vmem:[%s2287 + $0x20] sm:$0xff]
    %v2293 = vld [vmem:[%s2287 + $0x28] sm:$0xff]
    %v2294 = vld [vmem:[%s2287 + $0x30] sm:$0xff]
    %v2295 = vld [vmem:[%s2287 + $0x38] sm:$0xff]
    %v2296 = vld [vmem:[%s2287 + $0x40] sm:$0xff]
    %v2297 = vld [vmem:[%s2287 + $0x48] sm:$0xff]
    %v2298 = vld [vmem:[%s2287 + $0x50] sm:$0xff]
    %v2299 = vld [vmem:[%s2287 + $0x58] sm:$0xff]
    %v2300 = vld [vmem:[%s2287 + $0x60] sm:$0xff]
    %v2301 = vld [vmem:[%s2287 + $0x68] sm:$0xff]
    %v2302 = vld [vmem:[%s2287 + $0x70] sm:$0xff]
    %v2303 = vld [vmem:[%s2287 + $0x78] sm:$0xff]
    %v2304 = vld [vmem:[%s2287 + $0x80] sm:$0xff]
    %v2305 = vld [vmem:[%s2287 + $0x88] sm:$0xff]
    %v2306 = vld [vmem:[%s2287 + $0x90] sm:$0xff]
    %v2307 = vld [vmem:[%s2287 + $0x98] sm:$0xff]
    %v2308 = vld [vmem:[%s2287 + $0xa0] sm:$0xff]
    %2310 = vset.pattern.permute.xlu0 0
    %2311 = vperm.xlu0 %2310, %v2288
    %v2312 = vpop.permute.xlu0 %2311
    %2315 = vset.pattern.permute.xlu0 0
    %2316 = vperm.xlu0 %2315, %v2289
    %v2317 = vpop.permute.xlu0 %2316
    %2320 = vset.pattern.permute.xlu0 0
    %2321 = vperm.xlu0 %2320, %v2290
    %v2322 = vpop.permute.xlu0 %2321
    %2325 = vset.pattern.permute.xlu0 0
    %2326 = vperm.xlu0 %2325, %v2291
    %v2327 = vpop.permute.xlu0 %2326
    %2330 = vset.pattern.permute.xlu0 0
    %2331 = vperm.xlu0 %2330, %v2292
    %v2332 = vpop.permute.xlu0 %2331
    %2335 = vset.pattern.permute.xlu0 0
    %2336 = vperm.xlu0 %2335, %v2293
    %v2337 = vpop.permute.xlu0 %2336
    %2340 = vset.pattern.permute.xlu0 0
    %2341 = vperm.xlu0 %2340, %v2294
    %v2342 = vpop.permute.xlu0 %2341
    %2345 = vset.pattern.permute.xlu0 0
    %2346 = vperm.xlu0 %2345, %v2295
    %v2347 = vpop.permute.xlu0 %2346
    %2350 = vset.pattern.permute.xlu0 0
    %2351 = vperm.xlu0 %2350, %v2296
    %v2352 = vpop.permute.xlu0 %2351
    %2355 = vset.pattern.permute.xlu0 0
    %2356 = vperm.xlu0 %2355, %v2297
    %v2357 = vpop.permute.xlu0 %2356
    %2360 = vset.pattern.permute.xlu0 0
    %2361 = vperm.xlu0 %2360, %v2298
    %v2362 = vpop.permute.xlu0 %2361
    %2365 = vset.pattern.permute.xlu0 0
    %2366 = vperm.xlu0 %2365, %v2299
    %v2367 = vpop.permute.xlu0 %2366
    %2370 = vset.pattern.permute.xlu0 0
    %2371 = vperm.xlu0 %2370, %v2300
    %v2372 = vpop.permute.xlu0 %2371
    %2375 = vset.pattern.permute.xlu0 0
    %2376 = vperm.xlu0 %2375, %v2301
    %v2377 = vpop.permute.xlu0 %2376
    %2380 = vset.pattern.permute.xlu0 0
    %2381 = vperm.xlu0 %2380, %v2302
    %v2382 = vpop.permute.xlu0 %2381
    %2385 = vset.pattern.permute.xlu0 0
    %2386 = vperm.xlu0 %2385, %v2303
    %v2387 = vpop.permute.xlu0 %2386
    %2390 = vset.pattern.permute.xlu0 0
    %2391 = vperm.xlu0 %2390, %v2304
    %v2392 = vpop.permute.xlu0 %2391
    %2395 = vset.pattern.permute.xlu0 0
    %2396 = vperm.xlu0 %2395, %v2305
    %v2397 = vpop.permute.xlu0 %2396
    %2400 = vset.pattern.permute.xlu0 0
    %2401 = vperm.xlu0 %2400, %v2306
    %v2402 = vpop.permute.xlu0 %2401
    %2405 = vset.pattern.permute.xlu0 0
    %2406 = vperm.xlu0 %2405, %v2307
    %v2407 = vpop.permute.xlu0 %2406
    %2410 = vset.pattern.permute.xlu0 0
    %2411 = vperm.xlu0 %2410, %v2308
    %v2412 = vpop.permute.xlu0 %2411
    %v2414 = vmul.f32 %v2266, %v2312
    %v2415 = vmul.f32 %v2267, %v2317
    %v2416 = vmul.f32 %v2268, %v2322
    %v2417 = vmul.f32 %v2269, %v2327
    %v2418 = vmul.f32 %v2270, %v2332
    %v2419 = vmul.f32 %v2271, %v2337
    %v2420 = vmul.f32 %v2272, %v2342
    %v2421 = vmul.f32 %v2273, %v2347
    %v2422 = vmul.f32 %v2274, %v2352
    %v2423 = vmul.f32 %v2275, %v2357
    %v2424 = vmul.f32 %v2276, %v2362
    %v2425 = vmul.f32 %v2277, %v2367
    %v2426 = vmul.f32 %v2278, %v2372
    %v2427 = vmul.f32 %v2279, %v2377
    %v2428 = vmul.f32 %v2280, %v2382
    %v2429 = vmul.f32 %v2281, %v2387
    %v2430 = vmul.f32 %v2282, %v2392
    %v2431 = vmul.f32 %v2283, %v2397
    %v2432 = vmul.f32 %v2284, %v2402
    %v2433 = vmul.f32 %v2285, %v2407
    %v2434 = vmul.f32 %v2286, %v2412
    %v2435 = vpack.c.bf16 %v2415, %v2414
    %v2436 = vpack.c.bf16 %v2417, %v2416
    %v2437 = vpack.c.bf16 %v2419, %v2418
    %v2438 = vpack.c.bf16 %v2421, %v2420
    %v2439 = vpack.c.bf16 %v2423, %v2422
    %v2440 = vpack.c.bf16 %v2425, %v2424
    %v2441 = vpack.c.bf16 %v2427, %v2426
    %v2442 = vpack.c.bf16 %v2429, %v2428
    %v2443 = vpack.c.bf16 %v2431, %v2430
    %v2444 = vpack.c.bf16 %v2433, %v2432
    %v2445 = vpack.c.bf16 %v2434, %v2434
    %v2457 = vunpack.c.l.b16 %v2435
    %v2458 = vunpack.c.h.b16 %v2435
    %v2459 = vunpack.c.l.b16 %v2436
    %v2460 = vunpack.c.h.b16 %v2436
    %v2461 = vunpack.c.l.b16 %v2437
    %v2462 = vunpack.c.h.b16 %v2437
    %v2463 = vunpack.c.l.b16 %v2438
    %v2464 = vunpack.c.h.b16 %v2438
    %v2465 = vunpack.c.l.b16 %v2439
    %v2466 = vunpack.c.h.b16 %v2439
    %v2467 = vunpack.c.l.b16 %v2440
    %v2468 = vunpack.c.h.b16 %v2440
    %v2469 = vunpack.c.l.b16 %v2441
    %v2470 = vunpack.c.h.b16 %v2441
    %v2471 = vunpack.c.l.b16 %v2442
    %v2472 = vunpack.c.h.b16 %v2442
    %v2473 = vunpack.c.l.b16 %v2443
    %v2474 = vunpack.c.h.b16 %v2443
    %v2475 = vunpack.c.l.b16 %v2444
    %v2476 = vunpack.c.h.b16 %v2444
    %v2477 = vunpack.c.l.b16 %v2445
    %v2478 = vpack.c.b16 %v2457, %v2457
    %v2479 = vpack.c.b16 %v2458, %v2458
    %v2480 = vpack.c.b16 %v2459, %v2459
    %v2481 = vpack.c.b16 %v2460, %v2460
    %v2482 = vpack.c.b16 %v2461, %v2461
    %v2483 = vpack.c.b16 %v2462, %v2462
    %v2484 = vpack.c.b16 %v2463, %v2463
    %v2485 = vpack.c.b16 %v2464, %v2464
    %v2486 = vpack.c.b16 %v2465, %v2465
    %v2487 = vpack.c.b16 %v2466, %v2466
    %v2488 = vpack.c.b16 %v2467, %v2467
    %v2489 = vpack.c.b16 %v2468, %v2468
    %v2490 = vpack.c.b16 %v2469, %v2469
    %v2491 = vpack.c.b16 %v2470, %v2470
    %v2492 = vpack.c.b16 %v2471, %v2471
    %v2493 = vpack.c.b16 %v2472, %v2472
    %v2494 = vpack.c.b16 %v2473, %v2473
    %v2495 = vpack.c.b16 %v2474, %v2474
    %v2496 = vpack.c.b16 %v2475, %v2475
    %v2497 = vpack.c.b16 %v2476, %v2476
    %v2498 = vpack.c.b16 %v2477, %v2477
    %2520 = vst [vmem:[#allocation3 + $0x14] sm:$0xf] %v2478
    %2521 = vst [vmem:[#allocation3 + $0x38] sm:$0xf] %v2479
    %2522 = vst [vmem:[#allocation3 + $0x5c] sm:$0xf] %v2480
    %2523 = vst [vmem:[#allocation3 + $0x80] sm:$0xf] %v2481
    %2524 = vst [vmem:[#allocation3 + $0xa4] sm:$0xf] %v2482
    %2525 = vst [vmem:[#allocation3 + $0xc8] sm:$0xf] %v2483
    %2526 = vst [vmem:[#allocation3 + $0xec] sm:$0xf] %v2484
    %2527 = vst [vmem:[#allocation3 + $0x110] sm:$0xf] %v2485
    %2528 = vst [vmem:[#allocation3 + $0x134] sm:$0xf] %v2486
    %2529 = vst [vmem:[#allocation3 + $0x158] sm:$0xf] %v2487
    %2530 = vst [vmem:[#allocation3 + $0x17c] sm:$0xf] %v2488
    %2531 = vst [vmem:[#allocation3 + $0x1a0] sm:$0xf] %v2489
    %2532 = vst [vmem:[#allocation3 + $0x1c4] sm:$0xf] %v2490
    %2533 = vst [vmem:[#allocation3 + $0x1e8] sm:$0xf] %v2491
    %2534 = vst [vmem:[#allocation3 + $0x20c] sm:$0xf] %v2492
    %2535 = vst [vmem:[#allocation3 + $0x230] sm:$0xf] %v2493
    %2536 = vst [vmem:[#allocation3 + $0x254] sm:$0xf] %v2494
    %2537 = vst [vmem:[#allocation3 + $0x278] sm:$0xf] %v2495
    %2538 = vst [vmem:[#allocation3 + $0x29c] sm:$0xf] %v2496
    %2539 = vst [vmem:[#allocation3 + $0x2c0] sm:$0xf] %v2497
    %2540 = vst [vmem:[#allocation3 + $0x2e4] sm:$0xf] %v2498
    %v2541 = vld [vmem:[#allocation2 + $0x18] sm:$0xff]
    %v2542 = vld [vmem:[#allocation2 + $0x20] sm:$0xff]
    %v2543 = vld [vmem:[#allocation2 + $0x28] sm:$0xff]
    %v2544 = vld [vmem:[#allocation2 + $0x30] sm:$0xff]
    %v2545 = vld [vmem:[#allocation2 + $0x38] sm:$0xff]
    %v2546 = vld [vmem:[#allocation2 + $0x40] sm:$0xff]
    %v2547 = vld [vmem:[#allocation2 + $0x48] sm:$0xff]
    %v2548 = vld [vmem:[#allocation2 + $0x50] sm:$0xff]
    %v2549 = vld [vmem:[#allocation2 + $0x58] sm:$0xff]
    %v2550 = vld [vmem:[#allocation2 + $0x60] sm:$0xff]
    %v2551 = vld [vmem:[#allocation2 + $0x68] sm:$0xff]
    %v2552 = vld [vmem:[#allocation2 + $0x70] sm:$0xff]
    %v2553 = vld [vmem:[#allocation2 + $0x78] sm:$0xff]
    %v2554 = vld [vmem:[#allocation2 + $0x80] sm:$0xff]
    %v2555 = vld [vmem:[#allocation2 + $0x88] sm:$0xff]
    %v2556 = vld [vmem:[#allocation2 + $0x90] sm:$0xff]
    %v2557 = vld [vmem:[#allocation2 + $0x98] sm:$0xff]
    %v2558 = vld [vmem:[#allocation2 + $0xa0] sm:$0xff]
    %v2559 = vld [vmem:[#allocation2 + $0xa8] sm:$0xff]
    %v2560 = vld [vmem:[#allocation2 + $0xb0] sm:$0xff]
    %v2561 = vld [vmem:[#allocation2 + $0xb8] sm:$0xff]
    %s2562 = scalar_lea.vmem %s5, 1008
    %v2563 = vld [vmem:[%s2562] sm:$0xff]
    %v2564 = vld [vmem:[%s2562 + $0x8] sm:$0xff]
    %v2565 = vld [vmem:[%s2562 + $0x10] sm:$0xff]
    %v2566 = vld [vmem:[%s2562 + $0x18] sm:$0xff]
    %v2567 = vld [vmem:[%s2562 + $0x20] sm:$0xff]
    %v2568 = vld [vmem:[%s2562 + $0x28] sm:$0xff]
    %v2569 = vld [vmem:[%s2562 + $0x30] sm:$0xff]
    %v2570 = vld [vmem:[%s2562 + $0x38] sm:$0xff]
    %v2571 = vld [vmem:[%s2562 + $0x40] sm:$0xff]
    %v2572 = vld [vmem:[%s2562 + $0x48] sm:$0xff]
    %v2573 = vld [vmem:[%s2562 + $0x50] sm:$0xff]
    %v2574 = vld [vmem:[%s2562 + $0x58] sm:$0xff]
    %v2575 = vld [vmem:[%s2562 + $0x60] sm:$0xff]
    %v2576 = vld [vmem:[%s2562 + $0x68] sm:$0xff]
    %v2577 = vld [vmem:[%s2562 + $0x70] sm:$0xff]
    %v2578 = vld [vmem:[%s2562 + $0x78] sm:$0xff]
    %v2579 = vld [vmem:[%s2562 + $0x80] sm:$0xff]
    %v2580 = vld [vmem:[%s2562 + $0x88] sm:$0xff]
    %v2581 = vld [vmem:[%s2562 + $0x90] sm:$0xff]
    %v2582 = vld [vmem:[%s2562 + $0x98] sm:$0xff]
    %v2583 = vld [vmem:[%s2562 + $0xa0] sm:$0xff]
    %2585 = vset.pattern.permute.xlu0 0
    %2586 = vperm.xlu0 %2585, %v2563
    %v2587 = vpop.permute.xlu0 %2586
    %2590 = vset.pattern.permute.xlu0 0
    %2591 = vperm.xlu0 %2590, %v2564
    %v2592 = vpop.permute.xlu0 %2591
    %2595 = vset.pattern.permute.xlu0 0
    %2596 = vperm.xlu0 %2595, %v2565
    %v2597 = vpop.permute.xlu0 %2596
    %2600 = vset.pattern.permute.xlu0 0
    %2601 = vperm.xlu0 %2600, %v2566
    %v2602 = vpop.permute.xlu0 %2601
    %2605 = vset.pattern.permute.xlu0 0
    %2606 = vperm.xlu0 %2605, %v2567
    %v2607 = vpop.permute.xlu0 %2606
    %2610 = vset.pattern.permute.xlu0 0
    %2611 = vperm.xlu0 %2610, %v2568
    %v2612 = vpop.permute.xlu0 %2611
    %2615 = vset.pattern.permute.xlu0 0
    %2616 = vperm.xlu0 %2615, %v2569
    %v2617 = vpop.permute.xlu0 %2616
    %2620 = vset.pattern.permute.xlu0 0
    %2621 = vperm.xlu0 %2620, %v2570
    %v2622 = vpop.permute.xlu0 %2621
    %2625 = vset.pattern.permute.xlu0 0
    %2626 = vperm.xlu0 %2625, %v2571
    %v2627 = vpop.permute.xlu0 %2626
    %2630 = vset.pattern.permute.xlu0 0
    %2631 = vperm.xlu0 %2630, %v2572
    %v2632 = vpop.permute.xlu0 %2631
    %2635 = vset.pattern.permute.xlu0 0
    %2636 = vperm.xlu0 %2635, %v2573
    %v2637 = vpop.permute.xlu0 %2636
    %2640 = vset.pattern.permute.xlu0 0
    %2641 = vperm.xlu0 %2640, %v2574
    %v2642 = vpop.permute.xlu0 %2641
    %2645 = vset.pattern.permute.xlu0 0
    %2646 = vperm.xlu0 %2645, %v2575
    %v2647 = vpop.permute.xlu0 %2646
    %2650 = vset.pattern.permute.xlu0 0
    %2651 = vperm.xlu0 %2650, %v2576
    %v2652 = vpop.permute.xlu0 %2651
    %2655 = vset.pattern.permute.xlu0 0
    %2656 = vperm.xlu0 %2655, %v2577
    %v2657 = vpop.permute.xlu0 %2656
    %2660 = vset.pattern.permute.xlu0 0
    %2661 = vperm.xlu0 %2660, %v2578
    %v2662 = vpop.permute.xlu0 %2661
    %2665 = vset.pattern.permute.xlu0 0
    %2666 = vperm.xlu0 %2665, %v2579
    %v2667 = vpop.permute.xlu0 %2666
    %2670 = vset.pattern.permute.xlu0 0
    %2671 = vperm.xlu0 %2670, %v2580
    %v2672 = vpop.permute.xlu0 %2671
    %2675 = vset.pattern.permute.xlu0 0
    %2676 = vperm.xlu0 %2675, %v2581
    %v2677 = vpop.permute.xlu0 %2676
    %2680 = vset.pattern.permute.xlu0 0
    %2681 = vperm.xlu0 %2680, %v2582
    %v2682 = vpop.permute.xlu0 %2681
    %2685 = vset.pattern.permute.xlu0 0
    %2686 = vperm.xlu0 %2685, %v2583
    %v2687 = vpop.permute.xlu0 %2686
    %v2689 = vmul.f32 %v2541, %v2587
    %v2690 = vmul.f32 %v2542, %v2592
    %v2691 = vmul.f32 %v2543, %v2597
    %v2692 = vmul.f32 %v2544, %v2602
    %v2693 = vmul.f32 %v2545, %v2607
    %v2694 = vmul.f32 %v2546, %v2612
    %v2695 = vmul.f32 %v2547, %v2617
    %v2696 = vmul.f32 %v2548, %v2622
    %v2697 = vmul.f32 %v2549, %v2627
    %v2698 = vmul.f32 %v2550, %v2632
    %v2699 = vmul.f32 %v2551, %v2637
    %v2700 = vmul.f32 %v2552, %v2642
    %v2701 = vmul.f32 %v2553, %v2647
    %v2702 = vmul.f32 %v2554, %v2652
    %v2703 = vmul.f32 %v2555, %v2657
    %v2704 = vmul.f32 %v2556, %v2662
    %v2705 = vmul.f32 %v2557, %v2667
    %v2706 = vmul.f32 %v2558, %v2672
    %v2707 = vmul.f32 %v2559, %v2677
    %v2708 = vmul.f32 %v2560, %v2682
    %v2709 = vmul.f32 %v2561, %v2687
    %v2710 = vpack.c.bf16 %v2690, %v2689
    %v2711 = vpack.c.bf16 %v2692, %v2691
    %v2712 = vpack.c.bf16 %v2694, %v2693
    %v2713 = vpack.c.bf16 %v2696, %v2695
    %v2714 = vpack.c.bf16 %v2698, %v2697
    %v2715 = vpack.c.bf16 %v2700, %v2699
    %v2716 = vpack.c.bf16 %v2702, %v2701
    %v2717 = vpack.c.bf16 %v2704, %v2703
    %v2718 = vpack.c.bf16 %v2706, %v2705
    %v2719 = vpack.c.bf16 %v2708, %v2707
    %v2720 = vpack.c.bf16 %v2709, %v2709
    %v2732 = vunpack.c.l.b16 %v2710
    %v2733 = vunpack.c.h.b16 %v2710
    %v2734 = vunpack.c.l.b16 %v2711
    %v2735 = vunpack.c.h.b16 %v2711
    %v2736 = vunpack.c.l.b16 %v2712
    %v2737 = vunpack.c.h.b16 %v2712
    %v2738 = vunpack.c.l.b16 %v2713
    %v2739 = vunpack.c.h.b16 %v2713
    %v2740 = vunpack.c.l.b16 %v2714
    %v2741 = vunpack.c.h.b16 %v2714
    %v2742 = vunpack.c.l.b16 %v2715
    %v2743 = vunpack.c.h.b16 %v2715
    %v2744 = vunpack.c.l.b16 %v2716
    %v2745 = vunpack.c.h.b16 %v2716
    %v2746 = vunpack.c.l.b16 %v2717
    %v2747 = vunpack.c.h.b16 %v2717
    %v2748 = vunpack.c.l.b16 %v2718
    %v2749 = vunpack.c.h.b16 %v2718
    %v2750 = vunpack.c.l.b16 %v2719
    %v2751 = vunpack.c.h.b16 %v2719
    %v2752 = vunpack.c.l.b16 %v2720
    %v2753 = vpack.c.b16 %v2732, %v2732
    %v2754 = vpack.c.b16 %v2733, %v2733
    %v2755 = vpack.c.b16 %v2734, %v2734
    %v2756 = vpack.c.b16 %v2735, %v2735
    %v2757 = vpack.c.b16 %v2736, %v2736
    %v2758 = vpack.c.b16 %v2737, %v2737
    %v2759 = vpack.c.b16 %v2738, %v2738
    %v2760 = vpack.c.b16 %v2739, %v2739
    %v2761 = vpack.c.b16 %v2740, %v2740
    %v2762 = vpack.c.b16 %v2741, %v2741
    %v2763 = vpack.c.b16 %v2742, %v2742
    %v2764 = vpack.c.b16 %v2743, %v2743
    %v2765 = vpack.c.b16 %v2744, %v2744
    %v2766 = vpack.c.b16 %v2745, %v2745
    %v2767 = vpack.c.b16 %v2746, %v2746
    %v2768 = vpack.c.b16 %v2747, %v2747
    %v2769 = vpack.c.b16 %v2748, %v2748
    %v2770 = vpack.c.b16 %v2749, %v2749
    %v2771 = vpack.c.b16 %v2750, %v2750
    %v2772 = vpack.c.b16 %v2751, %v2751
    %v2773 = vpack.c.b16 %v2752, %v2752
    %2795 = vst [vmem:[#allocation3 + $0x18] sm:$0xf] %v2753
    %2796 = vst [vmem:[#allocation3 + $0x3c] sm:$0xf] %v2754
    %2797 = vst [vmem:[#allocation3 + $0x60] sm:$0xf] %v2755
    %2798 = vst [vmem:[#allocation3 + $0x84] sm:$0xf] %v2756
    %2799 = vst [vmem:[#allocation3 + $0xa8] sm:$0xf] %v2757
    %2800 = vst [vmem:[#allocation3 + $0xcc] sm:$0xf] %v2758
    %2801 = vst [vmem:[#allocation3 + $0xf0] sm:$0xf] %v2759
    %2802 = vst [vmem:[#allocation3 + $0x114] sm:$0xf] %v2760
    %2803 = vst [vmem:[#allocation3 + $0x138] sm:$0xf] %v2761
    %2804 = vst [vmem:[#allocation3 + $0x15c] sm:$0xf] %v2762
    %2805 = vst [vmem:[#allocation3 + $0x180] sm:$0xf] %v2763
    %2806 = vst [vmem:[#allocation3 + $0x1a4] sm:$0xf] %v2764
    %2807 = vst [vmem:[#allocation3 + $0x1c8] sm:$0xf] %v2765
    %2808 = vst [vmem:[#allocation3 + $0x1ec] sm:$0xf] %v2766
    %2809 = vst [vmem:[#allocation3 + $0x210] sm:$0xf] %v2767
    %2810 = vst [vmem:[#allocation3 + $0x234] sm:$0xf] %v2768
    %2811 = vst [vmem:[#allocation3 + $0x258] sm:$0xf] %v2769
    %2812 = vst [vmem:[#allocation3 + $0x27c] sm:$0xf] %v2770
    %2813 = vst [vmem:[#allocation3 + $0x2a0] sm:$0xf] %v2771
    %2814 = vst [vmem:[#allocation3 + $0x2c4] sm:$0xf] %v2772
    %2815 = vst [vmem:[#allocation3 + $0x2e8] sm:$0xf] %v2773
    %v2816 = vld [vmem:[#allocation2 + $0x19] sm:$0xff]
    %v2817 = vld [vmem:[#allocation2 + $0x21] sm:$0xff]
    %v2818 = vld [vmem:[#allocation2 + $0x29] sm:$0xff]
    %v2819 = vld [vmem:[#allocation2 + $0x31] sm:$0xff]
    %v2820 = vld [vmem:[#allocation2 + $0x39] sm:$0xff]
    %v2821 = vld [vmem:[#allocation2 + $0x41] sm:$0xff]
    %v2822 = vld [vmem:[#allocation2 + $0x49] sm:$0xff]
    %v2823 = vld [vmem:[#allocation2 + $0x51] sm:$0xff]
    %v2824 = vld [vmem:[#allocation2 + $0x59] sm:$0xff]
    %v2825 = vld [vmem:[#allocation2 + $0x61] sm:$0xff]
    %v2826 = vld [vmem:[#allocation2 + $0x69] sm:$0xff]
    %v2827 = vld [vmem:[#allocation2 + $0x71] sm:$0xff]
    %v2828 = vld [vmem:[#allocation2 + $0x79] sm:$0xff]
    %v2829 = vld [vmem:[#allocation2 + $0x81] sm:$0xff]
    %v2830 = vld [vmem:[#allocation2 + $0x89] sm:$0xff]
    %v2831 = vld [vmem:[#allocation2 + $0x91] sm:$0xff]
    %v2832 = vld [vmem:[#allocation2 + $0x99] sm:$0xff]
    %v2833 = vld [vmem:[#allocation2 + $0xa1] sm:$0xff]
    %v2834 = vld [vmem:[#allocation2 + $0xa9] sm:$0xff]
    %v2835 = vld [vmem:[#allocation2 + $0xb1] sm:$0xff]
    %v2836 = vld [vmem:[#allocation2 + $0xb9] sm:$0xff]
    %s2837 = scalar_lea.vmem %s5, 1176
    %v2838 = vld [vmem:[%s2837] sm:$0xff]
    %v2839 = vld [vmem:[%s2837 + $0x8] sm:$0xff]
    %v2840 = vld [vmem:[%s2837 + $0x10] sm:$0xff]
    %v2841 = vld [vmem:[%s2837 + $0x18] sm:$0xff]
    %v2842 = vld [vmem:[%s2837 + $0x20] sm:$0xff]
    %v2843 = vld [vmem:[%s2837 + $0x28] sm:$0xff]
    %v2844 = vld [vmem:[%s2837 + $0x30] sm:$0xff]
    %v2845 = vld [vmem:[%s2837 + $0x38] sm:$0xff]
    %v2846 = vld [vmem:[%s2837 + $0x40] sm:$0xff]
    %v2847 = vld [vmem:[%s2837 + $0x48] sm:$0xff]
    %v2848 = vld [vmem:[%s2837 + $0x50] sm:$0xff]
    %v2849 = vld [vmem:[%s2837 + $0x58] sm:$0xff]
    %v2850 = vld [vmem:[%s2837 + $0x60] sm:$0xff]
    %v2851 = vld [vmem:[%s2837 + $0x68] sm:$0xff]
    %v2852 = vld [vmem:[%s2837 + $0x70] sm:$0xff]
    %v2853 = vld [vmem:[%s2837 + $0x78] sm:$0xff]
    %v2854 = vld [vmem:[%s2837 + $0x80] sm:$0xff]
    %v2855 = vld [vmem:[%s2837 + $0x88] sm:$0xff]
    %v2856 = vld [vmem:[%s2837 + $0x90] sm:$0xff]
    %v2857 = vld [vmem:[%s2837 + $0x98] sm:$0xff]
    %v2858 = vld [vmem:[%s2837 + $0xa0] sm:$0xff]
    %2860 = vset.pattern.permute.xlu0 0
    %2861 = vperm.xlu0 %2860, %v2838
    %v2862 = vpop.permute.xlu0 %2861
    %2865 = vset.pattern.permute.xlu0 0
    %2866 = vperm.xlu0 %2865, %v2839
    %v2867 = vpop.permute.xlu0 %2866
    %2870 = vset.pattern.permute.xlu0 0
    %2871 = vperm.xlu0 %2870, %v2840
    %v2872 = vpop.permute.xlu0 %2871
    %2875 = vset.pattern.permute.xlu0 0
    %2876 = vperm.xlu0 %2875, %v2841
    %v2877 = vpop.permute.xlu0 %2876
    %2880 = vset.pattern.permute.xlu0 0
    %2881 = vperm.xlu0 %2880, %v2842
    %v2882 = vpop.permute.xlu0 %2881
    %2885 = vset.pattern.permute.xlu0 0
    %2886 = vperm.xlu0 %2885, %v2843
    %v2887 = vpop.permute.xlu0 %2886
    %2890 = vset.pattern.permute.xlu0 0
    %2891 = vperm.xlu0 %2890, %v2844
    %v2892 = vpop.permute.xlu0 %2891
    %2895 = vset.pattern.permute.xlu0 0
    %2896 = vperm.xlu0 %2895, %v2845
    %v2897 = vpop.permute.xlu0 %2896
    %2900 = vset.pattern.permute.xlu0 0
    %2901 = vperm.xlu0 %2900, %v2846
    %v2902 = vpop.permute.xlu0 %2901
    %2905 = vset.pattern.permute.xlu0 0
    %2906 = vperm.xlu0 %2905, %v2847
    %v2907 = vpop.permute.xlu0 %2906
    %2910 = vset.pattern.permute.xlu0 0
    %2911 = vperm.xlu0 %2910, %v2848
    %v2912 = vpop.permute.xlu0 %2911
    %2915 = vset.pattern.permute.xlu0 0
    %2916 = vperm.xlu0 %2915, %v2849
    %v2917 = vpop.permute.xlu0 %2916
    %2920 = vset.pattern.permute.xlu0 0
    %2921 = vperm.xlu0 %2920, %v2850
    %v2922 = vpop.permute.xlu0 %2921
    %2925 = vset.pattern.permute.xlu0 0
    %2926 = vperm.xlu0 %2925, %v2851
    %v2927 = vpop.permute.xlu0 %2926
    %2930 = vset.pattern.permute.xlu0 0
    %2931 = vperm.xlu0 %2930, %v2852
    %v2932 = vpop.permute.xlu0 %2931
    %2935 = vset.pattern.permute.xlu0 0
    %2936 = vperm.xlu0 %2935, %v2853
    %v2937 = vpop.permute.xlu0 %2936
    %2940 = vset.pattern.permute.xlu0 0
    %2941 = vperm.xlu0 %2940, %v2854
    %v2942 = vpop.permute.xlu0 %2941
    %2945 = vset.pattern.permute.xlu0 0
    %2946 = vperm.xlu0 %2945, %v2855
    %v2947 = vpop.permute.xlu0 %2946
    %2950 = vset.pattern.permute.xlu0 0
    %2951 = vperm.xlu0 %2950, %v2856
    %v2952 = vpop.permute.xlu0 %2951
    %2955 = vset.pattern.permute.xlu0 0
    %2956 = vperm.xlu0 %2955, %v2857
    %v2957 = vpop.permute.xlu0 %2956
    %2960 = vset.pattern.permute.xlu0 0
    %2961 = vperm.xlu0 %2960, %v2858
    %v2962 = vpop.permute.xlu0 %2961
    %v2964 = vmul.f32 %v2816, %v2862
    %v2965 = vmul.f32 %v2817, %v2867
    %v2966 = vmul.f32 %v2818, %v2872
    %v2967 = vmul.f32 %v2819, %v2877
    %v2968 = vmul.f32 %v2820, %v2882
    %v2969 = vmul.f32 %v2821, %v2887
    %v2970 = vmul.f32 %v2822, %v2892
    %v2971 = vmul.f32 %v2823, %v2897
    %v2972 = vmul.f32 %v2824, %v2902
    %v2973 = vmul.f32 %v2825, %v2907
    %v2974 = vmul.f32 %v2826, %v2912
    %v2975 = vmul.f32 %v2827, %v2917
    %v2976 = vmul.f32 %v2828, %v2922
    %v2977 = vmul.f32 %v2829, %v2927
    %v2978 = vmul.f32 %v2830, %v2932
    %v2979 = vmul.f32 %v2831, %v2937
    %v2980 = vmul.f32 %v2832, %v2942
    %v2981 = vmul.f32 %v2833, %v2947
    %v2982 = vmul.f32 %v2834, %v2952
    %v2983 = vmul.f32 %v2835, %v2957
    %v2984 = vmul.f32 %v2836, %v2962
    %v2985 = vpack.c.bf16 %v2965, %v2964
    %v2986 = vpack.c.bf16 %v2967, %v2966
    %v2987 = vpack.c.bf16 %v2969, %v2968
    %v2988 = vpack.c.bf16 %v2971, %v2970
    %v2989 = vpack.c.bf16 %v2973, %v2972
    %v2990 = vpack.c.bf16 %v2975, %v2974
    %v2991 = vpack.c.bf16 %v2977, %v2976
    %v2992 = vpack.c.bf16 %v2979, %v2978
    %v2993 = vpack.c.bf16 %v2981, %v2980
    %v2994 = vpack.c.bf16 %v2983, %v2982
    %v2995 = vpack.c.bf16 %v2984, %v2984
    %v3007 = vunpack.c.l.b16 %v2985
    %v3008 = vunpack.c.h.b16 %v2985
    %v3009 = vunpack.c.l.b16 %v2986
    %v3010 = vunpack.c.h.b16 %v2986
    %v3011 = vunpack.c.l.b16 %v2987
    %v3012 = vunpack.c.h.b16 %v2987
    %v3013 = vunpack.c.l.b16 %v2988
    %v3014 = vunpack.c.h.b16 %v2988
    %v3015 = vunpack.c.l.b16 %v2989
    %v3016 = vunpack.c.h.b16 %v2989
    %v3017 = vunpack.c.l.b16 %v2990
    %v3018 = vunpack.c.h.b16 %v2990
    %v3019 = vunpack.c.l.b16 %v2991
    %v3020 = vunpack.c.h.b16 %v2991
    %v3021 = vunpack.c.l.b16 %v2992
    %v3022 = vunpack.c.h.b16 %v2992
    %v3023 = vunpack.c.l.b16 %v2993
    %v3024 = vunpack.c.h.b16 %v2993
    %v3025 = vunpack.c.l.b16 %v2994
    %v3026 = vunpack.c.h.b16 %v2994
    %v3027 = vunpack.c.l.b16 %v2995
    %v3028 = vpack.c.b16 %v3007, %v3007
    %v3029 = vpack.c.b16 %v3008, %v3008
    %v3030 = vpack.c.b16 %v3009, %v3009
    %v3031 = vpack.c.b16 %v3010, %v3010
    %v3032 = vpack.c.b16 %v3011, %v3011
    %v3033 = vpack.c.b16 %v3012, %v3012
    %v3034 = vpack.c.b16 %v3013, %v3013
    %v3035 = vpack.c.b16 %v3014, %v3014
    %v3036 = vpack.c.b16 %v3015, %v3015
    %v3037 = vpack.c.b16 %v3016, %v3016
    %v3038 = vpack.c.b16 %v3017, %v3017
    %v3039 = vpack.c.b16 %v3018, %v3018
    %v3040 = vpack.c.b16 %v3019, %v3019
    %v3041 = vpack.c.b16 %v3020, %v3020
    %v3042 = vpack.c.b16 %v3021, %v3021
    %v3043 = vpack.c.b16 %v3022, %v3022
    %v3044 = vpack.c.b16 %v3023, %v3023
    %v3045 = vpack.c.b16 %v3024, %v3024
    %v3046 = vpack.c.b16 %v3025, %v3025
    %v3047 = vpack.c.b16 %v3026, %v3026
    %v3048 = vpack.c.b16 %v3027, %v3027
    %3070 = vst [vmem:[#allocation3 + $0x1c] sm:$0xf] %v3028
    %3071 = vst [vmem:[#allocation3 + $0x40] sm:$0xf] %v3029
    %3072 = vst [vmem:[#allocation3 + $0x64] sm:$0xf] %v3030
    %3073 = vst [vmem:[#allocation3 + $0x88] sm:$0xf] %v3031
    %3074 = vst [vmem:[#allocation3 + $0xac] sm:$0xf] %v3032
    %3075 = vst [vmem:[#allocation3 + $0xd0] sm:$0xf] %v3033
    %3076 = vst [vmem:[#allocation3 + $0xf4] sm:$0xf] %v3034
    %3077 = vst [vmem:[#allocation3 + $0x118] sm:$0xf] %v3035
    %3078 = vst [vmem:[#allocation3 + $0x13c] sm:$0xf] %v3036
    %3079 = vst [vmem:[#allocation3 + $0x160] sm:$0xf] %v3037
    %3080 = vst [vmem:[#allocation3 + $0x184] sm:$0xf] %v3038
    %3081 = vst [vmem:[#allocation3 + $0x1a8] sm:$0xf] %v3039
    %3082 = vst [vmem:[#allocation3 + $0x1cc] sm:$0xf] %v3040
    %3083 = vst [vmem:[#allocation3 + $0x1f0] sm:$0xf] %v3041
    %3084 = vst [vmem:[#allocation3 + $0x214] sm:$0xf] %v3042
    %3085 = vst [vmem:[#allocation3 + $0x238] sm:$0xf] %v3043
    %3086 = vst [vmem:[#allocation3 + $0x25c] sm:$0xf] %v3044
    %3087 = vst [vmem:[#allocation3 + $0x280] sm:$0xf] %v3045
    %3088 = vst [vmem:[#allocation3 + $0x2a4] sm:$0xf] %v3046
    %3089 = vst [vmem:[#allocation3 + $0x2c8] sm:$0xf] %v3047
    %3090 = vst [vmem:[#allocation3 + $0x2ec] sm:$0xf] %v3048
    %v3091 = vld [vmem:[#allocation2 + $0x1a] sm:$0xff]
    %v3092 = vld [vmem:[#allocation2 + $0x22] sm:$0xff]
    %v3093 = vld [vmem:[#allocation2 + $0x2a] sm:$0xff]
    %v3094 = vld [vmem:[#allocation2 + $0x32] sm:$0xff]
    %v3095 = vld [vmem:[#allocation2 + $0x3a] sm:$0xff]
    %v3096 = vld [vmem:[#allocation2 + $0x42] sm:$0xff]
    %v3097 = vld [vmem:[#allocation2 + $0x4a] sm:$0xff]
    %v3098 = vld [vmem:[#allocation2 + $0x52] sm:$0xff]
    %v3099 = vld [vmem:[#allocation2 + $0x5a] sm:$0xff]
    %v3100 = vld [vmem:[#allocation2 + $0x62] sm:$0xff]
    %v3101 = vld [vmem:[#allocation2 + $0x6a] sm:$0xff]
    %v3102 = vld [vmem:[#allocation2 + $0x72] sm:$0xff]
    %v3103 = vld [vmem:[#allocation2 + $0x7a] sm:$0xff]
    %v3104 = vld [vmem:[#allocation2 + $0x82] sm:$0xff]
    %v3105 = vld [vmem:[#allocation2 + $0x8a] sm:$0xff]
    %v3106 = vld [vmem:[#allocation2 + $0x92] sm:$0xff]
    %v3107 = vld [vmem:[#allocation2 + $0x9a] sm:$0xff]
    %v3108 = vld [vmem:[#allocation2 + $0xa2] sm:$0xff]
    %v3109 = vld [vmem:[#allocation2 + $0xaa] sm:$0xff]
    %v3110 = vld [vmem:[#allocation2 + $0xb2] sm:$0xff]
    %v3111 = vld [vmem:[#allocation2 + $0xba] sm:$0xff]
    %s3112 = scalar_lea.vmem %s5, 1344
    %v3113 = vld [vmem:[%s3112] sm:$0xff]
    %v3114 = vld [vmem:[%s3112 + $0x8] sm:$0xff]
    %v3115 = vld [vmem:[%s3112 + $0x10] sm:$0xff]
    %v3116 = vld [vmem:[%s3112 + $0x18] sm:$0xff]
    %v3117 = vld [vmem:[%s3112 + $0x20] sm:$0xff]
    %v3118 = vld [vmem:[%s3112 + $0x28] sm:$0xff]
    %v3119 = vld [vmem:[%s3112 + $0x30] sm:$0xff]
    %v3120 = vld [vmem:[%s3112 + $0x38] sm:$0xff]
    %v3121 = vld [vmem:[%s3112 + $0x40] sm:$0xff]
    %v3122 = vld [vmem:[%s3112 + $0x48] sm:$0xff]
    %v3123 = vld [vmem:[%s3112 + $0x50] sm:$0xff]
    %v3124 = vld [vmem:[%s3112 + $0x58] sm:$0xff]
    %v3125 = vld [vmem:[%s3112 + $0x60] sm:$0xff]
    %v3126 = vld [vmem:[%s3112 + $0x68] sm:$0xff]
    %v3127 = vld [vmem:[%s3112 + $0x70] sm:$0xff]
    %v3128 = vld [vmem:[%s3112 + $0x78] sm:$0xff]
    %v3129 = vld [vmem:[%s3112 + $0x80] sm:$0xff]
    %v3130 = vld [vmem:[%s3112 + $0x88] sm:$0xff]
    %v3131 = vld [vmem:[%s3112 + $0x90] sm:$0xff]
    %v3132 = vld [vmem:[%s3112 + $0x98] sm:$0xff]
    %v3133 = vld [vmem:[%s3112 + $0xa0] sm:$0xff]
    %3135 = vset.pattern.permute.xlu0 0
    %3136 = vperm.xlu0 %3135, %v3113
    %v3137 = vpop.permute.xlu0 %3136
    %3140 = vset.pattern.permute.xlu0 0
    %3141 = vperm.xlu0 %3140, %v3114
    %v3142 = vpop.permute.xlu0 %3141
    %3145 = vset.pattern.permute.xlu0 0
    %3146 = vperm.xlu0 %3145, %v3115
    %v3147 = vpop.permute.xlu0 %3146
    %3150 = vset.pattern.permute.xlu0 0
    %3151 = vperm.xlu0 %3150, %v3116
    %v3152 = vpop.permute.xlu0 %3151
    %3155 = vset.pattern.permute.xlu0 0
    %3156 = vperm.xlu0 %3155, %v3117
    %v3157 = vpop.permute.xlu0 %3156
    %3160 = vset.pattern.permute.xlu0 0
    %3161 = vperm.xlu0 %3160, %v3118
    %v3162 = vpop.permute.xlu0 %3161
    %3165 = vset.pattern.permute.xlu0 0
    %3166 = vperm.xlu0 %3165, %v3119
    %v3167 = vpop.permute.xlu0 %3166
    %3170 = vset.pattern.permute.xlu0 0
    %3171 = vperm.xlu0 %3170, %v3120
    %v3172 = vpop.permute.xlu0 %3171
    %3175 = vset.pattern.permute.xlu0 0
    %3176 = vperm.xlu0 %3175, %v3121
    %v3177 = vpop.permute.xlu0 %3176
    %3180 = vset.pattern.permute.xlu0 0
    %3181 = vperm.xlu0 %3180, %v3122
    %v3182 = vpop.permute.xlu0 %3181
    %3185 = vset.pattern.permute.xlu0 0
    %3186 = vperm.xlu0 %3185, %v3123
    %v3187 = vpop.permute.xlu0 %3186
    %3190 = vset.pattern.permute.xlu0 0
    %3191 = vperm.xlu0 %3190, %v3124
    %v3192 = vpop.permute.xlu0 %3191
    %3195 = vset.pattern.permute.xlu0 0
    %3196 = vperm.xlu0 %3195, %v3125
    %v3197 = vpop.permute.xlu0 %3196
    %3200 = vset.pattern.permute.xlu0 0
    %3201 = vperm.xlu0 %3200, %v3126
    %v3202 = vpop.permute.xlu0 %3201
    %3205 = vset.pattern.permute.xlu0 0
    %3206 = vperm.xlu0 %3205, %v3127
    %v3207 = vpop.permute.xlu0 %3206
    %3210 = vset.pattern.permute.xlu0 0
    %3211 = vperm.xlu0 %3210, %v3128
    %v3212 = vpop.permute.xlu0 %3211
    %3215 = vset.pattern.permute.xlu0 0
    %3216 = vperm.xlu0 %3215, %v3129
    %v3217 = vpop.permute.xlu0 %3216
    %3220 = vset.pattern.permute.xlu0 0
    %3221 = vperm.xlu0 %3220, %v3130
    %v3222 = vpop.permute.xlu0 %3221
    %3225 = vset.pattern.permute.xlu0 0
    %3226 = vperm.xlu0 %3225, %v3131
    %v3227 = vpop.permute.xlu0 %3226
    %3230 = vset.pattern.permute.xlu0 0
    %3231 = vperm.xlu0 %3230, %v3132
    %v3232 = vpop.permute.xlu0 %3231
    %3235 = vset.pattern.permute.xlu0 0
    %3236 = vperm.xlu0 %3235, %v3133
    %v3237 = vpop.permute.xlu0 %3236
    %v3239 = vmul.f32 %v3091, %v3137
    %v3240 = vmul.f32 %v3092, %v3142
    %v3241 = vmul.f32 %v3093, %v3147
    %v3242 = vmul.f32 %v3094, %v3152
    %v3243 = vmul.f32 %v3095, %v3157
    %v3244 = vmul.f32 %v3096, %v3162
    %v3245 = vmul.f32 %v3097, %v3167
    %v3246 = vmul.f32 %v3098, %v3172
    %v3247 = vmul.f32 %v3099, %v3177
    %v3248 = vmul.f32 %v3100, %v3182
    %v3249 = vmul.f32 %v3101, %v3187
    %v3250 = vmul.f32 %v3102, %v3192
    %v3251 = vmul.f32 %v3103, %v3197
    %v3252 = vmul.f32 %v3104, %v3202
    %v3253 = vmul.f32 %v3105, %v3207
    %v3254 = vmul.f32 %v3106, %v3212
    %v3255 = vmul.f32 %v3107, %v3217
    %v3256 = vmul.f32 %v3108, %v3222
    %v3257 = vmul.f32 %v3109, %v3227
    %v3258 = vmul.f32 %v3110, %v3232
    %v3259 = vmul.f32 %v3111, %v3237
    %v3260 = vpack.c.bf16 %v3240, %v3239
    %v3261 = vpack.c.bf16 %v3242, %v3241
    %v3262 = vpack.c.bf16 %v3244, %v3243
    %v3263 = vpack.c.bf16 %v3246, %v3245
    %v3264 = vpack.c.bf16 %v3248, %v3247
    %v3265 = vpack.c.bf16 %v3250, %v3249
    %v3266 = vpack.c.bf16 %v3252, %v3251
    %v3267 = vpack.c.bf16 %v3254, %v3253
    %v3268 = vpack.c.bf16 %v3256, %v3255
    %v3269 = vpack.c.bf16 %v3258, %v3257
    %v3270 = vpack.c.bf16 %v3259, %v3259
    %v3282 = vunpack.c.l.b16 %v3260
    %v3283 = vunpack.c.h.b16 %v3260
    %v3284 = vunpack.c.l.b16 %v3261
    %v3285 = vunpack.c.h.b16 %v3261
    %v3286 = vunpack.c.l.b16 %v3262
    %v3287 = vunpack.c.h.b16 %v3262
    %v3288 = vunpack.c.l.b16 %v3263
    %v3289 = vunpack.c.h.b16 %v3263
    %v3290 = vunpack.c.l.b16 %v3264
    %v3291 = vunpack.c.h.b16 %v3264
    %v3292 = vunpack.c.l.b16 %v3265
    %v3293 = vunpack.c.h.b16 %v3265
    %v3294 = vunpack.c.l.b16 %v3266
    %v3295 = vunpack.c.h.b16 %v3266
    %v3296 = vunpack.c.l.b16 %v3267
    %v3297 = vunpack.c.h.b16 %v3267
    %v3298 = vunpack.c.l.b16 %v3268
    %v3299 = vunpack.c.h.b16 %v3268
    %v3300 = vunpack.c.l.b16 %v3269
    %v3301 = vunpack.c.h.b16 %v3269
    %v3302 = vunpack.c.l.b16 %v3270
    %v3303 = vpack.c.b16 %v3282, %v3282
    %v3304 = vpack.c.b16 %v3283, %v3283
    %v3305 = vpack.c.b16 %v3284, %v3284
    %v3306 = vpack.c.b16 %v3285, %v3285
    %v3307 = vpack.c.b16 %v3286, %v3286
    %v3308 = vpack.c.b16 %v3287, %v3287
    %v3309 = vpack.c.b16 %v3288, %v3288
    %v3310 = vpack.c.b16 %v3289, %v3289
    %v3311 = vpack.c.b16 %v3290, %v3290
    %v3312 = vpack.c.b16 %v3291, %v3291
    %v3313 = vpack.c.b16 %v3292, %v3292
    %v3314 = vpack.c.b16 %v3293, %v3293
    %v3315 = vpack.c.b16 %v3294, %v3294
    %v3316 = vpack.c.b16 %v3295, %v3295
    %v3317 = vpack.c.b16 %v3296, %v3296
    %v3318 = vpack.c.b16 %v3297, %v3297
    %v3319 = vpack.c.b16 %v3298, %v3298
    %v3320 = vpack.c.b16 %v3299, %v3299
    %v3321 = vpack.c.b16 %v3300, %v3300
    %v3322 = vpack.c.b16 %v3301, %v3301
    %v3323 = vpack.c.b16 %v3302, %v3302
    %3345 = vst [vmem:[#allocation3 + $0x20] sm:$0xf] %v3303
    %3346 = vst [vmem:[#allocation3 + $0x44] sm:$0xf] %v3304
    %3347 = vst [vmem:[#allocation3 + $0x68] sm:$0xf] %v3305
    %3348 = vst [vmem:[#allocation3 + $0x8c] sm:$0xf] %v3306
    %3349 = vst [vmem:[#allocation3 + $0xb0] sm:$0xf] %v3307
    %3350 = vst [vmem:[#allocation3 + $0xd4] sm:$0xf] %v3308
    %3351 = vst [vmem:[#allocation3 + $0xf8] sm:$0xf] %v3309
    %3352 = vst [vmem:[#allocation3 + $0x11c] sm:$0xf] %v3310
    %3353 = vst [vmem:[#allocation3 + $0x140] sm:$0xf] %v3311
    %3354 = vst [vmem:[#allocation3 + $0x164] sm:$0xf] %v3312
    %3355 = vst [vmem:[#allocation3 + $0x188] sm:$0xf] %v3313
    %3356 = vst [vmem:[#allocation3 + $0x1ac] sm:$0xf] %v3314
    %3357 = vst [vmem:[#allocation3 + $0x1d0] sm:$0xf] %v3315
    %3358 = vst [vmem:[#allocation3 + $0x1f4] sm:$0xf] %v3316
    %3359 = vst [vmem:[#allocation3 + $0x218] sm:$0xf] %v3317
    %3360 = vst [vmem:[#allocation3 + $0x23c] sm:$0xf] %v3318
    %3361 = vst [vmem:[#allocation3 + $0x260] sm:$0xf] %v3319
    %3362 = vst [vmem:[#allocation3 + $0x284] sm:$0xf] %v3320
    %3363 = vst [vmem:[#allocation3 + $0x2a8] sm:$0xf] %v3321
    %3364 = vst [vmem:[#allocation3 + $0x2cc] sm:$0xf] %v3322
    %3365 = vst [vmem:[#allocation3 + $0x2f0] sm:$0xf] %v3323
    %v3366 = vld [vmem:[#allocation3] sm:$0xff]
    %v3367 = vld [vmem:[#allocation3 + $0x8] sm:$0xff]
    %v3368 = vld [vmem:[#allocation3 + $0x10] sm:$0xff]
    %v3369 = vld [vmem:[#allocation3 + $0x18] sm:$0xff]
    %v3370 = vld [vmem:[#allocation3 + $0x20] sm:$0xf]
    %v3371 = vld [vmem:[#allocation3 + $0x24] sm:$0xff]
    %v3372 = vld [vmem:[#allocation3 + $0x2c] sm:$0xff]
    %v3373 = vld [vmem:[#allocation3 + $0x34] sm:$0xff]
    %v3374 = vld [vmem:[#allocation3 + $0x3c] sm:$0xff]
    %v3375 = vld [vmem:[#allocation3 + $0x44] sm:$0xf]
    %v3376 = vld [vmem:[#allocation3 + $0x48] sm:$0xff]
    %v3377 = vld [vmem:[#allocation3 + $0x50] sm:$0xff]
    %v3378 = vld [vmem:[#allocation3 + $0x58] sm:$0xff]
    %v3379 = vld [vmem:[#allocation3 + $0x60] sm:$0xff]
    %v3380 = vld [vmem:[#allocation3 + $0x68] sm:$0xf]
    %v3381 = vld [vmem:[#allocation3 + $0x6c] sm:$0xff]
    %v3382 = vld [vmem:[#allocation3 + $0x74] sm:$0xff]
    %v3383 = vld [vmem:[#allocation3 + $0x7c] sm:$0xff]
    %v3384 = vld [vmem:[#allocation3 + $0x84] sm:$0xff]
    %v3385 = vld [vmem:[#allocation3 + $0x8c] sm:$0xf]
    %v3386 = vld [vmem:[#allocation3 + $0x90] sm:$0xff]
    %v3387 = vld [vmem:[#allocation3 + $0x98] sm:$0xff]
    %v3388 = vld [vmem:[#allocation3 + $0xa0] sm:$0xff]
    %v3389 = vld [vmem:[#allocation3 + $0xa8] sm:$0xff]
    %v3390 = vld [vmem:[#allocation3 + $0xb0] sm:$0xf]
    %v3391 = vld [vmem:[#allocation3 + $0xb4] sm:$0xff]
    %v3392 = vld [vmem:[#allocation3 + $0xbc] sm:$0xff]
    %v3393 = vld [vmem:[#allocation3 + $0xc4] sm:$0xff]
    %v3394 = vld [vmem:[#allocation3 + $0xcc] sm:$0xff]
    %v3395 = vld [vmem:[#allocation3 + $0xd4] sm:$0xf]
    %v3396 = vld [vmem:[#allocation3 + $0xd8] sm:$0xff]
    %v3397 = vld [vmem:[#allocation3 + $0xe0] sm:$0xff]
    %v3398 = vld [vmem:[#allocation3 + $0xe8] sm:$0xff]
    %v3399 = vld [vmem:[#allocation3 + $0xf0] sm:$0xff]
    %v3400 = vld [vmem:[#allocation3 + $0xf8] sm:$0xf]
    %v3401 = vld [vmem:[#allocation3 + $0xfc] sm:$0xff]
    %v3402 = vld [vmem:[#allocation3 + $0x104] sm:$0xff]
    %v3403 = vld [vmem:[#allocation3 + $0x10c] sm:$0xff]
    %v3404 = vld [vmem:[#allocation3 + $0x114] sm:$0xff]
    %v3405 = vld [vmem:[#allocation3 + $0x11c] sm:$0xf]
    %v3406 = vld [vmem:[#allocation3 + $0x120] sm:$0xff]
    %v3407 = vld [vmem:[#allocation3 + $0x128] sm:$0xff]
    %v3408 = vld [vmem:[#allocation3 + $0x130] sm:$0xff]
    %v3409 = vld [vmem:[#allocation3 + $0x138] sm:$0xff]
    %v3410 = vld [vmem:[#allocation3 + $0x140] sm:$0xf]
    %v3411 = vld [vmem:[#allocation3 + $0x144] sm:$0xff]
    %v3412 = vld [vmem:[#allocation3 + $0x14c] sm:$0xff]
    %v3413 = vld [vmem:[#allocation3 + $0x154] sm:$0xff]
    %v3414 = vld [vmem:[#allocation3 + $0x15c] sm:$0xff]
    %v3415 = vld [vmem:[#allocation3 + $0x164] sm:$0xf]
    %v3416 = vld [vmem:[#allocation3 + $0x168] sm:$0xff]
    %v3417 = vld [vmem:[#allocation3 + $0x170] sm:$0xff]
    %v3418 = vld [vmem:[#allocation3 + $0x178] sm:$0xff]
    %v3419 = vld [vmem:[#allocation3 + $0x180] sm:$0xff]
    %v3420 = vld [vmem:[#allocation3 + $0x188] sm:$0xf]
    %v3421 = vld [vmem:[#allocation3 + $0x18c] sm:$0xff]
    %v3422 = vld [vmem:[#allocation3 + $0x194] sm:$0xff]
    %v3423 = vld [vmem:[#allocation3 + $0x19c] sm:$0xff]
    %v3424 = vld [vmem:[#allocation3 + $0x1a4] sm:$0xff]
    %v3425 = vld [vmem:[#allocation3 + $0x1ac] sm:$0xf]
    %v3426 = vld [vmem:[#allocation3 + $0x1b0] sm:$0xff]
    %v3427 = vld [vmem:[#allocation3 + $0x1b8] sm:$0xff]
    %v3428 = vld [vmem:[#allocation3 + $0x1c0] sm:$0xff]
    %v3429 = vld [vmem:[#allocation3 + $0x1c8] sm:$0xff]
    %v3430 = vld [vmem:[#allocation3 + $0x1d0] sm:$0xf]
    %v3431 = vld [vmem:[#allocation3 + $0x1d4] sm:$0xff]
    %v3432 = vld [vmem:[#allocation3 + $0x1dc] sm:$0xff]
    %v3433 = vld [vmem:[#allocation3 + $0x1e4] sm:$0xff]
    %v3434 = vld [vmem:[#allocation3 + $0x1ec] sm:$0xff]
    %v3435 = vld [vmem:[#allocation3 + $0x1f4] sm:$0xf]
    %v3436 = vld [vmem:[#allocation3 + $0x1f8] sm:$0xff]
    %v3437 = vld [vmem:[#allocation3 + $0x200] sm:$0xff]
    %v3438 = vld [vmem:[#allocation3 + $0x208] sm:$0xff]
    %v3439 = vld [vmem:[#allocation3 + $0x210] sm:$0xff]
    %v3440 = vld [vmem:[#allocation3 + $0x218] sm:$0xf]
    %v3441 = vld [vmem:[#allocation3 + $0x21c] sm:$0xff]
    %v3442 = vld [vmem:[#allocation3 + $0x224] sm:$0xff]
    %v3443 = vld [vmem:[#allocation3 + $0x22c] sm:$0xff]
    %v3444 = vld [vmem:[#allocation3 + $0x234] sm:$0xff]
    %v3445 = vld [vmem:[#allocation3 + $0x23c] sm:$0xf]
    %v3446 = vld [vmem:[#allocation3 + $0x240] sm:$0xff]
    %v3447 = vld [vmem:[#allocation3 + $0x248] sm:$0xff]
    %v3448 = vld [vmem:[#allocation3 + $0x250] sm:$0xff]
    %v3449 = vld [vmem:[#allocation3 + $0x258] sm:$0xff]
    %v3450 = vld [vmem:[#allocation3 + $0x260] sm:$0xf]
    %v3451 = vld [vmem:[#allocation3 + $0x264] sm:$0xff]
    %v3452 = vld [vmem:[#allocation3 + $0x26c] sm:$0xff]
    %v3453 = vld [vmem:[#allocation3 + $0x274] sm:$0xff]
    %v3454 = vld [vmem:[#allocation3 + $0x27c] sm:$0xff]
    %v3455 = vld [vmem:[#allocation3 + $0x284] sm:$0xf]
    %v3456 = vld [vmem:[#allocation3 + $0x288] sm:$0xff]
    %v3457 = vld [vmem:[#allocation3 + $0x290] sm:$0xff]
    %v3458 = vld [vmem:[#allocation3 + $0x298] sm:$0xff]
    %v3459 = vld [vmem:[#allocation3 + $0x2a0] sm:$0xff]
    %v3460 = vld [vmem:[#allocation3 + $0x2a8] sm:$0xf]
    %v3461 = vld [vmem:[#allocation3 + $0x2ac] sm:$0xff]
    %v3462 = vld [vmem:[#allocation3 + $0x2b4] sm:$0xff]
    %v3463 = vld [vmem:[#allocation3 + $0x2bc] sm:$0xff]
    %v3464 = vld [vmem:[#allocation3 + $0x2c4] sm:$0xff]
    %v3465 = vld [vmem:[#allocation3 + $0x2cc] sm:$0xf]
    %v3466 = vld [vmem:[#allocation3 + $0x2d0] sm:$0xff]
    %v3467 = vld [vmem:[#allocation3 + $0x2d8] sm:$0xff]
    %v3468 = vld [vmem:[#allocation3 + $0x2e0] sm:$0xff]
    %v3469 = vld [vmem:[#allocation3 + $0x2e8] sm:$0xff]
    %v3470 = vld [vmem:[#allocation3 + $0x2f0] sm:$0xf]
    %v3576 = vunpack.c.l.b16 %v3366
    %v3577 = vunpack.c.h.b16 %v3366
    %v3578 = vunpack.c.l.b16 %v3367
    %v3579 = vunpack.c.h.b16 %v3367
    %v3580 = vunpack.c.l.b16 %v3368
    %v3581 = vunpack.c.h.b16 %v3368
    %v3582 = vunpack.c.l.b16 %v3369
    %v3583 = vunpack.c.h.b16 %v3369
    %v3584 = vunpack.c.l.b16 %v3370
    %v3585 = vunpack.c.l.b16 %v3371
    %v3586 = vunpack.c.h.b16 %v3371
    %v3587 = vunpack.c.l.b16 %v3372
    %v3588 = vunpack.c.h.b16 %v3372
    %v3589 = vunpack.c.l.b16 %v3373
    %v3590 = vunpack.c.h.b16 %v3373
    %v3591 = vunpack.c.l.b16 %v3374
    %v3592 = vunpack.c.h.b16 %v3374
    %v3593 = vunpack.c.l.b16 %v3375
    %v3594 = vunpack.c.l.b16 %v3376
    %v3595 = vunpack.c.h.b16 %v3376
    %v3596 = vunpack.c.l.b16 %v3377
    %v3597 = vunpack.c.h.b16 %v3377
    %v3598 = vunpack.c.l.b16 %v3378
    %v3599 = vunpack.c.h.b16 %v3378
    %v3600 = vunpack.c.l.b16 %v3379
    %v3601 = vunpack.c.h.b16 %v3379
    %v3602 = vunpack.c.l.b16 %v3380
    %v3603 = vunpack.c.l.b16 %v3381
    %v3604 = vunpack.c.h.b16 %v3381
    %v3605 = vunpack.c.l.b16 %v3382
    %v3606 = vunpack.c.h.b16 %v3382
    %v3607 = vunpack.c.l.b16 %v3383
    %v3608 = vunpack.c.h.b16 %v3383
    %v3609 = vunpack.c.l.b16 %v3384
    %v3610 = vunpack.c.h.b16 %v3384
    %v3611 = vunpack.c.l.b16 %v3385
    %v3612 = vunpack.c.l.b16 %v3386
    %v3613 = vunpack.c.h.b16 %v3386
    %v3614 = vunpack.c.l.b16 %v3387
    %v3615 = vunpack.c.h.b16 %v3387
    %v3616 = vunpack.c.l.b16 %v3388
    %v3617 = vunpack.c.h.b16 %v3388
    %v3618 = vunpack.c.l.b16 %v3389
    %v3619 = vunpack.c.h.b16 %v3389
    %v3620 = vunpack.c.l.b16 %v3390
    %v3621 = vunpack.c.l.b16 %v3391
    %v3622 = vunpack.c.h.b16 %v3391
    %v3623 = vunpack.c.l.b16 %v3392
    %v3624 = vunpack.c.h.b16 %v3392
    %v3625 = vunpack.c.l.b16 %v3393
    %v3626 = vunpack.c.h.b16 %v3393
    %v3627 = vunpack.c.l.b16 %v3394
    %v3628 = vunpack.c.h.b16 %v3394
    %v3629 = vunpack.c.l.b16 %v3395
    %v3630 = vunpack.c.l.b16 %v3396
    %v3631 = vunpack.c.h.b16 %v3396
    %v3632 = vunpack.c.l.b16 %v3397
    %v3633 = vunpack.c.h.b16 %v3397
    %v3634 = vunpack.c.l.b16 %v3398
    %v3635 = vunpack.c.h.b16 %v3398
    %v3636 = vunpack.c.l.b16 %v3399
    %v3637 = vunpack.c.h.b16 %v3399
    %v3638 = vunpack.c.l.b16 %v3400
    %v3639 = vunpack.c.l.b16 %v3401
    %v3640 = vunpack.c.h.b16 %v3401
    %v3641 = vunpack.c.l.b16 %v3402
    %v3642 = vunpack.c.h.b16 %v3402
    %v3643 = vunpack.c.l.b16 %v3403
    %v3644 = vunpack.c.h.b16 %v3403
    %v3645 = vunpack.c.l.b16 %v3404
    %v3646 = vunpack.c.h.b16 %v3404
    %v3647 = vunpack.c.l.b16 %v3405
    %v3648 = vunpack.c.l.b16 %v3406
    %v3649 = vunpack.c.h.b16 %v3406
    %v3650 = vunpack.c.l.b16 %v3407
    %v3651 = vunpack.c.h.b16 %v3407
    %v3652 = vunpack.c.l.b16 %v3408
    %v3653 = vunpack.c.h.b16 %v3408
    %v3654 = vunpack.c.l.b16 %v3409
    %v3655 = vunpack.c.h.b16 %v3409
    %v3656 = vunpack.c.l.b16 %v3410
    %v3657 = vunpack.c.l.b16 %v3411
    %v3658 = vunpack.c.h.b16 %v3411
    %v3659 = vunpack.c.l.b16 %v3412
    %v3660 = vunpack.c.h.b16 %v3412
    %v3661 = vunpack.c.l.b16 %v3413
    %v3662 = vunpack.c.h.b16 %v3413
    %v3663 = vunpack.c.l.b16 %v3414
    %v3664 = vunpack.c.h.b16 %v3414
    %v3665 = vunpack.c.l.b16 %v3415
    %v3666 = vunpack.c.l.b16 %v3416
    %v3667 = vunpack.c.h.b16 %v3416
    %v3668 = vunpack.c.l.b16 %v3417
    %v3669 = vunpack.c.h.b16 %v3417
    %v3670 = vunpack.c.l.b16 %v3418
    %v3671 = vunpack.c.h.b16 %v3418
    %v3672 = vunpack.c.l.b16 %v3419
    %v3673 = vunpack.c.h.b16 %v3419
    %v3674 = vunpack.c.l.b16 %v3420
    %v3675 = vunpack.c.l.b16 %v3421
    %v3676 = vunpack.c.h.b16 %v3421
    %v3677 = vunpack.c.l.b16 %v3422
    %v3678 = vunpack.c.h.b16 %v3422
    %v3679 = vunpack.c.l.b16 %v3423
    %v3680 = vunpack.c.h.b16 %v3423
    %v3681 = vunpack.c.l.b16 %v3424
    %v3682 = vunpack.c.h.b16 %v3424
    %v3683 = vunpack.c.l.b16 %v3425
    %v3684 = vunpack.c.l.b16 %v3426
    %v3685 = vunpack.c.h.b16 %v3426
    %v3686 = vunpack.c.l.b16 %v3427
    %v3687 = vunpack.c.h.b16 %v3427
    %v3688 = vunpack.c.l.b16 %v3428
    %v3689 = vunpack.c.h.b16 %v3428
    %v3690 = vunpack.c.l.b16 %v3429
    %v3691 = vunpack.c.h.b16 %v3429
    %v3692 = vunpack.c.l.b16 %v3430
    %v3693 = vunpack.c.l.b16 %v3431
    %v3694 = vunpack.c.h.b16 %v3431
    %v3695 = vunpack.c.l.b16 %v3432
    %v3696 = vunpack.c.h.b16 %v3432
    %v3697 = vunpack.c.l.b16 %v3433
    %v3698 = vunpack.c.h.b16 %v3433
    %v3699 = vunpack.c.l.b16 %v3434
    %v3700 = vunpack.c.h.b16 %v3434
    %v3701 = vunpack.c.l.b16 %v3435
    %v3702 = vunpack.c.l.b16 %v3436
    %v3703 = vunpack.c.h.b16 %v3436
    %v3704 = vunpack.c.l.b16 %v3437
    %v3705 = vunpack.c.h.b16 %v3437
    %v3706 = vunpack.c.l.b16 %v3438
    %v3707 = vunpack.c.h.b16 %v3438
    %v3708 = vunpack.c.l.b16 %v3439
    %v3709 = vunpack.c.h.b16 %v3439
    %v3710 = vunpack.c.l.b16 %v3440
    %v3711 = vunpack.c.l.b16 %v3441
    %v3712 = vunpack.c.h.b16 %v3441
    %v3713 = vunpack.c.l.b16 %v3442
    %v3714 = vunpack.c.h.b16 %v3442
    %v3715 = vunpack.c.l.b16 %v3443
    %v3716 = vunpack.c.h.b16 %v3443
    %v3717 = vunpack.c.l.b16 %v3444
    %v3718 = vunpack.c.h.b16 %v3444
    %v3719 = vunpack.c.l.b16 %v3445
    %v3720 = vunpack.c.l.b16 %v3446
    %v3721 = vunpack.c.h.b16 %v3446
    %v3722 = vunpack.c.l.b16 %v3447
    %v3723 = vunpack.c.h.b16 %v3447
    %v3724 = vunpack.c.l.b16 %v3448
    %v3725 = vunpack.c.h.b16 %v3448
    %v3726 = vunpack.c.l.b16 %v3449
    %v3727 = vunpack.c.h.b16 %v3449
    %v3728 = vunpack.c.l.b16 %v3450
    %v3729 = vunpack.c.l.b16 %v3451
    %v3730 = vunpack.c.h.b16 %v3451
    %v3731 = vunpack.c.l.b16 %v3452
    %v3732 = vunpack.c.h.b16 %v3452
    %v3733 = vunpack.c.l.b16 %v3453
    %v3734 = vunpack.c.h.b16 %v3453
    %v3735 = vunpack.c.l.b16 %v3454
    %v3736 = vunpack.c.h.b16 %v3454
    %v3737 = vunpack.c.l.b16 %v3455
    %v3738 = vunpack.c.l.b16 %v3456
    %v3739 = vunpack.c.h.b16 %v3456
    %v3740 = vunpack.c.l.b16 %v3457
    %v3741 = vunpack.c.h.b16 %v3457
    %v3742 = vunpack.c.l.b16 %v3458
    %v3743 = vunpack.c.h.b16 %v3458
    %v3744 = vunpack.c.l.b16 %v3459
    %v3745 = vunpack.c.h.b16 %v3459
    %v3746 = vunpack.c.l.b16 %v3460
    %v3747 = vunpack.c.l.b16 %v3461
    %v3748 = vunpack.c.h.b16 %v3461
    %v3749 = vunpack.c.l.b16 %v3462
    %v3750 = vunpack.c.h.b16 %v3462
    %v3751 = vunpack.c.l.b16 %v3463
    %v3752 = vunpack.c.h.b16 %v3463
    %v3753 = vunpack.c.l.b16 %v3464
    %v3754 = vunpack.c.h.b16 %v3464
    %v3755 = vunpack.c.l.b16 %v3465
    %v3756 = vunpack.c.l.b16 %v3466
    %v3757 = vunpack.c.h.b16 %v3466
    %v3758 = vunpack.c.l.b16 %v3467
    %v3759 = vunpack.c.h.b16 %v3467
    %v3760 = vunpack.c.l.b16 %v3468
    %v3761 = vunpack.c.h.b16 %v3468
    %v3762 = vunpack.c.l.b16 %v3469
    %v3763 = vunpack.c.h.b16 %v3469
    %v3764 = vunpack.c.l.b16 %v3470
    %v3765 = vpack.c.b16 %v3585, %v3576
    %v3766 = vpack.c.b16 %v3586, %v3577
    %v3767 = vpack.c.b16 %v3587, %v3578
    %v3768 = vpack.c.b16 %v3588, %v3579
    %v3769 = vpack.c.b16 %v3589, %v3580
    %v3770 = vpack.c.b16 %v3590, %v3581
    %v3771 = vpack.c.b16 %v3591, %v3582
    %v3772 = vpack.c.b16 %v3592, %v3583
    %v3773 = vpack.c.b16 %v3593, %v3584
    %v3774 = vpack.c.b16 %v3603, %v3594
    %v3775 = vpack.c.b16 %v3604, %v3595
    %v3776 = vpack.c.b16 %v3605, %v3596
    %v3777 = vpack.c.b16 %v3606, %v3597
    %v3778 = vpack.c.b16 %v3607, %v3598
    %v3779 = vpack.c.b16 %v3608, %v3599
    %v3780 = vpack.c.b16 %v3609, %v3600
    %v3781 = vpack.c.b16 %v3610, %v3601
    %v3782 = vpack.c.b16 %v3611, %v3602
    %v3783 = vpack.c.b16 %v3621, %v3612
    %v3784 = vpack.c.b16 %v3622, %v3613
    %v3785 = vpack.c.b16 %v3623, %v3614
    %v3786 = vpack.c.b16 %v3624, %v3615
    %v3787 = vpack.c.b16 %v3625, %v3616
    %v3788 = vpack.c.b16 %v3626, %v3617
    %v3789 = vpack.c.b16 %v3627, %v3618
    %v3790 = vpack.c.b16 %v3628, %v3619
    %v3791 = vpack.c.b16 %v3629, %v3620
    %v3792 = vpack.c.b16 %v3639, %v3630
    %v3793 = vpack.c.b16 %v3640, %v3631
    %v3794 = vpack.c.b16 %v3641, %v3632
    %v3795 = vpack.c.b16 %v3642, %v3633
    %v3796 = vpack.c.b16 %v3643, %v3634
    %v3797 = vpack.c.b16 %v3644, %v3635
    %v3798 = vpack.c.b16 %v3645, %v3636
    %v3799 = vpack.c.b16 %v3646, %v3637
    %v3800 = vpack.c.b16 %v3647, %v3638
    %v3801 = vpack.c.b16 %v3657, %v3648
    %v3802 = vpack.c.b16 %v3658, %v3649
    %v3803 = vpack.c.b16 %v3659, %v3650
    %v3804 = vpack.c.b16 %v3660, %v3651
    %v3805 = vpack.c.b16 %v3661, %v3652
    %v3806 = vpack.c.b16 %v3662, %v3653
    %v3807 = vpack.c.b16 %v3663, %v3654
    %v3808 = vpack.c.b16 %v3664, %v3655
    %v3809 = vpack.c.b16 %v3665, %v3656
    %v3810 = vpack.c.b16 %v3675, %v3666
    %v3811 = vpack.c.b16 %v3676, %v3667
    %v3812 = vpack.c.b16 %v3677, %v3668
    %v3813 = vpack.c.b16 %v3678, %v3669
    %v3814 = vpack.c.b16 %v3679, %v3670
    %v3815 = vpack.c.b16 %v3680, %v3671
    %v3816 = vpack.c.b16 %v3681, %v3672
    %v3817 = vpack.c.b16 %v3682, %v3673
    %v3818 = vpack.c.b16 %v3683, %v3674
    %v3819 = vpack.c.b16 %v3693, %v3684
    %v3820 = vpack.c.b16 %v3694, %v3685
    %v3821 = vpack.c.b16 %v3695, %v3686
    %v3822 = vpack.c.b16 %v3696, %v3687
    %v3823 = vpack.c.b16 %v3697, %v3688
    %v3824 = vpack.c.b16 %v3698, %v3689
    %v3825 = vpack.c.b16 %v3699, %v3690
    %v3826 = vpack.c.b16 %v3700, %v3691
    %v3827 = vpack.c.b16 %v3701, %v3692
    %v3828 = vpack.c.b16 %v3711, %v3702
    %v3829 = vpack.c.b16 %v3712, %v3703
    %v3830 = vpack.c.b16 %v3713, %v3704
    %v3831 = vpack.c.b16 %v3714, %v3705
    %v3832 = vpack.c.b16 %v3715, %v3706
    %v3833 = vpack.c.b16 %v3716, %v3707
    %v3834 = vpack.c.b16 %v3717, %v3708
    %v3835 = vpack.c.b16 %v3718, %v3709
    %v3836 = vpack.c.b16 %v3719, %v3710
    %v3837 = vpack.c.b16 %v3729, %v3720
    %v3838 = vpack.c.b16 %v3730, %v3721
    %v3839 = vpack.c.b16 %v3731, %v3722
    %v3840 = vpack.c.b16 %v3732, %v3723
    %v3841 = vpack.c.b16 %v3733, %v3724
    %v3842 = vpack.c.b16 %v3734, %v3725
    %v3843 = vpack.c.b16 %v3735, %v3726
    %v3844 = vpack.c.b16 %v3736, %v3727
    %v3845 = vpack.c.b16 %v3737, %v3728
    %v3846 = vpack.c.b16 %v3747, %v3738
    %v3847 = vpack.c.b16 %v3748, %v3739
    %v3848 = vpack.c.b16 %v3749, %v3740
    %v3849 = vpack.c.b16 %v3750, %v3741
    %v3850 = vpack.c.b16 %v3751, %v3742
    %v3851 = vpack.c.b16 %v3752, %v3743
    %v3852 = vpack.c.b16 %v3753, %v3744
    %v3853 = vpack.c.b16 %v3754, %v3745
    %v3854 = vpack.c.b16 %v3755, %v3746
    %v3855 = vpack.c.b16 %v3756, %v3756
    %v3856 = vpack.c.b16 %v3757, %v3757
    %v3857 = vpack.c.b16 %v3758, %v3758
    %v3858 = vpack.c.b16 %v3759, %v3759
    %v3859 = vpack.c.b16 %v3760, %v3760
    %v3860 = vpack.c.b16 %v3761, %v3761
    %v3861 = vpack.c.b16 %v3762, %v3762
    %v3862 = vpack.c.b16 %v3763, %v3763
    %v3863 = vpack.c.b16 %v3764, %v3764
    %v4107 = vunpack.c.l.b16 %v727
    %v4108 = vunpack.c.l.b16 %v728
    %v4109 = vunpack.c.l.b16 %v729
    %v4110 = vunpack.c.l.b16 %v730
    %v4111 = vunpack.c.l.b16 %v731
    %v4112 = vunpack.c.l.b16 %v732
    %v4113 = vunpack.c.l.b16 %v733
    %v4114 = vunpack.c.l.b16 %v734
    %v4115 = vunpack.c.l.b16 %v735
    %v4116 = vunpack.c.l.b16 %v736
    %v4117 = vunpack.c.l.b16 %v737
    %v4118 = vunpack.c.l.b16 %v738
    %v4119 = vunpack.c.l.b16 %v739
    %v4120 = vunpack.c.l.b16 %v740
    %v4121 = vunpack.c.l.b16 %v741
    %v4122 = vunpack.c.l.b16 %v742
    %v4123 = vunpack.c.l.b16 %v743
    %v4124 = vunpack.c.l.b16 %v744
    %v4125 = vunpack.c.l.b16 %v745
    %v4126 = vunpack.c.l.b16 %v746
    %v4127 = vunpack.c.l.b16 %v747
    %v4128 = vunpack.c.l.b16 %v748
    %v4129 = vunpack.c.l.b16 %v749
    %v4130 = vunpack.c.l.b16 %v750
    %v4131 = vunpack.c.l.b16 %v751
    %v4132 = vunpack.c.l.b16 %v752
    %v4133 = vunpack.c.l.b16 %v753
    %v4134 = vunpack.c.l.b16 %v754
    %v4135 = vunpack.c.l.b16 %v755
    %v4136 = vunpack.c.l.b16 %v756
    %v4137 = vunpack.c.l.b16 %v757
    %v4138 = vunpack.c.l.b16 %v758
    %v4139 = vunpack.c.l.b16 %v759
    %v4140 = vunpack.c.l.b16 %v760
    %v4141 = vunpack.c.l.b16 %v761
    %v4142 = vunpack.c.l.b16 %v762
    %v4143 = vunpack.c.l.b16 %v763
    %v4144 = vunpack.c.l.b16 %v764
    %v4145 = vunpack.c.l.b16 %v765
    %v4146 = vunpack.c.l.b16 %v766
    %v4147 = vunpack.c.l.b16 %v767
    %v4148 = vunpack.c.l.b16 %v768
    %v4149 = vunpack.c.l.b16 %v769
    %v4150 = vunpack.c.l.b16 %v770
    %v4151 = vunpack.c.l.b16 %v771
    %v4152 = vunpack.c.l.b16 %v772
    %v4153 = vunpack.c.l.b16 %v773
    %v4154 = vunpack.c.l.b16 %v774
    %v4155 = vunpack.c.l.b16 %v775
    %v4156 = vunpack.c.l.b16 %v776
    %v4157 = vunpack.c.l.b16 %v777
    %v4158 = vunpack.c.l.b16 %v778
    %v4159 = vunpack.c.l.b16 %v779
    %v4160 = vunpack.c.l.b16 %v780
    %v4161 = vunpack.c.l.b16 %v781
    %v4162 = vunpack.c.l.b16 %v782
    %v4163 = vunpack.c.l.b16 %v783
    %v4164 = vunpack.c.l.b16 %v784
    %v4165 = vunpack.c.l.b16 %v785
    %v4166 = vunpack.c.l.b16 %v786
    %v4167 = vunpack.c.l.b16 %v787
    %v4168 = vunpack.c.l.b16 %v788
    %v4169 = vunpack.c.l.b16 %v789
    %v4170 = vunpack.c.l.b16 %v790
    %v4171 = vunpack.c.l.b16 %v791
    %v4172 = vunpack.c.l.b16 %v792
    %v4173 = vunpack.c.l.b16 %v793
    %v4174 = vunpack.c.l.b16 %v794
    %v4175 = vunpack.c.l.b16 %v795
    %v4176 = vunpack.c.l.b16 %v796
    %v4177 = vunpack.c.l.b16 %v797
    %v4178 = vunpack.c.l.b16 %v798
    %v4179 = vunpack.c.l.b16 %v799
    %v4180 = vunpack.c.l.b16 %v800
    %v4181 = vunpack.c.l.b16 %v801
    %v4182 = vunpack.c.l.b16 %v802
    %v4183 = vunpack.c.l.b16 %v803
    %v4184 = vunpack.c.l.b16 %v804
    %v4185 = vunpack.c.l.b16 %v805
    %v4186 = vunpack.c.l.b16 %v806
    %v4187 = vunpack.c.l.b16 %v807
    %v4188 = vunpack.c.l.b16 %v808
    %v4189 = vunpack.c.l.b16 %v809
    %v4190 = vunpack.c.l.b16 %v810
    %v4191 = vunpack.c.l.b16 %v811
    %v4192 = vunpack.c.l.b16 %v812
    %v4193 = vunpack.c.l.b16 %v813
    %v4194 = vunpack.c.l.b16 %v814
    %v4195 = vunpack.c.l.b16 %v815
    %v4196 = vunpack.c.l.b16 %v816
    %v4197 = vunpack.c.l.b16 %v817
    %v4198 = vunpack.c.l.b16 %v818
    %v4199 = vunpack.c.l.b16 %v819
    %v4200 = vunpack.c.l.b16 %v820
    %v4201 = vunpack.c.l.b16 %v821
    %v4202 = vunpack.c.l.b16 %v822
    %v4203 = vunpack.c.l.b16 %v823
    %v4204 = vunpack.c.l.b16 %v824
    %v4205 = vunpack.c.l.b16 %v825
    %v4206 = vunpack.c.l.b16 %v826
    %v4207 = vunpack.c.l.b16 %v827
    %v4208 = vunpack.c.l.b16 %v828
    %v4209 = vunpack.c.l.b16 %v829
    %v4210 = vunpack.c.l.b16 %v830
    %v4211 = vunpack.c.l.b16 %v831
    %v4212 = vunpack.c.l.b16 %v832
    %v4213 = vunpack.c.l.b16 %v833
    %v4214 = vunpack.c.l.b16 %v834
    %v4215 = vunpack.c.l.b16 %v835
    %v4216 = vunpack.c.l.b16 %v836
    %v4217 = vunpack.c.l.b16 %v837
    %v4218 = vunpack.c.l.b16 %v838
    %v4219 = vunpack.c.l.b16 %v839
    %v4220 = vunpack.c.l.b16 %v840
    %v4221 = vunpack.c.l.b16 %v841
    %v4222 = vunpack.c.l.b16 %v842
    %v4223 = vunpack.c.l.b16 %v843
    %v4224 = vunpack.c.l.b16 %v844
    %v4225 = vunpack.c.l.b16 %v845
    %v4226 = vunpack.c.l.b16 %v846
    %v4227 = vunpack.c.l.b16 %v847
    %v4228 = vunpack.c.l.b16 %v848
    %v4229 = vunpack.c.l.b16 %v849
    %v4230 = vunpack.c.l.b16 %v850
    %v4231 = vunpack.c.l.b16 %v851
    %v4232 = vunpack.c.l.b16 %v852
    %v4233 = vunpack.c.l.b16 %v853
    %v4234 = vunpack.c.l.b16 %v854
    %v4235 = vunpack.c.l.b16 %v855
    %v4236 = vunpack.c.l.b16 %v856
    %v4237 = vunpack.c.l.b16 %v857
    %v4238 = vunpack.c.l.b16 %v858
    %v4239 = vunpack.c.l.b16 %v859
    %v4240 = vunpack.c.l.b16 %v860
    %v4241 = vunpack.c.l.b16 %v861
    %v4242 = vunpack.c.l.b16 %v862
    %v4243 = vunpack.c.l.b16 %v863
    %v4244 = vunpack.c.l.b16 %v864
    %v4245 = vunpack.c.l.b16 %v865
    %v4246 = vunpack.c.l.b16 %v866
    %v4247 = vunpack.c.l.b16 %v867
    %v4248 = vunpack.c.l.b16 %v868
    %v4249 = vunpack.c.l.b16 %v869
    %v4250 = vunpack.c.l.b16 %v870
    %v4251 = vpack.c.b16 %v4108, %v4107
    %v4252 = vpack.c.b16 %v4110, %v4109
    %v4253 = vpack.c.b16 %v4112, %v4111
    %v4254 = vpack.c.b16 %v4114, %v4113
    %v4255 = vpack.c.b16 %v4116, %v4115
    %v4256 = vpack.c.b16 %v4118, %v4117
    %v4257 = vpack.c.b16 %v4120, %v4119
    %v4258 = vpack.c.b16 %v4122, %v4121
    %v4259 = vpack.c.b16 %v4124, %v4123
    %v4260 = vpack.c.b16 %v4126, %v4125
    %v4261 = vpack.c.b16 %v4128, %v4127
    %v4262 = vpack.c.b16 %v4130, %v4129
    %v4263 = vpack.c.b16 %v4132, %v4131
    %v4264 = vpack.c.b16 %v4134, %v4133
    %v4265 = vpack.c.b16 %v4136, %v4135
    %v4266 = vpack.c.b16 %v4138, %v4137
    %v4267 = vpack.c.b16 %v4140, %v4139
    %v4268 = vpack.c.b16 %v4142, %v4141
    %v4269 = vpack.c.b16 %v4144, %v4143
    %v4270 = vpack.c.b16 %v4146, %v4145
    %v4271 = vpack.c.b16 %v4148, %v4147
    %v4272 = vpack.c.b16 %v4150, %v4149
    %v4273 = vpack.c.b16 %v4152, %v4151
    %v4274 = vpack.c.b16 %v4154, %v4153
    %v4275 = vpack.c.b16 %v4156, %v4155
    %v4276 = vpack.c.b16 %v4158, %v4157
    %v4277 = vpack.c.b16 %v4160, %v4159
    %v4278 = vpack.c.b16 %v4162, %v4161
    %v4279 = vpack.c.b16 %v4164, %v4163
    %v4280 = vpack.c.b16 %v4166, %v4165
    %v4281 = vpack.c.b16 %v4168, %v4167
    %v4282 = vpack.c.b16 %v4170, %v4169
    %v4283 = vpack.c.b16 %v4172, %v4171
    %v4284 = vpack.c.b16 %v4174, %v4173
    %v4285 = vpack.c.b16 %v4176, %v4175
    %v4286 = vpack.c.b16 %v4178, %v4177
    %v4287 = vpack.c.b16 %v4180, %v4179
    %v4288 = vpack.c.b16 %v4182, %v4181
    %v4289 = vpack.c.b16 %v4184, %v4183
    %v4290 = vpack.c.b16 %v4186, %v4185
    %v4291 = vpack.c.b16 %v4188, %v4187
    %v4292 = vpack.c.b16 %v4190, %v4189
    %v4293 = vpack.c.b16 %v4192, %v4191
    %v4294 = vpack.c.b16 %v4194, %v4193
    %v4295 = vpack.c.b16 %v4196, %v4195
    %v4296 = vpack.c.b16 %v4198, %v4197
    %v4297 = vpack.c.b16 %v4200, %v4199
    %v4298 = vpack.c.b16 %v4202, %v4201
    %v4299 = vpack.c.b16 %v4204, %v4203
    %v4300 = vpack.c.b16 %v4206, %v4205
    %v4301 = vpack.c.b16 %v4208, %v4207
    %v4302 = vpack.c.b16 %v4210, %v4209
    %v4303 = vpack.c.b16 %v4212, %v4211
    %v4304 = vpack.c.b16 %v4214, %v4213
    %v4305 = vpack.c.b16 %v4216, %v4215
    %v4306 = vpack.c.b16 %v4218, %v4217
    %v4307 = vpack.c.b16 %v4220, %v4219
    %v4308 = vpack.c.b16 %v4222, %v4221
    %v4309 = vpack.c.b16 %v4224, %v4223
    %v4310 = vpack.c.b16 %v4226, %v4225
    %v4311 = vpack.c.b16 %v4228, %v4227
    %v4312 = vpack.c.b16 %v4230, %v4229
    %v4313 = vpack.c.b16 %v4232, %v4231
    %v4314 = vpack.c.b16 %v4234, %v4233
    %v4315 = vpack.c.b16 %v4236, %v4235
    %v4316 = vpack.c.b16 %v4238, %v4237
    %v4317 = vpack.c.b16 %v4240, %v4239
    %v4318 = vpack.c.b16 %v4242, %v4241
    %v4319 = vpack.c.b16 %v4244, %v4243
    %v4320 = vpack.c.b16 %v4246, %v4245
    %v4321 = vpack.c.b16 %v4248, %v4247
    %v4322 = vpack.c.b16 %v4250, %v4249
    %4395 = vmatprep.subr.bf16.mxu0 0
    %4396 = vmatpush1.bf16.msra.mxu0 %v4251
    %4397 = vmatprep.subr.bf16.mxu0 0
    %4398 = vmatpush1.bf16.msra.mxu0 %v4252
    %4399 = vmatprep.subr.bf16.mxu0 0
    %4400 = vmatpush1.bf16.msra.mxu0 %v4253
    %4401 = vmatprep.subr.bf16.mxu0 0
    %4402 = vmatpush1.bf16.msra.mxu0 %v4254
    %4403 = vmatprep.subr.bf16.mxu0 0
    %4404 = vmatpush1.bf16.msra.mxu0 %v4255
    %4405 = vmatprep.subr.bf16.mxu0 0
    %4406 = vmatpush1.bf16.msra.mxu0 %v4256
    %4407 = vmatprep.subr.bf16.mxu0 0
    %4408 = vmatpush1.bf16.msra.mxu0 %v4257
    %4409 = vmatprep.subr.bf16.mxu0 0
    %4410 = vmatpush1.bf16.msra.mxu0 %v4258
    %4411 = vmatprep.subr.bf16.mxu0 0
    %4412 = vmatpush1.bf16.msra.mxu0 %v4259
    %4413 = vmatprep.subr.bf16.mxu0 0
    %4414 = vmatpush1.bf16.msra.mxu0 %v4260
    %4415 = vmatprep.subr.bf16.mxu0 0
    %4416 = vmatpush1.bf16.msra.mxu0 %v4261
    %4417 = vmatprep.subr.bf16.mxu0 0
    %4418 = vmatpush1.bf16.msra.mxu0 %v4262
    %4419 = vmatprep.subr.bf16.mxu0 0
    %4420 = vmatpush1.bf16.msra.mxu0 %v4263
    %4421 = vmatprep.subr.bf16.mxu0 0
    %4422 = vmatpush1.bf16.msra.mxu0 %v4264
    %4423 = vmatprep.subr.bf16.mxu0 0
    %4424 = vmatpush1.bf16.msra.mxu0 %v4265
    %4425 = vmatprep.subr.bf16.mxu0 0
    %4426 = vmatpush1.bf16.msra.mxu0 %v4266
    %4427 = vmatprep.mubr.bf16.mxu0 %v3766
    %4428 = vmatmul.mubr.bf16.gmra.mrb[0].mxu0 %v3765
    %v4429 = vpop.f32.mrb[0].mxu0
    %v4430 = vadd.f32 0.0, %v4429
    %v4431 = vpop.f32.mrb[0].mxu0
    %v4432 = vpop.f32.mrb[0].mxu0
    %v4433 = vadd.f32 0.0, %v4432
    %v4434 = vpop.f32.mrb[0].mxu0
    %4435 = vmatprep.mubr.bf16.mxu0 %v3775
    %4436 = vmatmul.mubr.bf16.gmra.mrb[0].mxu0 %v3774
    %v4437 = vpop.f32.mrb[0].mxu0
    %v4438 = vadd.f32 0.0, %v4437
    %v4439 = vpop.f32.mrb[0].mxu0
    %v4440 = vpop.f32.mrb[0].mxu0
    %v4441 = vadd.f32 0.0, %v4440
    %v4442 = vpop.f32.mrb[0].mxu0
    %4443 = vmatprep.mubr.bf16.mxu0 %v3784
    %4444 = vmatmul.mubr.bf16.gmra.mrb[0].mxu0 %v3783
    %v4445 = vpop.f32.mrb[0].mxu0
    %v4446 = vadd.f32 0.0, %v4445
    %v4447 = vpop.f32.mrb[0].mxu0
    %v4448 = vpop.f32.mrb[0].mxu0
    %v4449 = vadd.f32 0.0, %v4448
    %v4450 = vpop.f32.mrb[0].mxu0
    %4451 = vmatprep.mubr.bf16.mxu0 %v3793
    %4452 = vmatmul.mubr.bf16.gmra.mrb[0].mxu0 %v3792
    %v4453 = vpop.f32.mrb[0].mxu0
    %v4454 = vadd.f32 0.0, %v4453
    %v4455 = vpop.f32.mrb[0].mxu0
    %v4456 = vpop.f32.mrb[0].mxu0
    %v4457 = vadd.f32 0.0, %v4456
    %v4458 = vpop.f32.mrb[0].mxu0
    %4459 = vmatprep.mubr.bf16.mxu0 %v3802
    %4460 = vmatmul.mubr.bf16.gmra.mrb[0].mxu0 %v3801
    %v4461 = vpop.f32.mrb[0].mxu0
    %v4462 = vadd.f32 0.0, %v4461
    %v4463 = vpop.f32.mrb[0].mxu0
    %v4464 = vpop.f32.mrb[0].mxu0
    %v4465 = vadd.f32 0.0, %v4464
    %v4466 = vpop.f32.mrb[0].mxu0
    %4467 = vmatprep.mubr.bf16.mxu0 %v3811
    %4468 = vmatmul.mubr.bf16.gmra.mrb[0].mxu0 %v3810
    %v4469 = vpop.f32.mrb[0].mxu0
    %v4470 = vadd.f32 0.0, %v4469
    %v4471 = vpop.f32.mrb[0].mxu0
    %v4472 = vpop.f32.mrb[0].mxu0
    %v4473 = vadd.f32 0.0, %v4472
    %v4474 = vpop.f32.mrb[0].mxu0
    %4475 = vmatprep.mubr.bf16.mxu0 %v3820
    %4476 = vmatmul.mubr.bf16.gmra.mrb[0].mxu0 %v3819
    %v4477 = vpop.f32.mrb[0].mxu0
    %v4478 = vadd.f32 0.0, %v4477
    %v4479 = vpop.f32.mrb[0].mxu0
    %v4480 = vpop.f32.mrb[0].mxu0
    %v4481 = vadd.f32 0.0, %v4480
    %v4482 = vpop.f32.mrb[0].mxu0
    %4483 = vmatprep.mubr.bf16.mxu0 %v3829
    %4484 = vmatmul.mubr.bf16.gmra.mrb[0].mxu0 %v3828
    %v4485 = vpop.f32.mrb[0].mxu0
    %v4486 = vadd.f32 0.0, %v4485
    %v4487 = vpop.f32.mrb[0].mxu0
    %v4488 = vpop.f32.mrb[0].mxu0
    %v4489 = vadd.f32 0.0, %v4488
    %v4490 = vpop.f32.mrb[0].mxu0
    %4491 = vmatprep.mubr.bf16.mxu0 %v3838
    %4492 = vmatmul.mubr.bf16.gmra.mrb[0].mxu0 %v3837
    %v4493 = vpop.f32.mrb[0].mxu0
    %v4494 = vadd.f32 0.0, %v4493
    %v4495 = vpop.f32.mrb[0].mxu0
    %v4496 = vpop.f32.mrb[0].mxu0
    %v4497 = vadd.f32 0.0, %v4496
    %v4498 = vpop.f32.mrb[0].mxu0
    %4499 = vmatprep.mubr.bf16.mxu0 %v3847
    %4500 = vmatmul.mubr.bf16.gmra.mrb[0].mxu0 %v3846
    %v4501 = vpop.f32.mrb[0].mxu0
    %v4502 = vadd.f32 0.0, %v4501
    %v4503 = vpop.f32.mrb[0].mxu0
    %v4504 = vpop.f32.mrb[0].mxu0
    %v4505 = vadd.f32 0.0, %v4504
    %v4506 = vpop.f32.mrb[0].mxu0
    %4507 = vmatprep.mubr.bf16.mxu0 %v3856
    %4508 = vmatmul.mubr.bf16.gmra.mrb[0].mxu0 %v3855
    %v4509 = vpop.f32.mrb[0].mxu0
    %v4510 = vadd.f32 0.0, %v4509
    %v4511 = vpop.f32.mrb[0].mxu0
    %v4512 = vpop.f32.mrb[0].mxu0
    %v4513 = vpop.f32.mrb[0].mxu0
    %4514 = vdwg.mxu0
    %4515 = vmatprep.subr.bf16.mxu0 0
    %4516 = vmatpush1.bf16.msra.mxu0 %v4267
    %4517 = vmatprep.subr.bf16.mxu0 0
    %4518 = vmatpush1.bf16.msra.mxu0 %v4268
    %4519 = vmatprep.subr.bf16.mxu0 0
    %4520 = vmatpush1.bf16.msra.mxu0 %v4269
    %4521 = vmatprep.subr.bf16.mxu0 0
    %4522 = vmatpush1.bf16.msra.mxu0 %v4270
    %4523 = vmatprep.subr.bf16.mxu0 0
    %4524 = vmatpush1.bf16.msra.mxu0 %v4271
    %4525 = vmatprep.subr.bf16.mxu0 0
    %4526 = vmatpush1.bf16.msra.mxu0 %v4272
    %4527 = vmatprep.subr.bf16.mxu0 0
    %4528 = vmatpush1.bf16.msra.mxu0 %v4273
    %4529 = vmatprep.subr.bf16.mxu0 0
    %4530 = vmatpush1.bf16.msra.mxu0 %v4274
    %4531 = vmatprep.subr.bf16.mxu0 0
    %4532 = vmatpush1.bf16.msra.mxu0 %v4275
    %4533 = vmatprep.subr.bf16.mxu0 0
    %4534 = vmatpush1.bf16.msra.mxu0 %v4276
    %4535 = vmatprep.subr.bf16.mxu0 0
    %4536 = vmatpush1.bf16.msra.mxu0 %v4277
    %4537 = vmatprep.subr.bf16.mxu0 0
    %4538 = vmatpush1.bf16.msra.mxu0 %v4278
    %4539 = vmatprep.subr.bf16.mxu0 0
    %4540 = vmatpush1.bf16.msra.mxu0 %v4279
    %4541 = vmatprep.subr.bf16.mxu0 0
    %4542 = vmatpush1.bf16.msra.mxu0 %v4280
    %4543 = vmatprep.subr.bf16.mxu0 0
    %4544 = vmatpush1.bf16.msra.mxu0 %v4281
    %4545 = vmatprep.subr.bf16.mxu0 0
    %4546 = vmatpush1.bf16.msra.mxu0 %v4282
    %4547 = vmatprep.mubr.bf16.mxu0 %v3768
    %4548 = vmatmul.mubr.bf16.gmra.mrb[0].mxu0 %v3767
    %v4549 = vpop.f32.mrb[0].mxu0
    %v4550 = vadd.f32 %v4430, %v4549
    %v4551 = vpop.f32.mrb[0].mxu0
    %v4552 = vpop.f32.mrb[0].mxu0
    %v4553 = vadd.f32 %v4433, %v4552
    %v4554 = vpop.f32.mrb[0].mxu0
    %4555 = vmatprep.mubr.bf16.mxu0 %v3777
    %4556 = vmatmul.mubr.bf16.gmra.mrb[0].mxu0 %v3776
    %v4557 = vpop.f32.mrb[0].mxu0
    %v4558 = vadd.f32 %v4438, %v4557
    %v4559 = vpop.f32.mrb[0].mxu0
    %v4560 = vpop.f32.mrb[0].mxu0
    %v4561 = vadd.f32 %v4441, %v4560
    %v4562 = vpop.f32.mrb[0].mxu0
    %4563 = vmatprep.mubr.bf16.mxu0 %v3786
    %4564 = vmatmul.mubr.bf16.gmra.mrb[0].mxu0 %v3785
    %v4565 = vpop.f32.mrb[0].mxu0
    %v4566 = vadd.f32 %v4446, %v4565
    %v4567 = vpop.f32.mrb[0].mxu0
    %v4568 = vpop.f32.mrb[0].mxu0
    %v4569 = vadd.f32 %v4449, %v4568
    %v4570 = vpop.f32.mrb[0].mxu0
    %4571 = vmatprep.mubr.bf16.mxu0 %v3795
    %4572 = vmatmul.mubr.bf16.gmra.mrb[0].mxu0 %v3794
    %v4573 = vpop.f32.mrb[0].mxu0
    %v4574 = vadd.f32 %v4454, %v4573
    %v4575 = vpop.f32.mrb[0].mxu0
    %v4576 = vpop.f32.mrb[0].mxu0
    %v4577 = vadd.f32 %v4457, %v4576
    %v4578 = vpop.f32.mrb[0].mxu0
    %4579 = vmatprep.mubr.bf16.mxu0 %v3804
    %4580 = vmatmul.mubr.bf16.gmra.mrb[0].mxu0 %v3803
    %v4581 = vpop.f32.mrb[0].mxu0
    %v4582 = vadd.f32 %v4462, %v4581
    %v4583 = vpop.f32.mrb[0].mxu0
    %v4584 = vpop.f32.mrb[0].mxu0
    %v4585 = vadd.f32 %v4465, %v4584
    %v4586 = vpop.f32.mrb[0].mxu0
    %4587 = vmatprep.mubr.bf16.mxu0 %v3813
    %4588 = vmatmul.mubr.bf16.gmra.mrb[0].mxu0 %v3812
    %v4589 = vpop.f32.mrb[0].mxu0
    %v4590 = vadd.f32 %v4470, %v4589
    %v4591 = vpop.f32.mrb[0].mxu0
    %v4592 = vpop.f32.mrb[0].mxu0
    %v4593 = vadd.f32 %v4473, %v4592
    %v4594 = vpop.f32.mrb[0].mxu0
    %4595 = vmatprep.mubr.bf16.mxu0 %v3822
    %4596 = vmatmul.mubr.bf16.gmra.mrb[0].mxu0 %v3821
    %v4597 = vpop.f32.mrb[0].mxu0
    %v4598 = vadd.f32 %v4478, %v4597
    %v4599 = vpop.f32.mrb[0].mxu0
    %v4600 = vpop.f32.mrb[0].mxu0
    %v4601 = vadd.f32 %v4481, %v4600
    %v4602 = vpop.f32.mrb[0].mxu0
    %4603 = vmatprep.mubr.bf16.mxu0 %v3831
    %4604 = vmatmul.mubr.bf16.gmra.mrb[0].mxu0 %v3830
    %v4605 = vpop.f32.mrb[0].mxu0
    %v4606 = vadd.f32 %v4486, %v4605
    %v4607 = vpop.f32.mrb[0].mxu0
    %v4608 = vpop.f32.mrb[0].mxu0
    %v4609 = vadd.f32 %v4489, %v4608
    %v4610 = vpop.f32.mrb[0].mxu0
    %4611 = vmatprep.mubr.bf16.mxu0 %v3840
    %4612 = vmatmul.mubr.bf16.gmra.mrb[0].mxu0 %v3839
    %v4613 = vpop.f32.mrb[0].mxu0
    %v4614 = vadd.f32 %v4494, %v4613
    %v4615 = vpop.f32.mrb[0].mxu0
    %v4616 = vpop.f32.mrb[0].mxu0
    %v4617 = vadd.f32 %v4497, %v4616
    %v4618 = vpop.f32.mrb[0].mxu0
    %4619 = vmatprep.mubr.bf16.mxu0 %v3849
    %4620 = vmatmul.mubr.bf16.gmra.mrb[0].mxu0 %v3848
    %v4621 = vpop.f32.mrb[0].mxu0
    %v4622 = vadd.f32 %v4502, %v4621
    %v4623 = vpop.f32.mrb[0].mxu0
    %v4624 = vpop.f32.mrb[0].mxu0
    %v4625 = vadd.f32 %v4505, %v4624
    %v4626 = vpop.f32.mrb[0].mxu0
    %4627 = vmatprep.mubr.bf16.mxu0 %v3858
    %4628 = vmatmul.mubr.bf16.gmra.mrb[0].mxu0 %v3857
    %v4629 = vpop.f32.mrb[0].mxu0
    %v4630 = vadd.f32 %v4510, %v4629
    %v4631 = vpop.f32.mrb[0].mxu0
    %v4632 = vpop.f32.mrb[0].mxu0
    %v4633 = vpop.f32.mrb[0].mxu0
    %4634 = vdwg.mxu0
    %4635 = vmatprep.subr.bf16.mxu0 0
    %4636 = vmatpush1.bf16.msra.mxu0 %v4283
    %4637 = vmatprep.subr.bf16.mxu0 0
    %4638 = vmatpush1.bf16.msra.mxu0 %v4284
    %4639 = vmatprep.subr.bf16.mxu0 0
    %4640 = vmatpush1.bf16.msra.mxu0 %v4285
    %4641 = vmatprep.subr.bf16.mxu0 0
    %4642 = vmatpush1.bf16.msra.mxu0 %v4286
    %4643 = vmatprep.subr.bf16.mxu0 0
    %4644 = vmatpush1.bf16.msra.mxu0 %v4287
    %4645 = vmatprep.subr.bf16.mxu0 0
    %4646 = vmatpush1.bf16.msra.mxu0 %v4288
    %4647 = vmatprep.subr.bf16.mxu0 0
    %4648 = vmatpush1.bf16.msra.mxu0 %v4289
    %4649 = vmatprep.subr.bf16.mxu0 0
    %4650 = vmatpush1.bf16.msra.mxu0 %v4290
    %4651 = vmatprep.subr.bf16.mxu0 0
    %4652 = vmatpush1.bf16.msra.mxu0 %v4291
    %4653 = vmatprep.subr.bf16.mxu0 0
    %4654 = vmatpush1.bf16.msra.mxu0 %v4292
    %4655 = vmatprep.subr.bf16.mxu0 0
    %4656 = vmatpush1.bf16.msra.mxu0 %v4293
    %4657 = vmatprep.subr.bf16.mxu0 0
    %4658 = vmatpush1.bf16.msra.mxu0 %v4294
    %4659 = vmatprep.subr.bf16.mxu0 0
    %4660 = vmatpush1.bf16.msra.mxu0 %v4295
    %4661 = vmatprep.subr.bf16.mxu0 0
    %4662 = vmatpush1.bf16.msra.mxu0 %v4296
    %4663 = vmatprep.subr.bf16.mxu0 0
    %4664 = vmatpush1.bf16.msra.mxu0 %v4297
    %4665 = vmatprep.subr.bf16.mxu0 0
    %4666 = vmatpush1.bf16.msra.mxu0 %v4298
    %4667 = vmatprep.mubr.bf16.mxu0 %v3770
    %4668 = vmatmul.mubr.bf16.gmra.mrb[0].mxu0 %v3769
    %v4669 = vpop.f32.mrb[0].mxu0
    %v4670 = vadd.f32 %v4550, %v4669
    %v4671 = vpop.f32.mrb[0].mxu0
    %v4672 = vpop.f32.mrb[0].mxu0
    %v4673 = vadd.f32 %v4553, %v4672
    %v4674 = vpop.f32.mrb[0].mxu0
    %4675 = vmatprep.mubr.bf16.mxu0 %v3779
    %4676 = vmatmul.mubr.bf16.gmra.mrb[0].mxu0 %v3778
    %v4677 = vpop.f32.mrb[0].mxu0
    %v4678 = vadd.f32 %v4558, %v4677
    %v4679 = vpop.f32.mrb[0].mxu0
    %v4680 = vpop.f32.mrb[0].mxu0
    %v4681 = vadd.f32 %v4561, %v4680
    %v4682 = vpop.f32.mrb[0].mxu0
    %4683 = vmatprep.mubr.bf16.mxu0 %v3788
    %4684 = vmatmul.mubr.bf16.gmra.mrb[0].mxu0 %v3787
    %v4685 = vpop.f32.mrb[0].mxu0
    %v4686 = vadd.f32 %v4566, %v4685
    %v4687 = vpop.f32.mrb[0].mxu0
    %v4688 = vpop.f32.mrb[0].mxu0
    %v4689 = vadd.f32 %v4569, %v4688
    %v4690 = vpop.f32.mrb[0].mxu0
    %4691 = vmatprep.mubr.bf16.mxu0 %v3797
    %4692 = vmatmul.mubr.bf16.gmra.mrb[0].mxu0 %v3796
    %v4693 = vpop.f32.mrb[0].mxu0
    %v4694 = vadd.f32 %v4574, %v4693
    %v4695 = vpop.f32.mrb[0].mxu0
    %v4696 = vpop.f32.mrb[0].mxu0
    %v4697 = vadd.f32 %v4577, %v4696
    %v4698 = vpop.f32.mrb[0].mxu0
    %4699 = vmatprep.mubr.bf16.mxu0 %v3806
    %4700 = vmatmul.mubr.bf16.gmra.mrb[0].mxu0 %v3805
    %v4701 = vpop.f32.mrb[0].mxu0
    %v4702 = vadd.f32 %v4582, %v4701
    %v4703 = vpop.f32.mrb[0].mxu0
    %v4704 = vpop.f32.mrb[0].mxu0
    %v4705 = vadd.f32 %v4585, %v4704
    %v4706 = vpop.f32.mrb[0].mxu0
    %4707 = vmatprep.mubr.bf16.mxu0 %v3815
    %4708 = vmatmul.mubr.bf16.gmra.mrb[0].mxu0 %v3814
    %v4709 = vpop.f32.mrb[0].mxu0
    %v4710 = vadd.f32 %v4590, %v4709
    %v4711 = vpop.f32.mrb[0].mxu0
    %v4712 = vpop.f32.mrb[0].mxu0
    %v4713 = vadd.f32 %v4593, %v4712
    %v4714 = vpop.f32.mrb[0].mxu0
    %4715 = vmatprep.mubr.bf16.mxu0 %v3824
    %4716 = vmatmul.mubr.bf16.gmra.mrb[0].mxu0 %v3823
    %v4717 = vpop.f32.mrb[0].mxu0
    %v4718 = vadd.f32 %v4598, %v4717
    %v4719 = vpop.f32.mrb[0].mxu0
    %v4720 = vpop.f32.mrb[0].mxu0
    %v4721 = vadd.f32 %v4601, %v4720
    %v4722 = vpop.f32.mrb[0].mxu0
    %4723 = vmatprep.mubr.bf16.mxu0 %v3833
    %4724 = vmatmul.mubr.bf16.gmra.mrb[0].mxu0 %v3832
    %v4725 = vpop.f32.mrb[0].mxu0
    %v4726 = vadd.f32 %v4606, %v4725
    %v4727 = vpop.f32.mrb[0].mxu0
    %v4728 = vpop.f32.mrb[0].mxu0
    %v4729 = vadd.f32 %v4609, %v4728
    %v4730 = vpop.f32.mrb[0].mxu0
    %4731 = vmatprep.mubr.bf16.mxu0 %v3842
    %4732 = vmatmul.mubr.bf16.gmra.mrb[0].mxu0 %v3841
    %v4733 = vpop.f32.mrb[0].mxu0
    %v4734 = vadd.f32 %v4614, %v4733
    %v4735 = vpop.f32.mrb[0].mxu0
    %v4736 = vpop.f32.mrb[0].mxu0
    %v4737 = vadd.f32 %v4617, %v4736
    %v4738 = vpop.f32.mrb[0].mxu0
    %4739 = vmatprep.mubr.bf16.mxu0 %v3851
    %4740 = vmatmul.mubr.bf16.gmra.mrb[0].mxu0 %v3850
    %v4741 = vpop.f32.mrb[0].mxu0
    %v4742 = vadd.f32 %v4622, %v4741
    %v4743 = vpop.f32.mrb[0].mxu0
    %v4744 = vpop.f32.mrb[0].mxu0
    %v4745 = vadd.f32 %v4625, %v4744
    %v4746 = vpop.f32.mrb[0].mxu0
    %4747 = vmatprep.mubr.bf16.mxu0 %v3860
    %4748 = vmatmul.mubr.bf16.gmra.mrb[0].mxu0 %v3859
    %v4749 = vpop.f32.mrb[0].mxu0
    %v4750 = vadd.f32 %v4630, %v4749
    %v4751 = vpop.f32.mrb[0].mxu0
    %v4752 = vpop.f32.mrb[0].mxu0
    %v4753 = vpop.f32.mrb[0].mxu0
    %4754 = vdwg.mxu0
    %4755 = vmatprep.subr.bf16.mxu0 0
    %4756 = vmatpush1.bf16.msra.mxu0 %v4299
    %4757 = vmatprep.subr.bf16.mxu0 0
    %4758 = vmatpush1.bf16.msra.mxu0 %v4300
    %4759 = vmatprep.subr.bf16.mxu0 0
    %4760 = vmatpush1.bf16.msra.mxu0 %v4301
    %4761 = vmatprep.subr.bf16.mxu0 0
    %4762 = vmatpush1.bf16.msra.mxu0 %v4302
    %4763 = vmatprep.subr.bf16.mxu0 0
    %4764 = vmatpush1.bf16.msra.mxu0 %v4303
    %4765 = vmatprep.subr.bf16.mxu0 0
    %4766 = vmatpush1.bf16.msra.mxu0 %v4304
    %4767 = vmatprep.subr.bf16.mxu0 0
    %4768 = vmatpush1.bf16.msra.mxu0 %v4305
    %4769 = vmatprep.subr.bf16.mxu0 0
    %4770 = vmatpush1.bf16.msra.mxu0 %v4306
    %4771 = vmatprep.subr.bf16.mxu0 0
    %4772 = vmatpush1.bf16.msra.mxu0 %v4307
    %4773 = vmatprep.subr.bf16.mxu0 0
    %4774 = vmatpush1.bf16.msra.mxu0 %v4308
    %4775 = vmatprep.subr.bf16.mxu0 0
    %4776 = vmatpush1.bf16.msra.mxu0 %v4309
    %4777 = vmatprep.subr.bf16.mxu0 0
    %4778 = vmatpush1.bf16.msra.mxu0 %v4310
    %4779 = vmatprep.subr.bf16.mxu0 0
    %4780 = vmatpush1.bf16.msra.mxu0 %v4311
    %4781 = vmatprep.subr.bf16.mxu0 0
    %4782 = vmatpush1.bf16.msra.mxu0 %v4312
    %4783 = vmatprep.subr.bf16.mxu0 0
    %4784 = vmatpush1.bf16.msra.mxu0 %v4313
    %4785 = vmatprep.subr.bf16.mxu0 0
    %4786 = vmatpush1.bf16.msra.mxu0 %v4314
    %4787 = vmatprep.mubr.bf16.mxu0 %v3772
    %4788 = vmatmul.mubr.bf16.gmra.mrb[0].mxu0 %v3771
    %v4789 = vpop.f32.mrb[0].mxu0
    %v4790 = vadd.f32 %v4670, %v4789
    %v4791 = vpop.f32.mrb[0].mxu0
    %v4792 = vpop.f32.mrb[0].mxu0
    %v4793 = vadd.f32 %v4673, %v4792
    %v4794 = vpop.f32.mrb[0].mxu0
    %4795 = vmatprep.mubr.bf16.mxu0 %v3781
    %4796 = vmatmul.mubr.bf16.gmra.mrb[0].mxu0 %v3780
    %v4797 = vpop.f32.mrb[0].mxu0
    %v4798 = vadd.f32 %v4678, %v4797
    %v4799 = vpop.f32.mrb[0].mxu0
    %v4800 = vpop.f32.mrb[0].mxu0
    %v4801 = vadd.f32 %v4681, %v4800
    %v4802 = vpop.f32.mrb[0].mxu0
    %4803 = vmatprep.mubr.bf16.mxu0 %v3790
    %4804 = vmatmul.mubr.bf16.gmra.mrb[0].mxu0 %v3789
    %v4805 = vpop.f32.mrb[0].mxu0
    %v4806 = vadd.f32 %v4686, %v4805
    %v4807 = vpop.f32.mrb[0].mxu0
    %v4808 = vpop.f32.mrb[0].mxu0
    %v4809 = vadd.f32 %v4689, %v4808
    %v4810 = vpop.f32.mrb[0].mxu0
    %4811 = vmatprep.mubr.bf16.mxu0 %v3799
    %4812 = vmatmul.mubr.bf16.gmra.mrb[0].mxu0 %v3798
    %v4813 = vpop.f32.mrb[0].mxu0
    %v4814 = vadd.f32 %v4694, %v4813
    %v4815 = vpop.f32.mrb[0].mxu0
    %v4816 = vpop.f32.mrb[0].mxu0
    %v4817 = vadd.f32 %v4697, %v4816
    %v4818 = vpop.f32.mrb[0].mxu0
    %4819 = vmatprep.mubr.bf16.mxu0 %v3808
    %4820 = vmatmul.mubr.bf16.gmra.mrb[0].mxu0 %v3807
    %v4821 = vpop.f32.mrb[0].mxu0
    %v4822 = vadd.f32 %v4702, %v4821
    %v4823 = vpop.f32.mrb[0].mxu0
    %v4824 = vpop.f32.mrb[0].mxu0
    %v4825 = vadd.f32 %v4705, %v4824
    %v4826 = vpop.f32.mrb[0].mxu0
    %4827 = vmatprep.mubr.bf16.mxu0 %v3817
    %4828 = vmatmul.mubr.bf16.gmra.mrb[0].mxu0 %v3816
    %v4829 = vpop.f32.mrb[0].mxu0
    %v4830 = vadd.f32 %v4710, %v4829
    %v4831 = vpop.f32.mrb[0].mxu0
    %v4832 = vpop.f32.mrb[0].mxu0
    %v4833 = vadd.f32 %v4713, %v4832
    %v4834 = vpop.f32.mrb[0].mxu0
    %4835 = vmatprep.mubr.bf16.mxu0 %v3826
    %4836 = vmatmul.mubr.bf16.gmra.mrb[0].mxu0 %v3825
    %v4837 = vpop.f32.mrb[0].mxu0
    %v4838 = vadd.f32 %v4718, %v4837
    %v4839 = vpop.f32.mrb[0].mxu0
    %v4840 = vpop.f32.mrb[0].mxu0
    %v4841 = vadd.f32 %v4721, %v4840
    %v4842 = vpop.f32.mrb[0].mxu0
    %4843 = vmatprep.mubr.bf16.mxu0 %v3835
    %4844 = vmatmul.mubr.bf16.gmra.mrb[0].mxu0 %v3834
    %v4845 = vpop.f32.mrb[0].mxu0
    %v4846 = vadd.f32 %v4726, %v4845
    %v4847 = vpop.f32.mrb[0].mxu0
    %v4848 = vpop.f32.mrb[0].mxu0
    %v4849 = vadd.f32 %v4729, %v4848
    %v4850 = vpop.f32.mrb[0].mxu0
    %4851 = vmatprep.mubr.bf16.mxu0 %v3844
    %4852 = vmatmul.mubr.bf16.gmra.mrb[0].mxu0 %v3843
    %v4853 = vpop.f32.mrb[0].mxu0
    %v4854 = vadd.f32 %v4734, %v4853
    %v4855 = vpop.f32.mrb[0].mxu0
    %v4856 = vpop.f32.mrb[0].mxu0
    %v4857 = vadd.f32 %v4737, %v4856
    %v4858 = vpop.f32.mrb[0].mxu0
    %4859 = vmatprep.mubr.bf16.mxu0 %v3853
    %4860 = vmatmul.mubr.bf16.gmra.mrb[0].mxu0 %v3852
    %v4861 = vpop.f32.mrb[0].mxu0
    %v4862 = vadd.f32 %v4742, %v4861
    %v4863 = vpop.f32.mrb[0].mxu0
    %v4864 = vpop.f32.mrb[0].mxu0
    %v4865 = vadd.f32 %v4745, %v4864
    %v4866 = vpop.f32.mrb[0].mxu0
    %4867 = vmatprep.mubr.bf16.mxu0 %v3862
    %4868 = vmatmul.mubr.bf16.gmra.mrb[0].mxu0 %v3861
    %v4869 = vpop.f32.mrb[0].mxu0
    %v4870 = vadd.f32 %v4750, %v4869
    %v4871 = vpop.f32.mrb[0].mxu0
    %v4872 = vpop.f32.mrb[0].mxu0
    %v4873 = vpop.f32.mrb[0].mxu0
    %4874 = vdwg.mxu0
    %4875 = vmatprep.subr.bf16.mxu0 0
    %4876 = vmatpush1.bf16.msra.mxu0 %v4315
    %4877 = vmatprep.subr.bf16.mxu0 0
    %4878 = vmatpush1.bf16.msra.mxu0 %v4316
    %4879 = vmatprep.subr.bf16.mxu0 0
    %4880 = vmatpush1.bf16.msra.mxu0 %v4317
    %4881 = vmatprep.subr.bf16.mxu0 0
    %4882 = vmatpush1.bf16.msra.mxu0 %v4318
    %4883 = vmatprep.subr.bf16.mxu0 0
    %4884 = vmatpush1.bf16.msra.mxu0 %v4319
    %4885 = vmatprep.subr.bf16.mxu0 0
    %4886 = vmatpush1.bf16.msra.mxu0 %v4320
    %4887 = vmatprep.subr.bf16.mxu0 0
    %4888 = vmatpush1.bf16.msra.mxu0 %v4321
    %4889 = vmatprep.subr.bf16.mxu0 0
    %4890 = vmatpush1.bf16.msra.mxu0 %v4322
    %4891 = vmatprep.subr.bf16.mxu0 0
    %4892 = vmatpush1.bf16.msra.mxu0 0
    %4893 = vmatprep.subr.bf16.mxu0 0
    %4894 = vmatpush1.bf16.msra.mxu0 0
    %4895 = vmatprep.subr.bf16.mxu0 0
    %4896 = vmatpush1.bf16.msra.mxu0 0
    %4897 = vmatprep.subr.bf16.mxu0 0
    %4898 = vmatpush1.bf16.msra.mxu0 0
    %4899 = vmatprep.subr.bf16.mxu0 0
    %4900 = vmatpush1.bf16.msra.mxu0 0
    %4901 = vmatprep.subr.bf16.mxu0 0
    %4902 = vmatpush1.bf16.msra.mxu0 0
    %4903 = vmatprep.subr.bf16.mxu0 0
    %4904 = vmatpush1.bf16.msra.mxu0 0
    %4905 = vmatprep.subr.bf16.mxu0 0
    %4906 = vmatpush1.bf16.msra.mxu0 0
    %4907 = vmatprep.mubr.bf16.mxu0 0
    %4908 = vmatmul.mubr.bf16.gmra.mrb[0].mxu0 %v3773
    %v4909 = vpop.f32.mrb[0].mxu0
    %v4910 = vadd.f32 %v4790, %v4909
    %v4911 = vpop.f32.mrb[0].mxu0
    %v4912 = vpop.f32.mrb[0].mxu0
    %v4913 = vadd.f32 %v4793, %v4912
    %v4914 = vpop.f32.mrb[0].mxu0
    %4915 = vmatprep.mubr.bf16.mxu0 0
    %4916 = vmatmul.mubr.bf16.gmra.mrb[0].mxu0 %v3782
    %v4917 = vpop.f32.mrb[0].mxu0
    %v4918 = vadd.f32 %v4798, %v4917
    %v4919 = vpop.f32.mrb[0].mxu0
    %v4920 = vpop.f32.mrb[0].mxu0
    %v4921 = vadd.f32 %v4801, %v4920
    %v4922 = vpop.f32.mrb[0].mxu0
    %4923 = vmatprep.mubr.bf16.mxu0 0
    %4924 = vmatmul.mubr.bf16.gmra.mrb[0].mxu0 %v3791
    %v4925 = vpop.f32.mrb[0].mxu0
    %v4926 = vadd.f32 %v4806, %v4925
    %v4927 = vpop.f32.mrb[0].mxu0
    %v4928 = vpop.f32.mrb[0].mxu0
    %v4929 = vadd.f32 %v4809, %v4928
    %v4930 = vpop.f32.mrb[0].mxu0
    %4931 = vmatprep.mubr.bf16.mxu0 0
    %4932 = vmatmul.mubr.bf16.gmra.mrb[0].mxu0 %v3800
    %v4933 = vpop.f32.mrb[0].mxu0
    %v4934 = vadd.f32 %v4814, %v4933
    %v4935 = vpop.f32.mrb[0].mxu0
    %v4936 = vpop.f32.mrb[0].mxu0
    %v4937 = vadd.f32 %v4817, %v4936
    %v4938 = vpop.f32.mrb[0].mxu0
    %4939 = vmatprep.mubr.bf16.mxu0 0
    %4940 = vmatmul.mubr.bf16.gmra.mrb[0].mxu0 %v3809
    %v4941 = vpop.f32.mrb[0].mxu0
    %v4942 = vadd.f32 %v4822, %v4941
    %v4943 = vpop.f32.mrb[0].mxu0
    %v4944 = vpop.f32.mrb[0].mxu0
    %v4945 = vadd.f32 %v4825, %v4944
    %v4946 = vpop.f32.mrb[0].mxu0
    %4947 = vmatprep.mubr.bf16.mxu0 0
    %4948 = vmatmul.mubr.bf16.gmra.mrb[0].mxu0 %v3818
    %v4949 = vpop.f32.mrb[0].mxu0
    %v4950 = vadd.f32 %v4830, %v4949
    %v4951 = vpop.f32.mrb[0].mxu0
    %v4952 = vpop.f32.mrb[0].mxu0
    %v4953 = vadd.f32 %v4833, %v4952
    %v4954 = vpop.f32.mrb[0].mxu0
    %4955 = vmatprep.mubr.bf16.mxu0 0
    %4956 = vmatmul.mubr.bf16.gmra.mrb[0].mxu0 %v3827
    %v4957 = vpop.f32.mrb[0].mxu0
    %v4958 = vadd.f32 %v4838, %v4957
    %v4959 = vpop.f32.mrb[0].mxu0
    %v4960 = vpop.f32.mrb[0].mxu0
    %v4961 = vadd.f32 %v4841, %v4960
    %v4962 = vpop.f32.mrb[0].mxu0
    %4963 = vmatprep.mubr.bf16.mxu0 0
    %4964 = vmatmul.mubr.bf16.gmra.mrb[0].mxu0 %v3836
    %v4965 = vpop.f32.mrb[0].mxu0
    %v4966 = vadd.f32 %v4846, %v4965
    %v4967 = vpop.f32.mrb[0].mxu0
    %v4968 = vpop.f32.mrb[0].mxu0
    %v4969 = vadd.f32 %v4849, %v4968
    %v4970 = vpop.f32.mrb[0].mxu0
    %4971 = vmatprep.mubr.bf16.mxu0 0
    %4972 = vmatmul.mubr.bf16.gmra.mrb[0].mxu0 %v3845
    %v4973 = vpop.f32.mrb[0].mxu0
    %v4974 = vadd.f32 %v4854, %v4973
    %v4975 = vpop.f32.mrb[0].mxu0
    %v4976 = vpop.f32.mrb[0].mxu0
    %v4977 = vadd.f32 %v4857, %v4976
    %v4978 = vpop.f32.mrb[0].mxu0
    %4979 = vmatprep.mubr.bf16.mxu0 0
    %4980 = vmatmul.mubr.bf16.gmra.mrb[0].mxu0 %v3854
    %v4981 = vpop.f32.mrb[0].mxu0
    %v4982 = vadd.f32 %v4862, %v4981
    %v4983 = vpop.f32.mrb[0].mxu0
    %v4984 = vpop.f32.mrb[0].mxu0
    %v4985 = vadd.f32 %v4865, %v4984
    %v4986 = vpop.f32.mrb[0].mxu0
    %4987 = vmatprep.mubr.bf16.mxu0 0
    %4988 = vmatmul.mubr.bf16.gmra.mrb[0].mxu0 %v3863
    %v4989 = vpop.f32.mrb[0].mxu0
    %v4990 = vadd.f32 %v4870, %v4989
    %v4991 = vpop.f32.mrb[0].mxu0
    %v4992 = vpop.f32.mrb[0].mxu0
    %v4993 = vpop.f32.mrb[0].mxu0
    %4994 = vdwg.mxu0
    %s4995 = sadd.s32 %s723, 1
    %s4996 = scalar_lea.vmem %s3, %s4995
    %v4997 = vld [vmem:[%s4996] sm:$0x1]
    %s4998 = scalar_lea.vmem %s4, %s4995
    %v4999 = vld [vmem:[%s4998] sm:$0x1]
    %v5000 = vadd.f32 %v4910, %v4913
    %v5001 = vadd.f32 %v5000, %v4918
    %v5002 = vadd.f32 %v5001, %v4921
    %v5003 = vadd.f32 %v5002, %v4926
    %v5004 = vadd.f32 %v5003, %v4929
    %v5005 = vadd.f32 %v5004, %v4934
    %v5006 = vadd.f32 %v5005, %v4937
    %v5007 = vadd.f32 %v5006, %v4942
    %v5008 = vadd.f32 %v5007, %v4945
    %v5009 = vadd.f32 %v5008, %v4950
    %v5010 = vadd.f32 %v5009, %v4953
    %v5011 = vadd.f32 %v5010, %v4958
    %v5012 = vadd.f32 %v5011, %v4961
    %v5013 = vadd.f32 %v5012, %v4966
    %v5014 = vadd.f32 %v5013, %v4969
    %v5015 = vadd.f32 %v5014, %v4974
    %v5016 = vadd.f32 %v5015, %v4977
    %v5017 = vadd.f32 %v5016, %v4982
    %v5018 = vadd.f32 %v5017, %v4985
    %v5019 = vadd.f32 %v5018, %v4990
    %v5020 = vrot.slane %v5019, 4
    %v5021 = vadd.f32 %v5019, %v5020
    %v5022 = vrot.slane %v5021, 2
    %v5023 = vadd.f32 %v5021, %v5022
    %v5024 = vrot.slane %v5023, 1
    %v5025 = vadd.f32 %v5023, %v5024
    %v5026 = vmul.f32 %v5025, 0.0061728396
    %v5027 = vsub.f32 %v4910, %v5026
    %v5028 = vsub.f32 %v4913, %v5026
    %v5029 = vsub.f32 %v4918, %v5026
    %v5030 = vsub.f32 %v4921, %v5026
    %v5031 = vsub.f32 %v4926, %v5026
    %v5032 = vsub.f32 %v4929, %v5026
    %v5033 = vsub.f32 %v4934, %v5026
    %v5034 = vsub.f32 %v4937, %v5026
    %v5035 = vsub.f32 %v4942, %v5026
    %v5036 = vsub.f32 %v4945, %v5026
    %v5037 = vsub.f32 %v4950, %v5026
    %v5038 = vsub.f32 %v4953, %v5026
    %v5039 = vsub.f32 %v4958, %v5026
    %v5040 = vsub.f32 %v4961, %v5026
    %v5041 = vsub.f32 %v4966, %v5026
    %v5042 = vsub.f32 %v4969, %v5026
    %v5043 = vsub.f32 %v4974, %v5026
    %v5044 = vsub.f32 %v4977, %v5026
    %v5045 = vsub.f32 %v4982, %v5026
    %v5046 = vsub.f32 %v4985, %v5026
    %v5047 = vsub.f32 %v4990, %v5026
    %v5048 = vmul.f32 %v5027, %v427
    %v5049 = vmul.f32 %v5028, %v432
    %v5050 = vmul.f32 %v5029, %v437
    %v5051 = vmul.f32 %v5030, %v442
    %v5052 = vmul.f32 %v5031, %v447
    %v5053 = vmul.f32 %v5032, %v452
    %v5054 = vmul.f32 %v5033, %v457
    %v5055 = vmul.f32 %v5034, %v462
    %v5056 = vmul.f32 %v5035, %v467
    %v5057 = vmul.f32 %v5036, %v472
    %v5058 = vmul.f32 %v5037, %v477
    %v5059 = vmul.f32 %v5038, %v482
    %v5060 = vmul.f32 %v5039, %v487
    %v5061 = vmul.f32 %v5040, %v492
    %v5062 = vmul.f32 %v5041, %v497
    %v5063 = vmul.f32 %v5042, %v502
    %v5064 = vmul.f32 %v5043, %v507
    %v5065 = vmul.f32 %v5044, %v512
    %v5066 = vmul.f32 %v5045, %v517
    %v5067 = vmul.f32 %v5046, %v522
    %v5068 = vmul.f32 %v5047, %v527
    %v5069 = vmul.f32 %v5048, %v5048
    %v5070 = vmul.f32 %v5049, %v5049
    %v5071 = vmul.f32 %v5050, %v5050
    %v5072 = vmul.f32 %v5051, %v5051
    %v5073 = vmul.f32 %v5052, %v5052
    %v5074 = vmul.f32 %v5053, %v5053
    %v5075 = vmul.f32 %v5054, %v5054
    %v5076 = vmul.f32 %v5055, %v5055
    %v5077 = vmul.f32 %v5056, %v5056
    %v5078 = vmul.f32 %v5057, %v5057
    %v5079 = vmul.f32 %v5058, %v5058
    %v5080 = vmul.f32 %v5059, %v5059
    %v5081 = vmul.f32 %v5060, %v5060
    %v5082 = vmul.f32 %v5061, %v5061
    %v5083 = vmul.f32 %v5062, %v5062
    %v5084 = vmul.f32 %v5063, %v5063
    %v5085 = vmul.f32 %v5064, %v5064
    %v5086 = vmul.f32 %v5065, %v5065
    %v5087 = vmul.f32 %v5066, %v5066
    %v5088 = vmul.f32 %v5067, %v5067
    %v5089 = vmul.f32 %v5068, %v5068
    %v5090 = vadd.f32 %v5069, %v5070
    %v5091 = vadd.f32 %v5090, %v5071
    %v5092 = vadd.f32 %v5091, %v5072
    %v5093 = vadd.f32 %v5092, %v5073
    %v5094 = vadd.f32 %v5093, %v5074
    %v5095 = vadd.f32 %v5094, %v5075
    %v5096 = vadd.f32 %v5095, %v5076
    %v5097 = vadd.f32 %v5096, %v5077
    %v5098 = vadd.f32 %v5097, %v5078
    %v5099 = vadd.f32 %v5098, %v5079
    %v5100 = vadd.f32 %v5099, %v5080
    %v5101 = vadd.f32 %v5100, %v5081
    %v5102 = vadd.f32 %v5101, %v5082
    %v5103 = vadd.f32 %v5102, %v5083
    %v5104 = vadd.f32 %v5103, %v5084
    %v5105 = vadd.f32 %v5104, %v5085
    %v5106 = vadd.f32 %v5105, %v5086
    %v5107 = vadd.f32 %v5106, %v5087
    %v5108 = vadd.f32 %v5107, %v5088
    %v5109 = vadd.f32 %v5108, %v5089
    %v5110 = vrot.slane %v5109, 4
    %v5111 = vadd.f32 %v5109, %v5110
    %v5112 = vrot.slane %v5111, 2
    %v5113 = vadd.f32 %v5111, %v5112
    %v5114 = vrot.slane %v5113, 1
    %v5115 = vadd.f32 %v5113, %v5114
    %v5116 = vmul.f32 %v5115, 0.0061728396
    %v5117 = vadd.f32 %v5116, 1e-05
    %v5118 = vrsqrt.pop %v5117
    %v5119 = vmul.f32 %v5027, %v5118
    %v5120 = vmul.f32 %v5028, %v5118
    %v5121 = vmul.f32 %v5029, %v5118
    %v5122 = vmul.f32 %v5030, %v5118
    %v5123 = vmul.f32 %v5031, %v5118
    %v5124 = vmul.f32 %v5032, %v5118
    %v5125 = vmul.f32 %v5033, %v5118
    %v5126 = vmul.f32 %v5034, %v5118
    %v5127 = vmul.f32 %v5035, %v5118
    %v5128 = vmul.f32 %v5036, %v5118
    %v5129 = vmul.f32 %v5037, %v5118
    %v5130 = vmul.f32 %v5038, %v5118
    %v5131 = vmul.f32 %v5039, %v5118
    %v5132 = vmul.f32 %v5040, %v5118
    %v5133 = vmul.f32 %v5041, %v5118
    %v5134 = vmul.f32 %v5042, %v5118
    %v5135 = vmul.f32 %v5043, %v5118
    %v5136 = vmul.f32 %v5044, %v5118
    %v5137 = vmul.f32 %v5045, %v5118
    %v5138 = vmul.f32 %v5046, %v5118
    %v5139 = vmul.f32 %v5047, %v5118
    %v5141 = vlaneseq
    %v5142 = vshrl.u32 %v5141, 7
    %v5143 = vsub.s32 0, %v5142
    %v5144 = vrot.slane %v4997, %v5143
    %v5146 = vmul.f32 %v5119, %v5144
    %v5147 = vmul.f32 %v5120, %v5144
    %v5148 = vmul.f32 %v5121, %v5144
    %v5149 = vmul.f32 %v5122, %v5144
    %v5150 = vmul.f32 %v5123, %v5144
    %v5151 = vmul.f32 %v5124, %v5144
    %v5152 = vmul.f32 %v5125, %v5144
    %v5153 = vmul.f32 %v5126, %v5144
    %v5154 = vmul.f32 %v5127, %v5144
    %v5155 = vmul.f32 %v5128, %v5144
    %v5156 = vmul.f32 %v5129, %v5144
    %v5157 = vmul.f32 %v5130, %v5144
    %v5158 = vmul.f32 %v5131, %v5144
    %v5159 = vmul.f32 %v5132, %v5144
    %v5160 = vmul.f32 %v5133, %v5144
    %v5161 = vmul.f32 %v5134, %v5144
    %v5162 = vmul.f32 %v5135, %v5144
    %v5163 = vmul.f32 %v5136, %v5144
    %v5164 = vmul.f32 %v5137, %v5144
    %v5165 = vmul.f32 %v5138, %v5144
    %v5166 = vmul.f32 %v5139, %v5144
    %v5168 = vlaneseq
    %v5169 = vshrl.u32 %v5168, 7
    %v5170 = vsub.s32 0, %v5169
    %v5171 = vrot.slane %v4999, %v5170
    %v5173 = vadd.f32 %v5146, %v5171
    %v5174 = vadd.f32 %v5147, %v5171
    %v5175 = vadd.f32 %v5148, %v5171
    %v5176 = vadd.f32 %v5149, %v5171
    %v5177 = vadd.f32 %v5150, %v5171
    %v5178 = vadd.f32 %v5151, %v5171
    %v5179 = vadd.f32 %v5152, %v5171
    %v5180 = vadd.f32 %v5153, %v5171
    %v5181 = vadd.f32 %v5154, %v5171
    %v5182 = vadd.f32 %v5155, %v5171
    %v5183 = vadd.f32 %v5156, %v5171
    %v5184 = vadd.f32 %v5157, %v5171
    %v5185 = vadd.f32 %v5158, %v5171
    %v5186 = vadd.f32 %v5159, %v5171
    %v5187 = vadd.f32 %v5160, %v5171
    %v5188 = vadd.f32 %v5161, %v5171
    %v5189 = vadd.f32 %v5162, %v5171
    %v5190 = vadd.f32 %v5163, %v5171
    %v5191 = vadd.f32 %v5164, %v5171
    %v5192 = vadd.f32 %v5165, %v5171
    %v5193 = vadd.f32 %v5166, %v5171
    %v5194 = vmax.f32 %v5173, 0.0
    %v5195 = vmax.f32 %v5174, 0.0
    %v5196 = vmax.f32 %v5175, 0.0
    %v5197 = vmax.f32 %v5176, 0.0
    %v5198 = vmax.f32 %v5177, 0.0
    %v5199 = vmax.f32 %v5178, 0.0
    %v5200 = vmax.f32 %v5179, 0.0
    %v5201 = vmax.f32 %v5180, 0.0
    %v5202 = vmax.f32 %v5181, 0.0
    %v5203 = vmax.f32 %v5182, 0.0
    %v5204 = vmax.f32 %v5183, 0.0
    %v5205 = vmax.f32 %v5184, 0.0
    %v5206 = vmax.f32 %v5185, 0.0
    %v5207 = vmax.f32 %v5186, 0.0
    %v5208 = vmax.f32 %v5187, 0.0
    %v5209 = vmax.f32 %v5188, 0.0
    %v5210 = vmax.f32 %v5189, 0.0
    %v5211 = vmax.f32 %v5190, 0.0
    %v5212 = vmax.f32 %v5191, 0.0
    %v5213 = vmax.f32 %v5192, 0.0
    %v5214 = vmax.f32 %v5193, 0.0
    %s5215 = smul.u32 %s4995, 144
    %s5216 = smul.addr %s5215, 4
    %s5217 = scalar_lea.vmem %s2, %s5216
    %v5218 = vld [vmem:[%s5217] sm:$0xf]
    %v5219 = vld [vmem:[%s5217 + $0x4] sm:$0xf]
    %v5220 = vld [vmem:[%s5217 + $0x8] sm:$0xf]
    %v5221 = vld [vmem:[%s5217 + $0xc] sm:$0xf]
    %v5222 = vld [vmem:[%s5217 + $0x10] sm:$0xf]
    %v5223 = vld [vmem:[%s5217 + $0x14] sm:$0xf]
    %v5224 = vld [vmem:[%s5217 + $0x18] sm:$0xf]
    %v5225 = vld [vmem:[%s5217 + $0x1c] sm:$0xf]
    %v5226 = vld [vmem:[%s5217 + $0x20] sm:$0xf]
    %v5227 = vld [vmem:[%s5217 + $0x24] sm:$0xf]
    %v5228 = vld [vmem:[%s5217 + $0x28] sm:$0xf]
    %v5229 = vld [vmem:[%s5217 + $0x2c] sm:$0xf]
    %v5230 = vld [vmem:[%s5217 + $0x30] sm:$0xf]
    %v5231 = vld [vmem:[%s5217 + $0x34] sm:$0xf]
    %v5232 = vld [vmem:[%s5217 + $0x38] sm:$0xf]
    %v5233 = vld [vmem:[%s5217 + $0x3c] sm:$0xf]
    %v5234 = vld [vmem:[%s5217 + $0x40] sm:$0xf]
    %v5235 = vld [vmem:[%s5217 + $0x44] sm:$0xf]
    %v5236 = vld [vmem:[%s5217 + $0x48] sm:$0xf]
    %v5237 = vld [vmem:[%s5217 + $0x4c] sm:$0xf]
    %v5238 = vld [vmem:[%s5217 + $0x50] sm:$0xf]
    %v5239 = vld [vmem:[%s5217 + $0x54] sm:$0xf]
    %v5240 = vld [vmem:[%s5217 + $0x58] sm:$0xf]
    %v5241 = vld [vmem:[%s5217 + $0x5c] sm:$0xf]
    %v5242 = vld [vmem:[%s5217 + $0x60] sm:$0xf]
    %v5243 = vld [vmem:[%s5217 + $0x64] sm:$0xf]
    %v5244 = vld [vmem:[%s5217 + $0x68] sm:$0xf]
    %v5245 = vld [vmem:[%s5217 + $0x6c] sm:$0xf]
    %v5246 = vld [vmem:[%s5217 + $0x70] sm:$0xf]
    %v5247 = vld [vmem:[%s5217 + $0x74] sm:$0xf]
    %v5248 = vld [vmem:[%s5217 + $0x78] sm:$0xf]
    %v5249 = vld [vmem:[%s5217 + $0x7c] sm:$0xf]
    %v5250 = vld [vmem:[%s5217 + $0x80] sm:$0xf]
    %v5251 = vld [vmem:[%s5217 + $0x84] sm:$0xf]
    %v5252 = vld [vmem:[%s5217 + $0x88] sm:$0xf]
    %v5253 = vld [vmem:[%s5217 + $0x8c] sm:$0xf]
    %v5254 = vld [vmem:[%s5217 + $0x90] sm:$0xf]
    %v5255 = vld [vmem:[%s5217 + $0x94] sm:$0xf]
    %v5256 = vld [vmem:[%s5217 + $0x98] sm:$0xf]
    %v5257 = vld [vmem:[%s5217 + $0x9c] sm:$0xf]
    %v5258 = vld [vmem:[%s5217 + $0xa0] sm:$0xf]
    %v5259 = vld [vmem:[%s5217 + $0xa4] sm:$0xf]
    %v5260 = vld [vmem:[%s5217 + $0xa8] sm:$0xf]
    %v5261 = vld [vmem:[%s5217 + $0xac] sm:$0xf]
    %v5262 = vld [vmem:[%s5217 + $0xb0] sm:$0xf]
    %v5263 = vld [vmem:[%s5217 + $0xb4] sm:$0xf]
    %v5264 = vld [vmem:[%s5217 + $0xb8] sm:$0xf]
    %v5265 = vld [vmem:[%s5217 + $0xbc] sm:$0xf]
    %v5266 = vld [vmem:[%s5217 + $0xc0] sm:$0xf]
    %v5267 = vld [vmem:[%s5217 + $0xc4] sm:$0xf]
    %v5268 = vld [vmem:[%s5217 + $0xc8] sm:$0xf]
    %v5269 = vld [vmem:[%s5217 + $0xcc] sm:$0xf]
    %v5270 = vld [vmem:[%s5217 + $0xd0] sm:$0xf]
    %v5271 = vld [vmem:[%s5217 + $0xd4] sm:$0xf]
    %v5272 = vld [vmem:[%s5217 + $0xd8] sm:$0xf]
    %v5273 = vld [vmem:[%s5217 + $0xdc] sm:$0xf]
    %v5274 = vld [vmem:[%s5217 + $0xe0] sm:$0xf]
    %v5275 = vld [vmem:[%s5217 + $0xe4] sm:$0xf]
    %v5276 = vld [vmem:[%s5217 + $0xe8] sm:$0xf]
    %v5277 = vld [vmem:[%s5217 + $0xec] sm:$0xf]
    %v5278 = vld [vmem:[%s5217 + $0xf0] sm:$0xf]
    %v5279 = vld [vmem:[%s5217 + $0xf4] sm:$0xf]
    %v5280 = vld [vmem:[%s5217 + $0xf8] sm:$0xf]
    %v5281 = vld [vmem:[%s5217 + $0xfc] sm:$0xf]
    %v5282 = vld [vmem:[%s5217 + $0x100] sm:$0xf]
    %v5283 = vld [vmem:[%s5217 + $0x104] sm:$0xf]
    %v5284 = vld [vmem:[%s5217 + $0x108] sm:$0xf]
    %v5285 = vld [vmem:[%s5217 + $0x10c] sm:$0xf]
    %v5286 = vld [vmem:[%s5217 + $0x110] sm:$0xf]
    %v5287 = vld [vmem:[%s5217 + $0x114] sm:$0xf]
    %v5288 = vld [vmem:[%s5217 + $0x118] sm:$0xf]
    %v5289 = vld [vmem:[%s5217 + $0x11c] sm:$0xf]
    %v5290 = vld [vmem:[%s5217 + $0x120] sm:$0xf]
    %v5291 = vld [vmem:[%s5217 + $0x124] sm:$0xf]
    %v5292 = vld [vmem:[%s5217 + $0x128] sm:$0xf]
    %v5293 = vld [vmem:[%s5217 + $0x12c] sm:$0xf]
    %v5294 = vld [vmem:[%s5217 + $0x130] sm:$0xf]
    %v5295 = vld [vmem:[%s5217 + $0x134] sm:$0xf]
    %v5296 = vld [vmem:[%s5217 + $0x138] sm:$0xf]
    %v5297 = vld [vmem:[%s5217 + $0x13c] sm:$0xf]
    %v5298 = vld [vmem:[%s5217 + $0x140] sm:$0xf]
    %v5299 = vld [vmem:[%s5217 + $0x144] sm:$0xf]
    %v5300 = vld [vmem:[%s5217 + $0x148] sm:$0xf]
    %v5301 = vld [vmem:[%s5217 + $0x14c] sm:$0xf]
    %v5302 = vld [vmem:[%s5217 + $0x150] sm:$0xf]
    %v5303 = vld [vmem:[%s5217 + $0x154] sm:$0xf]
    %v5304 = vld [vmem:[%s5217 + $0x158] sm:$0xf]
    %v5305 = vld [vmem:[%s5217 + $0x15c] sm:$0xf]
    %v5306 = vld [vmem:[%s5217 + $0x160] sm:$0xf]
    %v5307 = vld [vmem:[%s5217 + $0x164] sm:$0xf]
    %v5308 = vld [vmem:[%s5217 + $0x168] sm:$0xf]
    %v5309 = vld [vmem:[%s5217 + $0x16c] sm:$0xf]
    %v5310 = vld [vmem:[%s5217 + $0x170] sm:$0xf]
    %v5311 = vld [vmem:[%s5217 + $0x174] sm:$0xf]
    %v5312 = vld [vmem:[%s5217 + $0x178] sm:$0xf]
    %v5313 = vld [vmem:[%s5217 + $0x17c] sm:$0xf]
    %v5314 = vld [vmem:[%s5217 + $0x180] sm:$0xf]
    %v5315 = vld [vmem:[%s5217 + $0x184] sm:$0xf]
    %v5316 = vld [vmem:[%s5217 + $0x188] sm:$0xf]
    %v5317 = vld [vmem:[%s5217 + $0x18c] sm:$0xf]
    %v5318 = vld [vmem:[%s5217 + $0x190] sm:$0xf]
    %v5319 = vld [vmem:[%s5217 + $0x194] sm:$0xf]
    %v5320 = vld [vmem:[%s5217 + $0x198] sm:$0xf]
    %v5321 = vld [vmem:[%s5217 + $0x19c] sm:$0xf]
    %v5322 = vld [vmem:[%s5217 + $0x1a0] sm:$0xf]
    %v5323 = vld [vmem:[%s5217 + $0x1a4] sm:$0xf]
    %v5324 = vld [vmem:[%s5217 + $0x1a8] sm:$0xf]
    %v5325 = vld [vmem:[%s5217 + $0x1ac] sm:$0xf]
    %v5326 = vld [vmem:[%s5217 + $0x1b0] sm:$0xf]
    %v5327 = vld [vmem:[%s5217 + $0x1b4] sm:$0xf]
    %v5328 = vld [vmem:[%s5217 + $0x1b8] sm:$0xf]
    %v5329 = vld [vmem:[%s5217 + $0x1bc] sm:$0xf]
    %v5330 = vld [vmem:[%s5217 + $0x1c0] sm:$0xf]
    %v5331 = vld [vmem:[%s5217 + $0x1c4] sm:$0xf]
    %v5332 = vld [vmem:[%s5217 + $0x1c8] sm:$0xf]
    %v5333 = vld [vmem:[%s5217 + $0x1cc] sm:$0xf]
    %v5334 = vld [vmem:[%s5217 + $0x1d0] sm:$0xf]
    %v5335 = vld [vmem:[%s5217 + $0x1d4] sm:$0xf]
    %v5336 = vld [vmem:[%s5217 + $0x1d8] sm:$0xf]
    %v5337 = vld [vmem:[%s5217 + $0x1dc] sm:$0xf]
    %v5338 = vld [vmem:[%s5217 + $0x1e0] sm:$0xf]
    %v5339 = vld [vmem:[%s5217 + $0x1e4] sm:$0xf]
    %v5340 = vld [vmem:[%s5217 + $0x1e8] sm:$0xf]
    %v5341 = vld [vmem:[%s5217 + $0x1ec] sm:$0xf]
    %v5342 = vld [vmem:[%s5217 + $0x1f0] sm:$0xf]
    %v5343 = vld [vmem:[%s5217 + $0x1f4] sm:$0xf]
    %v5344 = vld [vmem:[%s5217 + $0x1f8] sm:$0xf]
    %v5345 = vld [vmem:[%s5217 + $0x1fc] sm:$0xf]
    %v5346 = vld [vmem:[%s5217 + $0x200] sm:$0xf]
    %v5347 = vld [vmem:[%s5217 + $0x204] sm:$0xf]
    %v5348 = vld [vmem:[%s5217 + $0x208] sm:$0xf]
    %v5349 = vld [vmem:[%s5217 + $0x20c] sm:$0xf]
    %v5350 = vld [vmem:[%s5217 + $0x210] sm:$0xf]
    %v5351 = vld [vmem:[%s5217 + $0x214] sm:$0xf]
    %v5352 = vld [vmem:[%s5217 + $0x218] sm:$0xf]
    %v5353 = vld [vmem:[%s5217 + $0x21c] sm:$0xf]
    %v5354 = vld [vmem:[%s5217 + $0x220] sm:$0xf]
    %v5355 = vld [vmem:[%s5217 + $0x224] sm:$0xf]
    %v5356 = vld [vmem:[%s5217 + $0x228] sm:$0xf]
    %v5357 = vld [vmem:[%s5217 + $0x22c] sm:$0xf]
    %v5358 = vld [vmem:[%s5217 + $0x230] sm:$0xf]
    %v5359 = vld [vmem:[%s5217 + $0x234] sm:$0xf]
    %v5360 = vld [vmem:[%s5217 + $0x238] sm:$0xf]
    %v5361 = vld [vmem:[%s5217 + $0x23c] sm:$0xf]
    %5362 = vst [vmem:[#allocation2 + $0x10] sm:$0xff] %v5194
    %5363 = vst [vmem:[#allocation2 + $0x18] sm:$0xff] %v5195
    %5364 = vst [vmem:[#allocation2 + $0x20] sm:$0xff] %v5196
    %5365 = vst [vmem:[#allocation2 + $0x28] sm:$0xff] %v5197
    %5366 = vst [vmem:[#allocation2 + $0x30] sm:$0xff] %v5198
    %5367 = vst [vmem:[#allocation2 + $0x38] sm:$0xff] %v5199
    %5368 = vst [vmem:[#allocation2 + $0x40] sm:$0xff] %v5200
    %5369 = vst [vmem:[#allocation2 + $0x48] sm:$0xff] %v5201
    %5370 = vst [vmem:[#allocation2 + $0x50] sm:$0xff] %v5202
    %5371 = vst [vmem:[#allocation2 + $0x58] sm:$0xff] %v5203
    %5372 = vst [vmem:[#allocation2 + $0x60] sm:$0xff] %v5204
    %5373 = vst [vmem:[#allocation2 + $0x68] sm:$0xff] %v5205
    %5374 = vst [vmem:[#allocation2 + $0x70] sm:$0xff] %v5206
    %5375 = vst [vmem:[#allocation2 + $0x78] sm:$0xff] %v5207
    %5376 = vst [vmem:[#allocation2 + $0x80] sm:$0xff] %v5208
    %5377 = vst [vmem:[#allocation2 + $0x88] sm:$0xff] %v5209
    %5378 = vst [vmem:[#allocation2 + $0x90] sm:$0xff] %v5210
    %5379 = vst [vmem:[#allocation2 + $0x98] sm:$0xff] %v5211
    %5380 = vst [vmem:[#allocation2 + $0xa0] sm:$0xff] %v5212
    %5381 = vst [vmem:[#allocation2 + $0xa8] sm:$0xff] %v5213
    %5382 = vst [vmem:[#allocation2 + $0xb0] sm:$0xff] %v5214
    %v5383 = vld [vmem:[#allocation2 + $0x6] sm:$0xff]
    %v5384 = vld [vmem:[#allocation2 + $0xe] sm:$0xff]
    %v5385 = vld [vmem:[#allocation2 + $0x16] sm:$0xff]
    %v5386 = vld [vmem:[#allocation2 + $0x1e] sm:$0xff]
    %v5387 = vld [vmem:[#allocation2 + $0x26] sm:$0xff]
    %v5388 = vld [vmem:[#allocation2 + $0x2e] sm:$0xff]
    %v5389 = vld [vmem:[#allocation2 + $0x36] sm:$0xff]
    %v5390 = vld [vmem:[#allocation2 + $0x3e] sm:$0xff]
    %v5391 = vld [vmem:[#allocation2 + $0x46] sm:$0xff]
    %v5392 = vld [vmem:[#allocation2 + $0x4e] sm:$0xff]
    %v5393 = vld [vmem:[#allocation2 + $0x56] sm:$0xff]
    %v5394 = vld [vmem:[#allocation2 + $0x5e] sm:$0xff]
    %v5395 = vld [vmem:[#allocation2 + $0x66] sm:$0xff]
    %v5396 = vld [vmem:[#allocation2 + $0x6e] sm:$0xff]
    %v5397 = vld [vmem:[#allocation2 + $0x76] sm:$0xff]
    %v5398 = vld [vmem:[#allocation2 + $0x7e] sm:$0xff]
    %v5399 = vld [vmem:[#allocation2 + $0x86] sm:$0xff]
    %v5400 = vld [vmem:[#allocation2 + $0x8e] sm:$0xff]
    %v5401 = vld [vmem:[#allocation2 + $0x96] sm:$0xff]
    %v5402 = vld [vmem:[#allocation2 + $0x9e] sm:$0xff]
    %v5403 = vld [vmem:[#allocation2 + $0xa6] sm:$0xff]
    %v5404 = vld [vmem:[%s5] sm:$0xff]
    %v5405 = vld [vmem:[%s5 + $0x8] sm:$0xff]
    %v5406 = vld [vmem:[%s5 + $0x10] sm:$0xff]
    %v5407 = vld [vmem:[%s5 + $0x18] sm:$0xff]
    %v5408 = vld [vmem:[%s5 + $0x20] sm:$0xff]
    %v5409 = vld [vmem:[%s5 + $0x28] sm:$0xff]
    %v5410 = vld [vmem:[%s5 + $0x30] sm:$0xff]
    %v5411 = vld [vmem:[%s5 + $0x38] sm:$0xff]
    %v5412 = vld [vmem:[%s5 + $0x40] sm:$0xff]
    %v5413 = vld [vmem:[%s5 + $0x48] sm:$0xff]
    %v5414 = vld [vmem:[%s5 + $0x50] sm:$0xff]
    %v5415 = vld [vmem:[%s5 + $0x58] sm:$0xff]
    %v5416 = vld [vmem:[%s5 + $0x60] sm:$0xff]
    %v5417 = vld [vmem:[%s5 + $0x68] sm:$0xff]
    %v5418 = vld [vmem:[%s5 + $0x70] sm:$0xff]
    %v5419 = vld [vmem:[%s5 + $0x78] sm:$0xff]
    %v5420 = vld [vmem:[%s5 + $0x80] sm:$0xff]
    %v5421 = vld [vmem:[%s5 + $0x88] sm:$0xff]
    %v5422 = vld [vmem:[%s5 + $0x90] sm:$0xff]
    %v5423 = vld [vmem:[%s5 + $0x98] sm:$0xff]
    %v5424 = vld [vmem:[%s5 + $0xa0] sm:$0xff]
    %5426 = vset.pattern.permute.xlu0 0
    %5427 = vperm.xlu0 %5426, %v5404
    %v5428 = vpop.permute.xlu0 %5427
    %5431 = vset.pattern.permute.xlu0 0
    %5432 = vperm.xlu0 %5431, %v5405
    %v5433 = vpop.permute.xlu0 %5432
    %5436 = vset.pattern.permute.xlu0 0
    %5437 = vperm.xlu0 %5436, %v5406
    %v5438 = vpop.permute.xlu0 %5437
    %5441 = vset.pattern.permute.xlu0 0
    %5442 = vperm.xlu0 %5441, %v5407
    %v5443 = vpop.permute.xlu0 %5442
    %5446 = vset.pattern.permute.xlu0 0
    %5447 = vperm.xlu0 %5446, %v5408
    %v5448 = vpop.permute.xlu0 %5447
    %5451 = vset.pattern.permute.xlu0 0
    %5452 = vperm.xlu0 %5451, %v5409
    %v5453 = vpop.permute.xlu0 %5452
    %5456 = vset.pattern.permute.xlu0 0
    %5457 = vperm.xlu0 %5456, %v5410
    %v5458 = vpop.permute.xlu0 %5457
    %5461 = vset.pattern.permute.xlu0 0
    %5462 = vperm.xlu0 %5461, %v5411
    %v5463 = vpop.permute.xlu0 %5462
    %5466 = vset.pattern.permute.xlu0 0
    %5467 = vperm.xlu0 %5466, %v5412
    %v5468 = vpop.permute.xlu0 %5467
    %5471 = vset.pattern.permute.xlu0 0
    %5472 = vperm.xlu0 %5471, %v5413
    %v5473 = vpop.permute.xlu0 %5472
    %5476 = vset.pattern.permute.xlu0 0
    %5477 = vperm.xlu0 %5476, %v5414
    %v5478 = vpop.permute.xlu0 %5477
    %5481 = vset.pattern.permute.xlu0 0
    %5482 = vperm.xlu0 %5481, %v5415
    %v5483 = vpop.permute.xlu0 %5482
    %5486 = vset.pattern.permute.xlu0 0
    %5487 = vperm.xlu0 %5486, %v5416
    %v5488 = vpop.permute.xlu0 %5487
    %5491 = vset.pattern.permute.xlu0 0
    %5492 = vperm.xlu0 %5491, %v5417
    %v5493 = vpop.permute.xlu0 %5492
    %5496 = vset.pattern.permute.xlu0 0
    %5497 = vperm.xlu0 %5496, %v5418
    %v5498 = vpop.permute.xlu0 %5497
    %5501 = vset.pattern.permute.xlu0 0
    %5502 = vperm.xlu0 %5501, %v5419
    %v5503 = vpop.permute.xlu0 %5502
    %5506 = vset.pattern.permute.xlu0 0
    %5507 = vperm.xlu0 %5506, %v5420
    %v5508 = vpop.permute.xlu0 %5507
    %5511 = vset.pattern.permute.xlu0 0
    %5512 = vperm.xlu0 %5511, %v5421
    %v5513 = vpop.permute.xlu0 %5512
    %5516 = vset.pattern.permute.xlu0 0
    %5517 = vperm.xlu0 %5516, %v5422
    %v5518 = vpop.permute.xlu0 %5517
    %5521 = vset.pattern.permute.xlu0 0
    %5522 = vperm.xlu0 %5521, %v5423
    %v5523 = vpop.permute.xlu0 %5522
    %5526 = vset.pattern.permute.xlu0 0
    %5527 = vperm.xlu0 %5526, %v5424
    %v5528 = vpop.permute.xlu0 %5527
    %v5530 = vmul.f32 %v5383, %v5428
    %v5531 = vmul.f32 %v5384, %v5433
    %v5532 = vmul.f32 %v5385, %v5438
    %v5533 = vmul.f32 %v5386, %v5443
    %v5534 = vmul.f32 %v5387, %v5448
    %v5535 = vmul.f32 %v5388, %v5453
    %v5536 = vmul.f32 %v5389, %v5458
    %v5537 = vmul.f32 %v5390, %v5463
    %v5538 = vmul.f32 %v5391, %v5468
    %v5539 = vmul.f32 %v5392, %v5473
    %v5540 = vmul.f32 %v5393, %v5478
    %v5541 = vmul.f32 %v5394, %v5483
    %v5542 = vmul.f32 %v5395, %v5488
    %v5543 = vmul.f32 %v5396, %v5493
    %v5544 = vmul.f32 %v5397, %v5498
    %v5545 = vmul.f32 %v5398, %v5503
    %v5546 = vmul.f32 %v5399, %v5508
    %v5547 = vmul.f32 %v5400, %v5513
    %v5548 = vmul.f32 %v5401, %v5518
    %v5549 = vmul.f32 %v5402, %v5523
    %v5550 = vmul.f32 %v5403, %v5528
    %v5551 = vpack.c.bf16 %v5531, %v5530
    %v5552 = vpack.c.bf16 %v5533, %v5532
    %v5553 = vpack.c.bf16 %v5535, %v5534
    %v5554 = vpack.c.bf16 %v5537, %v5536
    %v5555 = vpack.c.bf16 %v5539, %v5538
    %v5556 = vpack.c.bf16 %v5541, %v5540
    %v5557 = vpack.c.bf16 %v5543, %v5542
    %v5558 = vpack.c.bf16 %v5545, %v5544
    %v5559 = vpack.c.bf16 %v5547, %v5546
    %v5560 = vpack.c.bf16 %v5549, %v5548
    %v5561 = vpack.c.bf16 %v5550, %v5550
    %v5573 = vunpack.c.l.b16 %v5551
    %v5574 = vunpack.c.h.b16 %v5551
    %v5575 = vunpack.c.l.b16 %v5552
    %v5576 = vunpack.c.h.b16 %v5552
    %v5577 = vunpack.c.l.b16 %v5553
    %v5578 = vunpack.c.h.b16 %v5553
    %v5579 = vunpack.c.l.b16 %v5554
    %v5580 = vunpack.c.h.b16 %v5554
    %v5581 = vunpack.c.l.b16 %v5555
    %v5582 = vunpack.c.h.b16 %v5555
    %v5583 = vunpack.c.l.b16 %v5556
    %v5584 = vunpack.c.h.b16 %v5556
    %v5585 = vunpack.c.l.b16 %v5557
    %v5586 = vunpack.c.h.b16 %v5557
    %v5587 = vunpack.c.l.b16 %v5558
    %v5588 = vunpack.c.h.b16 %v5558
    %v5589 = vunpack.c.l.b16 %v5559
    %v5590 = vunpack.c.h.b16 %v5559
    %v5591 = vunpack.c.l.b16 %v5560
    %v5592 = vunpack.c.h.b16 %v5560
    %v5593 = vunpack.c.l.b16 %v5561
    %v5594 = vpack.c.b16 %v5573, %v5573
    %v5595 = vpack.c.b16 %v5574, %v5574
    %v5596 = vpack.c.b16 %v5575, %v5575
    %v5597 = vpack.c.b16 %v5576, %v5576
    %v5598 = vpack.c.b16 %v5577, %v5577
    %v5599 = vpack.c.b16 %v5578, %v5578
    %v5600 = vpack.c.b16 %v5579, %v5579
    %v5601 = vpack.c.b16 %v5580, %v5580
    %v5602 = vpack.c.b16 %v5581, %v5581
    %v5603 = vpack.c.b16 %v5582, %v5582
    %v5604 = vpack.c.b16 %v5583, %v5583
    %v5605 = vpack.c.b16 %v5584, %v5584
    %v5606 = vpack.c.b16 %v5585, %v5585
    %v5607 = vpack.c.b16 %v5586, %v5586
    %v5608 = vpack.c.b16 %v5587, %v5587
    %v5609 = vpack.c.b16 %v5588, %v5588
    %v5610 = vpack.c.b16 %v5589, %v5589
    %v5611 = vpack.c.b16 %v5590, %v5590
    %v5612 = vpack.c.b16 %v5591, %v5591
    %v5613 = vpack.c.b16 %v5592, %v5592
    %v5614 = vpack.c.b16 %v5593, %v5593
    %5636 = vst [vmem:[#allocation3] sm:$0xf] %v5594
    %5637 = vst [vmem:[#allocation3 + $0x24] sm:$0xf] %v5595
    %5638 = vst [vmem:[#allocation3 + $0x48] sm:$0xf] %v5596
    %5639 = vst [vmem:[#allocation3 + $0x6c] sm:$0xf] %v5597
    %5640 = vst [vmem:[#allocation3 + $0x90] sm:$0xf] %v5598
    %5641 = vst [vmem:[#allocation3 + $0xb4] sm:$0xf] %v5599
    %5642 = vst [vmem:[#allocation3 + $0xd8] sm:$0xf] %v5600
    %5643 = vst [vmem:[#allocation3 + $0xfc] sm:$0xf] %v5601
    %5644 = vst [vmem:[#allocation3 + $0x120] sm:$0xf] %v5602
    %5645 = vst [vmem:[#allocation3 + $0x144] sm:$0xf] %v5603
    %5646 = vst [vmem:[#allocation3 + $0x168] sm:$0xf] %v5604
    %5647 = vst [vmem:[#allocation3 + $0x18c] sm:$0xf] %v5605
    %5648 = vst [vmem:[#allocation3 + $0x1b0] sm:$0xf] %v5606
    %5649 = vst [vmem:[#allocation3 + $0x1d4] sm:$0xf] %v5607
    %5650 = vst [vmem:[#allocation3 + $0x1f8] sm:$0xf] %v5608
    %5651 = vst [vmem:[#allocation3 + $0x21c] sm:$0xf] %v5609
    %5652 = vst [vmem:[#allocation3 + $0x240] sm:$0xf] %v5610
    %5653 = vst [vmem:[#allocation3 + $0x264] sm:$0xf] %v5611
    %5654 = vst [vmem:[#allocation3 + $0x288] sm:$0xf] %v5612
    %5655 = vst [vmem:[#allocation3 + $0x2ac] sm:$0xf] %v5613
    %5656 = vst [vmem:[#allocation3 + $0x2d0] sm:$0xf] %v5614
    %v5657 = vld [vmem:[#allocation2 + $0x7] sm:$0xff]
    %v5658 = vld [vmem:[#allocation2 + $0xf] sm:$0xff]
    %v5659 = vld [vmem:[#allocation2 + $0x17] sm:$0xff]
    %v5660 = vld [vmem:[#allocation2 + $0x1f] sm:$0xff]
    %v5661 = vld [vmem:[#allocation2 + $0x27] sm:$0xff]
    %v5662 = vld [vmem:[#allocation2 + $0x2f] sm:$0xff]
    %v5663 = vld [vmem:[#allocation2 + $0x37] sm:$0xff]
    %v5664 = vld [vmem:[#allocation2 + $0x3f] sm:$0xff]
    %v5665 = vld [vmem:[#allocation2 + $0x47] sm:$0xff]
    %v5666 = vld [vmem:[#allocation2 + $0x4f] sm:$0xff]
    %v5667 = vld [vmem:[#allocation2 + $0x57] sm:$0xff]
    %v5668 = vld [vmem:[#allocation2 + $0x5f] sm:$0xff]
    %v5669 = vld [vmem:[#allocation2 + $0x67] sm:$0xff]
    %v5670 = vld [vmem:[#allocation2 + $0x6f] sm:$0xff]
    %v5671 = vld [vmem:[#allocation2 + $0x77] sm:$0xff]
    %v5672 = vld [vmem:[#allocation2 + $0x7f] sm:$0xff]
    %v5673 = vld [vmem:[#allocation2 + $0x87] sm:$0xff]
    %v5674 = vld [vmem:[#allocation2 + $0x8f] sm:$0xff]
    %v5675 = vld [vmem:[#allocation2 + $0x97] sm:$0xff]
    %v5676 = vld [vmem:[#allocation2 + $0x9f] sm:$0xff]
    %v5677 = vld [vmem:[#allocation2 + $0xa7] sm:$0xff]
    %v5678 = vld [vmem:[%s1187] sm:$0xff]
    %v5679 = vld [vmem:[%s1187 + $0x8] sm:$0xff]
    %v5680 = vld [vmem:[%s1187 + $0x10] sm:$0xff]
    %v5681 = vld [vmem:[%s1187 + $0x18] sm:$0xff]
    %v5682 = vld [vmem:[%s1187 + $0x20] sm:$0xff]
    %v5683 = vld [vmem:[%s1187 + $0x28] sm:$0xff]
    %v5684 = vld [vmem:[%s1187 + $0x30] sm:$0xff]
    %v5685 = vld [vmem:[%s1187 + $0x38] sm:$0xff]
    %v5686 = vld [vmem:[%s1187 + $0x40] sm:$0xff]
    %v5687 = vld [vmem:[%s1187 + $0x48] sm:$0xff]
    %v5688 = vld [vmem:[%s1187 + $0x50] sm:$0xff]
    %v5689 = vld [vmem:[%s1187 + $0x58] sm:$0xff]
    %v5690 = vld [vmem:[%s1187 + $0x60] sm:$0xff]
    %v5691 = vld [vmem:[%s1187 + $0x68] sm:$0xff]
    %v5692 = vld [vmem:[%s1187 + $0x70] sm:$0xff]
    %v5693 = vld [vmem:[%s1187 + $0x78] sm:$0xff]
    %v5694 = vld [vmem:[%s1187 + $0x80] sm:$0xff]
    %v5695 = vld [vmem:[%s1187 + $0x88] sm:$0xff]
    %v5696 = vld [vmem:[%s1187 + $0x90] sm:$0xff]
    %v5697 = vld [vmem:[%s1187 + $0x98] sm:$0xff]
    %v5698 = vld [vmem:[%s1187 + $0xa0] sm:$0xff]
    %5700 = vset.pattern.permute.xlu0 0
    %5701 = vperm.xlu0 %5700, %v5678
    %v5702 = vpop.permute.xlu0 %5701
    %5705 = vset.pattern.permute.xlu0 0
    %5706 = vperm.xlu0 %5705, %v5679
    %v5707 = vpop.permute.xlu0 %5706
    %5710 = vset.pattern.permute.xlu0 0
    %5711 = vperm.xlu0 %5710, %v5680
    %v5712 = vpop.permute.xlu0 %5711
    %5715 = vset.pattern.permute.xlu0 0
    %5716 = vperm.xlu0 %5715, %v5681
    %v5717 = vpop.permute.xlu0 %5716
    %5720 = vset.pattern.permute.xlu0 0
    %5721 = vperm.xlu0 %5720, %v5682
    %v5722 = vpop.permute.xlu0 %5721
    %5725 = vset.pattern.permute.xlu0 0
    %5726 = vperm.xlu0 %5725, %v5683
    %v5727 = vpop.permute.xlu0 %5726
    %5730 = vset.pattern.permute.xlu0 0
    %5731 = vperm.xlu0 %5730, %v5684
    %v5732 = vpop.permute.xlu0 %5731
    %5735 = vset.pattern.permute.xlu0 0
    %5736 = vperm.xlu0 %5735, %v5685
    %v5737 = vpop.permute.xlu0 %5736
    %5740 = vset.pattern.permute.xlu0 0
    %5741 = vperm.xlu0 %5740, %v5686
    %v5742 = vpop.permute.xlu0 %5741
    %5745 = vset.pattern.permute.xlu0 0
    %5746 = vperm.xlu0 %5745, %v5687
    %v5747 = vpop.permute.xlu0 %5746
    %5750 = vset.pattern.permute.xlu0 0
    %5751 = vperm.xlu0 %5750, %v5688
    %v5752 = vpop.permute.xlu0 %5751
    %5755 = vset.pattern.permute.xlu0 0
    %5756 = vperm.xlu0 %5755, %v5689
    %v5757 = vpop.permute.xlu0 %5756
    %5760 = vset.pattern.permute.xlu0 0
    %5761 = vperm.xlu0 %5760, %v5690
    %v5762 = vpop.permute.xlu0 %5761
    %5765 = vset.pattern.permute.xlu0 0
    %5766 = vperm.xlu0 %5765, %v5691
    %v5767 = vpop.permute.xlu0 %5766
    %5770 = vset.pattern.permute.xlu0 0
    %5771 = vperm.xlu0 %5770, %v5692
    %v5772 = vpop.permute.xlu0 %5771
    %5775 = vset.pattern.permute.xlu0 0
    %5776 = vperm.xlu0 %5775, %v5693
    %v5777 = vpop.permute.xlu0 %5776
    %5780 = vset.pattern.permute.xlu0 0
    %5781 = vperm.xlu0 %5780, %v5694
    %v5782 = vpop.permute.xlu0 %5781
    %5785 = vset.pattern.permute.xlu0 0
    %5786 = vperm.xlu0 %5785, %v5695
    %v5787 = vpop.permute.xlu0 %5786
    %5790 = vset.pattern.permute.xlu0 0
    %5791 = vperm.xlu0 %5790, %v5696
    %v5792 = vpop.permute.xlu0 %5791
    %5795 = vset.pattern.permute.xlu0 0
    %5796 = vperm.xlu0 %5795, %v5697
    %v5797 = vpop.permute.xlu0 %5796
    %5800 = vset.pattern.permute.xlu0 0
    %5801 = vperm.xlu0 %5800, %v5698
    %v5802 = vpop.permute.xlu0 %5801
    %v5804 = vmul.f32 %v5657, %v5702
    %v5805 = vmul.f32 %v5658, %v5707
    %v5806 = vmul.f32 %v5659, %v5712
    %v5807 = vmul.f32 %v5660, %v5717
    %v5808 = vmul.f32 %v5661, %v5722
    %v5809 = vmul.f32 %v5662, %v5727
    %v5810 = vmul.f32 %v5663, %v5732
    %v5811 = vmul.f32 %v5664, %v5737
    %v5812 = vmul.f32 %v5665, %v5742
    %v5813 = vmul.f32 %v5666, %v5747
    %v5814 = vmul.f32 %v5667, %v5752
    %v5815 = vmul.f32 %v5668, %v5757
    %v5816 = vmul.f32 %v5669, %v5762
    %v5817 = vmul.f32 %v5670, %v5767
    %v5818 = vmul.f32 %v5671, %v5772
    %v5819 = vmul.f32 %v5672, %v5777
    %v5820 = vmul.f32 %v5673, %v5782
    %v5821 = vmul.f32 %v5674, %v5787
    %v5822 = vmul.f32 %v5675, %v5792
    %v5823 = vmul.f32 %v5676, %v5797
    %v5824 = vmul.f32 %v5677, %v5802
    %v5825 = vpack.c.bf16 %v5805, %v5804
    %v5826 = vpack.c.bf16 %v5807, %v5806
    %v5827 = vpack.c.bf16 %v5809, %v5808
    %v5828 = vpack.c.bf16 %v5811, %v5810
    %v5829 = vpack.c.bf16 %v5813, %v5812
    %v5830 = vpack.c.bf16 %v5815, %v5814
    %v5831 = vpack.c.bf16 %v5817, %v5816
    %v5832 = vpack.c.bf16 %v5819, %v5818
    %v5833 = vpack.c.bf16 %v5821, %v5820
    %v5834 = vpack.c.bf16 %v5823, %v5822
    %v5835 = vpack.c.bf16 %v5824, %v5824
    %v5847 = vunpack.c.l.b16 %v5825
    %v5848 = vunpack.c.h.b16 %v5825
    %v5849 = vunpack.c.l.b16 %v5826
    %v5850 = vunpack.c.h.b16 %v5826
    %v5851 = vunpack.c.l.b16 %v5827
    %v5852 = vunpack.c.h.b16 %v5827
    %v5853 = vunpack.c.l.b16 %v5828
    %v5854 = vunpack.c.h.b16 %v5828
    %v5855 = vunpack.c.l.b16 %v5829
    %v5856 = vunpack.c.h.b16 %v5829
    %v5857 = vunpack.c.l.b16 %v5830
    %v5858 = vunpack.c.h.b16 %v5830
    %v5859 = vunpack.c.l.b16 %v5831
    %v5860 = vunpack.c.h.b16 %v5831
    %v5861 = vunpack.c.l.b16 %v5832
    %v5862 = vunpack.c.h.b16 %v5832
    %v5863 = vunpack.c.l.b16 %v5833
    %v5864 = vunpack.c.h.b16 %v5833
    %v5865 = vunpack.c.l.b16 %v5834
    %v5866 = vunpack.c.h.b16 %v5834
    %v5867 = vunpack.c.l.b16 %v5835
    %v5868 = vpack.c.b16 %v5847, %v5847
    %v5869 = vpack.c.b16 %v5848, %v5848
    %v5870 = vpack.c.b16 %v5849, %v5849
    %v5871 = vpack.c.b16 %v5850, %v5850
    %v5872 = vpack.c.b16 %v5851, %v5851
    %v5873 = vpack.c.b16 %v5852, %v5852
    %v5874 = vpack.c.b16 %v5853, %v5853
    %v5875 = vpack.c.b16 %v5854, %v5854
    %v5876 = vpack.c.b16 %v5855, %v5855
    %v5877 = vpack.c.b16 %v5856, %v5856
    %v5878 = vpack.c.b16 %v5857, %v5857
    %v5879 = vpack.c.b16 %v5858, %v5858
    %v5880 = vpack.c.b16 %v5859, %v5859
    %v5881 = vpack.c.b16 %v5860, %v5860
    %v5882 = vpack.c.b16 %v5861, %v5861
    %v5883 = vpack.c.b16 %v5862, %v5862
    %v5884 = vpack.c.b16 %v5863, %v5863
    %v5885 = vpack.c.b16 %v5864, %v5864
    %v5886 = vpack.c.b16 %v5865, %v5865
    %v5887 = vpack.c.b16 %v5866, %v5866
    %v5888 = vpack.c.b16 %v5867, %v5867
    %5910 = vst [vmem:[#allocation3 + $0x4] sm:$0xf] %v5868
    %5911 = vst [vmem:[#allocation3 + $0x28] sm:$0xf] %v5869
    %5912 = vst [vmem:[#allocation3 + $0x4c] sm:$0xf] %v5870
    %5913 = vst [vmem:[#allocation3 + $0x70] sm:$0xf] %v5871
    %5914 = vst [vmem:[#allocation3 + $0x94] sm:$0xf] %v5872
    %5915 = vst [vmem:[#allocation3 + $0xb8] sm:$0xf] %v5873
    %5916 = vst [vmem:[#allocation3 + $0xdc] sm:$0xf] %v5874
    %5917 = vst [vmem:[#allocation3 + $0x100] sm:$0xf] %v5875
    %5918 = vst [vmem:[#allocation3 + $0x124] sm:$0xf] %v5876
    %5919 = vst [vmem:[#allocation3 + $0x148] sm:$0xf] %v5877
    %5920 = vst [vmem:[#allocation3 + $0x16c] sm:$0xf] %v5878
    %5921 = vst [vmem:[#allocation3 + $0x190] sm:$0xf] %v5879
    %5922 = vst [vmem:[#allocation3 + $0x1b4] sm:$0xf] %v5880
    %5923 = vst [vmem:[#allocation3 + $0x1d8] sm:$0xf] %v5881
    %5924 = vst [vmem:[#allocation3 + $0x1fc] sm:$0xf] %v5882
    %5925 = vst [vmem:[#allocation3 + $0x220] sm:$0xf] %v5883
    %5926 = vst [vmem:[#allocation3 + $0x244] sm:$0xf] %v5884
    %5927 = vst [vmem:[#allocation3 + $0x268] sm:$0xf] %v5885
    %5928 = vst [vmem:[#allocation3 + $0x28c] sm:$0xf] %v5886
    %5929 = vst [vmem:[#allocation3 + $0x2b0] sm:$0xf] %v5887
    %5930 = vst [vmem:[#allocation3 + $0x2d4] sm:$0xf] %v5888
    %v5931 = vld [vmem:[#allocation2 + $0x8] sm:$0xff]
    %v5932 = vld [vmem:[#allocation2 + $0x10] sm:$0xff]
    %v5933 = vld [vmem:[#allocation2 + $0x18] sm:$0xff]
    %v5934 = vld [vmem:[#allocation2 + $0x20] sm:$0xff]
    %v5935 = vld [vmem:[#allocation2 + $0x28] sm:$0xff]
    %v5936 = vld [vmem:[#allocation2 + $0x30] sm:$0xff]
    %v5937 = vld [vmem:[#allocation2 + $0x38] sm:$0xff]
    %v5938 = vld [vmem:[#allocation2 + $0x40] sm:$0xff]
    %v5939 = vld [vmem:[#allocation2 + $0x48] sm:$0xff]
    %v5940 = vld [vmem:[#allocation2 + $0x50] sm:$0xff]
    %v5941 = vld [vmem:[#allocation2 + $0x58] sm:$0xff]
    %v5942 = vld [vmem:[#allocation2 + $0x60] sm:$0xff]
    %v5943 = vld [vmem:[#allocation2 + $0x68] sm:$0xff]
    %v5944 = vld [vmem:[#allocation2 + $0x70] sm:$0xff]
    %v5945 = vld [vmem:[#allocation2 + $0x78] sm:$0xff]
    %v5946 = vld [vmem:[#allocation2 + $0x80] sm:$0xff]
    %v5947 = vld [vmem:[#allocation2 + $0x88] sm:$0xff]
    %v5948 = vld [vmem:[#allocation2 + $0x90] sm:$0xff]
    %v5949 = vld [vmem:[#allocation2 + $0x98] sm:$0xff]
    %v5950 = vld [vmem:[#allocation2 + $0xa0] sm:$0xff]
    %v5951 = vld [vmem:[#allocation2 + $0xa8] sm:$0xff]
    %v5952 = vld [vmem:[%s1462] sm:$0xff]
    %v5953 = vld [vmem:[%s1462 + $0x8] sm:$0xff]
    %v5954 = vld [vmem:[%s1462 + $0x10] sm:$0xff]
    %v5955 = vld [vmem:[%s1462 + $0x18] sm:$0xff]
    %v5956 = vld [vmem:[%s1462 + $0x20] sm:$0xff]
    %v5957 = vld [vmem:[%s1462 + $0x28] sm:$0xff]
    %v5958 = vld [vmem:[%s1462 + $0x30] sm:$0xff]
    %v5959 = vld [vmem:[%s1462 + $0x38] sm:$0xff]
    %v5960 = vld [vmem:[%s1462 + $0x40] sm:$0xff]
    %v5961 = vld [vmem:[%s1462 + $0x48] sm:$0xff]
    %v5962 = vld [vmem:[%s1462 + $0x50] sm:$0xff]
    %v5963 = vld [vmem:[%s1462 + $0x58] sm:$0xff]
    %v5964 = vld [vmem:[%s1462 + $0x60] sm:$0xff]
    %v5965 = vld [vmem:[%s1462 + $0x68] sm:$0xff]
    %v5966 = vld [vmem:[%s1462 + $0x70] sm:$0xff]
    %v5967 = vld [vmem:[%s1462 + $0x78] sm:$0xff]
    %v5968 = vld [vmem:[%s1462 + $0x80] sm:$0xff]
    %v5969 = vld [vmem:[%s1462 + $0x88] sm:$0xff]
    %v5970 = vld [vmem:[%s1462 + $0x90] sm:$0xff]
    %v5971 = vld [vmem:[%s1462 + $0x98] sm:$0xff]
    %v5972 = vld [vmem:[%s1462 + $0xa0] sm:$0xff]
    %5974 = vset.pattern.permute.xlu0 0
    %5975 = vperm.xlu0 %5974, %v5952
    %v5976 = vpop.permute.xlu0 %5975
    %5979 = vset.pattern.permute.xlu0 0
    %5980 = vperm.xlu0 %5979, %v5953
    %v5981 = vpop.permute.xlu0 %5980
    %5984 = vset.pattern.permute.xlu0 0
    %5985 = vperm.xlu0 %5984, %v5954
    %v5986 = vpop.permute.xlu0 %5985
    %5989 = vset.pattern.permute.xlu0 0
    %5990 = vperm.xlu0 %5989, %v5955
    %v5991 = vpop.permute.xlu0 %5990
    %5994 = vset.pattern.permute.xlu0 0
    %5995 = vperm.xlu0 %5994, %v5956
    %v5996 = vpop.permute.xlu0 %5995
    %5999 = vset.pattern.permute.xlu0 0
    %6000 = vperm.xlu0 %5999, %v5957
    %v6001 = vpop.permute.xlu0 %6000
    %6004 = vset.pattern.permute.xlu0 0
    %6005 = vperm.xlu0 %6004, %v5958
    %v6006 = vpop.permute.xlu0 %6005
    %6009 = vset.pattern.permute.xlu0 0
    %6010 = vperm.xlu0 %6009, %v5959
    %v6011 = vpop.permute.xlu0 %6010
    %6014 = vset.pattern.permute.xlu0 0
    %6015 = vperm.xlu0 %6014, %v5960
    %v6016 = vpop.permute.xlu0 %6015
    %6019 = vset.pattern.permute.xlu0 0
    %6020 = vperm.xlu0 %6019, %v5961
    %v6021 = vpop.permute.xlu0 %6020
    %6024 = vset.pattern.permute.xlu0 0
    %6025 = vperm.xlu0 %6024, %v5962
    %v6026 = vpop.permute.xlu0 %6025
    %6029 = vset.pattern.permute.xlu0 0
    %6030 = vperm.xlu0 %6029, %v5963
    %v6031 = vpop.permute.xlu0 %6030
    %6034 = vset.pattern.permute.xlu0 0
    %6035 = vperm.xlu0 %6034, %v5964
    %v6036 = vpop.permute.xlu0 %6035
    %6039 = vset.pattern.permute.xlu0 0
    %6040 = vperm.xlu0 %6039, %v5965
    %v6041 = vpop.permute.xlu0 %6040
    %6044 = vset.pattern.permute.xlu0 0
    %6045 = vperm.xlu0 %6044, %v5966
    %v6046 = vpop.permute.xlu0 %6045
    %6049 = vset.pattern.permute.xlu0 0
    %6050 = vperm.xlu0 %6049, %v5967
    %v6051 = vpop.permute.xlu0 %6050
    %6054 = vset.pattern.permute.xlu0 0
    %6055 = vperm.xlu0 %6054, %v5968
    %v6056 = vpop.permute.xlu0 %6055
    %6059 = vset.pattern.permute.xlu0 0
    %6060 = vperm.xlu0 %6059, %v5969
    %v6061 = vpop.permute.xlu0 %6060
    %6064 = vset.pattern.permute.xlu0 0
    %6065 = vperm.xlu0 %6064, %v5970
    %v6066 = vpop.permute.xlu0 %6065
    %6069 = vset.pattern.permute.xlu0 0
    %6070 = vperm.xlu0 %6069, %v5971
    %v6071 = vpop.permute.xlu0 %6070
    %6074 = vset.pattern.permute.xlu0 0
    %6075 = vperm.xlu0 %6074, %v5972
    %v6076 = vpop.permute.xlu0 %6075
    %v6078 = vmul.f32 %v5931, %v5976
    %v6079 = vmul.f32 %v5932, %v5981
    %v6080 = vmul.f32 %v5933, %v5986
    %v6081 = vmul.f32 %v5934, %v5991
    %v6082 = vmul.f32 %v5935, %v5996
    %v6083 = vmul.f32 %v5936, %v6001
    %v6084 = vmul.f32 %v5937, %v6006
    %v6085 = vmul.f32 %v5938, %v6011
    %v6086 = vmul.f32 %v5939, %v6016
    %v6087 = vmul.f32 %v5940, %v6021
    %v6088 = vmul.f32 %v5941, %v6026
    %v6089 = vmul.f32 %v5942, %v6031
    %v6090 = vmul.f32 %v5943, %v6036
    %v6091 = vmul.f32 %v5944, %v6041
    %v6092 = vmul.f32 %v5945, %v6046
    %v6093 = vmul.f32 %v5946, %v6051
    %v6094 = vmul.f32 %v5947, %v6056
    %v6095 = vmul.f32 %v5948, %v6061
    %v6096 = vmul.f32 %v5949, %v6066
    %v6097 = vmul.f32 %v5950, %v6071
    %v6098 = vmul.f32 %v5951, %v6076
    %v6099 = vpack.c.bf16 %v6079, %v6078
    %v6100 = vpack.c.bf16 %v6081, %v6080
    %v6101 = vpack.c.bf16 %v6083, %v6082
    %v6102 = vpack.c.bf16 %v6085, %v6084
    %v6103 = vpack.c.bf16 %v6087, %v6086
    %v6104 = vpack.c.bf16 %v6089, %v6088
    %v6105 = vpack.c.bf16 %v6091, %v6090
    %v6106 = vpack.c.bf16 %v6093, %v6092
    %v6107 = vpack.c.bf16 %v6095, %v6094
    %v6108 = vpack.c.bf16 %v6097, %v6096
    %v6109 = vpack.c.bf16 %v6098, %v6098
    %v6121 = vunpack.c.l.b16 %v6099
    %v6122 = vunpack.c.h.b16 %v6099
    %v6123 = vunpack.c.l.b16 %v6100
    %v6124 = vunpack.c.h.b16 %v6100
    %v6125 = vunpack.c.l.b16 %v6101
    %v6126 = vunpack.c.h.b16 %v6101
    %v6127 = vunpack.c.l.b16 %v6102
    %v6128 = vunpack.c.h.b16 %v6102
    %v6129 = vunpack.c.l.b16 %v6103
    %v6130 = vunpack.c.h.b16 %v6103
    %v6131 = vunpack.c.l.b16 %v6104
    %v6132 = vunpack.c.h.b16 %v6104
    %v6133 = vunpack.c.l.b16 %v6105
    %v6134 = vunpack.c.h.b16 %v6105
    %v6135 = vunpack.c.l.b16 %v6106
    %v6136 = vunpack.c.h.b16 %v6106
    %v6137 = vunpack.c.l.b16 %v6107
    %v6138 = vunpack.c.h.b16 %v6107
    %v6139 = vunpack.c.l.b16 %v6108
    %v6140 = vunpack.c.h.b16 %v6108
    %v6141 = vunpack.c.l.b16 %v6109
    %v6142 = vpack.c.b16 %v6121, %v6121
    %v6143 = vpack.c.b16 %v6122, %v6122
    %v6144 = vpack.c.b16 %v6123, %v6123
    %v6145 = vpack.c.b16 %v6124, %v6124
    %v6146 = vpack.c.b16 %v6125, %v6125
    %v6147 = vpack.c.b16 %v6126, %v6126
    %v6148 = vpack.c.b16 %v6127, %v6127
    %v6149 = vpack.c.b16 %v6128, %v6128
    %v6150 = vpack.c.b16 %v6129, %v6129
    %v6151 = vpack.c.b16 %v6130, %v6130
    %v6152 = vpack.c.b16 %v6131, %v6131
    %v6153 = vpack.c.b16 %v6132, %v6132
    %v6154 = vpack.c.b16 %v6133, %v6133
    %v6155 = vpack.c.b16 %v6134, %v6134
    %v6156 = vpack.c.b16 %v6135, %v6135
    %v6157 = vpack.c.b16 %v6136, %v6136
    %v6158 = vpack.c.b16 %v6137, %v6137
    %v6159 = vpack.c.b16 %v6138, %v6138
    %v6160 = vpack.c.b16 %v6139, %v6139
    %v6161 = vpack.c.b16 %v6140, %v6140
    %v6162 = vpack.c.b16 %v6141, %v6141
    %6184 = vst [vmem:[#allocation3 + $0x8] sm:$0xf] %v6142
    %6185 = vst [vmem:[#allocation3 + $0x2c] sm:$0xf] %v6143
    %6186 = vst [vmem:[#allocation3 + $0x50] sm:$0xf] %v6144
    %6187 = vst [vmem:[#allocation3 + $0x74] sm:$0xf] %v6145
    %6188 = vst [vmem:[#allocation3 + $0x98] sm:$0xf] %v6146
    %6189 = vst [vmem:[#allocation3 + $0xbc] sm:$0xf] %v6147
    %6190 = vst [vmem:[#allocation3 + $0xe0] sm:$0xf] %v6148
    %6191 = vst [vmem:[#allocation3 + $0x104] sm:$0xf] %v6149
    %6192 = vst [vmem:[#allocation3 + $0x128] sm:$0xf] %v6150
    %6193 = vst [vmem:[#allocation3 + $0x14c] sm:$0xf] %v6151
    %6194 = vst [vmem:[#allocation3 + $0x170] sm:$0xf] %v6152
    %6195 = vst [vmem:[#allocation3 + $0x194] sm:$0xf] %v6153
    %6196 = vst [vmem:[#allocation3 + $0x1b8] sm:$0xf] %v6154
    %6197 = vst [vmem:[#allocation3 + $0x1dc] sm:$0xf] %v6155
    %6198 = vst [vmem:[#allocation3 + $0x200] sm:$0xf] %v6156
    %6199 = vst [vmem:[#allocation3 + $0x224] sm:$0xf] %v6157
    %6200 = vst [vmem:[#allocation3 + $0x248] sm:$0xf] %v6158
    %6201 = vst [vmem:[#allocation3 + $0x26c] sm:$0xf] %v6159
    %6202 = vst [vmem:[#allocation3 + $0x290] sm:$0xf] %v6160
    %6203 = vst [vmem:[#allocation3 + $0x2b4] sm:$0xf] %v6161
    %6204 = vst [vmem:[#allocation3 + $0x2d8] sm:$0xf] %v6162
    %v6205 = vld [vmem:[#allocation2 + $0xf] sm:$0xff]
    %v6206 = vld [vmem:[#allocation2 + $0x17] sm:$0xff]
    %v6207 = vld [vmem:[#allocation2 + $0x1f] sm:$0xff]
    %v6208 = vld [vmem:[#allocation2 + $0x27] sm:$0xff]
    %v6209 = vld [vmem:[#allocation2 + $0x2f] sm:$0xff]
    %v6210 = vld [vmem:[#allocation2 + $0x37] sm:$0xff]
    %v6211 = vld [vmem:[#allocation2 + $0x3f] sm:$0xff]
    %v6212 = vld [vmem:[#allocation2 + $0x47] sm:$0xff]
    %v6213 = vld [vmem:[#allocation2 + $0x4f] sm:$0xff]
    %v6214 = vld [vmem:[#allocation2 + $0x57] sm:$0xff]
    %v6215 = vld [vmem:[#allocation2 + $0x5f] sm:$0xff]
    %v6216 = vld [vmem:[#allocation2 + $0x67] sm:$0xff]
    %v6217 = vld [vmem:[#allocation2 + $0x6f] sm:$0xff]
    %v6218 = vld [vmem:[#allocation2 + $0x77] sm:$0xff]
    %v6219 = vld [vmem:[#allocation2 + $0x7f] sm:$0xff]
    %v6220 = vld [vmem:[#allocation2 + $0x87] sm:$0xff]
    %v6221 = vld [vmem:[#allocation2 + $0x8f] sm:$0xff]
    %v6222 = vld [vmem:[#allocation2 + $0x97] sm:$0xff]
    %v6223 = vld [vmem:[#allocation2 + $0x9f] sm:$0xff]
    %v6224 = vld [vmem:[#allocation2 + $0xa7] sm:$0xff]
    %v6225 = vld [vmem:[#allocation2 + $0xaf] sm:$0xff]
    %v6226 = vld [vmem:[%s1737] sm:$0xff]
    %v6227 = vld [vmem:[%s1737 + $0x8] sm:$0xff]
    %v6228 = vld [vmem:[%s1737 + $0x10] sm:$0xff]
    %v6229 = vld [vmem:[%s1737 + $0x18] sm:$0xff]
    %v6230 = vld [vmem:[%s1737 + $0x20] sm:$0xff]
    %v6231 = vld [vmem:[%s1737 + $0x28] sm:$0xff]
    %v6232 = vld [vmem:[%s1737 + $0x30] sm:$0xff]
    %v6233 = vld [vmem:[%s1737 + $0x38] sm:$0xff]
    %v6234 = vld [vmem:[%s1737 + $0x40] sm:$0xff]
    %v6235 = vld [vmem:[%s1737 + $0x48] sm:$0xff]
    %v6236 = vld [vmem:[%s1737 + $0x50] sm:$0xff]
    %v6237 = vld [vmem:[%s1737 + $0x58] sm:$0xff]
    %v6238 = vld [vmem:[%s1737 + $0x60] sm:$0xff]
    %v6239 = vld [vmem:[%s1737 + $0x68] sm:$0xff]
    %v6240 = vld [vmem:[%s1737 + $0x70] sm:$0xff]
    %v6241 = vld [vmem:[%s1737 + $0x78] sm:$0xff]
    %v6242 = vld [vmem:[%s1737 + $0x80] sm:$0xff]
    %v6243 = vld [vmem:[%s1737 + $0x88] sm:$0xff]
    %v6244 = vld [vmem:[%s1737 + $0x90] sm:$0xff]
    %v6245 = vld [vmem:[%s1737 + $0x98] sm:$0xff]
    %v6246 = vld [vmem:[%s1737 + $0xa0] sm:$0xff]
    %6248 = vset.pattern.permute.xlu0 0
    %6249 = vperm.xlu0 %6248, %v6226
    %v6250 = vpop.permute.xlu0 %6249
    %6253 = vset.pattern.permute.xlu0 0
    %6254 = vperm.xlu0 %6253, %v6227
    %v6255 = vpop.permute.xlu0 %6254
    %6258 = vset.pattern.permute.xlu0 0
    %6259 = vperm.xlu0 %6258, %v6228
    %v6260 = vpop.permute.xlu0 %6259
    %6263 = vset.pattern.permute.xlu0 0
    %6264 = vperm.xlu0 %6263, %v6229
    %v6265 = vpop.permute.xlu0 %6264
    %6268 = vset.pattern.permute.xlu0 0
    %6269 = vperm.xlu0 %6268, %v6230
    %v6270 = vpop.permute.xlu0 %6269
    %6273 = vset.pattern.permute.xlu0 0
    %6274 = vperm.xlu0 %6273, %v6231
    %v6275 = vpop.permute.xlu0 %6274
    %6278 = vset.pattern.permute.xlu0 0
    %6279 = vperm.xlu0 %6278, %v6232
    %v6280 = vpop.permute.xlu0 %6279
    %6283 = vset.pattern.permute.xlu0 0
    %6284 = vperm.xlu0 %6283, %v6233
    %v6285 = vpop.permute.xlu0 %6284
    %6288 = vset.pattern.permute.xlu0 0
    %6289 = vperm.xlu0 %6288, %v6234
    %v6290 = vpop.permute.xlu0 %6289
    %6293 = vset.pattern.permute.xlu0 0
    %6294 = vperm.xlu0 %6293, %v6235
    %v6295 = vpop.permute.xlu0 %6294
    %6298 = vset.pattern.permute.xlu0 0
    %6299 = vperm.xlu0 %6298, %v6236
    %v6300 = vpop.permute.xlu0 %6299
    %6303 = vset.pattern.permute.xlu0 0
    %6304 = vperm.xlu0 %6303, %v6237
    %v6305 = vpop.permute.xlu0 %6304
    %6308 = vset.pattern.permute.xlu0 0
    %6309 = vperm.xlu0 %6308, %v6238
    %v6310 = vpop.permute.xlu0 %6309
    %6313 = vset.pattern.permute.xlu0 0
    %6314 = vperm.xlu0 %6313, %v6239
    %v6315 = vpop.permute.xlu0 %6314
    %6318 = vset.pattern.permute.xlu0 0
    %6319 = vperm.xlu0 %6318, %v6240
    %v6320 = vpop.permute.xlu0 %6319
    %6323 = vset.pattern.permute.xlu0 0
    %6324 = vperm.xlu0 %6323, %v6241
    %v6325 = vpop.permute.xlu0 %6324
    %6328 = vset.pattern.permute.xlu0 0
    %6329 = vperm.xlu0 %6328, %v6242
    %v6330 = vpop.permute.xlu0 %6329
    %6333 = vset.pattern.permute.xlu0 0
    %6334 = vperm.xlu0 %6333, %v6243
    %v6335 = vpop.permute.xlu0 %6334
    %6338 = vset.pattern.permute.xlu0 0
    %6339 = vperm.xlu0 %6338, %v6244
    %v6340 = vpop.permute.xlu0 %6339
    %6343 = vset.pattern.permute.xlu0 0
    %6344 = vperm.xlu0 %6343, %v6245
    %v6345 = vpop.permute.xlu0 %6344
    %6348 = vset.pattern.permute.xlu0 0
    %6349 = vperm.xlu0 %6348, %v6246
    %v6350 = vpop.permute.xlu0 %6349
    %v6352 = vmul.f32 %v6205, %v6250
    %v6353 = vmul.f32 %v6206, %v6255
    %v6354 = vmul.f32 %v6207, %v6260
    %v6355 = vmul.f32 %v6208, %v6265
    %v6356 = vmul.f32 %v6209, %v6270
    %v6357 = vmul.f32 %v6210, %v6275
    %v6358 = vmul.f32 %v6211, %v6280
    %v6359 = vmul.f32 %v6212, %v6285
    %v6360 = vmul.f32 %v6213, %v6290
    %v6361 = vmul.f32 %v6214, %v6295
    %v6362 = vmul.f32 %v6215, %v6300
    %v6363 = vmul.f32 %v6216, %v6305
    %v6364 = vmul.f32 %v6217, %v6310
    %v6365 = vmul.f32 %v6218, %v6315
    %v6366 = vmul.f32 %v6219, %v6320
    %v6367 = vmul.f32 %v6220, %v6325
    %v6368 = vmul.f32 %v6221, %v6330
    %v6369 = vmul.f32 %v6222, %v6335
    %v6370 = vmul.f32 %v6223, %v6340
    %v6371 = vmul.f32 %v6224, %v6345
    %v6372 = vmul.f32 %v6225, %v6350
    %v6373 = vpack.c.bf16 %v6353, %v6352
    %v6374 = vpack.c.bf16 %v6355, %v6354
    %v6375 = vpack.c.bf16 %v6357, %v6356
    %v6376 = vpack.c.bf16 %v6359, %v6358
    %v6377 = vpack.c.bf16 %v6361, %v6360
    %v6378 = vpack.c.bf16 %v6363, %v6362
    %v6379 = vpack.c.bf16 %v6365, %v6364
    %v6380 = vpack.c.bf16 %v6367, %v6366
    %v6381 = vpack.c.bf16 %v6369, %v6368
    %v6382 = vpack.c.bf16 %v6371, %v6370
    %v6383 = vpack.c.bf16 %v6372, %v6372
    %v6395 = vunpack.c.l.b16 %v6373
    %v6396 = vunpack.c.h.b16 %v6373
    %v6397 = vunpack.c.l.b16 %v6374
    %v6398 = vunpack.c.h.b16 %v6374
    %v6399 = vunpack.c.l.b16 %v6375
    %v6400 = vunpack.c.h.b16 %v6375
    %v6401 = vunpack.c.l.b16 %v6376
    %v6402 = vunpack.c.h.b16 %v6376
    %v6403 = vunpack.c.l.b16 %v6377
    %v6404 = vunpack.c.h.b16 %v6377
    %v6405 = vunpack.c.l.b16 %v6378
    %v6406 = vunpack.c.h.b16 %v6378
    %v6407 = vunpack.c.l.b16 %v6379
    %v6408 = vunpack.c.h.b16 %v6379
    %v6409 = vunpack.c.l.b16 %v6380
    %v6410 = vunpack.c.h.b16 %v6380
    %v6411 = vunpack.c.l.b16 %v6381
    %v6412 = vunpack.c.h.b16 %v6381
    %v6413 = vunpack.c.l.b16 %v6382
    %v6414 = vunpack.c.h.b16 %v6382
    %v6415 = vunpack.c.l.b16 %v6383
    %v6416 = vpack.c.b16 %v6395, %v6395
    %v6417 = vpack.c.b16 %v6396, %v6396
    %v6418 = vpack.c.b16 %v6397, %v6397
    %v6419 = vpack.c.b16 %v6398, %v6398
    %v6420 = vpack.c.b16 %v6399, %v6399
    %v6421 = vpack.c.b16 %v6400, %v6400
    %v6422 = vpack.c.b16 %v6401, %v6401
    %v6423 = vpack.c.b16 %v6402, %v6402
    %v6424 = vpack.c.b16 %v6403, %v6403
    %v6425 = vpack.c.b16 %v6404, %v6404
    %v6426 = vpack.c.b16 %v6405, %v6405
    %v6427 = vpack.c.b16 %v6406, %v6406
    %v6428 = vpack.c.b16 %v6407, %v6407
    %v6429 = vpack.c.b16 %v6408, %v6408
    %v6430 = vpack.c.b16 %v6409, %v6409
    %v6431 = vpack.c.b16 %v6410, %v6410
    %v6432 = vpack.c.b16 %v6411, %v6411
    %v6433 = vpack.c.b16 %v6412, %v6412
    %v6434 = vpack.c.b16 %v6413, %v6413
    %v6435 = vpack.c.b16 %v6414, %v6414
    %v6436 = vpack.c.b16 %v6415, %v6415
    %6458 = vst [vmem:[#allocation3 + $0xc] sm:$0xf] %v6416
    %6459 = vst [vmem:[#allocation3 + $0x30] sm:$0xf] %v6417
    %6460 = vst [vmem:[#allocation3 + $0x54] sm:$0xf] %v6418
    %6461 = vst [vmem:[#allocation3 + $0x78] sm:$0xf] %v6419
    %6462 = vst [vmem:[#allocation3 + $0x9c] sm:$0xf] %v6420
    %6463 = vst [vmem:[#allocation3 + $0xc0] sm:$0xf] %v6421
    %6464 = vst [vmem:[#allocation3 + $0xe4] sm:$0xf] %v6422
    %6465 = vst [vmem:[#allocation3 + $0x108] sm:$0xf] %v6423
    %6466 = vst [vmem:[#allocation3 + $0x12c] sm:$0xf] %v6424
    %6467 = vst [vmem:[#allocation3 + $0x150] sm:$0xf] %v6425
    %6468 = vst [vmem:[#allocation3 + $0x174] sm:$0xf] %v6426
    %6469 = vst [vmem:[#allocation3 + $0x198] sm:$0xf] %v6427
    %6470 = vst [vmem:[#allocation3 + $0x1bc] sm:$0xf] %v6428
    %6471 = vst [vmem:[#allocation3 + $0x1e0] sm:$0xf] %v6429
    %6472 = vst [vmem:[#allocation3 + $0x204] sm:$0xf] %v6430
    %6473 = vst [vmem:[#allocation3 + $0x228] sm:$0xf] %v6431
    %6474 = vst [vmem:[#allocation3 + $0x24c] sm:$0xf] %v6432
    %6475 = vst [vmem:[#allocation3 + $0x270] sm:$0xf] %v6433
    %6476 = vst [vmem:[#allocation3 + $0x294] sm:$0xf] %v6434
    %6477 = vst [vmem:[#allocation3 + $0x2b8] sm:$0xf] %v6435
    %6478 = vst [vmem:[#allocation3 + $0x2dc] sm:$0xf] %v6436
    %v6479 = vld [vmem:[#allocation2 + $0x10] sm:$0xff]
    %v6480 = vld [vmem:[#allocation2 + $0x18] sm:$0xff]
    %v6481 = vld [vmem:[#allocation2 + $0x20] sm:$0xff]
    %v6482 = vld [vmem:[#allocation2 + $0x28] sm:$0xff]
    %v6483 = vld [vmem:[#allocation2 + $0x30] sm:$0xff]
    %v6484 = vld [vmem:[#allocation2 + $0x38] sm:$0xff]
    %v6485 = vld [vmem:[#allocation2 + $0x40] sm:$0xff]
    %v6486 = vld [vmem:[#allocation2 + $0x48] sm:$0xff]
    %v6487 = vld [vmem:[#allocation2 + $0x50] sm:$0xff]
    %v6488 = vld [vmem:[#allocation2 + $0x58] sm:$0xff]
    %v6489 = vld [vmem:[#allocation2 + $0x60] sm:$0xff]
    %v6490 = vld [vmem:[#allocation2 + $0x68] sm:$0xff]
    %v6491 = vld [vmem:[#allocation2 + $0x70] sm:$0xff]
    %v6492 = vld [vmem:[#allocation2 + $0x78] sm:$0xff]
    %v6493 = vld [vmem:[#allocation2 + $0x80] sm:$0xff]
    %v6494 = vld [vmem:[#allocation2 + $0x88] sm:$0xff]
    %v6495 = vld [vmem:[#allocation2 + $0x90] sm:$0xff]
    %v6496 = vld [vmem:[#allocation2 + $0x98] sm:$0xff]
    %v6497 = vld [vmem:[#allocation2 + $0xa0] sm:$0xff]
    %v6498 = vld [vmem:[#allocation2 + $0xa8] sm:$0xff]
    %v6499 = vld [vmem:[#allocation2 + $0xb0] sm:$0xff]
    %v6500 = vld [vmem:[%s2012] sm:$0xff]
    %v6501 = vld [vmem:[%s2012 + $0x8] sm:$0xff]
    %v6502 = vld [vmem:[%s2012 + $0x10] sm:$0xff]
    %v6503 = vld [vmem:[%s2012 + $0x18] sm:$0xff]
    %v6504 = vld [vmem:[%s2012 + $0x20] sm:$0xff]
    %v6505 = vld [vmem:[%s2012 + $0x28] sm:$0xff]
    %v6506 = vld [vmem:[%s2012 + $0x30] sm:$0xff]
    %v6507 = vld [vmem:[%s2012 + $0x38] sm:$0xff]
    %v6508 = vld [vmem:[%s2012 + $0x40] sm:$0xff]
    %v6509 = vld [vmem:[%s2012 + $0x48] sm:$0xff]
    %v6510 = vld [vmem:[%s2012 + $0x50] sm:$0xff]
    %v6511 = vld [vmem:[%s2012 + $0x58] sm:$0xff]
    %v6512 = vld [vmem:[%s2012 + $0x60] sm:$0xff]
    %v6513 = vld [vmem:[%s2012 + $0x68] sm:$0xff]
    %v6514 = vld [vmem:[%s2012 + $0x70] sm:$0xff]
    %v6515 = vld [vmem:[%s2012 + $0x78] sm:$0xff]
    %v6516 = vld [vmem:[%s2012 + $0x80] sm:$0xff]
    %v6517 = vld [vmem:[%s2012 + $0x88] sm:$0xff]
    %v6518 = vld [vmem:[%s2012 + $0x90] sm:$0xff]
    %v6519 = vld [vmem:[%s2012 + $0x98] sm:$0xff]
    %v6520 = vld [vmem:[%s2012 + $0xa0] sm:$0xff]
    %6522 = vset.pattern.permute.xlu0 0
    %6523 = vperm.xlu0 %6522, %v6500
    %v6524 = vpop.permute.xlu0 %6523
    %6527 = vset.pattern.permute.xlu0 0
    %6528 = vperm.xlu0 %6527, %v6501
    %v6529 = vpop.permute.xlu0 %6528
    %6532 = vset.pattern.permute.xlu0 0
    %6533 = vperm.xlu0 %6532, %v6502
    %v6534 = vpop.permute.xlu0 %6533
    %6537 = vset.pattern.permute.xlu0 0
    %6538 = vperm.xlu0 %6537, %v6503
    %v6539 = vpop.permute.xlu0 %6538
    %6542 = vset.pattern.permute.xlu0 0
    %6543 = vperm.xlu0 %6542, %v6504
    %v6544 = vpop.permute.xlu0 %6543
    %6547 = vset.pattern.permute.xlu0 0
    %6548 = vperm.xlu0 %6547, %v6505
    %v6549 = vpop.permute.xlu0 %6548
    %6552 = vset.pattern.permute.xlu0 0
    %6553 = vperm.xlu0 %6552, %v6506
    %v6554 = vpop.permute.xlu0 %6553
    %6557 = vset.pattern.permute.xlu0 0
    %6558 = vperm.xlu0 %6557, %v6507
    %v6559 = vpop.permute.xlu0 %6558
    %6562 = vset.pattern.permute.xlu0 0
    %6563 = vperm.xlu0 %6562, %v6508
    %v6564 = vpop.permute.xlu0 %6563
    %6567 = vset.pattern.permute.xlu0 0
    %6568 = vperm.xlu0 %6567, %v6509
    %v6569 = vpop.permute.xlu0 %6568
    %6572 = vset.pattern.permute.xlu0 0
    %6573 = vperm.xlu0 %6572, %v6510
    %v6574 = vpop.permute.xlu0 %6573
    %6577 = vset.pattern.permute.xlu0 0
    %6578 = vperm.xlu0 %6577, %v6511
    %v6579 = vpop.permute.xlu0 %6578
    %6582 = vset.pattern.permute.xlu0 0
    %6583 = vperm.xlu0 %6582, %v6512
    %v6584 = vpop.permute.xlu0 %6583
    %6587 = vset.pattern.permute.xlu0 0
    %6588 = vperm.xlu0 %6587, %v6513
    %v6589 = vpop.permute.xlu0 %6588
    %6592 = vset.pattern.permute.xlu0 0
    %6593 = vperm.xlu0 %6592, %v6514
    %v6594 = vpop.permute.xlu0 %6593
    %6597 = vset.pattern.permute.xlu0 0
    %6598 = vperm.xlu0 %6597, %v6515
    %v6599 = vpop.permute.xlu0 %6598
    %6602 = vset.pattern.permute.xlu0 0
    %6603 = vperm.xlu0 %6602, %v6516
    %v6604 = vpop.permute.xlu0 %6603
    %6607 = vset.pattern.permute.xlu0 0
    %6608 = vperm.xlu0 %6607, %v6517
    %v6609 = vpop.permute.xlu0 %6608
    %6612 = vset.pattern.permute.xlu0 0
    %6613 = vperm.xlu0 %6612, %v6518
    %v6614 = vpop.permute.xlu0 %6613
    %6617 = vset.pattern.permute.xlu0 0
    %6618 = vperm.xlu0 %6617, %v6519
    %v6619 = vpop.permute.xlu0 %6618
    %6622 = vset.pattern.permute.xlu0 0
    %6623 = vperm.xlu0 %6622, %v6520
    %v6624 = vpop.permute.xlu0 %6623
    %v6626 = vmul.f32 %v6479, %v6524
    %v6627 = vmul.f32 %v6480, %v6529
    %v6628 = vmul.f32 %v6481, %v6534
    %v6629 = vmul.f32 %v6482, %v6539
    %v6630 = vmul.f32 %v6483, %v6544
    %v6631 = vmul.f32 %v6484, %v6549
    %v6632 = vmul.f32 %v6485, %v6554
    %v6633 = vmul.f32 %v6486, %v6559
    %v6634 = vmul.f32 %v6487, %v6564
    %v6635 = vmul.f32 %v6488, %v6569
    %v6636 = vmul.f32 %v6489, %v6574
    %v6637 = vmul.f32 %v6490, %v6579
    %v6638 = vmul.f32 %v6491, %v6584
    %v6639 = vmul.f32 %v6492, %v6589
    %v6640 = vmul.f32 %v6493, %v6594
    %v6641 = vmul.f32 %v6494, %v6599
    %v6642 = vmul.f32 %v6495, %v6604
    %v6643 = vmul.f32 %v6496, %v6609
    %v6644 = vmul.f32 %v6497, %v6614
    %v6645 = vmul.f32 %v6498, %v6619
    %v6646 = vmul.f32 %v6499, %v6624
    %v6647 = vpack.c.bf16 %v6627, %v6626
    %v6648 = vpack.c.bf16 %v6629, %v6628
    %v6649 = vpack.c.bf16 %v6631, %v6630
    %v6650 = vpack.c.bf16 %v6633, %v6632
    %v6651 = vpack.c.bf16 %v6635, %v6634
    %v6652 = vpack.c.bf16 %v6637, %v6636
    %v6653 = vpack.c.bf16 %v6639, %v6638
    %v6654 = vpack.c.bf16 %v6641, %v6640
    %v6655 = vpack.c.bf16 %v6643, %v6642
    %v6656 = vpack.c.bf16 %v6645, %v6644
    %v6657 = vpack.c.bf16 %v6646, %v6646
    %v6669 = vunpack.c.l.b16 %v6647
    %v6670 = vunpack.c.h.b16 %v6647
    %v6671 = vunpack.c.l.b16 %v6648
    %v6672 = vunpack.c.h.b16 %v6648
    %v6673 = vunpack.c.l.b16 %v6649
    %v6674 = vunpack.c.h.b16 %v6649
    %v6675 = vunpack.c.l.b16 %v6650
    %v6676 = vunpack.c.h.b16 %v6650
    %v6677 = vunpack.c.l.b16 %v6651
    %v6678 = vunpack.c.h.b16 %v6651
    %v6679 = vunpack.c.l.b16 %v6652
    %v6680 = vunpack.c.h.b16 %v6652
    %v6681 = vunpack.c.l.b16 %v6653
    %v6682 = vunpack.c.h.b16 %v6653
    %v6683 = vunpack.c.l.b16 %v6654
    %v6684 = vunpack.c.h.b16 %v6654
    %v6685 = vunpack.c.l.b16 %v6655
    %v6686 = vunpack.c.h.b16 %v6655
    %v6687 = vunpack.c.l.b16 %v6656
    %v6688 = vunpack.c.h.b16 %v6656
    %v6689 = vunpack.c.l.b16 %v6657
    %v6690 = vpack.c.b16 %v6669, %v6669
    %v6691 = vpack.c.b16 %v6670, %v6670
    %v6692 = vpack.c.b16 %v6671, %v6671
    %v6693 = vpack.c.b16 %v6672, %v6672
    %v6694 = vpack.c.b16 %v6673, %v6673
    %v6695 = vpack.c.b16 %v6674, %v6674
    %v6696 = vpack.c.b16 %v6675, %v6675
    %v6697 = vpack.c.b16 %v6676, %v6676
    %v6698 = vpack.c.b16 %v6677, %v6677
    %v6699 = vpack.c.b16 %v6678, %v6678
    %v6700 = vpack.c.b16 %v6679, %v6679
    %v6701 = vpack.c.b16 %v6680, %v6680
    %v6702 = vpack.c.b16 %v6681, %v6681
    %v6703 = vpack.c.b16 %v6682, %v6682
    %v6704 = vpack.c.b16 %v6683, %v6683
    %v6705 = vpack.c.b16 %v6684, %v6684
    %v6706 = vpack.c.b16 %v6685, %v6685
    %v6707 = vpack.c.b16 %v6686, %v6686
    %v6708 = vpack.c.b16 %v6687, %v6687
    %v6709 = vpack.c.b16 %v6688, %v6688
    %v6710 = vpack.c.b16 %v6689, %v6689
    %6732 = vst [vmem:[#allocation3 + $0x10] sm:$0xf] %v6690
    %6733 = vst [vmem:[#allocation3 + $0x34] sm:$0xf] %v6691
    %6734 = vst [vmem:[#allocation3 + $0x58] sm:$0xf] %v6692
    %6735 = vst [vmem:[#allocation3 + $0x7c] sm:$0xf] %v6693
    %6736 = vst [vmem:[#allocation3 + $0xa0] sm:$0xf] %v6694
    %6737 = vst [vmem:[#allocation3 + $0xc4] sm:$0xf] %v6695
    %6738 = vst [vmem:[#allocation3 + $0xe8] sm:$0xf] %v6696
    %6739 = vst [vmem:[#allocation3 + $0x10c] sm:$0xf] %v6697
    %6740 = vst [vmem:[#allocation3 + $0x130] sm:$0xf] %v6698
    %6741 = vst [vmem:[#allocation3 + $0x154] sm:$0xf] %v6699
    %6742 = vst [vmem:[#allocation3 + $0x178] sm:$0xf] %v6700
    %6743 = vst [vmem:[#allocation3 + $0x19c] sm:$0xf] %v6701
    %6744 = vst [vmem:[#allocation3 + $0x1c0] sm:$0xf] %v6702
    %6745 = vst [vmem:[#allocation3 + $0x1e4] sm:$0xf] %v6703
    %6746 = vst [vmem:[#allocation3 + $0x208] sm:$0xf] %v6704
    %6747 = vst [vmem:[#allocation3 + $0x22c] sm:$0xf] %v6705
    %6748 = vst [vmem:[#allocation3 + $0x250] sm:$0xf] %v6706
    %6749 = vst [vmem:[#allocation3 + $0x274] sm:$0xf] %v6707
    %6750 = vst [vmem:[#allocation3 + $0x298] sm:$0xf] %v6708
    %6751 = vst [vmem:[#allocation3 + $0x2bc] sm:$0xf] %v6709
    %6752 = vst [vmem:[#allocation3 + $0x2e0] sm:$0xf] %v6710
    %v6753 = vld [vmem:[#allocation2 + $0x11] sm:$0xff]
    %v6754 = vld [vmem:[#allocation2 + $0x19] sm:$0xff]
    %v6755 = vld [vmem:[#allocation2 + $0x21] sm:$0xff]
    %v6756 = vld [vmem:[#allocation2 + $0x29] sm:$0xff]
    %v6757 = vld [vmem:[#allocation2 + $0x31] sm:$0xff]
    %v6758 = vld [vmem:[#allocation2 + $0x39] sm:$0xff]
    %v6759 = vld [vmem:[#allocation2 + $0x41] sm:$0xff]
    %v6760 = vld [vmem:[#allocation2 + $0x49] sm:$0xff]
    %v6761 = vld [vmem:[#allocation2 + $0x51] sm:$0xff]
    %v6762 = vld [vmem:[#allocation2 + $0x59] sm:$0xff]
    %v6763 = vld [vmem:[#allocation2 + $0x61] sm:$0xff]
    %v6764 = vld [vmem:[#allocation2 + $0x69] sm:$0xff]
    %v6765 = vld [vmem:[#allocation2 + $0x71] sm:$0xff]
    %v6766 = vld [vmem:[#allocation2 + $0x79] sm:$0xff]
    %v6767 = vld [vmem:[#allocation2 + $0x81] sm:$0xff]
    %v6768 = vld [vmem:[#allocation2 + $0x89] sm:$0xff]
    %v6769 = vld [vmem:[#allocation2 + $0x91] sm:$0xff]
    %v6770 = vld [vmem:[#allocation2 + $0x99] sm:$0xff]
    %v6771 = vld [vmem:[#allocation2 + $0xa1] sm:$0xff]
    %v6772 = vld [vmem:[#allocation2 + $0xa9] sm:$0xff]
    %v6773 = vld [vmem:[#allocation2 + $0xb1] sm:$0xff]
    %v6774 = vld [vmem:[%s2287] sm:$0xff]
    %v6775 = vld [vmem:[%s2287 + $0x8] sm:$0xff]
    %v6776 = vld [vmem:[%s2287 + $0x10] sm:$0xff]
    %v6777 = vld [vmem:[%s2287 + $0x18] sm:$0xff]
    %v6778 = vld [vmem:[%s2287 + $0x20] sm:$0xff]
    %v6779 = vld [vmem:[%s2287 + $0x28] sm:$0xff]
    %v6780 = vld [vmem:[%s2287 + $0x30] sm:$0xff]
    %v6781 = vld [vmem:[%s2287 + $0x38] sm:$0xff]
    %v6782 = vld [vmem:[%s2287 + $0x40] sm:$0xff]
    %v6783 = vld [vmem:[%s2287 + $0x48] sm:$0xff]
    %v6784 = vld [vmem:[%s2287 + $0x50] sm:$0xff]
    %v6785 = vld [vmem:[%s2287 + $0x58] sm:$0xff]
    %v6786 = vld [vmem:[%s2287 + $0x60] sm:$0xff]
    %v6787 = vld [vmem:[%s2287 + $0x68] sm:$0xff]
    %v6788 = vld [vmem:[%s2287 + $0x70] sm:$0xff]
    %v6789 = vld [vmem:[%s2287 + $0x78] sm:$0xff]
    %v6790 = vld [vmem:[%s2287 + $0x80] sm:$0xff]
    %v6791 = vld [vmem:[%s2287 + $0x88] sm:$0xff]
    %v6792 = vld [vmem:[%s2287 + $0x90] sm:$0xff]
    %v6793 = vld [vmem:[%s2287 + $0x98] sm:$0xff]
    %v6794 = vld [vmem:[%s2287 + $0xa0] sm:$0xff]
    %6796 = vset.pattern.permute.xlu0 0
    %6797 = vperm.xlu0 %6796, %v6774
    %v6798 = vpop.permute.xlu0 %6797
    %6801 = vset.pattern.permute.xlu0 0
    %6802 = vperm.xlu0 %6801, %v6775
    %v6803 = vpop.permute.xlu0 %6802
    %6806 = vset.pattern.permute.xlu0 0
    %6807 = vperm.xlu0 %6806, %v6776
    %v6808 = vpop.permute.xlu0 %6807
    %6811 = vset.pattern.permute.xlu0 0
    %6812 = vperm.xlu0 %6811, %v6777
    %v6813 = vpop.permute.xlu0 %6812
    %6816 = vset.pattern.permute.xlu0 0
    %6817 = vperm.xlu0 %6816, %v6778
    %v6818 = vpop.permute.xlu0 %6817
    %6821 = vset.pattern.permute.xlu0 0
    %6822 = vperm.xlu0 %6821, %v6779
    %v6823 = vpop.permute.xlu0 %6822
    %6826 = vset.pattern.permute.xlu0 0
    %6827 = vperm.xlu0 %6826, %v6780
    %v6828 = vpop.permute.xlu0 %6827
    %6831 = vset.pattern.permute.xlu0 0
    %6832 = vperm.xlu0 %6831, %v6781
    %v6833 = vpop.permute.xlu0 %6832
    %6836 = vset.pattern.permute.xlu0 0
    %6837 = vperm.xlu0 %6836, %v6782
    %v6838 = vpop.permute.xlu0 %6837
    %6841 = vset.pattern.permute.xlu0 0
    %6842 = vperm.xlu0 %6841, %v6783
    %v6843 = vpop.permute.xlu0 %6842
    %6846 = vset.pattern.permute.xlu0 0
    %6847 = vperm.xlu0 %6846, %v6784
    %v6848 = vpop.permute.xlu0 %6847
    %6851 = vset.pattern.permute.xlu0 0
    %6852 = vperm.xlu0 %6851, %v6785
    %v6853 = vpop.permute.xlu0 %6852
    %6856 = vset.pattern.permute.xlu0 0
    %6857 = vperm.xlu0 %6856, %v6786
    %v6858 = vpop.permute.xlu0 %6857
    %6861 = vset.pattern.permute.xlu0 0
    %6862 = vperm.xlu0 %6861, %v6787
    %v6863 = vpop.permute.xlu0 %6862
    %6866 = vset.pattern.permute.xlu0 0
    %6867 = vperm.xlu0 %6866, %v6788
    %v6868 = vpop.permute.xlu0 %6867
    %6871 = vset.pattern.permute.xlu0 0
    %6872 = vperm.xlu0 %6871, %v6789
    %v6873 = vpop.permute.xlu0 %6872
    %6876 = vset.pattern.permute.xlu0 0
    %6877 = vperm.xlu0 %6876, %v6790
    %v6878 = vpop.permute.xlu0 %6877
    %6881 = vset.pattern.permute.xlu0 0
    %6882 = vperm.xlu0 %6881, %v6791
    %v6883 = vpop.permute.xlu0 %6882
    %6886 = vset.pattern.permute.xlu0 0
    %6887 = vperm.xlu0 %6886, %v6792
    %v6888 = vpop.permute.xlu0 %6887
    %6891 = vset.pattern.permute.xlu0 0
    %6892 = vperm.xlu0 %6891, %v6793
    %v6893 = vpop.permute.xlu0 %6892
    %6896 = vset.pattern.permute.xlu0 0
    %6897 = vperm.xlu0 %6896, %v6794
    %v6898 = vpop.permute.xlu0 %6897
    %v6900 = vmul.f32 %v6753, %v6798
    %v6901 = vmul.f32 %v6754, %v6803
    %v6902 = vmul.f32 %v6755, %v6808
    %v6903 = vmul.f32 %v6756, %v6813
    %v6904 = vmul.f32 %v6757, %v6818
    %v6905 = vmul.f32 %v6758, %v6823
    %v6906 = vmul.f32 %v6759, %v6828
    %v6907 = vmul.f32 %v6760, %v6833
    %v6908 = vmul.f32 %v6761, %v6838
    %v6909 = vmul.f32 %v6762, %v6843
    %v6910 = vmul.f32 %v6763, %v6848
    %v6911 = vmul.f32 %v6764, %v6853
    %v6912 = vmul.f32 %v6765, %v6858
    %v6913 = vmul.f32 %v6766, %v6863
    %v6914 = vmul.f32 %v6767, %v6868
    %v6915 = vmul.f32 %v6768, %v6873
    %v6916 = vmul.f32 %v6769, %v6878
    %v6917 = vmul.f32 %v6770, %v6883
    %v6918 = vmul.f32 %v6771, %v6888
    %v6919 = vmul.f32 %v6772, %v6893
    %v6920 = vmul.f32 %v6773, %v6898
    %v6921 = vpack.c.bf16 %v6901, %v6900
    %v6922 = vpack.c.bf16 %v6903, %v6902
    %v6923 = vpack.c.bf16 %v6905, %v6904
    %v6924 = vpack.c.bf16 %v6907, %v6906
    %v6925 = vpack.c.bf16 %v6909, %v6908
    %v6926 = vpack.c.bf16 %v6911, %v6910
    %v6927 = vpack.c.bf16 %v6913, %v6912
    %v6928 = vpack.c.bf16 %v6915, %v6914
    %v6929 = vpack.c.bf16 %v6917, %v6916
    %v6930 = vpack.c.bf16 %v6919, %v6918
    %v6931 = vpack.c.bf16 %v6920, %v6920
    %v6943 = vunpack.c.l.b16 %v6921
    %v6944 = vunpack.c.h.b16 %v6921
    %v6945 = vunpack.c.l.b16 %v6922
    %v6946 = vunpack.c.h.b16 %v6922
    %v6947 = vunpack.c.l.b16 %v6923
    %v6948 = vunpack.c.h.b16 %v6923
    %v6949 = vunpack.c.l.b16 %v6924
    %v6950 = vunpack.c.h.b16 %v6924
    %v6951 = vunpack.c.l.b16 %v6925
    %v6952 = vunpack.c.h.b16 %v6925
    %v6953 = vunpack.c.l.b16 %v6926
    %v6954 = vunpack.c.h.b16 %v6926
    %v6955 = vunpack.c.l.b16 %v6927
    %v6956 = vunpack.c.h.b16 %v6927
    %v6957 = vunpack.c.l.b16 %v6928
    %v6958 = vunpack.c.h.b16 %v6928
    %v6959 = vunpack.c.l.b16 %v6929
    %v6960 = vunpack.c.h.b16 %v6929
    %v6961 = vunpack.c.l.b16 %v6930
    %v6962 = vunpack.c.h.b16 %v6930
    %v6963 = vunpack.c.l.b16 %v6931
    %v6964 = vpack.c.b16 %v6943, %v6943
    %v6965 = vpack.c.b16 %v6944, %v6944
    %v6966 = vpack.c.b16 %v6945, %v6945
    %v6967 = vpack.c.b16 %v6946, %v6946
    %v6968 = vpack.c.b16 %v6947, %v6947
    %v6969 = vpack.c.b16 %v6948, %v6948
    %v6970 = vpack.c.b16 %v6949, %v6949
    %v6971 = vpack.c.b16 %v6950, %v6950
    %v6972 = vpack.c.b16 %v6951, %v6951
    %v6973 = vpack.c.b16 %v6952, %v6952
    %v6974 = vpack.c.b16 %v6953, %v6953
    %v6975 = vpack.c.b16 %v6954, %v6954
    %v6976 = vpack.c.b16 %v6955, %v6955
    %v6977 = vpack.c.b16 %v6956, %v6956
    %v6978 = vpack.c.b16 %v6957, %v6957
    %v6979 = vpack.c.b16 %v6958, %v6958
    %v6980 = vpack.c.b16 %v6959, %v6959
    %v6981 = vpack.c.b16 %v6960, %v6960
    %v6982 = vpack.c.b16 %v6961, %v6961
    %v6983 = vpack.c.b16 %v6962, %v6962
    %v6984 = vpack.c.b16 %v6963, %v6963
    %7006 = vst [vmem:[#allocation3 + $0x14] sm:$0xf] %v6964
    %7007 = vst [vmem:[#allocation3 + $0x38] sm:$0xf] %v6965
    %7008 = vst [vmem:[#allocation3 + $0x5c] sm:$0xf] %v6966
    %7009 = vst [vmem:[#allocation3 + $0x80] sm:$0xf] %v6967
    %7010 = vst [vmem:[#allocation3 + $0xa4] sm:$0xf] %v6968
    %7011 = vst [vmem:[#allocation3 + $0xc8] sm:$0xf] %v6969
    %7012 = vst [vmem:[#allocation3 + $0xec] sm:$0xf] %v6970
    %7013 = vst [vmem:[#allocation3 + $0x110] sm:$0xf] %v6971
    %7014 = vst [vmem:[#allocation3 + $0x134] sm:$0xf] %v6972
    %7015 = vst [vmem:[#allocation3 + $0x158] sm:$0xf] %v6973
    %7016 = vst [vmem:[#allocation3 + $0x17c] sm:$0xf] %v6974
    %7017 = vst [vmem:[#allocation3 + $0x1a0] sm:$0xf] %v6975
    %7018 = vst [vmem:[#allocation3 + $0x1c4] sm:$0xf] %v6976
    %7019 = vst [vmem:[#allocation3 + $0x1e8] sm:$0xf] %v6977
    %7020 = vst [vmem:[#allocation3 + $0x20c] sm:$0xf] %v6978
    %7021 = vst [vmem:[#allocation3 + $0x230] sm:$0xf] %v6979
    %7022 = vst [vmem:[#allocation3 + $0x254] sm:$0xf] %v6980
    %7023 = vst [vmem:[#allocation3 + $0x278] sm:$0xf] %v6981
    %7024 = vst [vmem:[#allocation3 + $0x29c] sm:$0xf] %v6982
    %7025 = vst [vmem:[#allocation3 + $0x2c0] sm:$0xf] %v6983
    %7026 = vst [vmem:[#allocation3 + $0x2e4] sm:$0xf] %v6984
    %v7027 = vld [vmem:[#allocation2 + $0x18] sm:$0xff]
    %v7028 = vld [vmem:[#allocation2 + $0x20] sm:$0xff]
    %v7029 = vld [vmem:[#allocation2 + $0x28] sm:$0xff]
    %v7030 = vld [vmem:[#allocation2 + $0x30] sm:$0xff]
    %v7031 = vld [vmem:[#allocation2 + $0x38] sm:$0xff]
    %v7032 = vld [vmem:[#allocation2 + $0x40] sm:$0xff]
    %v7033 = vld [vmem:[#allocation2 + $0x48] sm:$0xff]
    %v7034 = vld [vmem:[#allocation2 + $0x50] sm:$0xff]
    %v7035 = vld [vmem:[#allocation2 + $0x58] sm:$0xff]
    %v7036 = vld [vmem:[#allocation2 + $0x60] sm:$0xff]
    %v7037 = vld [vmem:[#allocation2 + $0x68] sm:$0xff]
    %v7038 = vld [vmem:[#allocation2 + $0x70] sm:$0xff]
    %v7039 = vld [vmem:[#allocation2 + $0x78] sm:$0xff]
    %v7040 = vld [vmem:[#allocation2 + $0x80] sm:$0xff]
    %v7041 = vld [vmem:[#allocation2 + $0x88] sm:$0xff]
    %v7042 = vld [vmem:[#allocation2 + $0x90] sm:$0xff]
    %v7043 = vld [vmem:[#allocation2 + $0x98] sm:$0xff]
    %v7044 = vld [vmem:[#allocation2 + $0xa0] sm:$0xff]
    %v7045 = vld [vmem:[#allocation2 + $0xa8] sm:$0xff]
    %v7046 = vld [vmem:[#allocation2 + $0xb0] sm:$0xff]
    %v7047 = vld [vmem:[#allocation2 + $0xb8] sm:$0xff]
    %v7048 = vld [vmem:[%s2562] sm:$0xff]
    %v7049 = vld [vmem:[%s2562 + $0x8] sm:$0xff]
    %v7050 = vld [vmem:[%s2562 + $0x10] sm:$0xff]
    %v7051 = vld [vmem:[%s2562 + $0x18] sm:$0xff]
    %v7052 = vld [vmem:[%s2562 + $0x20] sm:$0xff]
    %v7053 = vld [vmem:[%s2562 + $0x28] sm:$0xff]
    %v7054 = vld [vmem:[%s2562 + $0x30] sm:$0xff]
    %v7055 = vld [vmem:[%s2562 + $0x38] sm:$0xff]
    %v7056 = vld [vmem:[%s2562 + $0x40] sm:$0xff]
    %v7057 = vld [vmem:[%s2562 + $0x48] sm:$0xff]
    %v7058 = vld [vmem:[%s2562 + $0x50] sm:$0xff]
    %v7059 = vld [vmem:[%s2562 + $0x58] sm:$0xff]
    %v7060 = vld [vmem:[%s2562 + $0x60] sm:$0xff]
    %v7061 = vld [vmem:[%s2562 + $0x68] sm:$0xff]
    %v7062 = vld [vmem:[%s2562 + $0x70] sm:$0xff]
    %v7063 = vld [vmem:[%s2562 + $0x78] sm:$0xff]
    %v7064 = vld [vmem:[%s2562 + $0x80] sm:$0xff]
    %v7065 = vld [vmem:[%s2562 + $0x88] sm:$0xff]
    %v7066 = vld [vmem:[%s2562 + $0x90] sm:$0xff]
    %v7067 = vld [vmem:[%s2562 + $0x98] sm:$0xff]
    %v7068 = vld [vmem:[%s2562 + $0xa0] sm:$0xff]
    %7070 = vset.pattern.permute.xlu0 0
    %7071 = vperm.xlu0 %7070, %v7048
    %v7072 = vpop.permute.xlu0 %7071
    %7075 = vset.pattern.permute.xlu0 0
    %7076 = vperm.xlu0 %7075, %v7049
    %v7077 = vpop.permute.xlu0 %7076
    %7080 = vset.pattern.permute.xlu0 0
    %7081 = vperm.xlu0 %7080, %v7050
    %v7082 = vpop.permute.xlu0 %7081
    %7085 = vset.pattern.permute.xlu0 0
    %7086 = vperm.xlu0 %7085, %v7051
    %v7087 = vpop.permute.xlu0 %7086
    %7090 = vset.pattern.permute.xlu0 0
    %7091 = vperm.xlu0 %7090, %v7052
    %v7092 = vpop.permute.xlu0 %7091
    %7095 = vset.pattern.permute.xlu0 0
    %7096 = vperm.xlu0 %7095, %v7053
    %v7097 = vpop.permute.xlu0 %7096
    %7100 = vset.pattern.permute.xlu0 0
    %7101 = vperm.xlu0 %7100, %v7054
    %v7102 = vpop.permute.xlu0 %7101
    %7105 = vset.pattern.permute.xlu0 0
    %7106 = vperm.xlu0 %7105, %v7055
    %v7107 = vpop.permute.xlu0 %7106
    %7110 = vset.pattern.permute.xlu0 0
    %7111 = vperm.xlu0 %7110, %v7056
    %v7112 = vpop.permute.xlu0 %7111
    %7115 = vset.pattern.permute.xlu0 0
    %7116 = vperm.xlu0 %7115, %v7057
    %v7117 = vpop.permute.xlu0 %7116
    %7120 = vset.pattern.permute.xlu0 0
    %7121 = vperm.xlu0 %7120, %v7058
    %v7122 = vpop.permute.xlu0 %7121
    %7125 = vset.pattern.permute.xlu0 0
    %7126 = vperm.xlu0 %7125, %v7059
    %v7127 = vpop.permute.xlu0 %7126
    %7130 = vset.pattern.permute.xlu0 0
    %7131 = vperm.xlu0 %7130, %v7060
    %v7132 = vpop.permute.xlu0 %7131
    %7135 = vset.pattern.permute.xlu0 0
    %7136 = vperm.xlu0 %7135, %v7061
    %v7137 = vpop.permute.xlu0 %7136
    %7140 = vset.pattern.permute.xlu0 0
    %7141 = vperm.xlu0 %7140, %v7062
    %v7142 = vpop.permute.xlu0 %7141
    %7145 = vset.pattern.permute.xlu0 0
    %7146 = vperm.xlu0 %7145, %v7063
    %v7147 = vpop.permute.xlu0 %7146
    %7150 = vset.pattern.permute.xlu0 0
    %7151 = vperm.xlu0 %7150, %v7064
    %v7152 = vpop.permute.xlu0 %7151
    %7155 = vset.pattern.permute.xlu0 0
    %7156 = vperm.xlu0 %7155, %v7065
    %v7157 = vpop.permute.xlu0 %7156
    %7160 = vset.pattern.permute.xlu0 0
    %7161 = vperm.xlu0 %7160, %v7066
    %v7162 = vpop.permute.xlu0 %7161
    %7165 = vset.pattern.permute.xlu0 0
    %7166 = vperm.xlu0 %7165, %v7067
    %v7167 = vpop.permute.xlu0 %7166
    %7170 = vset.pattern.permute.xlu0 0
    %7171 = vperm.xlu0 %7170, %v7068
    %v7172 = vpop.permute.xlu0 %7171
    %v7174 = vmul.f32 %v7027, %v7072
    %v7175 = vmul.f32 %v7028, %v7077
    %v7176 = vmul.f32 %v7029, %v7082
    %v7177 = vmul.f32 %v7030, %v7087
    %v7178 = vmul.f32 %v7031, %v7092
    %v7179 = vmul.f32 %v7032, %v7097
    %v7180 = vmul.f32 %v7033, %v7102
    %v7181 = vmul.f32 %v7034, %v7107
    %v7182 = vmul.f32 %v7035, %v7112
    %v7183 = vmul.f32 %v7036, %v7117
    %v7184 = vmul.f32 %v7037, %v7122
    %v7185 = vmul.f32 %v7038, %v7127
    %v7186 = vmul.f32 %v7039, %v7132
    %v7187 = vmul.f32 %v7040, %v7137
    %v7188 = vmul.f32 %v7041, %v7142
    %v7189 = vmul.f32 %v7042, %v7147
    %v7190 = vmul.f32 %v7043, %v7152
    %v7191 = vmul.f32 %v7044, %v7157
    %v7192 = vmul.f32 %v7045, %v7162
    %v7193 = vmul.f32 %v7046, %v7167
    %v7194 = vmul.f32 %v7047, %v7172
    %v7195 = vpack.c.bf16 %v7175, %v7174
    %v7196 = vpack.c.bf16 %v7177, %v7176
    %v7197 = vpack.c.bf16 %v7179, %v7178
    %v7198 = vpack.c.bf16 %v7181, %v7180
    %v7199 = vpack.c.bf16 %v7183, %v7182
    %v7200 = vpack.c.bf16 %v7185, %v7184
    %v7201 = vpack.c.bf16 %v7187, %v7186
    %v7202 = vpack.c.bf16 %v7189, %v7188
    %v7203 = vpack.c.bf16 %v7191, %v7190
    %v7204 = vpack.c.bf16 %v7193, %v7192
    %v7205 = vpack.c.bf16 %v7194, %v7194
    %v7217 = vunpack.c.l.b16 %v7195
    %v7218 = vunpack.c.h.b16 %v7195
    %v7219 = vunpack.c.l.b16 %v7196
    %v7220 = vunpack.c.h.b16 %v7196
    %v7221 = vunpack.c.l.b16 %v7197
    %v7222 = vunpack.c.h.b16 %v7197
    %v7223 = vunpack.c.l.b16 %v7198
    %v7224 = vunpack.c.h.b16 %v7198
    %v7225 = vunpack.c.l.b16 %v7199
    %v7226 = vunpack.c.h.b16 %v7199
    %v7227 = vunpack.c.l.b16 %v7200
    %v7228 = vunpack.c.h.b16 %v7200
    %v7229 = vunpack.c.l.b16 %v7201
    %v7230 = vunpack.c.h.b16 %v7201
    %v7231 = vunpack.c.l.b16 %v7202
    %v7232 = vunpack.c.h.b16 %v7202
    %v7233 = vunpack.c.l.b16 %v7203
    %v7234 = vunpack.c.h.b16 %v7203
    %v7235 = vunpack.c.l.b16 %v7204
    %v7236 = vunpack.c.h.b16 %v7204
    %v7237 = vunpack.c.l.b16 %v7205
    %v7238 = vpack.c.b16 %v7217, %v7217
    %v7239 = vpack.c.b16 %v7218, %v7218
    %v7240 = vpack.c.b16 %v7219, %v7219
    %v7241 = vpack.c.b16 %v7220, %v7220
    %v7242 = vpack.c.b16 %v7221, %v7221
    %v7243 = vpack.c.b16 %v7222, %v7222
    %v7244 = vpack.c.b16 %v7223, %v7223
    %v7245 = vpack.c.b16 %v7224, %v7224
    %v7246 = vpack.c.b16 %v7225, %v7225
    %v7247 = vpack.c.b16 %v7226, %v7226
    %v7248 = vpack.c.b16 %v7227, %v7227
    %v7249 = vpack.c.b16 %v7228, %v7228
    %v7250 = vpack.c.b16 %v7229, %v7229
    %v7251 = vpack.c.b16 %v7230, %v7230
    %v7252 = vpack.c.b16 %v7231, %v7231
    %v7253 = vpack.c.b16 %v7232, %v7232
    %v7254 = vpack.c.b16 %v7233, %v7233
    %v7255 = vpack.c.b16 %v7234, %v7234
    %v7256 = vpack.c.b16 %v7235, %v7235
    %v7257 = vpack.c.b16 %v7236, %v7236
    %v7258 = vpack.c.b16 %v7237, %v7237
    %7280 = vst [vmem:[#allocation3 + $0x18] sm:$0xf] %v7238
    %7281 = vst [vmem:[#allocation3 + $0x3c] sm:$0xf] %v7239
    %7282 = vst [vmem:[#allocation3 + $0x60] sm:$0xf] %v7240
    %7283 = vst [vmem:[#allocation3 + $0x84] sm:$0xf] %v7241
    %7284 = vst [vmem:[#allocation3 + $0xa8] sm:$0xf] %v7242
    %7285 = vst [vmem:[#allocation3 + $0xcc] sm:$0xf] %v7243
    %7286 = vst [vmem:[#allocation3 + $0xf0] sm:$0xf] %v7244
    %7287 = vst [vmem:[#allocation3 + $0x114] sm:$0xf] %v7245
    %7288 = vst [vmem:[#allocation3 + $0x138] sm:$0xf] %v7246
    %7289 = vst [vmem:[#allocation3 + $0x15c] sm:$0xf] %v7247
    %7290 = vst [vmem:[#allocation3 + $0x180] sm:$0xf] %v7248
    %7291 = vst [vmem:[#allocation3 + $0x1a4] sm:$0xf] %v7249
    %7292 = vst [vmem:[#allocation3 + $0x1c8] sm:$0xf] %v7250
    %7293 = vst [vmem:[#allocation3 + $0x1ec] sm:$0xf] %v7251
    %7294 = vst [vmem:[#allocation3 + $0x210] sm:$0xf] %v7252
    %7295 = vst [vmem:[#allocation3 + $0x234] sm:$0xf] %v7253
    %7296 = vst [vmem:[#allocation3 + $0x258] sm:$0xf] %v7254
    %7297 = vst [vmem:[#allocation3 + $0x27c] sm:$0xf] %v7255
    %7298 = vst [vmem:[#allocation3 + $0x2a0] sm:$0xf] %v7256
    %7299 = vst [vmem:[#allocation3 + $0x2c4] sm:$0xf] %v7257
    %7300 = vst [vmem:[#allocation3 + $0x2e8] sm:$0xf] %v7258
    %v7301 = vld [vmem:[#allocation2 + $0x19] sm:$0xff]
    %v7302 = vld [vmem:[#allocation2 + $0x21] sm:$0xff]
    %v7303 = vld [vmem:[#allocation2 + $0x29] sm:$0xff]
    %v7304 = vld [vmem:[#allocation2 + $0x31] sm:$0xff]
    %v7305 = vld [vmem:[#allocation2 + $0x39] sm:$0xff]
    %v7306 = vld [vmem:[#allocation2 + $0x41] sm:$0xff]
    %v7307 = vld [vmem:[#allocation2 + $0x49] sm:$0xff]
    %v7308 = vld [vmem:[#allocation2 + $0x51] sm:$0xff]
    %v7309 = vld [vmem:[#allocation2 + $0x59] sm:$0xff]
    %v7310 = vld [vmem:[#allocation2 + $0x61] sm:$0xff]
    %v7311 = vld [vmem:[#allocation2 + $0x69] sm:$0xff]
    %v7312 = vld [vmem:[#allocation2 + $0x71] sm:$0xff]
    %v7313 = vld [vmem:[#allocation2 + $0x79] sm:$0xff]
    %v7314 = vld [vmem:[#allocation2 + $0x81] sm:$0xff]
    %v7315 = vld [vmem:[#allocation2 + $0x89] sm:$0xff]
    %v7316 = vld [vmem:[#allocation2 + $0x91] sm:$0xff]
    %v7317 = vld [vmem:[#allocation2 + $0x99] sm:$0xff]
    %v7318 = vld [vmem:[#allocation2 + $0xa1] sm:$0xff]
    %v7319 = vld [vmem:[#allocation2 + $0xa9] sm:$0xff]
    %v7320 = vld [vmem:[#allocation2 + $0xb1] sm:$0xff]
    %v7321 = vld [vmem:[#allocation2 + $0xb9] sm:$0xff]
    %v7322 = vld [vmem:[%s2837] sm:$0xff]
    %v7323 = vld [vmem:[%s2837 + $0x8] sm:$0xff]
    %v7324 = vld [vmem:[%s2837 + $0x10] sm:$0xff]
    %v7325 = vld [vmem:[%s2837 + $0x18] sm:$0xff]
    %v7326 = vld [vmem:[%s2837 + $0x20] sm:$0xff]
    %v7327 = vld [vmem:[%s2837 + $0x28] sm:$0xff]
    %v7328 = vld [vmem:[%s2837 + $0x30] sm:$0xff]
    %v7329 = vld [vmem:[%s2837 + $0x38] sm:$0xff]
    %v7330 = vld [vmem:[%s2837 + $0x40] sm:$0xff]
    %v7331 = vld [vmem:[%s2837 + $0x48] sm:$0xff]
    %v7332 = vld [vmem:[%s2837 + $0x50] sm:$0xff]
    %v7333 = vld [vmem:[%s2837 + $0x58] sm:$0xff]
    %v7334 = vld [vmem:[%s2837 + $0x60] sm:$0xff]
    %v7335 = vld [vmem:[%s2837 + $0x68] sm:$0xff]
    %v7336 = vld [vmem:[%s2837 + $0x70] sm:$0xff]
    %v7337 = vld [vmem:[%s2837 + $0x78] sm:$0xff]
    %v7338 = vld [vmem:[%s2837 + $0x80] sm:$0xff]
    %v7339 = vld [vmem:[%s2837 + $0x88] sm:$0xff]
    %v7340 = vld [vmem:[%s2837 + $0x90] sm:$0xff]
    %v7341 = vld [vmem:[%s2837 + $0x98] sm:$0xff]
    %v7342 = vld [vmem:[%s2837 + $0xa0] sm:$0xff]
    %7344 = vset.pattern.permute.xlu0 0
    %7345 = vperm.xlu0 %7344, %v7322
    %v7346 = vpop.permute.xlu0 %7345
    %7349 = vset.pattern.permute.xlu0 0
    %7350 = vperm.xlu0 %7349, %v7323
    %v7351 = vpop.permute.xlu0 %7350
    %7354 = vset.pattern.permute.xlu0 0
    %7355 = vperm.xlu0 %7354, %v7324
    %v7356 = vpop.permute.xlu0 %7355
    %7359 = vset.pattern.permute.xlu0 0
    %7360 = vperm.xlu0 %7359, %v7325
    %v7361 = vpop.permute.xlu0 %7360
    %7364 = vset.pattern.permute.xlu0 0
    %7365 = vperm.xlu0 %7364, %v7326
    %v7366 = vpop.permute.xlu0 %7365
    %7369 = vset.pattern.permute.xlu0 0
    %7370 = vperm.xlu0 %7369, %v7327
    %v7371 = vpop.permute.xlu0 %7370
    %7374 = vset.pattern.permute.xlu0 0
    %7375 = vperm.xlu0 %7374, %v7328
    %v7376 = vpop.permute.xlu0 %7375
    %7379 = vset.pattern.permute.xlu0 0
    %7380 = vperm.xlu0 %7379, %v7329
    %v7381 = vpop.permute.xlu0 %7380
    %7384 = vset.pattern.permute.xlu0 0
    %7385 = vperm.xlu0 %7384, %v7330
    %v7386 = vpop.permute.xlu0 %7385
    %7389 = vset.pattern.permute.xlu0 0
    %7390 = vperm.xlu0 %7389, %v7331
    %v7391 = vpop.permute.xlu0 %7390
    %7394 = vset.pattern.permute.xlu0 0
    %7395 = vperm.xlu0 %7394, %v7332
    %v7396 = vpop.permute.xlu0 %7395
    %7399 = vset.pattern.permute.xlu0 0
    %7400 = vperm.xlu0 %7399, %v7333
    %v7401 = vpop.permute.xlu0 %7400
    %7404 = vset.pattern.permute.xlu0 0
    %7405 = vperm.xlu0 %7404, %v7334
    %v7406 = vpop.permute.xlu0 %7405
    %7409 = vset.pattern.permute.xlu0 0
    %7410 = vperm.xlu0 %7409, %v7335
    %v7411 = vpop.permute.xlu0 %7410
    %7414 = vset.pattern.permute.xlu0 0
    %7415 = vperm.xlu0 %7414, %v7336
    %v7416 = vpop.permute.xlu0 %7415
    %7419 = vset.pattern.permute.xlu0 0
    %7420 = vperm.xlu0 %7419, %v7337
    %v7421 = vpop.permute.xlu0 %7420
    %7424 = vset.pattern.permute.xlu0 0
    %7425 = vperm.xlu0 %7424, %v7338
    %v7426 = vpop.permute.xlu0 %7425
    %7429 = vset.pattern.permute.xlu0 0
    %7430 = vperm.xlu0 %7429, %v7339
    %v7431 = vpop.permute.xlu0 %7430
    %7434 = vset.pattern.permute.xlu0 0
    %7435 = vperm.xlu0 %7434, %v7340
    %v7436 = vpop.permute.xlu0 %7435
    %7439 = vset.pattern.permute.xlu0 0
    %7440 = vperm.xlu0 %7439, %v7341
    %v7441 = vpop.permute.xlu0 %7440
    %7444 = vset.pattern.permute.xlu0 0
    %7445 = vperm.xlu0 %7444, %v7342
    %v7446 = vpop.permute.xlu0 %7445
    %v7448 = vmul.f32 %v7301, %v7346
    %v7449 = vmul.f32 %v7302, %v7351
    %v7450 = vmul.f32 %v7303, %v7356
    %v7451 = vmul.f32 %v7304, %v7361
    %v7452 = vmul.f32 %v7305, %v7366
    %v7453 = vmul.f32 %v7306, %v7371
    %v7454 = vmul.f32 %v7307, %v7376
    %v7455 = vmul.f32 %v7308, %v7381
    %v7456 = vmul.f32 %v7309, %v7386
    %v7457 = vmul.f32 %v7310, %v7391
    %v7458 = vmul.f32 %v7311, %v7396
    %v7459 = vmul.f32 %v7312, %v7401
    %v7460 = vmul.f32 %v7313, %v7406
    %v7461 = vmul.f32 %v7314, %v7411
    %v7462 = vmul.f32 %v7315, %v7416
    %v7463 = vmul.f32 %v7316, %v7421
    %v7464 = vmul.f32 %v7317, %v7426
    %v7465 = vmul.f32 %v7318, %v7431
    %v7466 = vmul.f32 %v7319, %v7436
    %v7467 = vmul.f32 %v7320, %v7441
    %v7468 = vmul.f32 %v7321, %v7446
    %v7469 = vpack.c.bf16 %v7449, %v7448
    %v7470 = vpack.c.bf16 %v7451, %v7450
    %v7471 = vpack.c.bf16 %v7453, %v7452
    %v7472 = vpack.c.bf16 %v7455, %v7454
    %v7473 = vpack.c.bf16 %v7457, %v7456
    %v7474 = vpack.c.bf16 %v7459, %v7458
    %v7475 = vpack.c.bf16 %v7461, %v7460
    %v7476 = vpack.c.bf16 %v7463, %v7462
    %v7477 = vpack.c.bf16 %v7465, %v7464
    %v7478 = vpack.c.bf16 %v7467, %v7466
    %v7479 = vpack.c.bf16 %v7468, %v7468
    %v7491 = vunpack.c.l.b16 %v7469
    %v7492 = vunpack.c.h.b16 %v7469
    %v7493 = vunpack.c.l.b16 %v7470
    %v7494 = vunpack.c.h.b16 %v7470
    %v7495 = vunpack.c.l.b16 %v7471
    %v7496 = vunpack.c.h.b16 %v7471
    %v7497 = vunpack.c.l.b16 %v7472
    %v7498 = vunpack.c.h.b16 %v7472
    %v7499 = vunpack.c.l.b16 %v7473
    %v7500 = vunpack.c.h.b16 %v7473
    %v7501 = vunpack.c.l.b16 %v7474
    %v7502 = vunpack.c.h.b16 %v7474
    %v7503 = vunpack.c.l.b16 %v7475
    %v7504 = vunpack.c.h.b16 %v7475
    %v7505 = vunpack.c.l.b16 %v7476
    %v7506 = vunpack.c.h.b16 %v7476
    %v7507 = vunpack.c.l.b16 %v7477
    %v7508 = vunpack.c.h.b16 %v7477
    %v7509 = vunpack.c.l.b16 %v7478
    %v7510 = vunpack.c.h.b16 %v7478
    %v7511 = vunpack.c.l.b16 %v7479
    %v7512 = vpack.c.b16 %v7491, %v7491
    %v7513 = vpack.c.b16 %v7492, %v7492
    %v7514 = vpack.c.b16 %v7493, %v7493
    %v7515 = vpack.c.b16 %v7494, %v7494
    %v7516 = vpack.c.b16 %v7495, %v7495
    %v7517 = vpack.c.b16 %v7496, %v7496
    %v7518 = vpack.c.b16 %v7497, %v7497
    %v7519 = vpack.c.b16 %v7498, %v7498
    %v7520 = vpack.c.b16 %v7499, %v7499
    %v7521 = vpack.c.b16 %v7500, %v7500
    %v7522 = vpack.c.b16 %v7501, %v7501
    %v7523 = vpack.c.b16 %v7502, %v7502
    %v7524 = vpack.c.b16 %v7503, %v7503
    %v7525 = vpack.c.b16 %v7504, %v7504
    %v7526 = vpack.c.b16 %v7505, %v7505
    %v7527 = vpack.c.b16 %v7506, %v7506
    %v7528 = vpack.c.b16 %v7507, %v7507
    %v7529 = vpack.c.b16 %v7508, %v7508
    %v7530 = vpack.c.b16 %v7509, %v7509
    %v7531 = vpack.c.b16 %v7510, %v7510
    %v7532 = vpack.c.b16 %v7511, %v7511
    %7554 = vst [vmem:[#allocation3 + $0x1c] sm:$0xf] %v7512
    %7555 = vst [vmem:[#allocation3 + $0x40] sm:$0xf] %v7513
    %7556 = vst [vmem:[#allocation3 + $0x64] sm:$0xf] %v7514
    %7557 = vst [vmem:[#allocation3 + $0x88] sm:$0xf] %v7515
    %7558 = vst [vmem:[#allocation3 + $0xac] sm:$0xf] %v7516
    %7559 = vst [vmem:[#allocation3 + $0xd0] sm:$0xf] %v7517
    %7560 = vst [vmem:[#allocation3 + $0xf4] sm:$0xf] %v7518
    %7561 = vst [vmem:[#allocation3 + $0x118] sm:$0xf] %v7519
    %7562 = vst [vmem:[#allocation3 + $0x13c] sm:$0xf] %v7520
    %7563 = vst [vmem:[#allocation3 + $0x160] sm:$0xf] %v7521
    %7564 = vst [vmem:[#allocation3 + $0x184] sm:$0xf] %v7522
    %7565 = vst [vmem:[#allocation3 + $0x1a8] sm:$0xf] %v7523
    %7566 = vst [vmem:[#allocation3 + $0x1cc] sm:$0xf] %v7524
    %7567 = vst [vmem:[#allocation3 + $0x1f0] sm:$0xf] %v7525
    %7568 = vst [vmem:[#allocation3 + $0x214] sm:$0xf] %v7526
    %7569 = vst [vmem:[#allocation3 + $0x238] sm:$0xf] %v7527
    %7570 = vst [vmem:[#allocation3 + $0x25c] sm:$0xf] %v7528
    %7571 = vst [vmem:[#allocation3 + $0x280] sm:$0xf] %v7529
    %7572 = vst [vmem:[#allocation3 + $0x2a4] sm:$0xf] %v7530
    %7573 = vst [vmem:[#allocation3 + $0x2c8] sm:$0xf] %v7531
    %7574 = vst [vmem:[#allocation3 + $0x2ec] sm:$0xf] %v7532
    %v7575 = vld [vmem:[#allocation2 + $0x1a] sm:$0xff]
    %v7576 = vld [vmem:[#allocation2 + $0x22] sm:$0xff]
    %v7577 = vld [vmem:[#allocation2 + $0x2a] sm:$0xff]
    %v7578 = vld [vmem:[#allocation2 + $0x32] sm:$0xff]
    %v7579 = vld [vmem:[#allocation2 + $0x3a] sm:$0xff]
    %v7580 = vld [vmem:[#allocation2 + $0x42] sm:$0xff]
    %v7581 = vld [vmem:[#allocation2 + $0x4a] sm:$0xff]
    %v7582 = vld [vmem:[#allocation2 + $0x52] sm:$0xff]
    %v7583 = vld [vmem:[#allocation2 + $0x5a] sm:$0xff]
    %v7584 = vld [vmem:[#allocation2 + $0x62] sm:$0xff]
    %v7585 = vld [vmem:[#allocation2 + $0x6a] sm:$0xff]
    %v7586 = vld [vmem:[#allocation2 + $0x72] sm:$0xff]
    %v7587 = vld [vmem:[#allocation2 + $0x7a] sm:$0xff]
    %v7588 = vld [vmem:[#allocation2 + $0x82] sm:$0xff]
    %v7589 = vld [vmem:[#allocation2 + $0x8a] sm:$0xff]
    %v7590 = vld [vmem:[#allocation2 + $0x92] sm:$0xff]
    %v7591 = vld [vmem:[#allocation2 + $0x9a] sm:$0xff]
    %v7592 = vld [vmem:[#allocation2 + $0xa2] sm:$0xff]
    %v7593 = vld [vmem:[#allocation2 + $0xaa] sm:$0xff]
    %v7594 = vld [vmem:[#allocation2 + $0xb2] sm:$0xff]
    %v7595 = vld [vmem:[#allocation2 + $0xba] sm:$0xff]
    %v7596 = vld [vmem:[%s3112] sm:$0xff]
    %v7597 = vld [vmem:[%s3112 + $0x8] sm:$0xff]
    %v7598 = vld [vmem:[%s3112 + $0x10] sm:$0xff]
    %v7599 = vld [vmem:[%s3112 + $0x18] sm:$0xff]
    %v7600 = vld [vmem:[%s3112 + $0x20] sm:$0xff]
    %v7601 = vld [vmem:[%s3112 + $0x28] sm:$0xff]
    %v7602 = vld [vmem:[%s3112 + $0x30] sm:$0xff]
    %v7603 = vld [vmem:[%s3112 + $0x38] sm:$0xff]
    %v7604 = vld [vmem:[%s3112 + $0x40] sm:$0xff]
    %v7605 = vld [vmem:[%s3112 + $0x48] sm:$0xff]
    %v7606 = vld [vmem:[%s3112 + $0x50] sm:$0xff]
    %v7607 = vld [vmem:[%s3112 + $0x58] sm:$0xff]
    %v7608 = vld [vmem:[%s3112 + $0x60] sm:$0xff]
    %v7609 = vld [vmem:[%s3112 + $0x68] sm:$0xff]
    %v7610 = vld [vmem:[%s3112 + $0x70] sm:$0xff]
    %v7611 = vld [vmem:[%s3112 + $0x78] sm:$0xff]
    %v7612 = vld [vmem:[%s3112 + $0x80] sm:$0xff]
    %v7613 = vld [vmem:[%s3112 + $0x88] sm:$0xff]
    %v7614 = vld [vmem:[%s3112 + $0x90] sm:$0xff]
    %v7615 = vld [vmem:[%s3112 + $0x98] sm:$0xff]
    %v7616 = vld [vmem:[%s3112 + $0xa0] sm:$0xff]
    %7618 = vset.pattern.permute.xlu0 0
    %7619 = vperm.xlu0 %7618, %v7596
    %v7620 = vpop.permute.xlu0 %7619
    %7623 = vset.pattern.permute.xlu0 0
    %7624 = vperm.xlu0 %7623, %v7597
    %v7625 = vpop.permute.xlu0 %7624
    %7628 = vset.pattern.permute.xlu0 0
    %7629 = vperm.xlu0 %7628, %v7598
    %v7630 = vpop.permute.xlu0 %7629
    %7633 = vset.pattern.permute.xlu0 0
    %7634 = vperm.xlu0 %7633, %v7599
    %v7635 = vpop.permute.xlu0 %7634
    %7638 = vset.pattern.permute.xlu0 0
    %7639 = vperm.xlu0 %7638, %v7600
    %v7640 = vpop.permute.xlu0 %7639
    %7643 = vset.pattern.permute.xlu0 0
    %7644 = vperm.xlu0 %7643, %v7601
    %v7645 = vpop.permute.xlu0 %7644
    %7648 = vset.pattern.permute.xlu0 0
    %7649 = vperm.xlu0 %7648, %v7602
    %v7650 = vpop.permute.xlu0 %7649
    %7653 = vset.pattern.permute.xlu0 0
    %7654 = vperm.xlu0 %7653, %v7603
    %v7655 = vpop.permute.xlu0 %7654
    %7658 = vset.pattern.permute.xlu0 0
    %7659 = vperm.xlu0 %7658, %v7604
    %v7660 = vpop.permute.xlu0 %7659
    %7663 = vset.pattern.permute.xlu0 0
    %7664 = vperm.xlu0 %7663, %v7605
    %v7665 = vpop.permute.xlu0 %7664
    %7668 = vset.pattern.permute.xlu0 0
    %7669 = vperm.xlu0 %7668, %v7606
    %v7670 = vpop.permute.xlu0 %7669
    %7673 = vset.pattern.permute.xlu0 0
    %7674 = vperm.xlu0 %7673, %v7607
    %v7675 = vpop.permute.xlu0 %7674
    %7678 = vset.pattern.permute.xlu0 0
    %7679 = vperm.xlu0 %7678, %v7608
    %v7680 = vpop.permute.xlu0 %7679
    %7683 = vset.pattern.permute.xlu0 0
    %7684 = vperm.xlu0 %7683, %v7609
    %v7685 = vpop.permute.xlu0 %7684
    %7688 = vset.pattern.permute.xlu0 0
    %7689 = vperm.xlu0 %7688, %v7610
    %v7690 = vpop.permute.xlu0 %7689
    %7693 = vset.pattern.permute.xlu0 0
    %7694 = vperm.xlu0 %7693, %v7611
    %v7695 = vpop.permute.xlu0 %7694
    %7698 = vset.pattern.permute.xlu0 0
    %7699 = vperm.xlu0 %7698, %v7612
    %v7700 = vpop.permute.xlu0 %7699
    %7703 = vset.pattern.permute.xlu0 0
    %7704 = vperm.xlu0 %7703, %v7613
    %v7705 = vpop.permute.xlu0 %7704
    %7708 = vset.pattern.permute.xlu0 0
    %7709 = vperm.xlu0 %7708, %v7614
    %v7710 = vpop.permute.xlu0 %7709
    %7713 = vset.pattern.permute.xlu0 0
    %7714 = vperm.xlu0 %7713, %v7615
    %v7715 = vpop.permute.xlu0 %7714
    %7718 = vset.pattern.permute.xlu0 0
    %7719 = vperm.xlu0 %7718, %v7616
    %v7720 = vpop.permute.xlu0 %7719
    %v7722 = vmul.f32 %v7575, %v7620
    %v7723 = vmul.f32 %v7576, %v7625
    %v7724 = vmul.f32 %v7577, %v7630
    %v7725 = vmul.f32 %v7578, %v7635
    %v7726 = vmul.f32 %v7579, %v7640
    %v7727 = vmul.f32 %v7580, %v7645
    %v7728 = vmul.f32 %v7581, %v7650
    %v7729 = vmul.f32 %v7582, %v7655
    %v7730 = vmul.f32 %v7583, %v7660
    %v7731 = vmul.f32 %v7584, %v7665
    %v7732 = vmul.f32 %v7585, %v7670
    %v7733 = vmul.f32 %v7586, %v7675
    %v7734 = vmul.f32 %v7587, %v7680
    %v7735 = vmul.f32 %v7588, %v7685
    %v7736 = vmul.f32 %v7589, %v7690
    %v7737 = vmul.f32 %v7590, %v7695
    %v7738 = vmul.f32 %v7591, %v7700
    %v7739 = vmul.f32 %v7592, %v7705
    %v7740 = vmul.f32 %v7593, %v7710
    %v7741 = vmul.f32 %v7594, %v7715
    %v7742 = vmul.f32 %v7595, %v7720
    %v7743 = vpack.c.bf16 %v7723, %v7722
    %v7744 = vpack.c.bf16 %v7725, %v7724
    %v7745 = vpack.c.bf16 %v7727, %v7726
    %v7746 = vpack.c.bf16 %v7729, %v7728
    %v7747 = vpack.c.bf16 %v7731, %v7730
    %v7748 = vpack.c.bf16 %v7733, %v7732
    %v7749 = vpack.c.bf16 %v7735, %v7734
    %v7750 = vpack.c.bf16 %v7737, %v7736
    %v7751 = vpack.c.bf16 %v7739, %v7738
    %v7752 = vpack.c.bf16 %v7741, %v7740
    %v7753 = vpack.c.bf16 %v7742, %v7742
    %v7765 = vunpack.c.l.b16 %v7743
    %v7766 = vunpack.c.h.b16 %v7743
    %v7767 = vunpack.c.l.b16 %v7744
    %v7768 = vunpack.c.h.b16 %v7744
    %v7769 = vunpack.c.l.b16 %v7745
    %v7770 = vunpack.c.h.b16 %v7745
    %v7771 = vunpack.c.l.b16 %v7746
    %v7772 = vunpack.c.h.b16 %v7746
    %v7773 = vunpack.c.l.b16 %v7747
    %v7774 = vunpack.c.h.b16 %v7747
    %v7775 = vunpack.c.l.b16 %v7748
    %v7776 = vunpack.c.h.b16 %v7748
    %v7777 = vunpack.c.l.b16 %v7749
    %v7778 = vunpack.c.h.b16 %v7749
    %v7779 = vunpack.c.l.b16 %v7750
    %v7780 = vunpack.c.h.b16 %v7750
    %v7781 = vunpack.c.l.b16 %v7751
    %v7782 = vunpack.c.h.b16 %v7751
    %v7783 = vunpack.c.l.b16 %v7752
    %v7784 = vunpack.c.h.b16 %v7752
    %v7785 = vunpack.c.l.b16 %v7753
    %v7786 = vpack.c.b16 %v7765, %v7765
    %v7787 = vpack.c.b16 %v7766, %v7766
    %v7788 = vpack.c.b16 %v7767, %v7767
    %v7789 = vpack.c.b16 %v7768, %v7768
    %v7790 = vpack.c.b16 %v7769, %v7769
    %v7791 = vpack.c.b16 %v7770, %v7770
    %v7792 = vpack.c.b16 %v7771, %v7771
    %v7793 = vpack.c.b16 %v7772, %v7772
    %v7794 = vpack.c.b16 %v7773, %v7773
    %v7795 = vpack.c.b16 %v7774, %v7774
    %v7796 = vpack.c.b16 %v7775, %v7775
    %v7797 = vpack.c.b16 %v7776, %v7776
    %v7798 = vpack.c.b16 %v7777, %v7777
    %v7799 = vpack.c.b16 %v7778, %v7778
    %v7800 = vpack.c.b16 %v7779, %v7779
    %v7801 = vpack.c.b16 %v7780, %v7780
    %v7802 = vpack.c.b16 %v7781, %v7781
    %v7803 = vpack.c.b16 %v7782, %v7782
    %v7804 = vpack.c.b16 %v7783, %v7783
    %v7805 = vpack.c.b16 %v7784, %v7784
    %v7806 = vpack.c.b16 %v7785, %v7785
    %7828 = vst [vmem:[#allocation3 + $0x20] sm:$0xf] %v7786
    %7829 = vst [vmem:[#allocation3 + $0x44] sm:$0xf] %v7787
    %7830 = vst [vmem:[#allocation3 + $0x68] sm:$0xf] %v7788
    %7831 = vst [vmem:[#allocation3 + $0x8c] sm:$0xf] %v7789
    %7832 = vst [vmem:[#allocation3 + $0xb0] sm:$0xf] %v7790
    %7833 = vst [vmem:[#allocation3 + $0xd4] sm:$0xf] %v7791
    %7834 = vst [vmem:[#allocation3 + $0xf8] sm:$0xf] %v7792
    %7835 = vst [vmem:[#allocation3 + $0x11c] sm:$0xf] %v7793
    %7836 = vst [vmem:[#allocation3 + $0x140] sm:$0xf] %v7794
    %7837 = vst [vmem:[#allocation3 + $0x164] sm:$0xf] %v7795
    %7838 = vst [vmem:[#allocation3 + $0x188] sm:$0xf] %v7796
    %7839 = vst [vmem:[#allocation3 + $0x1ac] sm:$0xf] %v7797
    %7840 = vst [vmem:[#allocation3 + $0x1d0] sm:$0xf] %v7798
    %7841 = vst [vmem:[#allocation3 + $0x1f4] sm:$0xf] %v7799
    %7842 = vst [vmem:[#allocation3 + $0x218] sm:$0xf] %v7800
    %7843 = vst [vmem:[#allocation3 + $0x23c] sm:$0xf] %v7801
    %7844 = vst [vmem:[#allocation3 + $0x260] sm:$0xf] %v7802
    %7845 = vst [vmem:[#allocation3 + $0x284] sm:$0xf] %v7803
    %7846 = vst [vmem:[#allocation3 + $0x2a8] sm:$0xf] %v7804
    %7847 = vst [vmem:[#allocation3 + $0x2cc] sm:$0xf] %v7805
    %7848 = vst [vmem:[#allocation3 + $0x2f0] sm:$0xf] %v7806
    %v7849 = vld [vmem:[#allocation3] sm:$0xff]
    %v7850 = vld [vmem:[#allocation3 + $0x8] sm:$0xff]
    %v7851 = vld [vmem:[#allocation3 + $0x10] sm:$0xff]
    %v7852 = vld [vmem:[#allocation3 + $0x18] sm:$0xff]
    %v7853 = vld [vmem:[#allocation3 + $0x20] sm:$0xf]
    %v7854 = vld [vmem:[#allocation3 + $0x24] sm:$0xff]
    %v7855 = vld [vmem:[#allocation3 + $0x2c] sm:$0xff]
    %v7856 = vld [vmem:[#allocation3 + $0x34] sm:$0xff]
    %v7857 = vld [vmem:[#allocation3 + $0x3c] sm:$0xff]
    %v7858 = vld [vmem:[#allocation3 + $0x44] sm:$0xf]
    %v7859 = vld [vmem:[#allocation3 + $0x48] sm:$0xff]
    %v7860 = vld [vmem:[#allocation3 + $0x50] sm:$0xff]
    %v7861 = vld [vmem:[#allocation3 + $0x58] sm:$0xff]
    %v7862 = vld [vmem:[#allocation3 + $0x60] sm:$0xff]
    %v7863 = vld [vmem:[#allocation3 + $0x68] sm:$0xf]
    %v7864 = vld [vmem:[#allocation3 + $0x6c] sm:$0xff]
    %v7865 = vld [vmem:[#allocation3 + $0x74] sm:$0xff]
    %v7866 = vld [vmem:[#allocation3 + $0x7c] sm:$0xff]
    %v7867 = vld [vmem:[#allocation3 + $0x84] sm:$0xff]
    %v7868 = vld [vmem:[#allocation3 + $0x8c] sm:$0xf]
    %v7869 = vld [vmem:[#allocation3 + $0x90] sm:$0xff]
    %v7870 = vld [vmem:[#allocation3 + $0x98] sm:$0xff]
    %v7871 = vld [vmem:[#allocation3 + $0xa0] sm:$0xff]
    %v7872 = vld [vmem:[#allocation3 + $0xa8] sm:$0xff]
    %v7873 = vld [vmem:[#allocation3 + $0xb0] sm:$0xf]
    %v7874 = vld [vmem:[#allocation3 + $0xb4] sm:$0xff]
    %v7875 = vld [vmem:[#allocation3 + $0xbc] sm:$0xff]
    %v7876 = vld [vmem:[#allocation3 + $0xc4] sm:$0xff]
    %v7877 = vld [vmem:[#allocation3 + $0xcc] sm:$0xff]
    %v7878 = vld [vmem:[#allocation3 + $0xd4] sm:$0xf]
    %v7879 = vld [vmem:[#allocation3 + $0xd8] sm:$0xff]
    %v7880 = vld [vmem:[#allocation3 + $0xe0] sm:$0xff]
    %v7881 = vld [vmem:[#allocation3 + $0xe8] sm:$0xff]
    %v7882 = vld [vmem:[#allocation3 + $0xf0] sm:$0xff]
    %v7883 = vld [vmem:[#allocation3 + $0xf8] sm:$0xf]
    %v7884 = vld [vmem:[#allocation3 + $0xfc] sm:$0xff]
    %v7885 = vld [vmem:[#allocation3 + $0x104] sm:$0xff]
    %v7886 = vld [vmem:[#allocation3 + $0x10c] sm:$0xff]
    %v7887 = vld [vmem:[#allocation3 + $0x114] sm:$0xff]
    %v7888 = vld [vmem:[#allocation3 + $0x11c] sm:$0xf]
    %v7889 = vld [vmem:[#allocation3 + $0x120] sm:$0xff]
    %v7890 = vld [vmem:[#allocation3 + $0x128] sm:$0xff]
    %v7891 = vld [vmem:[#allocation3 + $0x130] sm:$0xff]
    %v7892 = vld [vmem:[#allocation3 + $0x138] sm:$0xff]
    %v7893 = vld [vmem:[#allocation3 + $0x140] sm:$0xf]
    %v7894 = vld [vmem:[#allocation3 + $0x144] sm:$0xff]
    %v7895 = vld [vmem:[#allocation3 + $0x14c] sm:$0xff]
    %v7896 = vld [vmem:[#allocation3 + $0x154] sm:$0xff]
    %v7897 = vld [vmem:[#allocation3 + $0x15c] sm:$0xff]
    %v7898 = vld [vmem:[#allocation3 + $0x164] sm:$0xf]
    %v7899 = vld [vmem:[#allocation3 + $0x168] sm:$0xff]
    %v7900 = vld [vmem:[#allocation3 + $0x170] sm:$0xff]
    %v7901 = vld [vmem:[#allocation3 + $0x178] sm:$0xff]
    %v7902 = vld [vmem:[#allocation3 + $0x180] sm:$0xff]
    %v7903 = vld [vmem:[#allocation3 + $0x188] sm:$0xf]
    %v7904 = vld [vmem:[#allocation3 + $0x18c] sm:$0xff]
    %v7905 = vld [vmem:[#allocation3 + $0x194] sm:$0xff]
    %v7906 = vld [vmem:[#allocation3 + $0x19c] sm:$0xff]
    %v7907 = vld [vmem:[#allocation3 + $0x1a4] sm:$0xff]
    %v7908 = vld [vmem:[#allocation3 + $0x1ac] sm:$0xf]
    %v7909 = vld [vmem:[#allocation3 + $0x1b0] sm:$0xff]
    %v7910 = vld [vmem:[#allocation3 + $0x1b8] sm:$0xff]
    %v7911 = vld [vmem:[#allocation3 + $0x1c0] sm:$0xff]
    %v7912 = vld [vmem:[#allocation3 + $0x1c8] sm:$0xff]
    %v7913 = vld [vmem:[#allocation3 + $0x1d0] sm:$0xf]
    %v7914 = vld [vmem:[#allocation3 + $0x1d4] sm:$0xff]
    %v7915 = vld [vmem:[#allocation3 + $0x1dc] sm:$0xff]
    %v7916 = vld [vmem:[#allocation3 + $0x1e4] sm:$0xff]
    %v7917 = vld [vmem:[#allocation3 + $0x1ec] sm:$0xff]
    %v7918 = vld [vmem:[#allocation3 + $0x1f4] sm:$0xf]
    %v7919 = vld [vmem:[#allocation3 + $0x1f8] sm:$0xff]
    %v7920 = vld [vmem:[#allocation3 + $0x200] sm:$0xff]
    %v7921 = vld [vmem:[#allocation3 + $0x208] sm:$0xff]
    %v7922 = vld [vmem:[#allocation3 + $0x210] sm:$0xff]
    %v7923 = vld [vmem:[#allocation3 + $0x218] sm:$0xf]
    %v7924 = vld [vmem:[#allocation3 + $0x21c] sm:$0xff]
    %v7925 = vld [vmem:[#allocation3 + $0x224] sm:$0xff]
    %v7926 = vld [vmem:[#allocation3 + $0x22c] sm:$0xff]
    %v7927 = vld [vmem:[#allocation3 + $0x234] sm:$0xff]
    %v7928 = vld [vmem:[#allocation3 + $0x23c] sm:$0xf]
    %v7929 = vld [vmem:[#allocation3 + $0x240] sm:$0xff]
    %v7930 = vld [vmem:[#allocation3 + $0x248] sm:$0xff]
    %v7931 = vld [vmem:[#allocation3 + $0x250] sm:$0xff]
    %v7932 = vld [vmem:[#allocation3 + $0x258] sm:$0xff]
    %v7933 = vld [vmem:[#allocation3 + $0x260] sm:$0xf]
    %v7934 = vld [vmem:[#allocation3 + $0x264] sm:$0xff]
    %v7935 = vld [vmem:[#allocation3 + $0x26c] sm:$0xff]
    %v7936 = vld [vmem:[#allocation3 + $0x274] sm:$0xff]
    %v7937 = vld [vmem:[#allocation3 + $0x27c] sm:$0xff]
    %v7938 = vld [vmem:[#allocation3 + $0x284] sm:$0xf]
    %v7939 = vld [vmem:[#allocation3 + $0x288] sm:$0xff]
    %v7940 = vld [vmem:[#allocation3 + $0x290] sm:$0xff]
    %v7941 = vld [vmem:[#allocation3 + $0x298] sm:$0xff]
    %v7942 = vld [vmem:[#allocation3 + $0x2a0] sm:$0xff]
    %v7943 = vld [vmem:[#allocation3 + $0x2a8] sm:$0xf]
    %v7944 = vld [vmem:[#allocation3 + $0x2ac] sm:$0xff]
    %v7945 = vld [vmem:[#allocation3 + $0x2b4] sm:$0xff]
    %v7946 = vld [vmem:[#allocation3 + $0x2bc] sm:$0xff]
    %v7947 = vld [vmem:[#allocation3 + $0x2c4] sm:$0xff]
    %v7948 = vld [vmem:[#allocation3 + $0x2cc] sm:$0xf]
    %v7949 = vld [vmem:[#allocation3 + $0x2d0] sm:$0xff]
    %v7950 = vld [vmem:[#allocation3 + $0x2d8] sm:$0xff]
    %v7951 = vld [vmem:[#allocation3 + $0x2e0] sm:$0xff]
    %v7952 = vld [vmem:[#allocation3 + $0x2e8] sm:$0xff]
    %v7953 = vld [vmem:[#allocation3 + $0x2f0] sm:$0xf]
    %v8059 = vunpack.c.l.b16 %v7849
    %v8060 = vunpack.c.h.b16 %v7849
    %v8061 = vunpack.c.l.b16 %v7850
    %v8062 = vunpack.c.h.b16 %v7850
    %v8063 = vunpack.c.l.b16 %v7851
    %v8064 = vunpack.c.h.b16 %v7851
    %v8065 = vunpack.c.l.b16 %v7852
    %v8066 = vunpack.c.h.b16 %v7852
    %v8067 = vunpack.c.l.b16 %v7853
    %v8068 = vunpack.c.l.b16 %v7854
    %v8069 = vunpack.c.h.b16 %v7854
    %v8070 = vunpack.c.l.b16 %v7855
    %v8071 = vunpack.c.h.b16 %v7855
    %v8072 = vunpack.c.l.b16 %v7856
    %v8073 = vunpack.c.h.b16 %v7856
    %v8074 = vunpack.c.l.b16 %v7857
    %v8075 = vunpack.c.h.b16 %v7857
    %v8076 = vunpack.c.l.b16 %v7858
    %v8077 = vunpack.c.l.b16 %v7859
    %v8078 = vunpack.c.h.b16 %v7859
    %v8079 = vunpack.c.l.b16 %v7860
    %v8080 = vunpack.c.h.b16 %v7860
    %v8081 = vunpack.c.l.b16 %v7861
    %v8082 = vunpack.c.h.b16 %v7861
    %v8083 = vunpack.c.l.b16 %v7862
    %v8084 = vunpack.c.h.b16 %v7862
    %v8085 = vunpack.c.l.b16 %v7863
    %v8086 = vunpack.c.l.b16 %v7864
    %v8087 = vunpack.c.h.b16 %v7864
    %v8088 = vunpack.c.l.b16 %v7865
    %v8089 = vunpack.c.h.b16 %v7865
    %v8090 = vunpack.c.l.b16 %v7866
    %v8091 = vunpack.c.h.b16 %v7866
    %v8092 = vunpack.c.l.b16 %v7867
    %v8093 = vunpack.c.h.b16 %v7867
    %v8094 = vunpack.c.l.b16 %v7868
    %v8095 = vunpack.c.l.b16 %v7869
    %v8096 = vunpack.c.h.b16 %v7869
    %v8097 = vunpack.c.l.b16 %v7870
    %v8098 = vunpack.c.h.b16 %v7870
    %v8099 = vunpack.c.l.b16 %v7871
    %v8100 = vunpack.c.h.b16 %v7871
    %v8101 = vunpack.c.l.b16 %v7872
    %v8102 = vunpack.c.h.b16 %v7872
    %v8103 = vunpack.c.l.b16 %v7873
    %v8104 = vunpack.c.l.b16 %v7874
    %v8105 = vunpack.c.h.b16 %v7874
    %v8106 = vunpack.c.l.b16 %v7875
    %v8107 = vunpack.c.h.b16 %v7875
    %v8108 = vunpack.c.l.b16 %v7876
    %v8109 = vunpack.c.h.b16 %v7876
    %v8110 = vunpack.c.l.b16 %v7877
    %v8111 = vunpack.c.h.b16 %v7877
    %v8112 = vunpack.c.l.b16 %v7878
    %v8113 = vunpack.c.l.b16 %v7879
    %v8114 = vunpack.c.h.b16 %v7879
    %v8115 = vunpack.c.l.b16 %v7880
    %v8116 = vunpack.c.h.b16 %v7880
    %v8117 = vunpack.c.l.b16 %v7881
    %v8118 = vunpack.c.h.b16 %v7881
    %v8119 = vunpack.c.l.b16 %v7882
    %v8120 = vunpack.c.h.b16 %v7882
    %v8121 = vunpack.c.l.b16 %v7883
    %v8122 = vunpack.c.l.b16 %v7884
    %v8123 = vunpack.c.h.b16 %v7884
    %v8124 = vunpack.c.l.b16 %v7885
    %v8125 = vunpack.c.h.b16 %v7885
    %v8126 = vunpack.c.l.b16 %v7886
    %v8127 = vunpack.c.h.b16 %v7886
    %v8128 = vunpack.c.l.b16 %v7887
    %v8129 = vunpack.c.h.b16 %v7887
    %v8130 = vunpack.c.l.b16 %v7888
    %v8131 = vunpack.c.l.b16 %v7889
    %v8132 = vunpack.c.h.b16 %v7889
    %v8133 = vunpack.c.l.b16 %v7890
    %v8134 = vunpack.c.h.b16 %v7890
    %v8135 = vunpack.c.l.b16 %v7891
    %v8136 = vunpack.c.h.b16 %v7891
    %v8137 = vunpack.c.l.b16 %v7892
    %v8138 = vunpack.c.h.b16 %v7892
    %v8139 = vunpack.c.l.b16 %v7893
    %v8140 = vunpack.c.l.b16 %v7894
    %v8141 = vunpack.c.h.b16 %v7894
    %v8142 = vunpack.c.l.b16 %v7895
    %v8143 = vunpack.c.h.b16 %v7895
    %v8144 = vunpack.c.l.b16 %v7896
    %v8145 = vunpack.c.h.b16 %v7896
    %v8146 = vunpack.c.l.b16 %v7897
    %v8147 = vunpack.c.h.b16 %v7897
    %v8148 = vunpack.c.l.b16 %v7898
    %v8149 = vunpack.c.l.b16 %v7899
    %v8150 = vunpack.c.h.b16 %v7899
    %v8151 = vunpack.c.l.b16 %v7900
    %v8152 = vunpack.c.h.b16 %v7900
    %v8153 = vunpack.c.l.b16 %v7901
    %v8154 = vunpack.c.h.b16 %v7901
    %v8155 = vunpack.c.l.b16 %v7902
    %v8156 = vunpack.c.h.b16 %v7902
    %v8157 = vunpack.c.l.b16 %v7903
    %v8158 = vunpack.c.l.b16 %v7904
    %v8159 = vunpack.c.h.b16 %v7904
    %v8160 = vunpack.c.l.b16 %v7905
    %v8161 = vunpack.c.h.b16 %v7905
    %v8162 = vunpack.c.l.b16 %v7906
    %v8163 = vunpack.c.h.b16 %v7906
    %v8164 = vunpack.c.l.b16 %v7907
    %v8165 = vunpack.c.h.b16 %v7907
    %v8166 = vunpack.c.l.b16 %v7908
    %v8167 = vunpack.c.l.b16 %v7909
    %v8168 = vunpack.c.h.b16 %v7909
    %v8169 = vunpack.c.l.b16 %v7910
    %v8170 = vunpack.c.h.b16 %v7910
    %v8171 = vunpack.c.l.b16 %v7911
    %v8172 = vunpack.c.h.b16 %v7911
    %v8173 = vunpack.c.l.b16 %v7912
    %v8174 = vunpack.c.h.b16 %v7912
    %v8175 = vunpack.c.l.b16 %v7913
    %v8176 = vunpack.c.l.b16 %v7914
    %v8177 = vunpack.c.h.b16 %v7914
    %v8178 = vunpack.c.l.b16 %v7915
    %v8179 = vunpack.c.h.b16 %v7915
    %v8180 = vunpack.c.l.b16 %v7916
    %v8181 = vunpack.c.h.b16 %v7916
    %v8182 = vunpack.c.l.b16 %v7917
    %v8183 = vunpack.c.h.b16 %v7917
    %v8184 = vunpack.c.l.b16 %v7918
    %v8185 = vunpack.c.l.b16 %v7919
    %v8186 = vunpack.c.h.b16 %v7919
    %v8187 = vunpack.c.l.b16 %v7920
    %v8188 = vunpack.c.h.b16 %v7920
    %v8189 = vunpack.c.l.b16 %v7921
    %v8190 = vunpack.c.h.b16 %v7921
    %v8191 = vunpack.c.l.b16 %v7922
    %v8192 = vunpack.c.h.b16 %v7922
    %v8193 = vunpack.c.l.b16 %v7923
    %v8194 = vunpack.c.l.b16 %v7924
    %v8195 = vunpack.c.h.b16 %v7924
    %v8196 = vunpack.c.l.b16 %v7925
    %v8197 = vunpack.c.h.b16 %v7925
    %v8198 = vunpack.c.l.b16 %v7926
    %v8199 = vunpack.c.h.b16 %v7926
    %v8200 = vunpack.c.l.b16 %v7927
    %v8201 = vunpack.c.h.b16 %v7927
    %v8202 = vunpack.c.l.b16 %v7928
    %v8203 = vunpack.c.l.b16 %v7929
    %v8204 = vunpack.c.h.b16 %v7929
    %v8205 = vunpack.c.l.b16 %v7930
    %v8206 = vunpack.c.h.b16 %v7930
    %v8207 = vunpack.c.l.b16 %v7931
    %v8208 = vunpack.c.h.b16 %v7931
    %v8209 = vunpack.c.l.b16 %v7932
    %v8210 = vunpack.c.h.b16 %v7932
    %v8211 = vunpack.c.l.b16 %v7933
    %v8212 = vunpack.c.l.b16 %v7934
    %v8213 = vunpack.c.h.b16 %v7934
    %v8214 = vunpack.c.l.b16 %v7935
    %v8215 = vunpack.c.h.b16 %v7935
    %v8216 = vunpack.c.l.b16 %v7936
    %v8217 = vunpack.c.h.b16 %v7936
    %v8218 = vunpack.c.l.b16 %v7937
    %v8219 = vunpack.c.h.b16 %v7937
    %v8220 = vunpack.c.l.b16 %v7938
    %v8221 = vunpack.c.l.b16 %v7939
    %v8222 = vunpack.c.h.b16 %v7939
    %v8223 = vunpack.c.l.b16 %v7940
    %v8224 = vunpack.c.h.b16 %v7940
    %v8225 = vunpack.c.l.b16 %v7941
    %v8226 = vunpack.c.h.b16 %v7941
    %v8227 = vunpack.c.l.b16 %v7942
    %v8228 = vunpack.c.h.b16 %v7942
    %v8229 = vunpack.c.l.b16 %v7943
    %v8230 = vunpack.c.l.b16 %v7944
    %v8231 = vunpack.c.h.b16 %v7944
    %v8232 = vunpack.c.l.b16 %v7945
    %v8233 = vunpack.c.h.b16 %v7945
    %v8234 = vunpack.c.l.b16 %v7946
    %v8235 = vunpack.c.h.b16 %v7946
    %v8236 = vunpack.c.l.b16 %v7947
    %v8237 = vunpack.c.h.b16 %v7947
    %v8238 = vunpack.c.l.b16 %v7948
    %v8239 = vunpack.c.l.b16 %v7949
    %v8240 = vunpack.c.h.b16 %v7949
    %v8241 = vunpack.c.l.b16 %v7950
    %v8242 = vunpack.c.h.b16 %v7950
    %v8243 = vunpack.c.l.b16 %v7951
    %v8244 = vunpack.c.h.b16 %v7951
    %v8245 = vunpack.c.l.b16 %v7952
    %v8246 = vunpack.c.h.b16 %v7952
    %v8247 = vunpack.c.l.b16 %v7953
    %v8248 = vpack.c.b16 %v8068, %v8059
    %v8249 = vpack.c.b16 %v8069, %v8060
    %v8250 = vpack.c.b16 %v8070, %v8061
    %v8251 = vpack.c.b16 %v8071, %v8062
    %v8252 = vpack.c.b16 %v8072, %v8063
    %v8253 = vpack.c.b16 %v8073, %v8064
    %v8254 = vpack.c.b16 %v8074, %v8065
    %v8255 = vpack.c.b16 %v8075, %v8066
    %v8256 = vpack.c.b16 %v8076, %v8067
    %v8257 = vpack.c.b16 %v8086, %v8077
    %v8258 = vpack.c.b16 %v8087, %v8078
    %v8259 = vpack.c.b16 %v8088, %v8079
    %v8260 = vpack.c.b16 %v8089, %v8080
    %v8261 = vpack.c.b16 %v8090, %v8081
    %v8262 = vpack.c.b16 %v8091, %v8082
    %v8263 = vpack.c.b16 %v8092, %v8083
    %v8264 = vpack.c.b16 %v8093, %v8084
    %v8265 = vpack.c.b16 %v8094, %v8085
    %v8266 = vpack.c.b16 %v8104, %v8095
    %v8267 = vpack.c.b16 %v8105, %v8096
    %v8268 = vpack.c.b16 %v8106, %v8097
    %v8269 = vpack.c.b16 %v8107, %v8098
    %v8270 = vpack.c.b16 %v8108, %v8099
    %v8271 = vpack.c.b16 %v8109, %v8100
    %v8272 = vpack.c.b16 %v8110, %v8101
    %v8273 = vpack.c.b16 %v8111, %v8102
    %v8274 = vpack.c.b16 %v8112, %v8103
    %v8275 = vpack.c.b16 %v8122, %v8113
    %v8276 = vpack.c.b16 %v8123, %v8114
    %v8277 = vpack.c.b16 %v8124, %v8115
    %v8278 = vpack.c.b16 %v8125, %v8116
    %v8279 = vpack.c.b16 %v8126, %v8117
    %v8280 = vpack.c.b16 %v8127, %v8118
    %v8281 = vpack.c.b16 %v8128, %v8119
    %v8282 = vpack.c.b16 %v8129, %v8120
    %v8283 = vpack.c.b16 %v8130, %v8121
    %v8284 = vpack.c.b16 %v8140, %v8131
    %v8285 = vpack.c.b16 %v8141, %v8132
    %v8286 = vpack.c.b16 %v8142, %v8133
    %v8287 = vpack.c.b16 %v8143, %v8134
    %v8288 = vpack.c.b16 %v8144, %v8135
    %v8289 = vpack.c.b16 %v8145, %v8136
    %v8290 = vpack.c.b16 %v8146, %v8137
    %v8291 = vpack.c.b16 %v8147, %v8138
    %v8292 = vpack.c.b16 %v8148, %v8139
    %v8293 = vpack.c.b16 %v8158, %v8149
    %v8294 = vpack.c.b16 %v8159, %v8150
    %v8295 = vpack.c.b16 %v8160, %v8151
    %v8296 = vpack.c.b16 %v8161, %v8152
    %v8297 = vpack.c.b16 %v8162, %v8153
    %v8298 = vpack.c.b16 %v8163, %v8154
    %v8299 = vpack.c.b16 %v8164, %v8155
    %v8300 = vpack.c.b16 %v8165, %v8156
    %v8301 = vpack.c.b16 %v8166, %v8157
    %v8302 = vpack.c.b16 %v8176, %v8167
    %v8303 = vpack.c.b16 %v8177, %v8168
    %v8304 = vpack.c.b16 %v8178, %v8169
    %v8305 = vpack.c.b16 %v8179, %v8170
    %v8306 = vpack.c.b16 %v8180, %v8171
    %v8307 = vpack.c.b16 %v8181, %v8172
    %v8308 = vpack.c.b16 %v8182, %v8173
    %v8309 = vpack.c.b16 %v8183, %v8174
    %v8310 = vpack.c.b16 %v8184, %v8175
    %v8311 = vpack.c.b16 %v8194, %v8185
    %v8312 = vpack.c.b16 %v8195, %v8186
    %v8313 = vpack.c.b16 %v8196, %v8187
    %v8314 = vpack.c.b16 %v8197, %v8188
    %v8315 = vpack.c.b16 %v8198, %v8189
    %v8316 = vpack.c.b16 %v8199, %v8190
    %v8317 = vpack.c.b16 %v8200, %v8191
    %v8318 = vpack.c.b16 %v8201, %v8192
    %v8319 = vpack.c.b16 %v8202, %v8193
    %v8320 = vpack.c.b16 %v8212, %v8203
    %v8321 = vpack.c.b16 %v8213, %v8204
    %v8322 = vpack.c.b16 %v8214, %v8205
    %v8323 = vpack.c.b16 %v8215, %v8206
    %v8324 = vpack.c.b16 %v8216, %v8207
    %v8325 = vpack.c.b16 %v8217, %v8208
    %v8326 = vpack.c.b16 %v8218, %v8209
    %v8327 = vpack.c.b16 %v8219, %v8210
    %v8328 = vpack.c.b16 %v8220, %v8211
    %v8329 = vpack.c.b16 %v8230, %v8221
    %v8330 = vpack.c.b16 %v8231, %v8222
    %v8331 = vpack.c.b16 %v8232, %v8223
    %v8332 = vpack.c.b16 %v8233, %v8224
    %v8333 = vpack.c.b16 %v8234, %v8225
    %v8334 = vpack.c.b16 %v8235, %v8226
    %v8335 = vpack.c.b16 %v8236, %v8227
    %v8336 = vpack.c.b16 %v8237, %v8228
    %v8337 = vpack.c.b16 %v8238, %v8229
    %v8338 = vpack.c.b16 %v8239, %v8239
    %v8339 = vpack.c.b16 %v8240, %v8240
    %v8340 = vpack.c.b16 %v8241, %v8241
    %v8341 = vpack.c.b16 %v8242, %v8242
    %v8342 = vpack.c.b16 %v8243, %v8243
    %v8343 = vpack.c.b16 %v8244, %v8244
    %v8344 = vpack.c.b16 %v8245, %v8245
    %v8345 = vpack.c.b16 %v8246, %v8246
    %v8346 = vpack.c.b16 %v8247, %v8247
    %v8590 = vunpack.c.l.b16 %v5218
    %v8591 = vunpack.c.l.b16 %v5219
    %v8592 = vunpack.c.l.b16 %v5220
    %v8593 = vunpack.c.l.b16 %v5221
    %v8594 = vunpack.c.l.b16 %v5222
    %v8595 = vunpack.c.l.b16 %v5223
    %v8596 = vunpack.c.l.b16 %v5224
    %v8597 = vunpack.c.l.b16 %v5225
    %v8598 = vunpack.c.l.b16 %v5226
    %v8599 = vunpack.c.l.b16 %v5227
    %v8600 = vunpack.c.l.b16 %v5228
    %v8601 = vunpack.c.l.b16 %v5229
    %v8602 = vunpack.c.l.b16 %v5230
    %v8603 = vunpack.c.l.b16 %v5231
    %v8604 = vunpack.c.l.b16 %v5232
    %v8605 = vunpack.c.l.b16 %v5233
    %v8606 = vunpack.c.l.b16 %v5234
    %v8607 = vunpack.c.l.b16 %v5235
    %v8608 = vunpack.c.l.b16 %v5236
    %v8609 = vunpack.c.l.b16 %v5237
    %v8610 = vunpack.c.l.b16 %v5238
    %v8611 = vunpack.c.l.b16 %v5239
    %v8612 = vunpack.c.l.b16 %v5240
    %v8613 = vunpack.c.l.b16 %v5241
    %v8614 = vunpack.c.l.b16 %v5242
    %v8615 = vunpack.c.l.b16 %v5243
    %v8616 = vunpack.c.l.b16 %v5244
    %v8617 = vunpack.c.l.b16 %v5245
    %v8618 = vunpack.c.l.b16 %v5246
    %v8619 = vunpack.c.l.b16 %v5247
    %v8620 = vunpack.c.l.b16 %v5248
    %v8621 = vunpack.c.l.b16 %v5249
    %v8622 = vunpack.c.l.b16 %v5250
    %v8623 = vunpack.c.l.b16 %v5251
    %v8624 = vunpack.c.l.b16 %v5252
    %v8625 = vunpack.c.l.b16 %v5253
    %v8626 = vunpack.c.l.b16 %v5254
    %v8627 = vunpack.c.l.b16 %v5255
    %v8628 = vunpack.c.l.b16 %v5256
    %v8629 = vunpack.c.l.b16 %v5257
    %v8630 = vunpack.c.l.b16 %v5258
    %v8631 = vunpack.c.l.b16 %v5259
    %v8632 = vunpack.c.l.b16 %v5260
    %v8633 = vunpack.c.l.b16 %v5261
    %v8634 = vunpack.c.l.b16 %v5262
    %v8635 = vunpack.c.l.b16 %v5263
    %v8636 = vunpack.c.l.b16 %v5264
    %v8637 = vunpack.c.l.b16 %v5265
    %v8638 = vunpack.c.l.b16 %v5266
    %v8639 = vunpack.c.l.b16 %v5267
    %v8640 = vunpack.c.l.b16 %v5268
    %v8641 = vunpack.c.l.b16 %v5269
    %v8642 = vunpack.c.l.b16 %v5270
    %v8643 = vunpack.c.l.b16 %v5271
    %v8644 = vunpack.c.l.b16 %v5272
    %v8645 = vunpack.c.l.b16 %v5273
    %v8646 = vunpack.c.l.b16 %v5274
    %v8647 = vunpack.c.l.b16 %v5275
    %v8648 = vunpack.c.l.b16 %v5276
    %v8649 = vunpack.c.l.b16 %v5277
    %v8650 = vunpack.c.l.b16 %v5278
    %v8651 = vunpack.c.l.b16 %v5279
    %v8652 = vunpack.c.l.b16 %v5280
    %v8653 = vunpack.c.l.b16 %v5281
    %v8654 = vunpack.c.l.b16 %v5282
    %v8655 = vunpack.c.l.b16 %v5283
    %v8656 = vunpack.c.l.b16 %v5284
    %v8657 = vunpack.c.l.b16 %v5285
    %v8658 = vunpack.c.l.b16 %v5286
    %v8659 = vunpack.c.l.b16 %v5287
    %v8660 = vunpack.c.l.b16 %v5288
    %v8661 = vunpack.c.l.b16 %v5289
    %v8662 = vunpack.c.l.b16 %v5290
    %v8663 = vunpack.c.l.b16 %v5291
    %v8664 = vunpack.c.l.b16 %v5292
    %v8665 = vunpack.c.l.b16 %v5293
    %v8666 = vunpack.c.l.b16 %v5294
    %v8667 = vunpack.c.l.b16 %v5295
    %v8668 = vunpack.c.l.b16 %v5296
    %v8669 = vunpack.c.l.b16 %v5297
    %v8670 = vunpack.c.l.b16 %v5298
    %v8671 = vunpack.c.l.b16 %v5299
    %v8672 = vunpack.c.l.b16 %v5300
    %v8673 = vunpack.c.l.b16 %v5301
    %v8674 = vunpack.c.l.b16 %v5302
    %v8675 = vunpack.c.l.b16 %v5303
    %v8676 = vunpack.c.l.b16 %v5304
    %v8677 = vunpack.c.l.b16 %v5305
    %v8678 = vunpack.c.l.b16 %v5306
    %v8679 = vunpack.c.l.b16 %v5307
    %v8680 = vunpack.c.l.b16 %v5308
    %v8681 = vunpack.c.l.b16 %v5309
    %v8682 = vunpack.c.l.b16 %v5310
    %v8683 = vunpack.c.l.b16 %v5311
    %v8684 = vunpack.c.l.b16 %v5312
    %v8685 = vunpack.c.l.b16 %v5313
    %v8686 = vunpack.c.l.b16 %v5314
    %v8687 = vunpack.c.l.b16 %v5315
    %v8688 = vunpack.c.l.b16 %v5316
    %v8689 = vunpack.c.l.b16 %v5317
    %v8690 = vunpack.c.l.b16 %v5318
    %v8691 = vunpack.c.l.b16 %v5319
    %v8692 = vunpack.c.l.b16 %v5320
    %v8693 = vunpack.c.l.b16 %v5321
    %v8694 = vunpack.c.l.b16 %v5322
    %v8695 = vunpack.c.l.b16 %v5323
    %v8696 = vunpack.c.l.b16 %v5324
    %v8697 = vunpack.c.l.b16 %v5325
    %v8698 = vunpack.c.l.b16 %v5326
    %v8699 = vunpack.c.l.b16 %v5327
    %v8700 = vunpack.c.l.b16 %v5328
    %v8701 = vunpack.c.l.b16 %v5329
    %v8702 = vunpack.c.l.b16 %v5330
    %v8703 = vunpack.c.l.b16 %v5331
    %v8704 = vunpack.c.l.b16 %v5332
    %v8705 = vunpack.c.l.b16 %v5333
    %v8706 = vunpack.c.l.b16 %v5334
    %v8707 = vunpack.c.l.b16 %v5335
    %v8708 = vunpack.c.l.b16 %v5336
    %v8709 = vunpack.c.l.b16 %v5337
    %v8710 = vunpack.c.l.b16 %v5338
    %v8711 = vunpack.c.l.b16 %v5339
    %v8712 = vunpack.c.l.b16 %v5340
    %v8713 = vunpack.c.l.b16 %v5341
    %v8714 = vunpack.c.l.b16 %v5342
    %v8715 = vunpack.c.l.b16 %v5343
    %v8716 = vunpack.c.l.b16 %v5344
    %v8717 = vunpack.c.l.b16 %v5345
    %v8718 = vunpack.c.l.b16 %v5346
    %v8719 = vunpack.c.l.b16 %v5347
    %v8720 = vunpack.c.l.b16 %v5348
    %v8721 = vunpack.c.l.b16 %v5349
    %v8722 = vunpack.c.l.b16 %v5350
    %v8723 = vunpack.c.l.b16 %v5351
    %v8724 = vunpack.c.l.b16 %v5352
    %v8725 = vunpack.c.l.b16 %v5353
    %v8726 = vunpack.c.l.b16 %v5354
    %v8727 = vunpack.c.l.b16 %v5355
    %v8728 = vunpack.c.l.b16 %v5356
    %v8729 = vunpack.c.l.b16 %v5357
    %v8730 = vunpack.c.l.b16 %v5358
    %v8731 = vunpack.c.l.b16 %v5359
    %v8732 = vunpack.c.l.b16 %v5360
    %v8733 = vunpack.c.l.b16 %v5361
    %v8734 = vpack.c.b16 %v8591, %v8590
    %v8735 = vpack.c.b16 %v8593, %v8592
    %v8736 = vpack.c.b16 %v8595, %v8594
    %v8737 = vpack.c.b16 %v8597, %v8596
    %v8738 = vpack.c.b16 %v8599, %v8598
    %v8739 = vpack.c.b16 %v8601, %v8600
    %v8740 = vpack.c.b16 %v8603, %v8602
    %v8741 = vpack.c.b16 %v8605, %v8604
    %v8742 = vpack.c.b16 %v8607, %v8606
    %v8743 = vpack.c.b16 %v8609, %v8608
    %v8744 = vpack.c.b16 %v8611, %v8610
    %v8745 = vpack.c.b16 %v8613, %v8612
    %v8746 = vpack.c.b16 %v8615, %v8614
    %v8747 = vpack.c.b16 %v8617, %v8616
    %v8748 = vpack.c.b16 %v8619, %v8618
    %v8749 = vpack.c.b16 %v8621, %v8620
    %v8750 = vpack.c.b16 %v8623, %v8622
    %v8751 = vpack.c.b16 %v8625, %v8624
    %v8752 = vpack.c.b16 %v8627, %v8626
    %v8753 = vpack.c.b16 %v8629, %v8628
    %v8754 = vpack.c.b16 %v8631, %v8630
    %v8755 = vpack.c.b16 %v8633, %v8632
    %v8756 = vpack.c.b16 %v8635, %v8634
    %v8757 = vpack.c.b16 %v8637, %v8636
    %v8758 = vpack.c.b16 %v8639, %v8638
    %v8759 = vpack.c.b16 %v8641, %v8640
    %v8760 = vpack.c.b16 %v8643, %v8642
    %v8761 = vpack.c.b16 %v8645, %v8644
    %v8762 = vpack.c.b16 %v8647, %v8646
    %v8763 = vpack.c.b16 %v8649, %v8648
    %v8764 = vpack.c.b16 %v8651, %v8650
    %v8765 = vpack.c.b16 %v8653, %v8652
    %v8766 = vpack.c.b16 %v8655, %v8654
    %v8767 = vpack.c.b16 %v8657, %v8656
    %v8768 = vpack.c.b16 %v8659, %v8658
    %v8769 = vpack.c.b16 %v8661, %v8660
    %v8770 = vpack.c.b16 %v8663, %v8662
    %v8771 = vpack.c.b16 %v8665, %v8664
    %v8772 = vpack.c.b16 %v8667, %v8666
    %v8773 = vpack.c.b16 %v8669, %v8668
    %v8774 = vpack.c.b16 %v8671, %v8670
    %v8775 = vpack.c.b16 %v8673, %v8672
    %v8776 = vpack.c.b16 %v8675, %v8674
    %v8777 = vpack.c.b16 %v8677, %v8676
    %v8778 = vpack.c.b16 %v8679, %v8678
    %v8779 = vpack.c.b16 %v8681, %v8680
    %v8780 = vpack.c.b16 %v8683, %v8682
    %v8781 = vpack.c.b16 %v8685, %v8684
    %v8782 = vpack.c.b16 %v8687, %v8686
    %v8783 = vpack.c.b16 %v8689, %v8688
    %v8784 = vpack.c.b16 %v8691, %v8690
    %v8785 = vpack.c.b16 %v8693, %v8692
    %v8786 = vpack.c.b16 %v8695, %v8694
    %v8787 = vpack.c.b16 %v8697, %v8696
    %v8788 = vpack.c.b16 %v8699, %v8698
    %v8789 = vpack.c.b16 %v8701, %v8700
    %v8790 = vpack.c.b16 %v8703, %v8702
    %v8791 = vpack.c.b16 %v8705, %v8704
    %v8792 = vpack.c.b16 %v8707, %v8706
    %v8793 = vpack.c.b16 %v8709, %v8708
    %v8794 = vpack.c.b16 %v8711, %v8710
    %v8795 = vpack.c.b16 %v8713, %v8712
    %v8796 = vpack.c.b16 %v8715, %v8714
    %v8797 = vpack.c.b16 %v8717, %v8716
    %v8798 = vpack.c.b16 %v8719, %v8718
    %v8799 = vpack.c.b16 %v8721, %v8720
    %v8800 = vpack.c.b16 %v8723, %v8722
    %v8801 = vpack.c.b16 %v8725, %v8724
    %v8802 = vpack.c.b16 %v8727, %v8726
    %v8803 = vpack.c.b16 %v8729, %v8728
    %v8804 = vpack.c.b16 %v8731, %v8730
    %v8805 = vpack.c.b16 %v8733, %v8732
    %8878 = vmatprep.subr.bf16.mxu0 0
    %8879 = vmatpush1.bf16.msra.mxu0 %v8734
    %8880 = vmatprep.subr.bf16.mxu0 0
    %8881 = vmatpush1.bf16.msra.mxu0 %v8735
    %8882 = vmatprep.subr.bf16.mxu0 0
    %8883 = vmatpush1.bf16.msra.mxu0 %v8736
    %8884 = vmatprep.subr.bf16.mxu0 0
    %8885 = vmatpush1.bf16.msra.mxu0 %v8737
    %8886 = vmatprep.subr.bf16.mxu0 0
    %8887 = vmatpush1.bf16.msra.mxu0 %v8738
    %8888 = vmatprep.subr.bf16.mxu0 0
    %8889 = vmatpush1.bf16.msra.mxu0 %v8739
    %8890 = vmatprep.subr.bf16.mxu0 0
    %8891 = vmatpush1.bf16.msra.mxu0 %v8740
    %8892 = vmatprep.subr.bf16.mxu0 0
    %8893 = vmatpush1.bf16.msra.mxu0 %v8741
    %8894 = vmatprep.subr.bf16.mxu0 0
    %8895 = vmatpush1.bf16.msra.mxu0 %v8742
    %8896 = vmatprep.subr.bf16.mxu0 0
    %8897 = vmatpush1.bf16.msra.mxu0 %v8743
    %8898 = vmatprep.subr.bf16.mxu0 0
    %8899 = vmatpush1.bf16.msra.mxu0 %v8744
    %8900 = vmatprep.subr.bf16.mxu0 0
    %8901 = vmatpush1.bf16.msra.mxu0 %v8745
    %8902 = vmatprep.subr.bf16.mxu0 0
    %8903 = vmatpush1.bf16.msra.mxu0 %v8746
    %8904 = vmatprep.subr.bf16.mxu0 0
    %8905 = vmatpush1.bf16.msra.mxu0 %v8747
    %8906 = vmatprep.subr.bf16.mxu0 0
    %8907 = vmatpush1.bf16.msra.mxu0 %v8748
    %8908 = vmatprep.subr.bf16.mxu0 0
    %8909 = vmatpush1.bf16.msra.mxu0 %v8749
    %8910 = vmatprep.mubr.bf16.mxu0 %v8249
    %8911 = vmatmul.mubr.bf16.gmra.mrb[0].mxu0 %v8248
    %v8912 = vpop.f32.mrb[0].mxu0
    %v8913 = vadd.f32 0.0, %v8912
    %v8914 = vpop.f32.mrb[0].mxu0
    %v8915 = vpop.f32.mrb[0].mxu0
    %v8916 = vadd.f32 0.0, %v8915
    %v8917 = vpop.f32.mrb[0].mxu0
    %8918 = vmatprep.mubr.bf16.mxu0 %v8258
    %8919 = vmatmul.mubr.bf16.gmra.mrb[0].mxu0 %v8257
    %v8920 = vpop.f32.mrb[0].mxu0
    %v8921 = vadd.f32 0.0, %v8920
    %v8922 = vpop.f32.mrb[0].mxu0
    %v8923 = vpop.f32.mrb[0].mxu0
    %v8924 = vadd.f32 0.0, %v8923
    %v8925 = vpop.f32.mrb[0].mxu0
    %8926 = vmatprep.mubr.bf16.mxu0 %v8267
    %8927 = vmatmul.mubr.bf16.gmra.mrb[0].mxu0 %v8266
    %v8928 = vpop.f32.mrb[0].mxu0
    %v8929 = vadd.f32 0.0, %v8928
    %v8930 = vpop.f32.mrb[0].mxu0
    %v8931 = vpop.f32.mrb[0].mxu0
    %v8932 = vadd.f32 0.0, %v8931
    %v8933 = vpop.f32.mrb[0].mxu0
    %8934 = vmatprep.mubr.bf16.mxu0 %v8276
    %8935 = vmatmul.mubr.bf16.gmra.mrb[0].mxu0 %v8275
    %v8936 = vpop.f32.mrb[0].mxu0
    %v8937 = vadd.f32 0.0, %v8936
    %v8938 = vpop.f32.mrb[0].mxu0
    %v8939 = vpop.f32.mrb[0].mxu0
    %v8940 = vadd.f32 0.0, %v8939
    %v8941 = vpop.f32.mrb[0].mxu0
    %8942 = vmatprep.mubr.bf16.mxu0 %v8285
    %8943 = vmatmul.mubr.bf16.gmra.mrb[0].mxu0 %v8284
    %v8944 = vpop.f32.mrb[0].mxu0
    %v8945 = vadd.f32 0.0, %v8944
    %v8946 = vpop.f32.mrb[0].mxu0
    %v8947 = vpop.f32.mrb[0].mxu0
    %v8948 = vadd.f32 0.0, %v8947
    %v8949 = vpop.f32.mrb[0].mxu0
    %8950 = vmatprep.mubr.bf16.mxu0 %v8294
    %8951 = vmatmul.mubr.bf16.gmra.mrb[0].mxu0 %v8293
    %v8952 = vpop.f32.mrb[0].mxu0
    %v8953 = vadd.f32 0.0, %v8952
    %v8954 = vpop.f32.mrb[0].mxu0
    %v8955 = vpop.f32.mrb[0].mxu0
    %v8956 = vadd.f32 0.0, %v8955
    %v8957 = vpop.f32.mrb[0].mxu0
    %8958 = vmatprep.mubr.bf16.mxu0 %v8303
    %8959 = vmatmul.mubr.bf16.gmra.mrb[0].mxu0 %v8302
    %v8960 = vpop.f32.mrb[0].mxu0
    %v8961 = vadd.f32 0.0, %v8960
    %v8962 = vpop.f32.mrb[0].mxu0
    %v8963 = vpop.f32.mrb[0].mxu0
    %v8964 = vadd.f32 0.0, %v8963
    %v8965 = vpop.f32.mrb[0].mxu0
    %8966 = vmatprep.mubr.bf16.mxu0 %v8312
    %8967 = vmatmul.mubr.bf16.gmra.mrb[0].mxu0 %v8311
    %v8968 = vpop.f32.mrb[0].mxu0
    %v8969 = vadd.f32 0.0, %v8968
    %v8970 = vpop.f32.mrb[0].mxu0
    %v8971 = vpop.f32.mrb[0].mxu0
    %v8972 = vadd.f32 0.0, %v8971
    %v8973 = vpop.f32.mrb[0].mxu0
    %8974 = vmatprep.mubr.bf16.mxu0 %v8321
    %8975 = vmatmul.mubr.bf16.gmra.mrb[0].mxu0 %v8320
    %v8976 = vpop.f32.mrb[0].mxu0
    %v8977 = vadd.f32 0.0, %v8976
    %v8978 = vpop.f32.mrb[0].mxu0
    %v8979 = vpop.f32.mrb[0].mxu0
    %v8980 = vadd.f32 0.0, %v8979
    %v8981 = vpop.f32.mrb[0].mxu0
    %8982 = vmatprep.mubr.bf16.mxu0 %v8330
    %8983 = vmatmul.mubr.bf16.gmra.mrb[0].mxu0 %v8329
    %v8984 = vpop.f32.mrb[0].mxu0
    %v8985 = vadd.f32 0.0, %v8984
    %v8986 = vpop.f32.mrb[0].mxu0
    %v8987 = vpop.f32.mrb[0].mxu0
    %v8988 = vadd.f32 0.0, %v8987
    %v8989 = vpop.f32.mrb[0].mxu0
    %8990 = vmatprep.mubr.bf16.mxu0 %v8339
    %8991 = vmatmul.mubr.bf16.gmra.mrb[0].mxu0 %v8338
    %v8992 = vpop.f32.mrb[0].mxu0
    %v8993 = vadd.f32 0.0, %v8992
    %v8994 = vpop.f32.mrb[0].mxu0
    %v8995 = vpop.f32.mrb[0].mxu0
    %v8996 = vpop.f32.mrb[0].mxu0
    %8997 = vdwg.mxu0
    %8998 = vmatprep.subr.bf16.mxu0 0
    %8999 = vmatpush1.bf16.msra.mxu0 %v8750
    %9000 = vmatprep.subr.bf16.mxu0 0
    %9001 = vmatpush1.bf16.msra.mxu0 %v8751
    %9002 = vmatprep.subr.bf16.mxu0 0
    %9003 = vmatpush1.bf16.msra.mxu0 %v8752
    %9004 = vmatprep.subr.bf16.mxu0 0
    %9005 = vmatpush1.bf16.msra.mxu0 %v8753
    %9006 = vmatprep.subr.bf16.mxu0 0
    %9007 = vmatpush1.bf16.msra.mxu0 %v8754
    %9008 = vmatprep.subr.bf16.mxu0 0
    %9009 = vmatpush1.bf16.msra.mxu0 %v8755
    %9010 = vmatprep.subr.bf16.mxu0 0
    %9011 = vmatpush1.bf16.msra.mxu0 %v8756
    %9012 = vmatprep.subr.bf16.mxu0 0
    %9013 = vmatpush1.bf16.msra.mxu0 %v8757
    %9014 = vmatprep.subr.bf16.mxu0 0
    %9015 = vmatpush1.bf16.msra.mxu0 %v8758
    %9016 = vmatprep.subr.bf16.mxu0 0
    %9017 = vmatpush1.bf16.msra.mxu0 %v8759
    %9018 = vmatprep.subr.bf16.mxu0 0
    %9019 = vmatpush1.bf16.msra.mxu0 %v8760
    %9020 = vmatprep.subr.bf16.mxu0 0
    %9021 = vmatpush1.bf16.msra.mxu0 %v8761
    %9022 = vmatprep.subr.bf16.mxu0 0
    %9023 = vmatpush1.bf16.msra.mxu0 %v8762
    %9024 = vmatprep.subr.bf16.mxu0 0
    %9025 = vmatpush1.bf16.msra.mxu0 %v8763
    %9026 = vmatprep.subr.bf16.mxu0 0
    %9027 = vmatpush1.bf16.msra.mxu0 %v8764
    %9028 = vmatprep.subr.bf16.mxu0 0
    %9029 = vmatpush1.bf16.msra.mxu0 %v8765
    %9030 = vmatprep.mubr.bf16.mxu0 %v8251
    %9031 = vmatmul.mubr.bf16.gmra.mrb[0].mxu0 %v8250
    %v9032 = vpop.f32.mrb[0].mxu0
    %v9033 = vadd.f32 %v8913, %v9032
    %v9034 = vpop.f32.mrb[0].mxu0
    %v9035 = vpop.f32.mrb[0].mxu0
    %v9036 = vadd.f32 %v8916, %v9035
    %v9037 = vpop.f32.mrb[0].mxu0
    %9038 = vmatprep.mubr.bf16.mxu0 %v8260
    %9039 = vmatmul.mubr.bf16.gmra.mrb[0].mxu0 %v8259
    %v9040 = vpop.f32.mrb[0].mxu0
    %v9041 = vadd.f32 %v8921, %v9040
    %v9042 = vpop.f32.mrb[0].mxu0
    %v9043 = vpop.f32.mrb[0].mxu0
    %v9044 = vadd.f32 %v8924, %v9043
    %v9045 = vpop.f32.mrb[0].mxu0
    %9046 = vmatprep.mubr.bf16.mxu0 %v8269
    %9047 = vmatmul.mubr.bf16.gmra.mrb[0].mxu0 %v8268
    %v9048 = vpop.f32.mrb[0].mxu0
    %v9049 = vadd.f32 %v8929, %v9048
    %v9050 = vpop.f32.mrb[0].mxu0
    %v9051 = vpop.f32.mrb[0].mxu0
    %v9052 = vadd.f32 %v8932, %v9051
    %v9053 = vpop.f32.mrb[0].mxu0
    %9054 = vmatprep.mubr.bf16.mxu0 %v8278
    %9055 = vmatmul.mubr.bf16.gmra.mrb[0].mxu0 %v8277
    %v9056 = vpop.f32.mrb[0].mxu0
    %v9057 = vadd.f32 %v8937, %v9056
    %v9058 = vpop.f32.mrb[0].mxu0
    %v9059 = vpop.f32.mrb[0].mxu0
    %v9060 = vadd.f32 %v8940, %v9059
    %v9061 = vpop.f32.mrb[0].mxu0
    %9062 = vmatprep.mubr.bf16.mxu0 %v8287
    %9063 = vmatmul.mubr.bf16.gmra.mrb[0].mxu0 %v8286
    %v9064 = vpop.f32.mrb[0].mxu0
    %v9065 = vadd.f32 %v8945, %v9064
    %v9066 = vpop.f32.mrb[0].mxu0
    %v9067 = vpop.f32.mrb[0].mxu0
    %v9068 = vadd.f32 %v8948, %v9067
    %v9069 = vpop.f32.mrb[0].mxu0
    %9070 = vmatprep.mubr.bf16.mxu0 %v8296
    %9071 = vmatmul.mubr.bf16.gmra.mrb[0].mxu0 %v8295
    %v9072 = vpop.f32.mrb[0].mxu0
    %v9073 = vadd.f32 %v8953, %v9072
    %v9074 = vpop.f32.mrb[0].mxu0
    %v9075 = vpop.f32.mrb[0].mxu0
    %v9076 = vadd.f32 %v8956, %v9075
    %v9077 = vpop.f32.mrb[0].mxu0
    %9078 = vmatprep.mubr.bf16.mxu0 %v8305
    %9079 = vmatmul.mubr.bf16.gmra.mrb[0].mxu0 %v8304
    %v9080 = vpop.f32.mrb[0].mxu0
    %v9081 = vadd.f32 %v8961, %v9080
    %v9082 = vpop.f32.mrb[0].mxu0
    %v9083 = vpop.f32.mrb[0].mxu0
    %v9084 = vadd.f32 %v8964, %v9083
    %v9085 = vpop.f32.mrb[0].mxu0
    %9086 = vmatprep.mubr.bf16.mxu0 %v8314
    %9087 = vmatmul.mubr.bf16.gmra.mrb[0].mxu0 %v8313
    %v9088 = vpop.f32.mrb[0].mxu0
    %v9089 = vadd.f32 %v8969, %v9088
    %v9090 = vpop.f32.mrb[0].mxu0
    %v9091 = vpop.f32.mrb[0].mxu0
    %v9092 = vadd.f32 %v8972, %v9091
    %v9093 = vpop.f32.mrb[0].mxu0
    %9094 = vmatprep.mubr.bf16.mxu0 %v8323
    %9095 = vmatmul.mubr.bf16.gmra.mrb[0].mxu0 %v8322
    %v9096 = vpop.f32.mrb[0].mxu0
    %v9097 = vadd.f32 %v8977, %v9096
    %v9098 = vpop.f32.mrb[0].mxu0
    %v9099 = vpop.f32.mrb[0].mxu0
    %v9100 = vadd.f32 %v8980, %v9099
    %v9101 = vpop.f32.mrb[0].mxu0
    %9102 = vmatprep.mubr.bf16.mxu0 %v8332
    %9103 = vmatmul.mubr.bf16.gmra.mrb[0].mxu0 %v8331
    %v9104 = vpop.f32.mrb[0].mxu0
    %v9105 = vadd.f32 %v8985, %v9104
    %v9106 = vpop.f32.mrb[0].mxu0
    %v9107 = vpop.f32.mrb[0].mxu0
    %v9108 = vadd.f32 %v8988, %v9107
    %v9109 = vpop.f32.mrb[0].mxu0
    %9110 = vmatprep.mubr.bf16.mxu0 %v8341
    %9111 = vmatmul.mubr.bf16.gmra.mrb[0].mxu0 %v8340
    %v9112 = vpop.f32.mrb[0].mxu0
    %v9113 = vadd.f32 %v8993, %v9112
    %v9114 = vpop.f32.mrb[0].mxu0
    %v9115 = vpop.f32.mrb[0].mxu0
    %v9116 = vpop.f32.mrb[0].mxu0
    %9117 = vdwg.mxu0
    %9118 = vmatprep.subr.bf16.mxu0 0
    %9119 = vmatpush1.bf16.msra.mxu0 %v8766
    %9120 = vmatprep.subr.bf16.mxu0 0
    %9121 = vmatpush1.bf16.msra.mxu0 %v8767
    %9122 = vmatprep.subr.bf16.mxu0 0
    %9123 = vmatpush1.bf16.msra.mxu0 %v8768
    %9124 = vmatprep.subr.bf16.mxu0 0
    %9125 = vmatpush1.bf16.msra.mxu0 %v8769
    %9126 = vmatprep.subr.bf16.mxu0 0
    %9127 = vmatpush1.bf16.msra.mxu0 %v8770
    %9128 = vmatprep.subr.bf16.mxu0 0
    %9129 = vmatpush1.bf16.msra.mxu0 %v8771
    %9130 = vmatprep.subr.bf16.mxu0 0
    %9131 = vmatpush1.bf16.msra.mxu0 %v8772
    %9132 = vmatprep.subr.bf16.mxu0 0
    %9133 = vmatpush1.bf16.msra.mxu0 %v8773
    %9134 = vmatprep.subr.bf16.mxu0 0
    %9135 = vmatpush1.bf16.msra.mxu0 %v8774
    %9136 = vmatprep.subr.bf16.mxu0 0
    %9137 = vmatpush1.bf16.msra.mxu0 %v8775
    %9138 = vmatprep.subr.bf16.mxu0 0
    %9139 = vmatpush1.bf16.msra.mxu0 %v8776
    %9140 = vmatprep.subr.bf16.mxu0 0
    %9141 = vmatpush1.bf16.msra.mxu0 %v8777
    %9142 = vmatprep.subr.bf16.mxu0 0
    %9143 = vmatpush1.bf16.msra.mxu0 %v8778
    %9144 = vmatprep.subr.bf16.mxu0 0
    %9145 = vmatpush1.bf16.msra.mxu0 %v8779
    %9146 = vmatprep.subr.bf16.mxu0 0
    %9147 = vmatpush1.bf16.msra.mxu0 %v8780
    %9148 = vmatprep.subr.bf16.mxu0 0
    %9149 = vmatpush1.bf16.msra.mxu0 %v8781
    %9150 = vmatprep.mubr.bf16.mxu0 %v8253
    %9151 = vmatmul.mubr.bf16.gmra.mrb[0].mxu0 %v8252
    %v9152 = vpop.f32.mrb[0].mxu0
    %v9153 = vadd.f32 %v9033, %v9152
    %v9154 = vpop.f32.mrb[0].mxu0
    %v9155 = vpop.f32.mrb[0].mxu0
    %v9156 = vadd.f32 %v9036, %v9155
    %v9157 = vpop.f32.mrb[0].mxu0
    %9158 = vmatprep.mubr.bf16.mxu0 %v8262
    %9159 = vmatmul.mubr.bf16.gmra.mrb[0].mxu0 %v8261
    %v9160 = vpop.f32.mrb[0].mxu0
    %v9161 = vadd.f32 %v9041, %v9160
    %v9162 = vpop.f32.mrb[0].mxu0
    %v9163 = vpop.f32.mrb[0].mxu0
    %v9164 = vadd.f32 %v9044, %v9163
    %v9165 = vpop.f32.mrb[0].mxu0
    %9166 = vmatprep.mubr.bf16.mxu0 %v8271
    %9167 = vmatmul.mubr.bf16.gmra.mrb[0].mxu0 %v8270
    %v9168 = vpop.f32.mrb[0].mxu0
    %v9169 = vadd.f32 %v9049, %v9168
    %v9170 = vpop.f32.mrb[0].mxu0
    %v9171 = vpop.f32.mrb[0].mxu0
    %v9172 = vadd.f32 %v9052, %v9171
    %v9173 = vpop.f32.mrb[0].mxu0
    %9174 = vmatprep.mubr.bf16.mxu0 %v8280
    %9175 = vmatmul.mubr.bf16.gmra.mrb[0].mxu0 %v8279
    %v9176 = vpop.f32.mrb[0].mxu0
    %v9177 = vadd.f32 %v9057, %v9176
    %v9178 = vpop.f32.mrb[0].mxu0
    %v9179 = vpop.f32.mrb[0].mxu0
    %v9180 = vadd.f32 %v9060, %v9179
    %v9181 = vpop.f32.mrb[0].mxu0
    %9182 = vmatprep.mubr.bf16.mxu0 %v8289
    %9183 = vmatmul.mubr.bf16.gmra.mrb[0].mxu0 %v8288
    %v9184 = vpop.f32.mrb[0].mxu0
    %v9185 = vadd.f32 %v9065, %v9184
    %v9186 = vpop.f32.mrb[0].mxu0
    %v9187 = vpop.f32.mrb[0].mxu0
    %v9188 = vadd.f32 %v9068, %v9187
    %v9189 = vpop.f32.mrb[0].mxu0
    %9190 = vmatprep.mubr.bf16.mxu0 %v8298
    %9191 = vmatmul.mubr.bf16.gmra.mrb[0].mxu0 %v8297
    %v9192 = vpop.f32.mrb[0].mxu0
    %v9193 = vadd.f32 %v9073, %v9192
    %v9194 = vpop.f32.mrb[0].mxu0
    %v9195 = vpop.f32.mrb[0].mxu0
    %v9196 = vadd.f32 %v9076, %v9195
    %v9197 = vpop.f32.mrb[0].mxu0
    %9198 = vmatprep.mubr.bf16.mxu0 %v8307
    %9199 = vmatmul.mubr.bf16.gmra.mrb[0].mxu0 %v8306
    %v9200 = vpop.f32.mrb[0].mxu0
    %v9201 = vadd.f32 %v9081, %v9200
    %v9202 = vpop.f32.mrb[0].mxu0
    %v9203 = vpop.f32.mrb[0].mxu0
    %v9204 = vadd.f32 %v9084, %v9203
    %v9205 = vpop.f32.mrb[0].mxu0
    %9206 = vmatprep.mubr.bf16.mxu0 %v8316
    %9207 = vmatmul.mubr.bf16.gmra.mrb[0].mxu0 %v8315
    %v9208 = vpop.f32.mrb[0].mxu0
    %v9209 = vadd.f32 %v9089, %v9208
    %v9210 = vpop.f32.mrb[0].mxu0
    %v9211 = vpop.f32.mrb[0].mxu0
    %v9212 = vadd.f32 %v9092, %v9211
    %v9213 = vpop.f32.mrb[0].mxu0
    %9214 = vmatprep.mubr.bf16.mxu0 %v8325
    %9215 = vmatmul.mubr.bf16.gmra.mrb[0].mxu0 %v8324
    %v9216 = vpop.f32.mrb[0].mxu0
    %v9217 = vadd.f32 %v9097, %v9216
    %v9218 = vpop.f32.mrb[0].mxu0
    %v9219 = vpop.f32.mrb[0].mxu0
    %v9220 = vadd.f32 %v9100, %v9219
    %v9221 = vpop.f32.mrb[0].mxu0
    %9222 = vmatprep.mubr.bf16.mxu0 %v8334
    %9223 = vmatmul.mubr.bf16.gmra.mrb[0].mxu0 %v8333
    %v9224 = vpop.f32.mrb[0].mxu0
    %v9225 = vadd.f32 %v9105, %v9224
    %v9226 = vpop.f32.mrb[0].mxu0
    %v9227 = vpop.f32.mrb[0].mxu0
    %v9228 = vadd.f32 %v9108, %v9227
    %v9229 = vpop.f32.mrb[0].mxu0
    %9230 = vmatprep.mubr.bf16.mxu0 %v8343
    %9231 = vmatmul.mubr.bf16.gmra.mrb[0].mxu0 %v8342
    %v9232 = vpop.f32.mrb[0].mxu0
    %v9233 = vadd.f32 %v9113, %v9232
    %v9234 = vpop.f32.mrb[0].mxu0
    %v9235 = vpop.f32.mrb[0].mxu0
    %v9236 = vpop.f32.mrb[0].mxu0
    %9237 = vdwg.mxu0
    %9238 = vmatprep.subr.bf16.mxu0 0
    %9239 = vmatpush1.bf16.msra.mxu0 %v8782
    %9240 = vmatprep.subr.bf16.mxu0 0
    %9241 = vmatpush1.bf16.msra.mxu0 %v8783
    %9242 = vmatprep.subr.bf16.mxu0 0
    %9243 = vmatpush1.bf16.msra.mxu0 %v8784
    %9244 = vmatprep.subr.bf16.mxu0 0
    %9245 = vmatpush1.bf16.msra.mxu0 %v8785
    %9246 = vmatprep.subr.bf16.mxu0 0
    %9247 = vmatpush1.bf16.msra.mxu0 %v8786
    %9248 = vmatprep.subr.bf16.mxu0 0
    %9249 = vmatpush1.bf16.msra.mxu0 %v8787
    %9250 = vmatprep.subr.bf16.mxu0 0
    %9251 = vmatpush1.bf16.msra.mxu0 %v8788
    %9252 = vmatprep.subr.bf16.mxu0 0
    %9253 = vmatpush1.bf16.msra.mxu0 %v8789
    %9254 = vmatprep.subr.bf16.mxu0 0
    %9255 = vmatpush1.bf16.msra.mxu0 %v8790
    %9256 = vmatprep.subr.bf16.mxu0 0
    %9257 = vmatpush1.bf16.msra.mxu0 %v8791
    %9258 = vmatprep.subr.bf16.mxu0 0
    %9259 = vmatpush1.bf16.msra.mxu0 %v8792
    %9260 = vmatprep.subr.bf16.mxu0 0
    %9261 = vmatpush1.bf16.msra.mxu0 %v8793
    %9262 = vmatprep.subr.bf16.mxu0 0
    %9263 = vmatpush1.bf16.msra.mxu0 %v8794
    %9264 = vmatprep.subr.bf16.mxu0 0
    %9265 = vmatpush1.bf16.msra.mxu0 %v8795
    %9266 = vmatprep.subr.bf16.mxu0 0
    %9267 = vmatpush1.bf16.msra.mxu0 %v8796
    %9268 = vmatprep.subr.bf16.mxu0 0
    %9269 = vmatpush1.bf16.msra.mxu0 %v8797
    %9270 = vmatprep.mubr.bf16.mxu0 %v8255
    %9271 = vmatmul.mubr.bf16.gmra.mrb[0].mxu0 %v8254
    %v9272 = vpop.f32.mrb[0].mxu0
    %v9273 = vadd.f32 %v9153, %v9272
    %v9274 = vpop.f32.mrb[0].mxu0
    %v9275 = vpop.f32.mrb[0].mxu0
    %v9276 = vadd.f32 %v9156, %v9275
    %v9277 = vpop.f32.mrb[0].mxu0
    %9278 = vmatprep.mubr.bf16.mxu0 %v8264
    %9279 = vmatmul.mubr.bf16.gmra.mrb[0].mxu0 %v8263
    %v9280 = vpop.f32.mrb[0].mxu0
    %v9281 = vadd.f32 %v9161, %v9280
    %v9282 = vpop.f32.mrb[0].mxu0
    %v9283 = vpop.f32.mrb[0].mxu0
    %v9284 = vadd.f32 %v9164, %v9283
    %v9285 = vpop.f32.mrb[0].mxu0
    %9286 = vmatprep.mubr.bf16.mxu0 %v8273
    %9287 = vmatmul.mubr.bf16.gmra.mrb[0].mxu0 %v8272
    %v9288 = vpop.f32.mrb[0].mxu0
    %v9289 = vadd.f32 %v9169, %v9288
    %v9290 = vpop.f32.mrb[0].mxu0
    %v9291 = vpop.f32.mrb[0].mxu0
    %v9292 = vadd.f32 %v9172, %v9291
    %v9293 = vpop.f32.mrb[0].mxu0
    %9294 = vmatprep.mubr.bf16.mxu0 %v8282
    %9295 = vmatmul.mubr.bf16.gmra.mrb[0].mxu0 %v8281
    %v9296 = vpop.f32.mrb[0].mxu0
    %v9297 = vadd.f32 %v9177, %v9296
    %v9298 = vpop.f32.mrb[0].mxu0
    %v9299 = vpop.f32.mrb[0].mxu0
    %v9300 = vadd.f32 %v9180, %v9299
    %v9301 = vpop.f32.mrb[0].mxu0
    %9302 = vmatprep.mubr.bf16.mxu0 %v8291
    %9303 = vmatmul.mubr.bf16.gmra.mrb[0].mxu0 %v8290
    %v9304 = vpop.f32.mrb[0].mxu0
    %v9305 = vadd.f32 %v9185, %v9304
    %v9306 = vpop.f32.mrb[0].mxu0
    %v9307 = vpop.f32.mrb[0].mxu0
    %v9308 = vadd.f32 %v9188, %v9307
    %v9309 = vpop.f32.mrb[0].mxu0
    %9310 = vmatprep.mubr.bf16.mxu0 %v8300
    %9311 = vmatmul.mubr.bf16.gmra.mrb[0].mxu0 %v8299
    %v9312 = vpop.f32.mrb[0].mxu0
    %v9313 = vadd.f32 %v9193, %v9312
    %v9314 = vpop.f32.mrb[0].mxu0
    %v9315 = vpop.f32.mrb[0].mxu0
    %v9316 = vadd.f32 %v9196, %v9315
    %v9317 = vpop.f32.mrb[0].mxu0
    %9318 = vmatprep.mubr.bf16.mxu0 %v8309
    %9319 = vmatmul.mubr.bf16.gmra.mrb[0].mxu0 %v8308
    %v9320 = vpop.f32.mrb[0].mxu0
    %v9321 = vadd.f32 %v9201, %v9320
    %v9322 = vpop.f32.mrb[0].mxu0
    %v9323 = vpop.f32.mrb[0].mxu0
    %v9324 = vadd.f32 %v9204, %v9323
    %v9325 = vpop.f32.mrb[0].mxu0
    %9326 = vmatprep.mubr.bf16.mxu0 %v8318
    %9327 = vmatmul.mubr.bf16.gmra.mrb[0].mxu0 %v8317
    %v9328 = vpop.f32.mrb[0].mxu0
    %v9329 = vadd.f32 %v9209, %v9328
    %v9330 = vpop.f32.mrb[0].mxu0
    %v9331 = vpop.f32.mrb[0].mxu0
    %v9332 = vadd.f32 %v9212, %v9331
    %v9333 = vpop.f32.mrb[0].mxu0
    %9334 = vmatprep.mubr.bf16.mxu0 %v8327
    %9335 = vmatmul.mubr.bf16.gmra.mrb[0].mxu0 %v8326
    %v9336 = vpop.f32.mrb[0].mxu0
    %v9337 = vadd.f32 %v9217, %v9336
    %v9338 = vpop.f32.mrb[0].mxu0
    %v9339 = vpop.f32.mrb[0].mxu0
    %v9340 = vadd.f32 %v9220, %v9339
    %v9341 = vpop.f32.mrb[0].mxu0
    %9342 = vmatprep.mubr.bf16.mxu0 %v8336
    %9343 = vmatmul.mubr.bf16.gmra.mrb[0].mxu0 %v8335
    %v9344 = vpop.f32.mrb[0].mxu0
    %v9345 = vadd.f32 %v9225, %v9344
    %v9346 = vpop.f32.mrb[0].mxu0
    %v9347 = vpop.f32.mrb[0].mxu0
    %v9348 = vadd.f32 %v9228, %v9347
    %v9349 = vpop.f32.mrb[0].mxu0
    %9350 = vmatprep.mubr.bf16.mxu0 %v8345
    %9351 = vmatmul.mubr.bf16.gmra.mrb[0].mxu0 %v8344
    %v9352 = vpop.f32.mrb[0].mxu0
    %v9353 = vadd.f32 %v9233, %v9352
    %v9354 = vpop.f32.mrb[0].mxu0
    %v9355 = vpop.f32.mrb[0].mxu0
    %v9356 = vpop.f32.mrb[0].mxu0
    %9357 = vdwg.mxu0
    %9358 = vmatprep.subr.bf16.mxu0 0
    %9359 = vmatpush1.bf16.msra.mxu0 %v8798
    %9360 = vmatprep.subr.bf16.mxu0 0
    %9361 = vmatpush1.bf16.msra.mxu0 %v8799
    %9362 = vmatprep.subr.bf16.mxu0 0
    %9363 = vmatpush1.bf16.msra.mxu0 %v8800
    %9364 = vmatprep.subr.bf16.mxu0 0
    %9365 = vmatpush1.bf16.msra.mxu0 %v8801
    %9366 = vmatprep.subr.bf16.mxu0 0
    %9367 = vmatpush1.bf16.msra.mxu0 %v8802
    %9368 = vmatprep.subr.bf16.mxu0 0
    %9369 = vmatpush1.bf16.msra.mxu0 %v8803
    %9370 = vmatprep.subr.bf16.mxu0 0
    %9371 = vmatpush1.bf16.msra.mxu0 %v8804
    %9372 = vmatprep.subr.bf16.mxu0 0
    %9373 = vmatpush1.bf16.msra.mxu0 %v8805
    %9374 = vmatprep.subr.bf16.mxu0 0
    %9375 = vmatpush1.bf16.msra.mxu0 0
    %9376 = vmatprep.subr.bf16.mxu0 0
    %9377 = vmatpush1.bf16.msra.mxu0 0
    %9378 = vmatprep.subr.bf16.mxu0 0
    %9379 = vmatpush1.bf16.msra.mxu0 0
    %9380 = vmatprep.subr.bf16.mxu0 0
    %9381 = vmatpush1.bf16.msra.mxu0 0
    %9382 = vmatprep.subr.bf16.mxu0 0
    %9383 = vmatpush1.bf16.msra.mxu0 0
    %9384 = vmatprep.subr.bf16.mxu0 0
    %9385 = vmatpush1.bf16.msra.mxu0 0
    %9386 = vmatprep.subr.bf16.mxu0 0
    %9387 = vmatpush1.bf16.msra.mxu0 0
    %9388 = vmatprep.subr.bf16.mxu0 0
    %9389 = vmatpush1.bf16.msra.mxu0 0
    %9390 = vmatprep.mubr.bf16.mxu0 0
    %9391 = vmatmul.mubr.bf16.gmra.mrb[0].mxu0 %v8256
    %v9392 = vpop.f32.mrb[0].mxu0
    %v9393 = vadd.f32 %v9273, %v9392
    %v9394 = vpop.f32.mrb[0].mxu0
    %v9395 = vpop.f32.mrb[0].mxu0
    %v9396 = vadd.f32 %v9276, %v9395
    %v9397 = vpop.f32.mrb[0].mxu0
    %9398 = vmatprep.mubr.bf16.mxu0 0
    %9399 = vmatmul.mubr.bf16.gmra.mrb[0].mxu0 %v8265
    %v9400 = vpop.f32.mrb[0].mxu0
    %v9401 = vadd.f32 %v9281, %v9400
    %v9402 = vpop.f32.mrb[0].mxu0
    %v9403 = vpop.f32.mrb[0].mxu0
    %v9404 = vadd.f32 %v9284, %v9403
    %v9405 = vpop.f32.mrb[0].mxu0
    %9406 = vmatprep.mubr.bf16.mxu0 0
    %9407 = vmatmul.mubr.bf16.gmra.mrb[0].mxu0 %v8274
    %v9408 = vpop.f32.mrb[0].mxu0
    %v9409 = vadd.f32 %v9289, %v9408
    %v9410 = vpop.f32.mrb[0].mxu0
    %v9411 = vpop.f32.mrb[0].mxu0
    %v9412 = vadd.f32 %v9292, %v9411
    %v9413 = vpop.f32.mrb[0].mxu0
    %9414 = vmatprep.mubr.bf16.mxu0 0
    %9415 = vmatmul.mubr.bf16.gmra.mrb[0].mxu0 %v8283
    %v9416 = vpop.f32.mrb[0].mxu0
    %v9417 = vadd.f32 %v9297, %v9416
    %v9418 = vpop.f32.mrb[0].mxu0
    %v9419 = vpop.f32.mrb[0].mxu0
    %v9420 = vadd.f32 %v9300, %v9419
    %v9421 = vpop.f32.mrb[0].mxu0
    %9422 = vmatprep.mubr.bf16.mxu0 0
    %9423 = vmatmul.mubr.bf16.gmra.mrb[0].mxu0 %v8292
    %v9424 = vpop.f32.mrb[0].mxu0
    %v9425 = vadd.f32 %v9305, %v9424
    %v9426 = vpop.f32.mrb[0].mxu0
    %v9427 = vpop.f32.mrb[0].mxu0
    %v9428 = vadd.f32 %v9308, %v9427
    %v9429 = vpop.f32.mrb[0].mxu0
    %9430 = vmatprep.mubr.bf16.mxu0 0
    %9431 = vmatmul.mubr.bf16.gmra.mrb[0].mxu0 %v8301
    %v9432 = vpop.f32.mrb[0].mxu0
    %v9433 = vadd.f32 %v9313, %v9432
    %v9434 = vpop.f32.mrb[0].mxu0
    %v9435 = vpop.f32.mrb[0].mxu0
    %v9436 = vadd.f32 %v9316, %v9435
    %v9437 = vpop.f32.mrb[0].mxu0
    %9438 = vmatprep.mubr.bf16.mxu0 0
    %9439 = vmatmul.mubr.bf16.gmra.mrb[0].mxu0 %v8310
    %v9440 = vpop.f32.mrb[0].mxu0
    %v9441 = vadd.f32 %v9321, %v9440
    %v9442 = vpop.f32.mrb[0].mxu0
    %v9443 = vpop.f32.mrb[0].mxu0
    %v9444 = vadd.f32 %v9324, %v9443
    %v9445 = vpop.f32.mrb[0].mxu0
    %9446 = vmatprep.mubr.bf16.mxu0 0
    %9447 = vmatmul.mubr.bf16.gmra.mrb[0].mxu0 %v8319
    %v9448 = vpop.f32.mrb[0].mxu0
    %v9449 = vadd.f32 %v9329, %v9448
    %v9450 = vpop.f32.mrb[0].mxu0
    %v9451 = vpop.f32.mrb[0].mxu0
    %v9452 = vadd.f32 %v9332, %v9451
    %v9453 = vpop.f32.mrb[0].mxu0
    %9454 = vmatprep.mubr.bf16.mxu0 0
    %9455 = vmatmul.mubr.bf16.gmra.mrb[0].mxu0 %v8328
    %v9456 = vpop.f32.mrb[0].mxu0
    %v9457 = vadd.f32 %v9337, %v9456
    %v9458 = vpop.f32.mrb[0].mxu0
    %v9459 = vpop.f32.mrb[0].mxu0
    %v9460 = vadd.f32 %v9340, %v9459
    %v9461 = vpop.f32.mrb[0].mxu0
    %9462 = vmatprep.mubr.bf16.mxu0 0
    %9463 = vmatmul.mubr.bf16.gmra.mrb[0].mxu0 %v8337
    %v9464 = vpop.f32.mrb[0].mxu0
    %v9465 = vadd.f32 %v9345, %v9464
    %v9466 = vpop.f32.mrb[0].mxu0
    %v9467 = vpop.f32.mrb[0].mxu0
    %v9468 = vadd.f32 %v9348, %v9467
    %v9469 = vpop.f32.mrb[0].mxu0
    %9470 = vmatprep.mubr.bf16.mxu0 0
    %9471 = vmatmul.mubr.bf16.gmra.mrb[0].mxu0 %v8346
    %v9472 = vpop.f32.mrb[0].mxu0
    %v9473 = vadd.f32 %v9353, %v9472
    %v9474 = vpop.f32.mrb[0].mxu0
    %v9475 = vpop.f32.mrb[0].mxu0
    %v9476 = vpop.f32.mrb[0].mxu0
    %9477 = vdwg.mxu0
    %s9478 = sadd.s32 %s723, 2
    %s9479 = scalar_lea.vmem %s3, %s9478
    %v9480 = vld [vmem:[%s9479] sm:$0x1]
    %s9481 = scalar_lea.vmem %s4, %s9478
    %v9482 = vld [vmem:[%s9481] sm:$0x1]
    %v9483 = vadd.f32 %v9393, %v9396
    %v9484 = vadd.f32 %v9483, %v9401
    %v9485 = vadd.f32 %v9484, %v9404
    %v9486 = vadd.f32 %v9485, %v9409
    %v9487 = vadd.f32 %v9486, %v9412
    %v9488 = vadd.f32 %v9487, %v9417
    %v9489 = vadd.f32 %v9488, %v9420
    %v9490 = vadd.f32 %v9489, %v9425
    %v9491 = vadd.f32 %v9490, %v9428
    %v9492 = vadd.f32 %v9491, %v9433
    %v9493 = vadd.f32 %v9492, %v9436
    %v9494 = vadd.f32 %v9493, %v9441
    %v9495 = vadd.f32 %v9494, %v9444
    %v9496 = vadd.f32 %v9495, %v9449
    %v9497 = vadd.f32 %v9496, %v9452
    %v9498 = vadd.f32 %v9497, %v9457
    %v9499 = vadd.f32 %v9498, %v9460
    %v9500 = vadd.f32 %v9499, %v9465
    %v9501 = vadd.f32 %v9500, %v9468
    %v9502 = vadd.f32 %v9501, %v9473
    %v9503 = vrot.slane %v9502, 4
    %v9504 = vadd.f32 %v9502, %v9503
    %v9505 = vrot.slane %v9504, 2
    %v9506 = vadd.f32 %v9504, %v9505
    %v9507 = vrot.slane %v9506, 1
    %v9508 = vadd.f32 %v9506, %v9507
    %v9509 = vmul.f32 %v9508, 0.0061728396
    %v9510 = vsub.f32 %v9393, %v9509
    %v9511 = vsub.f32 %v9396, %v9509
    %v9512 = vsub.f32 %v9401, %v9509
    %v9513 = vsub.f32 %v9404, %v9509
    %v9514 = vsub.f32 %v9409, %v9509
    %v9515 = vsub.f32 %v9412, %v9509
    %v9516 = vsub.f32 %v9417, %v9509
    %v9517 = vsub.f32 %v9420, %v9509
    %v9518 = vsub.f32 %v9425, %v9509
    %v9519 = vsub.f32 %v9428, %v9509
    %v9520 = vsub.f32 %v9433, %v9509
    %v9521 = vsub.f32 %v9436, %v9509
    %v9522 = vsub.f32 %v9441, %v9509
    %v9523 = vsub.f32 %v9444, %v9509
    %v9524 = vsub.f32 %v9449, %v9509
    %v9525 = vsub.f32 %v9452, %v9509
    %v9526 = vsub.f32 %v9457, %v9509
    %v9527 = vsub.f32 %v9460, %v9509
    %v9528 = vsub.f32 %v9465, %v9509
    %v9529 = vsub.f32 %v9468, %v9509
    %v9530 = vsub.f32 %v9473, %v9509
    %v9531 = vmul.f32 %v9510, %v427
    %v9532 = vmul.f32 %v9511, %v432
    %v9533 = vmul.f32 %v9512, %v437
    %v9534 = vmul.f32 %v9513, %v442
    %v9535 = vmul.f32 %v9514, %v447
    %v9536 = vmul.f32 %v9515, %v452
    %v9537 = vmul.f32 %v9516, %v457
    %v9538 = vmul.f32 %v9517, %v462
    %v9539 = vmul.f32 %v9518, %v467
    %v9540 = vmul.f32 %v9519, %v472
    %v9541 = vmul.f32 %v9520, %v477
    %v9542 = vmul.f32 %v9521, %v482
    %v9543 = vmul.f32 %v9522, %v487
    %v9544 = vmul.f32 %v9523, %v492
    %v9545 = vmul.f32 %v9524, %v497
    %v9546 = vmul.f32 %v9525, %v502
    %v9547 = vmul.f32 %v9526, %v507
    %v9548 = vmul.f32 %v9527, %v512
    %v9549 = vmul.f32 %v9528, %v517
    %v9550 = vmul.f32 %v9529, %v522
    %v9551 = vmul.f32 %v9530, %v527
    %v9552 = vmul.f32 %v9531, %v9531
    %v9553 = vmul.f32 %v9532, %v9532
    %v9554 = vmul.f32 %v9533, %v9533
    %v9555 = vmul.f32 %v9534, %v9534
    %v9556 = vmul.f32 %v9535, %v9535
    %v9557 = vmul.f32 %v9536, %v9536
    %v9558 = vmul.f32 %v9537, %v9537
    %v9559 = vmul.f32 %v9538, %v9538
    %v9560 = vmul.f32 %v9539, %v9539
    %v9561 = vmul.f32 %v9540, %v9540
    %v9562 = vmul.f32 %v9541, %v9541
    %v9563 = vmul.f32 %v9542, %v9542
    %v9564 = vmul.f32 %v9543, %v9543
    %v9565 = vmul.f32 %v9544, %v9544
    %v9566 = vmul.f32 %v9545, %v9545
    %v9567 = vmul.f32 %v9546, %v9546
    %v9568 = vmul.f32 %v9547, %v9547
    %v9569 = vmul.f32 %v9548, %v9548
    %v9570 = vmul.f32 %v9549, %v9549
    %v9571 = vmul.f32 %v9550, %v9550
    %v9572 = vmul.f32 %v9551, %v9551
    %v9573 = vadd.f32 %v9552, %v9553
    %v9574 = vadd.f32 %v9573, %v9554
    %v9575 = vadd.f32 %v9574, %v9555
    %v9576 = vadd.f32 %v9575, %v9556
    %v9577 = vadd.f32 %v9576, %v9557
    %v9578 = vadd.f32 %v9577, %v9558
    %v9579 = vadd.f32 %v9578, %v9559
    %v9580 = vadd.f32 %v9579, %v9560
    %v9581 = vadd.f32 %v9580, %v9561
    %v9582 = vadd.f32 %v9581, %v9562
    %v9583 = vadd.f32 %v9582, %v9563
    %v9584 = vadd.f32 %v9583, %v9564
    %v9585 = vadd.f32 %v9584, %v9565
    %v9586 = vadd.f32 %v9585, %v9566
    %v9587 = vadd.f32 %v9586, %v9567
    %v9588 = vadd.f32 %v9587, %v9568
    %v9589 = vadd.f32 %v9588, %v9569
    %v9590 = vadd.f32 %v9589, %v9570
    %v9591 = vadd.f32 %v9590, %v9571
    %v9592 = vadd.f32 %v9591, %v9572
    %v9593 = vrot.slane %v9592, 4
    %v9594 = vadd.f32 %v9592, %v9593
    %v9595 = vrot.slane %v9594, 2
    %v9596 = vadd.f32 %v9594, %v9595
    %v9597 = vrot.slane %v9596, 1
    %v9598 = vadd.f32 %v9596, %v9597
    %v9599 = vmul.f32 %v9598, 0.0061728396
    %v9600 = vadd.f32 %v9599, 1e-05
    %v9601 = vrsqrt.pop %v9600
    %v9602 = vmul.f32 %v9510, %v9601
    %v9603 = vmul.f32 %v9511, %v9601
    %v9604 = vmul.f32 %v9512, %v9601
    %v9605 = vmul.f32 %v9513, %v9601
    %v9606 = vmul.f32 %v9514, %v9601
    %v9607 = vmul.f32 %v9515, %v9601
    %v9608 = vmul.f32 %v9516, %v9601
    %v9609 = vmul.f32 %v9517, %v9601
    %v9610 = vmul.f32 %v9518, %v9601
    %v9611 = vmul.f32 %v9519, %v9601
    %v9612 = vmul.f32 %v9520, %v9601
    %v9613 = vmul.f32 %v9521, %v9601
    %v9614 = vmul.f32 %v9522, %v9601
    %v9615 = vmul.f32 %v9523, %v9601
    %v9616 = vmul.f32 %v9524, %v9601
    %v9617 = vmul.f32 %v9525, %v9601
    %v9618 = vmul.f32 %v9526, %v9601
    %v9619 = vmul.f32 %v9527, %v9601
    %v9620 = vmul.f32 %v9528, %v9601
    %v9621 = vmul.f32 %v9529, %v9601
    %v9622 = vmul.f32 %v9530, %v9601
    %v9624 = vlaneseq
    %v9625 = vshrl.u32 %v9624, 7
    %v9626 = vsub.s32 0, %v9625
    %v9627 = vrot.slane %v9480, %v9626
    %v9629 = vmul.f32 %v9602, %v9627
    %v9630 = vmul.f32 %v9603, %v9627
    %v9631 = vmul.f32 %v9604, %v9627
    %v9632 = vmul.f32 %v9605, %v9627
    %v9633 = vmul.f32 %v9606, %v9627
    %v9634 = vmul.f32 %v9607, %v9627
    %v9635 = vmul.f32 %v9608, %v9627
    %v9636 = vmul.f32 %v9609, %v9627
    %v9637 = vmul.f32 %v9610, %v9627
    %v9638 = vmul.f32 %v9611, %v9627
    %v9639 = vmul.f32 %v9612, %v9627
    %v9640 = vmul.f32 %v9613, %v9627
    %v9641 = vmul.f32 %v9614, %v9627
    %v9642 = vmul.f32 %v9615, %v9627
    %v9643 = vmul.f32 %v9616, %v9627
    %v9644 = vmul.f32 %v9617, %v9627
    %v9645 = vmul.f32 %v9618, %v9627
    %v9646 = vmul.f32 %v9619, %v9627
    %v9647 = vmul.f32 %v9620, %v9627
    %v9648 = vmul.f32 %v9621, %v9627
    %v9649 = vmul.f32 %v9622, %v9627
    %v9651 = vlaneseq
    %v9652 = vshrl.u32 %v9651, 7
    %v9653 = vsub.s32 0, %v9652
    %v9654 = vrot.slane %v9482, %v9653
    %v9656 = vadd.f32 %v9629, %v9654
    %v9657 = vadd.f32 %v9630, %v9654
    %v9658 = vadd.f32 %v9631, %v9654
    %v9659 = vadd.f32 %v9632, %v9654
    %v9660 = vadd.f32 %v9633, %v9654
    %v9661 = vadd.f32 %v9634, %v9654
    %v9662 = vadd.f32 %v9635, %v9654
    %v9663 = vadd.f32 %v9636, %v9654
    %v9664 = vadd.f32 %v9637, %v9654
    %v9665 = vadd.f32 %v9638, %v9654
    %v9666 = vadd.f32 %v9639, %v9654
    %v9667 = vadd.f32 %v9640, %v9654
    %v9668 = vadd.f32 %v9641, %v9654
    %v9669 = vadd.f32 %v9642, %v9654
    %v9670 = vadd.f32 %v9643, %v9654
    %v9671 = vadd.f32 %v9644, %v9654
    %v9672 = vadd.f32 %v9645, %v9654
    %v9673 = vadd.f32 %v9646, %v9654
    %v9674 = vadd.f32 %v9647, %v9654
    %v9675 = vadd.f32 %v9648, %v9654
    %v9676 = vadd.f32 %v9649, %v9654
    %v9677 = vadd.f32 %v9656, %v702
    %v9678 = vadd.f32 %v9657, %v703
    %v9679 = vadd.f32 %v9658, %v704
    %v9680 = vadd.f32 %v9659, %v705
    %v9681 = vadd.f32 %v9660, %v706
    %v9682 = vadd.f32 %v9661, %v707
    %v9683 = vadd.f32 %v9662, %v708
    %v9684 = vadd.f32 %v9663, %v709
    %v9685 = vadd.f32 %v9664, %v710
    %v9686 = vadd.f32 %v9665, %v711
    %v9687 = vadd.f32 %v9666, %v712
    %v9688 = vadd.f32 %v9667, %v713
    %v9689 = vadd.f32 %v9668, %v714
    %v9690 = vadd.f32 %v9669, %v715
    %v9691 = vadd.f32 %v9670, %v716
    %v9692 = vadd.f32 %v9671, %v717
    %v9693 = vadd.f32 %v9672, %v718
    %v9694 = vadd.f32 %v9673, %v719
    %v9695 = vadd.f32 %v9674, %v720
    %v9696 = vadd.f32 %v9675, %v721
    %v9697 = vadd.f32 %v9676, %v722
    %v9698 = vmax.f32 %v9677, 0.0
    %v9699 = vmax.f32 %v9678, 0.0
    %v9700 = vmax.f32 %v9679, 0.0
    %v9701 = vmax.f32 %v9680, 0.0
    %v9702 = vmax.f32 %v9681, 0.0
    %v9703 = vmax.f32 %v9682, 0.0
    %v9704 = vmax.f32 %v9683, 0.0
    %v9705 = vmax.f32 %v9684, 0.0
    %v9706 = vmax.f32 %v9685, 0.0
    %v9707 = vmax.f32 %v9686, 0.0
    %v9708 = vmax.f32 %v9687, 0.0
    %v9709 = vmax.f32 %v9688, 0.0
    %v9710 = vmax.f32 %v9689, 0.0
    %v9711 = vmax.f32 %v9690, 0.0
    %v9712 = vmax.f32 %v9691, 0.0
    %v9713 = vmax.f32 %v9692, 0.0
    %v9714 = vmax.f32 %v9693, 0.0
    %v9715 = vmax.f32 %v9694, 0.0
    %v9716 = vmax.f32 %v9695, 0.0
    %v9717 = vmax.f32 %v9696, 0.0
    %v9718 = vmax.f32 %v9697, 0.0
  $region102: #{ppo_forward.1} parent=0 // loop_footer
    %s701 = sadd.s32 1, %s697
  $region103: #{ppo_forward.1} parent=0 // loop_footer_branch
    %696 = sbr.rel target = $region99
  $region104: #{ppo_forward.1} parent=0 // loop_exit
    _
  %v9719 = vmul.f32 %v702, %v427
  %v9720 = vmul.f32 %v703, %v432
  %v9721 = vmul.f32 %v704, %v437
  %v9722 = vmul.f32 %v705, %v442
  %v9723 = vmul.f32 %v706, %v447
  %v9724 = vmul.f32 %v707, %v452
  %v9725 = vmul.f32 %v708, %v457
  %v9726 = vmul.f32 %v709, %v462
  %v9727 = vmul.f32 %v710, %v467
  %v9728 = vmul.f32 %v711, %v472
  %v9729 = vmul.f32 %v712, %v477
  %v9730 = vmul.f32 %v713, %v482
  %v9731 = vmul.f32 %v714, %v487
  %v9732 = vmul.f32 %v715, %v492
  %v9733 = vmul.f32 %v716, %v497
  %v9734 = vmul.f32 %v717, %v502
  %v9735 = vmul.f32 %v718, %v507
  %v9736 = vmul.f32 %v719, %v512
  %v9737 = vmul.f32 %v720, %v517
  %v9738 = vmul.f32 %v721, %v522
  %v9739 = vmul.f32 %v722, %v527
  %v9740 = vpack.c.bf16 %v9720, %v9719
  %v9741 = vpack.c.bf16 %v9722, %v9721
  %v9742 = vpack.c.bf16 %v9724, %v9723
  %v9743 = vpack.c.bf16 %v9726, %v9725
  %v9744 = vpack.c.bf16 %v9728, %v9727
  %v9745 = vpack.c.bf16 %v9730, %v9729
  %v9746 = vpack.c.bf16 %v9732, %v9731
  %v9747 = vpack.c.bf16 %v9734, %v9733
  %v9748 = vpack.c.bf16 %v9736, %v9735
  %v9749 = vpack.c.bf16 %v9738, %v9737
  %v9750 = vpack.c.bf16 %v9739, %v9739
  %v9751 = vld [vmem:[%s7] sm:$0xf]
  %v9752 = vld [vmem:[%s7 + $0x4] sm:$0xf]
  %v9753 = vld [vmem:[%s7 + $0x8] sm:$0xf]
  %v9754 = vld [vmem:[%s7 + $0xc] sm:$0xf]
  %v9755 = vld [vmem:[%s7 + $0x10] sm:$0xf]
  %v9756 = vld [vmem:[%s7 + $0x14] sm:$0xf]
  %v9757 = vld [vmem:[%s7 + $0x18] sm:$0xf]
  %v9758 = vld [vmem:[%s7 + $0x1c] sm:$0xf]
  %v9759 = vld [vmem:[%s7 + $0x20] sm:$0xf]
  %v9760 = vld [vmem:[%s7 + $0x24] sm:$0xf]
  %v9761 = vld [vmem:[%s7 + $0x28] sm:$0xf]
  %v9762 = vld [vmem:[%s7 + $0x2c] sm:$0xf]
  %v9763 = vld [vmem:[%s7 + $0x30] sm:$0xf]
  %v9764 = vld [vmem:[%s7 + $0x34] sm:$0xf]
  %v9765 = vld [vmem:[%s7 + $0x38] sm:$0xf]
  %v9766 = vld [vmem:[%s7 + $0x3c] sm:$0xf]
  %v9783 = vunpack.c.l.b16 %v9751
  %v9784 = vunpack.c.l.b16 %v9752
  %v9785 = vunpack.c.l.b16 %v9753
  %v9786 = vunpack.c.l.b16 %v9754
  %v9787 = vunpack.c.l.b16 %v9755
  %v9788 = vunpack.c.l.b16 %v9756
  %v9789 = vunpack.c.l.b16 %v9757
  %v9790 = vunpack.c.l.b16 %v9758
  %v9791 = vunpack.c.l.b16 %v9759
  %v9792 = vunpack.c.l.b16 %v9760
  %v9793 = vunpack.c.l.b16 %v9761
  %v9794 = vunpack.c.l.b16 %v9762
  %v9795 = vunpack.c.l.b16 %v9763
  %v9796 = vunpack.c.l.b16 %v9764
  %v9797 = vunpack.c.l.b16 %v9765
  %v9798 = vunpack.c.l.b16 %v9766
  %v9799 = vpack.c.b16 %v9784, %v9783
  %v9800 = vpack.c.b16 %v9786, %v9785
  %v9801 = vpack.c.b16 %v9788, %v9787
  %v9802 = vpack.c.b16 %v9790, %v9789
  %v9803 = vpack.c.b16 %v9792, %v9791
  %v9804 = vpack.c.b16 %v9794, %v9793
  %v9805 = vpack.c.b16 %v9796, %v9795
  %v9806 = vpack.c.b16 %v9798, %v9797
  %9815 = vmatprep.subr.bf16.mxu0 0
  %9816 = vmatpush1.bf16.msra.mxu0 %v9799
  %9817 = vmatprep.subr.bf16.mxu0 0
  %9818 = vmatpush1.bf16.msra.mxu0 %v9800
  %9819 = vmatprep.subr.bf16.mxu0 0
  %9820 = vmatpush1.bf16.msra.mxu0 %v9801
  %9821 = vmatprep.subr.bf16.mxu0 0
  %9822 = vmatpush1.bf16.msra.mxu0 %v9802
  %9823 = vmatprep.subr.bf16.mxu0 0
  %9824 = vmatpush1.bf16.msra.mxu0 %v9803
  %9825 = vmatprep.subr.bf16.mxu0 0
  %9826 = vmatpush1.bf16.msra.mxu0 %v9804
  %9827 = vmatprep.subr.bf16.mxu0 0
  %9828 = vmatpush1.bf16.msra.mxu0 %v9805
  %9829 = vmatprep.subr.bf16.mxu0 0
  %9830 = vmatpush1.bf16.msra.mxu0 %v9806
  %9831 = vmatprep.subr.bf16.mxu0 0
  %9832 = vmatpush1.bf16.msra.mxu0 0
  %9833 = vmatprep.subr.bf16.mxu0 0
  %9834 = vmatpush1.bf16.msra.mxu0 0
  %9835 = vmatprep.subr.bf16.mxu0 0
  %9836 = vmatpush1.bf16.msra.mxu0 0
  %9837 = vmatprep.subr.bf16.mxu0 0
  %9838 = vmatpush1.bf16.msra.mxu0 0
  %9839 = vmatprep.subr.bf16.mxu0 0
  %9840 = vmatpush1.bf16.msra.mxu0 0
  %9841 = vmatprep.subr.bf16.mxu0 0
  %9842 = vmatpush1.bf16.msra.mxu0 0
  %9843 = vmatprep.subr.bf16.mxu0 0
  %9844 = vmatpush1.bf16.msra.mxu0 0
  %9845 = vmatprep.subr.bf16.mxu0 0
  %9846 = vmatpush1.bf16.msra.mxu0 0
  %9847 = vmatprep.mubr.bf16.mxu0 0
  %9848 = vmatmul.mubr.bf16.gmra.mrb[0].mxu0 %v9740
  %v9849 = vpop.f32.mrb[0].mxu0
  %v9850 = vadd.f32 0.0, %v9849
  %v9851 = vpop.f32.mrb[0].mxu0
  %v9852 = vpop.f32.mrb[0].mxu0
  %v9853 = vadd.f32 0.0, %v9852
  %v9854 = vpop.f32.mrb[0].mxu0
  %9855 = vmatprep.mubr.bf16.mxu0 0
  %9856 = vmatmul.mubr.bf16.gmra.mrb[0].mxu0 %v9741
  %v9857 = vpop.f32.mrb[0].mxu0
  %v9858 = vadd.f32 0.0, %v9857
  %v9859 = vpop.f32.mrb[0].mxu0
  %v9860 = vpop.f32.mrb[0].mxu0
  %v9861 = vadd.f32 0.0, %v9860
  %v9862 = vpop.f32.mrb[0].mxu0
  %9863 = vmatprep.mubr.bf16.mxu0 0
  %9864 = vmatmul.mubr.bf16.gmra.mrb[0].mxu0 %v9742
  %v9865 = vpop.f32.mrb[0].mxu0
  %v9866 = vadd.f32 0.0, %v9865
  %v9867 = vpop.f32.mrb[0].mxu0
  %v9868 = vpop.f32.mrb[0].mxu0
  %v9869 = vadd.f32 0.0, %v9868
  %v9870 = vpop.f32.mrb[0].mxu0
  %9871 = vmatprep.mubr.bf16.mxu0 0
  %9872 = vmatmul.mubr.bf16.gmra.mrb[0].mxu0 %v9743
  %v9873 = vpop.f32.mrb[0].mxu0
  %v9874 = vadd.f32 0.0, %v9873
  %v9875 = vpop.f32.mrb[0].mxu0
  %v9876 = vpop.f32.mrb[0].mxu0
  %v9877 = vadd.f32 0.0, %v9876
  %v9878 = vpop.f32.mrb[0].mxu0
  %9879 = vmatprep.mubr.bf16.mxu0 0
  %9880 = vmatmul.mubr.bf16.gmra.mrb[0].mxu0 %v9744
  %v9881 = vpop.f32.mrb[0].mxu0
  %v9882 = vadd.f32 0.0, %v9881
  %v9883 = vpop.f32.mrb[0].mxu0
  %v9884 = vpop.f32.mrb[0].mxu0
  %v9885 = vadd.f32 0.0, %v9884
  %v9886 = vpop.f32.mrb[0].mxu0
  %9887 = vmatprep.mubr.bf16.mxu0 0
  %9888 = vmatmul.mubr.bf16.gmra.mrb[0].mxu0 %v9745
  %v9889 = vpop.f32.mrb[0].mxu0
  %v9890 = vadd.f32 0.0, %v9889
  %v9891 = vpop.f32.mrb[0].mxu0
  %v9892 = vpop.f32.mrb[0].mxu0
  %v9893 = vadd.f32 0.0, %v9892
  %v9894 = vpop.f32.mrb[0].mxu0
  %9895 = vmatprep.mubr.bf16.mxu0 0
  %9896 = vmatmul.mubr.bf16.gmra.mrb[0].mxu0 %v9746
  %v9897 = vpop.f32.mrb[0].mxu0
  %v9898 = vadd.f32 0.0, %v9897
  %v9899 = vpop.f32.mrb[0].mxu0
  %v9900 = vpop.f32.mrb[0].mxu0
  %v9901 = vadd.f32 0.0, %v9900
  %v9902 = vpop.f32.mrb[0].mxu0
  %9903 = vmatprep.mubr.bf16.mxu0 0
  %9904 = vmatmul.mubr.bf16.gmra.mrb[0].mxu0 %v9747
  %v9905 = vpop.f32.mrb[0].mxu0
  %v9906 = vadd.f32 0.0, %v9905
  %v9907 = vpop.f32.mrb[0].mxu0
  %v9908 = vpop.f32.mrb[0].mxu0
  %v9909 = vadd.f32 0.0, %v9908
  %v9910 = vpop.f32.mrb[0].mxu0
  %9911 = vmatprep.mubr.bf16.mxu0 0
  %9912 = vmatmul.mubr.bf16.gmra.mrb[0].mxu0 %v9748
  %v9913 = vpop.f32.mrb[0].mxu0
  %v9914 = vadd.f32 0.0, %v9913
  %v9915 = vpop.f32.mrb[0].mxu0
  %v9916 = vpop.f32.mrb[0].mxu0
  %v9917 = vadd.f32 0.0, %v9916
  %v9918 = vpop.f32.mrb[0].mxu0
  %9919 = vmatprep.mubr.bf16.mxu0 0
  %9920 = vmatmul.mubr.bf16.gmra.mrb[0].mxu0 %v9749
  %v9921 = vpop.f32.mrb[0].mxu0
  %v9922 = vadd.f32 0.0, %v9921
  %v9923 = vpop.f32.mrb[0].mxu0
  %v9924 = vpop.f32.mrb[0].mxu0
  %v9925 = vadd.f32 0.0, %v9924
  %v9926 = vpop.f32.mrb[0].mxu0
  %9927 = vmatprep.mubr.bf16.mxu0 0
  %9928 = vmatmul.mubr.bf16.gmra.mrb[0].mxu0 %v9750
  %v9929 = vpop.f32.mrb[0].mxu0
  %v9930 = vadd.f32 0.0, %v9929
  %v9931 = vpop.f32.mrb[0].mxu0
  %v9932 = vpop.f32.mrb[0].mxu0
  %v9933 = vpop.f32.mrb[0].mxu0
  %9934 = vdwg.mxu0
  %v9935 = vld [vmem:[%s10] sm:$0x1]
  %v9936 = vld [vmem:[%s11] sm:$0x1]
  %v9937 = vadd.f32 %v9850, %v9853
  %v9938 = vadd.f32 %v9937, %v9858
  %v9939 = vadd.f32 %v9938, %v9861
  %v9940 = vadd.f32 %v9939, %v9866
  %v9941 = vadd.f32 %v9940, %v9869
  %v9942 = vadd.f32 %v9941, %v9874
  %v9943 = vadd.f32 %v9942, %v9877
  %v9944 = vadd.f32 %v9943, %v9882
  %v9945 = vadd.f32 %v9944, %v9885
  %v9946 = vadd.f32 %v9945, %v9890
  %v9947 = vadd.f32 %v9946, %v9893
  %v9948 = vadd.f32 %v9947, %v9898
  %v9949 = vadd.f32 %v9948, %v9901
  %v9950 = vadd.f32 %v9949, %v9906
  %v9951 = vadd.f32 %v9950, %v9909
  %v9952 = vadd.f32 %v9951, %v9914
  %v9953 = vadd.f32 %v9952, %v9917
  %v9954 = vadd.f32 %v9953, %v9922
  %v9955 = vadd.f32 %v9954, %v9925
  %v9956 = vadd.f32 %v9955, %v9930
  %v9957 = vrot.slane %v9956, 4
  %v9958 = vadd.f32 %v9956, %v9957
  %v9959 = vrot.slane %v9958, 2
  %v9960 = vadd.f32 %v9958, %v9959
  %v9961 = vrot.slane %v9960, 1
  %v9962 = vadd.f32 %v9960, %v9961
  %v9963 = vmul.f32 %v9962, 0.0061728396
  %v9964 = vsub.f32 %v9850, %v9963
  %v9965 = vsub.f32 %v9853, %v9963
  %v9966 = vsub.f32 %v9858, %v9963
  %v9967 = vsub.f32 %v9861, %v9963
  %v9968 = vsub.f32 %v9866, %v9963
  %v9969 = vsub.f32 %v9869, %v9963
  %v9970 = vsub.f32 %v9874, %v9963
  %v9971 = vsub.f32 %v9877, %v9963
  %v9972 = vsub.f32 %v9882, %v9963
  %v9973 = vsub.f32 %v9885, %v9963
  %v9974 = vsub.f32 %v9890, %v9963
  %v9975 = vsub.f32 %v9893, %v9963
  %v9976 = vsub.f32 %v9898, %v9963
  %v9977 = vsub.f32 %v9901, %v9963
  %v9978 = vsub.f32 %v9906, %v9963
  %v9979 = vsub.f32 %v9909, %v9963
  %v9980 = vsub.f32 %v9914, %v9963
  %v9981 = vsub.f32 %v9917, %v9963
  %v9982 = vsub.f32 %v9922, %v9963
  %v9983 = vsub.f32 %v9925, %v9963
  %v9984 = vsub.f32 %v9930, %v9963
  %v9985 = vmul.f32 %v9964, %v427
  %v9986 = vmul.f32 %v9965, %v432
  %v9987 = vmul.f32 %v9966, %v437
  %v9988 = vmul.f32 %v9967, %v442
  %v9989 = vmul.f32 %v9968, %v447
  %v9990 = vmul.f32 %v9969, %v452
  %v9991 = vmul.f32 %v9970, %v457
  %v9992 = vmul.f32 %v9971, %v462
  %v9993 = vmul.f32 %v9972, %v467
  %v9994 = vmul.f32 %v9973, %v472
  %v9995 = vmul.f32 %v9974, %v477
  %v9996 = vmul.f32 %v9975, %v482
  %v9997 = vmul.f32 %v9976, %v487
  %v9998 = vmul.f32 %v9977, %v492
  %v9999 = vmul.f32 %v9978, %v497
  %v10000 = vmul.f32 %v9979, %v502
  %v10001 = vmul.f32 %v9980, %v507
  %v10002 = vmul.f32 %v9981, %v512
  %v10003 = vmul.f32 %v9982, %v517
  %v10004 = vmul.f32 %v9983, %v522
  %v10005 = vmul.f32 %v9984, %v527
  %v10006 = vmul.f32 %v9985, %v9985
  %v10007 = vmul.f32 %v9986, %v9986
  %v10008 = vmul.f32 %v9987, %v9987
  %v10009 = vmul.f32 %v9988, %v9988
  %v10010 = vmul.f32 %v9989, %v9989
  %v10011 = vmul.f32 %v9990, %v9990
  %v10012 = vmul.f32 %v9991, %v9991
  %v10013 = vmul.f32 %v9992, %v9992
  %v10014 = vmul.f32 %v9993, %v9993
  %v10015 = vmul.f32 %v9994, %v9994
  %v10016 = vmul.f32 %v9995, %v9995
  %v10017 = vmul.f32 %v9996, %v9996
  %v10018 = vmul.f32 %v9997, %v9997
  %v10019 = vmul.f32 %v9998, %v9998
  %v10020 = vmul.f32 %v9999, %v9999
  %v10021 = vmul.f32 %v10000, %v10000
  %v10022 = vmul.f32 %v10001, %v10001
  %v10023 = vmul.f32 %v10002, %v10002
  %v10024 = vmul.f32 %v10003, %v10003
  %v10025 = vmul.f32 %v10004, %v10004
  %v10026 = vmul.f32 %v10005, %v10005
  %v10027 = vadd.f32 %v10006, %v10007
  %v10028 = vadd.f32 %v10027, %v10008
  %v10029 = vadd.f32 %v10028, %v10009
  %v10030 = vadd.f32 %v10029, %v10010
  %v10031 = vadd.f32 %v10030, %v10011
  %v10032 = vadd.f32 %v10031, %v10012
  %v10033 = vadd.f32 %v10032, %v10013
  %v10034 = vadd.f32 %v10033, %v10014
  %v10035 = vadd.f32 %v10034, %v10015
  %v10036 = vadd.f32 %v10035, %v10016
  %v10037 = vadd.f32 %v10036, %v10017
  %v10038 = vadd.f32 %v10037, %v10018
  %v10039 = vadd.f32 %v10038, %v10019
  %v10040 = vadd.f32 %v10039, %v10020
  %v10041 = vadd.f32 %v10040, %v10021
  %v10042 = vadd.f32 %v10041, %v10022
  %v10043 = vadd.f32 %v10042, %v10023
  %v10044 = vadd.f32 %v10043, %v10024
  %v10045 = vadd.f32 %v10044, %v10025
  %v10046 = vadd.f32 %v10045, %v10026
  %v10047 = vrot.slane %v10046, 4
  %v10048 = vadd.f32 %v10046, %v10047
  %v10049 = vrot.slane %v10048, 2
  %v10050 = vadd.f32 %v10048, %v10049
  %v10051 = vrot.slane %v10050, 1
  %v10052 = vadd.f32 %v10050, %v10051
  %v10053 = vmul.f32 %v10052, 0.0061728396
  %v10054 = vadd.f32 %v10053, 1e-05
  %v10055 = vrsqrt.pop %v10054
  %v10056 = vmul.f32 %v9964, %v10055
  %v10057 = vmul.f32 %v9965, %v10055
  %v10058 = vmul.f32 %v9966, %v10055
  %v10059 = vmul.f32 %v9967, %v10055
  %v10060 = vmul.f32 %v9968, %v10055
  %v10061 = vmul.f32 %v9969, %v10055
  %v10062 = vmul.f32 %v9970, %v10055
  %v10063 = vmul.f32 %v9971, %v10055
  %v10064 = vmul.f32 %v9972, %v10055
  %v10065 = vmul.f32 %v9973, %v10055
  %v10066 = vmul.f32 %v9974, %v10055
  %v10067 = vmul.f32 %v9975, %v10055
  %v10068 = vmul.f32 %v9976, %v10055
  %v10069 = vmul.f32 %v9977, %v10055
  %v10070 = vmul.f32 %v9978, %v10055
  %v10071 = vmul.f32 %v9979, %v10055
  %v10072 = vmul.f32 %v9980, %v10055
  %v10073 = vmul.f32 %v9981, %v10055
  %v10074 = vmul.f32 %v9982, %v10055
  %v10075 = vmul.f32 %v9983, %v10055
  %v10076 = vmul.f32 %v9984, %v10055
  %v10078 = vlaneseq
  %v10079 = vshrl.u32 %v10078, 7
  %v10080 = vsub.s32 0, %v10079
  %v10081 = vrot.slane %v9935, %v10080
  %v10083 = vmul.f32 %v10056, %v10081
  %v10084 = vmul.f32 %v10057, %v10081
  %v10085 = vmul.f32 %v10058, %v10081
  %v10086 = vmul.f32 %v10059, %v10081
  %v10087 = vmul.f32 %v10060, %v10081
  %v10088 = vmul.f32 %v10061, %v10081
  %v10089 = vmul.f32 %v10062, %v10081
  %v10090 = vmul.f32 %v10063, %v10081
  %v10091 = vmul.f32 %v10064, %v10081
  %v10092 = vmul.f32 %v10065, %v10081
  %v10093 = vmul.f32 %v10066, %v10081
  %v10094 = vmul.f32 %v10067, %v10081
  %v10095 = vmul.f32 %v10068, %v10081
  %v10096 = vmul.f32 %v10069, %v10081
  %v10097 = vmul.f32 %v10070, %v10081
  %v10098 = vmul.f32 %v10071, %v10081
  %v10099 = vmul.f32 %v10072, %v10081
  %v10100 = vmul.f32 %v10073, %v10081
  %v10101 = vmul.f32 %v10074, %v10081
  %v10102 = vmul.f32 %v10075, %v10081
  %v10103 = vmul.f32 %v10076, %v10081
  %v10105 = vlaneseq
  %v10106 = vshrl.u32 %v10105, 7
  %v10107 = vsub.s32 0, %v10106
  %v10108 = vrot.slane %v9936, %v10107
  %v10110 = vadd.f32 %v10083, %v10108
  %v10111 = vadd.f32 %v10084, %v10108
  %v10112 = vadd.f32 %v10085, %v10108
  %v10113 = vadd.f32 %v10086, %v10108
  %v10114 = vadd.f32 %v10087, %v10108
  %v10115 = vadd.f32 %v10088, %v10108
  %v10116 = vadd.f32 %v10089, %v10108
  %v10117 = vadd.f32 %v10090, %v10108
  %v10118 = vadd.f32 %v10091, %v10108
  %v10119 = vadd.f32 %v10092, %v10108
  %v10120 = vadd.f32 %v10093, %v10108
  %v10121 = vadd.f32 %v10094, %v10108
  %v10122 = vadd.f32 %v10095, %v10108
  %v10123 = vadd.f32 %v10096, %v10108
  %v10124 = vadd.f32 %v10097, %v10108
  %v10125 = vadd.f32 %v10098, %v10108
  %v10126 = vadd.f32 %v10099, %v10108
  %v10127 = vadd.f32 %v10100, %v10108
  %v10128 = vadd.f32 %v10101, %v10108
  %v10129 = vadd.f32 %v10102, %v10108
  %v10130 = vadd.f32 %v10103, %v10108
  %v10131 = vmax.f32 %v10110, 0.0
  %v10132 = vmax.f32 %v10111, 0.0
  %v10133 = vmax.f32 %v10112, 0.0
  %v10134 = vmax.f32 %v10113, 0.0
  %v10135 = vmax.f32 %v10114, 0.0
  %v10136 = vmax.f32 %v10115, 0.0
  %v10137 = vmax.f32 %v10116, 0.0
  %v10138 = vmax.f32 %v10117, 0.0
  %v10139 = vmax.f32 %v10118, 0.0
  %v10140 = vmax.f32 %v10119, 0.0
  %v10141 = vmax.f32 %v10120, 0.0
  %v10142 = vmax.f32 %v10121, 0.0
  %v10143 = vmax.f32 %v10122, 0.0
  %v10144 = vmax.f32 %v10123, 0.0
  %v10145 = vmax.f32 %v10124, 0.0
  %v10146 = vmax.f32 %v10125, 0.0
  %v10147 = vmax.f32 %v10126, 0.0
  %v10148 = vmax.f32 %v10127, 0.0
  %v10149 = vmax.f32 %v10128, 0.0
  %v10150 = vmax.f32 %v10129, 0.0
  %v10151 = vmax.f32 %v10130, 0.0
  %v10152 = vld [vmem:[%s8] sm:$0xf]
  %v10153 = vld [vmem:[%s8 + $0x4] sm:$0xf]
  %v10154 = vld [vmem:[%s8 + $0x8] sm:$0xf]
  %v10155 = vld [vmem:[%s8 + $0xc] sm:$0xf]
  %v10156 = vld [vmem:[%s8 + $0x10] sm:$0xf]
  %v10157 = vld [vmem:[%s8 + $0x14] sm:$0xf]
  %v10158 = vld [vmem:[%s8 + $0x18] sm:$0xf]
  %v10159 = vld [vmem:[%s8 + $0x1c] sm:$0xf]
  %v10160 = vld [vmem:[%s8 + $0x20] sm:$0xf]
  %v10161 = vld [vmem:[%s8 + $0x24] sm:$0xf]
  %v10162 = vld [vmem:[%s8 + $0x28] sm:$0xf]
  %v10163 = vld [vmem:[%s8 + $0x2c] sm:$0xf]
  %v10164 = vld [vmem:[%s8 + $0x30] sm:$0xf]
  %v10165 = vld [vmem:[%s8 + $0x34] sm:$0xf]
  %v10166 = vld [vmem:[%s8 + $0x38] sm:$0xf]
  %v10167 = vld [vmem:[%s8 + $0x3c] sm:$0xf]
  %v10184 = vunpack.c.l.b16 %v10152
  %v10185 = vunpack.c.l.b16 %v10153
  %v10186 = vunpack.c.l.b16 %v10154
  %v10187 = vunpack.c.l.b16 %v10155
  %v10188 = vunpack.c.l.b16 %v10156
  %v10189 = vunpack.c.l.b16 %v10157
  %v10190 = vunpack.c.l.b16 %v10158
  %v10191 = vunpack.c.l.b16 %v10159
  %v10192 = vunpack.c.l.b16 %v10160
  %v10193 = vunpack.c.l.b16 %v10161
  %v10194 = vunpack.c.l.b16 %v10162
  %v10195 = vunpack.c.l.b16 %v10163
  %v10196 = vunpack.c.l.b16 %v10164
  %v10197 = vunpack.c.l.b16 %v10165
  %v10198 = vunpack.c.l.b16 %v10166
  %v10199 = vunpack.c.l.b16 %v10167
  %v10200 = vpack.c.b16 %v10185, %v10184
  %v10201 = vpack.c.b16 %v10187, %v10186
  %v10202 = vpack.c.b16 %v10189, %v10188
  %v10203 = vpack.c.b16 %v10191, %v10190
  %v10204 = vpack.c.b16 %v10193, %v10192
  %v10205 = vpack.c.b16 %v10195, %v10194
  %v10206 = vpack.c.b16 %v10197, %v10196
  %v10207 = vpack.c.b16 %v10199, %v10198
  %10216 = vmatprep.subr.bf16.mxu0 0
  %10217 = vmatpush1.bf16.msra.mxu0 %v10200
  %10218 = vmatprep.subr.bf16.mxu0 0
  %10219 = vmatpush1.bf16.msra.mxu0 %v10201
  %10220 = vmatprep.subr.bf16.mxu0 0
  %10221 = vmatpush1.bf16.msra.mxu0 %v10202
  %10222 = vmatprep.subr.bf16.mxu0 0
  %10223 = vmatpush1.bf16.msra.mxu0 %v10203
  %10224 = vmatprep.subr.bf16.mxu0 0
  %10225 = vmatpush1.bf16.msra.mxu0 %v10204
  %10226 = vmatprep.subr.bf16.mxu0 0
  %10227 = vmatpush1.bf16.msra.mxu0 %v10205
  %10228 = vmatprep.subr.bf16.mxu0 0
  %10229 = vmatpush1.bf16.msra.mxu0 %v10206
  %10230 = vmatprep.subr.bf16.mxu0 0
  %10231 = vmatpush1.bf16.msra.mxu0 %v10207
  %10232 = vmatprep.subr.bf16.mxu0 0
  %10233 = vmatpush1.bf16.msra.mxu0 0
  %10234 = vmatprep.subr.bf16.mxu0 0
  %10235 = vmatpush1.bf16.msra.mxu0 0
  %10236 = vmatprep.subr.bf16.mxu0 0
  %10237 = vmatpush1.bf16.msra.mxu0 0
  %10238 = vmatprep.subr.bf16.mxu0 0
  %10239 = vmatpush1.bf16.msra.mxu0 0
  %10240 = vmatprep.subr.bf16.mxu0 0
  %10241 = vmatpush1.bf16.msra.mxu0 0
  %10242 = vmatprep.subr.bf16.mxu0 0
  %10243 = vmatpush1.bf16.msra.mxu0 0
  %10244 = vmatprep.subr.bf16.mxu0 0
  %10245 = vmatpush1.bf16.msra.mxu0 0
  %10246 = vmatprep.subr.bf16.mxu0 0
  %10247 = vmatpush1.bf16.msra.mxu0 0
  %10248 = vmatprep.mubr.bf16.mxu0 0
  %10249 = vmatmul.mubr.bf16.gmra.mrb[0].mxu0 %v9740
  %v10250 = vpop.f32.mrb[0].mxu0
  %v10251 = vadd.f32 0.0, %v10250
  %v10252 = vpop.f32.mrb[0].mxu0
  %v10253 = vpop.f32.mrb[0].mxu0
  %v10254 = vadd.f32 0.0, %v10253
  %v10255 = vpop.f32.mrb[0].mxu0
  %10256 = vmatprep.mubr.bf16.mxu0 0
  %10257 = vmatmul.mubr.bf16.gmra.mrb[0].mxu0 %v9741
  %v10258 = vpop.f32.mrb[0].mxu0
  %v10259 = vadd.f32 0.0, %v10258
  %v10260 = vpop.f32.mrb[0].mxu0
  %v10261 = vpop.f32.mrb[0].mxu0
  %v10262 = vadd.f32 0.0, %v10261
  %v10263 = vpop.f32.mrb[0].mxu0
  %10264 = vmatprep.mubr.bf16.mxu0 0
  %10265 = vmatmul.mubr.bf16.gmra.mrb[0].mxu0 %v9742
  %v10266 = vpop.f32.mrb[0].mxu0
  %v10267 = vadd.f32 0.0, %v10266
  %v10268 = vpop.f32.mrb[0].mxu0
  %v10269 = vpop.f32.mrb[0].mxu0
  %v10270 = vadd.f32 0.0, %v10269
  %v10271 = vpop.f32.mrb[0].mxu0
  %10272 = vmatprep.mubr.bf16.mxu0 0
  %10273 = vmatmul.mubr.bf16.gmra.mrb[0].mxu0 %v9743
  %v10274 = vpop.f32.mrb[0].mxu0
  %v10275 = vadd.f32 0.0, %v10274
  %v10276 = vpop.f32.mrb[0].mxu0
  %v10277 = vpop.f32.mrb[0].mxu0
  %v10278 = vadd.f32 0.0, %v10277
  %v10279 = vpop.f32.mrb[0].mxu0
  %10280 = vmatprep.mubr.bf16.mxu0 0
  %10281 = vmatmul.mubr.bf16.gmra.mrb[0].mxu0 %v9744
  %v10282 = vpop.f32.mrb[0].mxu0
  %v10283 = vadd.f32 0.0, %v10282
  %v10284 = vpop.f32.mrb[0].mxu0
  %v10285 = vpop.f32.mrb[0].mxu0
  %v10286 = vadd.f32 0.0, %v10285
  %v10287 = vpop.f32.mrb[0].mxu0
  %10288 = vmatprep.mubr.bf16.mxu0 0
  %10289 = vmatmul.mubr.bf16.gmra.mrb[0].mxu0 %v9745
  %v10290 = vpop.f32.mrb[0].mxu0
  %v10291 = vadd.f32 0.0, %v10290
  %v10292 = vpop.f32.mrb[0].mxu0
  %v10293 = vpop.f32.mrb[0].mxu0
  %v10294 = vadd.f32 0.0, %v10293
  %v10295 = vpop.f32.mrb[0].mxu0
  %10296 = vmatprep.mubr.bf16.mxu0 0
  %10297 = vmatmul.mubr.bf16.gmra.mrb[0].mxu0 %v9746
  %v10298 = vpop.f32.mrb[0].mxu0
  %v10299 = vadd.f32 0.0, %v10298
  %v10300 = vpop.f32.mrb[0].mxu0
  %v10301 = vpop.f32.mrb[0].mxu0
  %v10302 = vadd.f32 0.0, %v10301
  %v10303 = vpop.f32.mrb[0].mxu0
  %10304 = vmatprep.mubr.bf16.mxu0 0
  %10305 = vmatmul.mubr.bf16.gmra.mrb[0].mxu0 %v9747
  %v10306 = vpop.f32.mrb[0].mxu0
  %v10307 = vadd.f32 0.0, %v10306
  %v10308 = vpop.f32.mrb[0].mxu0
  %v10309 = vpop.f32.mrb[0].mxu0
  %v10310 = vadd.f32 0.0, %v10309
  %v10311 = vpop.f32.mrb[0].mxu0
  %10312 = vmatprep.mubr.bf16.mxu0 0
  %10313 = vmatmul.mubr.bf16.gmra.mrb[0].mxu0 %v9748
  %v10314 = vpop.f32.mrb[0].mxu0
  %v10315 = vadd.f32 0.0, %v10314
  %v10316 = vpop.f32.mrb[0].mxu0
  %v10317 = vpop.f32.mrb[0].mxu0
  %v10318 = vadd.f32 0.0, %v10317
  %v10319 = vpop.f32.mrb[0].mxu0
  %10320 = vmatprep.mubr.bf16.mxu0 0
  %10321 = vmatmul.mubr.bf16.gmra.mrb[0].mxu0 %v9749
  %v10322 = vpop.f32.mrb[0].mxu0
  %v10323 = vadd.f32 0.0, %v10322
  %v10324 = vpop.f32.mrb[0].mxu0
  %v10325 = vpop.f32.mrb[0].mxu0
  %v10326 = vadd.f32 0.0, %v10325
  %v10327 = vpop.f32.mrb[0].mxu0
  %10328 = vmatprep.mubr.bf16.mxu0 0
  %10329 = vmatmul.mubr.bf16.gmra.mrb[0].mxu0 %v9750
  %v10330 = vpop.f32.mrb[0].mxu0
  %v10331 = vadd.f32 0.0, %v10330
  %v10332 = vpop.f32.mrb[0].mxu0
  %v10333 = vpop.f32.mrb[0].mxu0
  %v10334 = vpop.f32.mrb[0].mxu0
  %10335 = vdwg.mxu0
  %v10336 = vld [vmem:[%s12] sm:$0x1]
  %v10337 = vld [vmem:[%s13] sm:$0x1]
  %v10338 = vadd.f32 %v10251, %v10254
  %v10339 = vadd.f32 %v10338, %v10259
  %v10340 = vadd.f32 %v10339, %v10262
  %v10341 = vadd.f32 %v10340, %v10267
  %v10342 = vadd.f32 %v10341, %v10270
  %v10343 = vadd.f32 %v10342, %v10275
  %v10344 = vadd.f32 %v10343, %v10278
  %v10345 = vadd.f32 %v10344, %v10283
  %v10346 = vadd.f32 %v10345, %v10286
  %v10347 = vadd.f32 %v10346, %v10291
  %v10348 = vadd.f32 %v10347, %v10294
  %v10349 = vadd.f32 %v10348, %v10299
  %v10350 = vadd.f32 %v10349, %v10302
  %v10351 = vadd.f32 %v10350, %v10307
  %v10352 = vadd.f32 %v10351, %v10310
  %v10353 = vadd.f32 %v10352, %v10315
  %v10354 = vadd.f32 %v10353, %v10318
  %v10355 = vadd.f32 %v10354, %v10323
  %v10356 = vadd.f32 %v10355, %v10326
  %v10357 = vadd.f32 %v10356, %v10331
  %v10358 = vrot.slane %v10357, 4
  %v10359 = vadd.f32 %v10357, %v10358
  %v10360 = vrot.slane %v10359, 2
  %v10361 = vadd.f32 %v10359, %v10360
  %v10362 = vrot.slane %v10361, 1
  %v10363 = vadd.f32 %v10361, %v10362
  %v10364 = vmul.f32 %v10363, 0.0061728396
  %v10365 = vsub.f32 %v10251, %v10364
  %v10366 = vsub.f32 %v10254, %v10364
  %v10367 = vsub.f32 %v10259, %v10364
  %v10368 = vsub.f32 %v10262, %v10364
  %v10369 = vsub.f32 %v10267, %v10364
  %v10370 = vsub.f32 %v10270, %v10364
  %v10371 = vsub.f32 %v10275, %v10364
  %v10372 = vsub.f32 %v10278, %v10364
  %v10373 = vsub.f32 %v10283, %v10364
  %v10374 = vsub.f32 %v10286, %v10364
  %v10375 = vsub.f32 %v10291, %v10364
  %v10376 = vsub.f32 %v10294, %v10364
  %v10377 = vsub.f32 %v10299, %v10364
  %v10378 = vsub.f32 %v10302, %v10364
  %v10379 = vsub.f32 %v10307, %v10364
  %v10380 = vsub.f32 %v10310, %v10364
  %v10381 = vsub.f32 %v10315, %v10364
  %v10382 = vsub.f32 %v10318, %v10364
  %v10383 = vsub.f32 %v10323, %v10364
  %v10384 = vsub.f32 %v10326, %v10364
  %v10385 = vsub.f32 %v10331, %v10364
  %v10386 = vmul.f32 %v10365, %v427
  %v10387 = vmul.f32 %v10366, %v432
  %v10388 = vmul.f32 %v10367, %v437
  %v10389 = vmul.f32 %v10368, %v442
  %v10390 = vmul.f32 %v10369, %v447
  %v10391 = vmul.f32 %v10370, %v452
  %v10392 = vmul.f32 %v10371, %v457
  %v10393 = vmul.f32 %v10372, %v462
  %v10394 = vmul.f32 %v10373, %v467
  %v10395 = vmul.f32 %v10374, %v472
  %v10396 = vmul.f32 %v10375, %v477
  %v10397 = vmul.f32 %v10376, %v482
  %v10398 = vmul.f32 %v10377, %v487
  %v10399 = vmul.f32 %v10378, %v492
  %v10400 = vmul.f32 %v10379, %v497
  %v10401 = vmul.f32 %v10380, %v502
  %v10402 = vmul.f32 %v10381, %v507
  %v10403 = vmul.f32 %v10382, %v512
  %v10404 = vmul.f32 %v10383, %v517
  %v10405 = vmul.f32 %v10384, %v522
  %v10406 = vmul.f32 %v10385, %v527
  %v10407 = vmul.f32 %v10386, %v10386
  %v10408 = vmul.f32 %v10387, %v10387
  %v10409 = vmul.f32 %v10388, %v10388
  %v10410 = vmul.f32 %v10389, %v10389
  %v10411 = vmul.f32 %v10390, %v10390
  %v10412 = vmul.f32 %v10391, %v10391
  %v10413 = vmul.f32 %v10392, %v10392
  %v10414 = vmul.f32 %v10393, %v10393
  %v10415 = vmul.f32 %v10394, %v10394
  %v10416 = vmul.f32 %v10395, %v10395
  %v10417 = vmul.f32 %v10396, %v10396
  %v10418 = vmul.f32 %v10397, %v10397
  %v10419 = vmul.f32 %v10398, %v10398
  %v10420 = vmul.f32 %v10399, %v10399
  %v10421 = vmul.f32 %v10400, %v10400
  %v10422 = vmul.f32 %v10401, %v10401
  %v10423 = vmul.f32 %v10402, %v10402
  %v10424 = vmul.f32 %v10403, %v10403
  %v10425 = vmul.f32 %v10404, %v10404
  %v10426 = vmul.f32 %v10405, %v10405
  %v10427 = vmul.f32 %v10406, %v10406
  %v10428 = vadd.f32 %v10407, %v10408
  %v10429 = vadd.f32 %v10428, %v10409
  %v10430 = vadd.f32 %v10429, %v10410
  %v10431 = vadd.f32 %v10430, %v10411
  %v10432 = vadd.f32 %v10431, %v10412
  %v10433 = vadd.f32 %v10432, %v10413
  %v10434 = vadd.f32 %v10433, %v10414
  %v10435 = vadd.f32 %v10434, %v10415
  %v10436 = vadd.f32 %v10435, %v10416
  %v10437 = vadd.f32 %v10436, %v10417
  %v10438 = vadd.f32 %v10437, %v10418
  %v10439 = vadd.f32 %v10438, %v10419
  %v10440 = vadd.f32 %v10439, %v10420
  %v10441 = vadd.f32 %v10440, %v10421
  %v10442 = vadd.f32 %v10441, %v10422
  %v10443 = vadd.f32 %v10442, %v10423
  %v10444 = vadd.f32 %v10443, %v10424
  %v10445 = vadd.f32 %v10444, %v10425
  %v10446 = vadd.f32 %v10445, %v10426
  %v10447 = vadd.f32 %v10446, %v10427
  %v10448 = vrot.slane %v10447, 4
  %v10449 = vadd.f32 %v10447, %v10448
  %v10450 = vrot.slane %v10449, 2
  %v10451 = vadd.f32 %v10449, %v10450
  %v10452 = vrot.slane %v10451, 1
  %v10453 = vadd.f32 %v10451, %v10452
  %v10454 = vmul.f32 %v10453, 0.0061728396
  %v10455 = vadd.f32 %v10454, 1e-05
  %v10456 = vrsqrt.pop %v10455
  %v10457 = vmul.f32 %v10365, %v10456
  %v10458 = vmul.f32 %v10366, %v10456
  %v10459 = vmul.f32 %v10367, %v10456
  %v10460 = vmul.f32 %v10368, %v10456
  %v10461 = vmul.f32 %v10369, %v10456
  %v10462 = vmul.f32 %v10370, %v10456
  %v10463 = vmul.f32 %v10371, %v10456
  %v10464 = vmul.f32 %v10372, %v10456
  %v10465 = vmul.f32 %v10373, %v10456
  %v10466 = vmul.f32 %v10374, %v10456
  %v10467 = vmul.f32 %v10375, %v10456
  %v10468 = vmul.f32 %v10376, %v10456
  %v10469 = vmul.f32 %v10377, %v10456
  %v10470 = vmul.f32 %v10378, %v10456
  %v10471 = vmul.f32 %v10379, %v10456
  %v10472 = vmul.f32 %v10380, %v10456
  %v10473 = vmul.f32 %v10381, %v10456
  %v10474 = vmul.f32 %v10382, %v10456
  %v10475 = vmul.f32 %v10383, %v10456
  %v10476 = vmul.f32 %v10384, %v10456
  %v10477 = vmul.f32 %v10385, %v10456
  %v10479 = vlaneseq
  %v10480 = vshrl.u32 %v10479, 7
  %v10481 = vsub.s32 0, %v10480
  %v10482 = vrot.slane %v10336, %v10481
  %v10484 = vmul.f32 %v10457, %v10482
  %v10485 = vmul.f32 %v10458, %v10482
  %v10486 = vmul.f32 %v10459, %v10482
  %v10487 = vmul.f32 %v10460, %v10482
  %v10488 = vmul.f32 %v10461, %v10482
  %v10489 = vmul.f32 %v10462, %v10482
  %v10490 = vmul.f32 %v10463, %v10482
  %v10491 = vmul.f32 %v10464, %v10482
  %v10492 = vmul.f32 %v10465, %v10482
  %v10493 = vmul.f32 %v10466, %v10482
  %v10494 = vmul.f32 %v10467, %v10482
  %v10495 = vmul.f32 %v10468, %v10482
  %v10496 = vmul.f32 %v10469, %v10482
  %v10497 = vmul.f32 %v10470, %v10482
  %v10498 = vmul.f32 %v10471, %v10482
  %v10499 = vmul.f32 %v10472, %v10482
  %v10500 = vmul.f32 %v10473, %v10482
  %v10501 = vmul.f32 %v10474, %v10482
  %v10502 = vmul.f32 %v10475, %v10482
  %v10503 = vmul.f32 %v10476, %v10482
  %v10504 = vmul.f32 %v10477, %v10482
  %v10506 = vlaneseq
  %v10507 = vshrl.u32 %v10506, 7
  %v10508 = vsub.s32 0, %v10507
  %v10509 = vrot.slane %v10337, %v10508
  %v10511 = vadd.f32 %v10484, %v10509
  %v10512 = vadd.f32 %v10485, %v10509
  %v10513 = vadd.f32 %v10486, %v10509
  %v10514 = vadd.f32 %v10487, %v10509
  %v10515 = vadd.f32 %v10488, %v10509
  %v10516 = vadd.f32 %v10489, %v10509
  %v10517 = vadd.f32 %v10490, %v10509
  %v10518 = vadd.f32 %v10491, %v10509
  %v10519 = vadd.f32 %v10492, %v10509
  %v10520 = vadd.f32 %v10493, %v10509
  %v10521 = vadd.f32 %v10494, %v10509
  %v10522 = vadd.f32 %v10495, %v10509
  %v10523 = vadd.f32 %v10496, %v10509
  %v10524 = vadd.f32 %v10497, %v10509
  %v10525 = vadd.f32 %v10498, %v10509
  %v10526 = vadd.f32 %v10499, %v10509
  %v10527 = vadd.f32 %v10500, %v10509
  %v10528 = vadd.f32 %v10501, %v10509
  %v10529 = vadd.f32 %v10502, %v10509
  %v10530 = vadd.f32 %v10503, %v10509
  %v10531 = vadd.f32 %v10504, %v10509
  %v10532 = vmax.f32 %v10511, 0.0
  %v10533 = vmax.f32 %v10512, 0.0
  %v10534 = vmax.f32 %v10513, 0.0
  %v10535 = vmax.f32 %v10514, 0.0
  %v10536 = vmax.f32 %v10515, 0.0
  %v10537 = vmax.f32 %v10516, 0.0
  %v10538 = vmax.f32 %v10517, 0.0
  %v10539 = vmax.f32 %v10518, 0.0
  %v10540 = vmax.f32 %v10519, 0.0
  %v10541 = vmax.f32 %v10520, 0.0
  %v10542 = vmax.f32 %v10521, 0.0
  %v10543 = vmax.f32 %v10522, 0.0
  %v10544 = vmax.f32 %v10523, 0.0
  %v10545 = vmax.f32 %v10524, 0.0
  %v10546 = vmax.f32 %v10525, 0.0
  %v10547 = vmax.f32 %v10526, 0.0
  %v10548 = vmax.f32 %v10527, 0.0
  %v10549 = vmax.f32 %v10528, 0.0
  %v10550 = vmax.f32 %v10529, 0.0
  %v10551 = vmax.f32 %v10530, 0.0
  %v10552 = vmax.f32 %v10531, 0.0
  %v10553 = vld [vmem:[%s9] sm:$0xff]
  %v10554 = vld [vmem:[%s9 + $0x8] sm:$0xff]
  %v10555 = vld [vmem:[%s9 + $0x10] sm:$0xff]
  %v10556 = vld [vmem:[%s9 + $0x18] sm:$0xff]
  %v10557 = vld [vmem:[%s9 + $0x20] sm:$0xff]
  %v10558 = vld [vmem:[%s9 + $0x28] sm:$0xff]
  %v10559 = vld [vmem:[%s9 + $0x30] sm:$0xff]
  %v10560 = vld [vmem:[%s9 + $0x38] sm:$0xff]
  %v10561 = vld [vmem:[%s9 + $0x40] sm:$0xff]
  %v10562 = vld [vmem:[%s9 + $0x48] sm:$0xff]
  %v10563 = vld [vmem:[%s9 + $0x50] sm:$0xff]
  %v10564 = vld [vmem:[%s9 + $0x58] sm:$0xff]
  %v10565 = vld [vmem:[%s9 + $0x60] sm:$0xff]
  %v10566 = vld [vmem:[%s9 + $0x68] sm:$0xff]
  %v10567 = vld [vmem:[%s9 + $0x70] sm:$0xff]
  %v10568 = vld [vmem:[%s9 + $0x78] sm:$0xff]
  %v10585 = vunpack.c.l.b16 %v10553
  %v10586 = vunpack.c.h.b16 %v10553
  %v10587 = vunpack.c.l.b16 %v10554
  %v10588 = vunpack.c.h.b16 %v10554
  %v10589 = vunpack.c.l.b16 %v10555
  %v10590 = vunpack.c.h.b16 %v10555
  %v10591 = vunpack.c.l.b16 %v10556
  %v10592 = vunpack.c.h.b16 %v10556
  %v10593 = vunpack.c.l.b16 %v10557
  %v10594 = vunpack.c.h.b16 %v10557
  %v10595 = vunpack.c.l.b16 %v10558
  %v10596 = vunpack.c.h.b16 %v10558
  %v10597 = vunpack.c.l.b16 %v10559
  %v10598 = vunpack.c.h.b16 %v10559
  %v10599 = vunpack.c.l.b16 %v10560
  %v10600 = vunpack.c.h.b16 %v10560
  %v10601 = vunpack.c.l.b16 %v10561
  %v10602 = vunpack.c.h.b16 %v10561
  %v10603 = vunpack.c.l.b16 %v10562
  %v10604 = vunpack.c.h.b16 %v10562
  %v10605 = vunpack.c.l.b16 %v10563
  %v10606 = vunpack.c.h.b16 %v10563
  %v10607 = vunpack.c.l.b16 %v10564
  %v10608 = vunpack.c.h.b16 %v10564
  %v10609 = vunpack.c.l.b16 %v10565
  %v10610 = vunpack.c.h.b16 %v10565
  %v10611 = vunpack.c.l.b16 %v10566
  %v10612 = vunpack.c.h.b16 %v10566
  %v10613 = vunpack.c.l.b16 %v10567
  %v10614 = vunpack.c.h.b16 %v10567
  %v10615 = vunpack.c.l.b16 %v10568
  %v10616 = vunpack.c.h.b16 %v10568
  %v10617 = vpack.c.b16 %v10587, %v10585
  %v10618 = vpack.c.b16 %v10588, %v10586
  %v10619 = vpack.c.b16 %v10591, %v10589
  %v10620 = vpack.c.b16 %v10592, %v10590
  %v10621 = vpack.c.b16 %v10595, %v10593
  %v10622 = vpack.c.b16 %v10596, %v10594
  %v10623 = vpack.c.b16 %v10599, %v10597
  %v10624 = vpack.c.b16 %v10600, %v10598
  %v10625 = vpack.c.b16 %v10603, %v10601
  %v10626 = vpack.c.b16 %v10604, %v10602
  %v10627 = vpack.c.b16 %v10607, %v10605
  %v10628 = vpack.c.b16 %v10608, %v10606
  %v10629 = vpack.c.b16 %v10611, %v10609
  %v10630 = vpack.c.b16 %v10612, %v10610
  %v10631 = vpack.c.b16 %v10615, %v10613
  %v10632 = vpack.c.b16 %v10616, %v10614
  %10649 = vmatprep.subr.bf16.mxu0 %v10618
  %10650 = vmatpush1.bf16.msra.mxu0 %v10617
  %10651 = vmatprep.subr.bf16.mxu0 %v10620
  %10652 = vmatpush1.bf16.msra.mxu0 %v10619
  %10653 = vmatprep.subr.bf16.mxu0 %v10622
  %10654 = vmatpush1.bf16.msra.mxu0 %v10621
  %10655 = vmatprep.subr.bf16.mxu0 %v10624
  %10656 = vmatpush1.bf16.msra.mxu0 %v10623
  %10657 = vmatprep.subr.bf16.mxu0 %v10626
  %10658 = vmatpush1.bf16.msra.mxu0 %v10625
  %10659 = vmatprep.subr.bf16.mxu0 %v10628
  %10660 = vmatpush1.bf16.msra.mxu0 %v10627
  %10661 = vmatprep.subr.bf16.mxu0 %v10630
  %10662 = vmatpush1.bf16.msra.mxu0 %v10629
  %10663 = vmatprep.subr.bf16.mxu0 %v10632
  %10664 = vmatpush1.bf16.msra.mxu0 %v10631
  %10665 = vmatprep.subr.bf16.mxu0 0
  %10666 = vmatpush1.bf16.msra.mxu0 0
  %10667 = vmatprep.subr.bf16.mxu0 0
  %10668 = vmatpush1.bf16.msra.mxu0 0
  %10669 = vmatprep.subr.bf16.mxu0 0
  %10670 = vmatpush1.bf16.msra.mxu0 0
  %10671 = vmatprep.subr.bf16.mxu0 0
  %10672 = vmatpush1.bf16.msra.mxu0 0
  %10673 = vmatprep.subr.bf16.mxu0 0
  %10674 = vmatpush1.bf16.msra.mxu0 0
  %10675 = vmatprep.subr.bf16.mxu0 0
  %10676 = vmatpush1.bf16.msra.mxu0 0
  %10677 = vmatprep.subr.bf16.mxu0 0
  %10678 = vmatpush1.bf16.msra.mxu0 0
  %10679 = vmatprep.subr.bf16.mxu0 0
  %10680 = vmatpush1.bf16.msra.mxu0 0
  %10681 = vmatprep.mubr.bf16.mxu0 0
  %10682 = vmatmul.mubr.bf16.gmra.mrb[0].mxu0 %v9740
  %v10683 = vpop.f32.mrb[0].mxu0
  %v10684 = vadd.f32 0.0, %v10683
  %v10685 = vpop.f32.mrb[0].mxu0
  %v10686 = vadd.f32 0.0, %v10685
  %v10687 = vpop.f32.mrb[0].mxu0
  %v10688 = vadd.f32 0.0, %v10687
  %v10689 = vpop.f32.mrb[0].mxu0
  %v10690 = vadd.f32 0.0, %v10689
  %10691 = vmatprep.mubr.bf16.mxu0 0
  %10692 = vmatmul.mubr.bf16.gmra.mrb[0].mxu0 %v9741
  %v10693 = vpop.f32.mrb[0].mxu0
  %v10694 = vadd.f32 0.0, %v10693
  %v10695 = vpop.f32.mrb[0].mxu0
  %v10696 = vadd.f32 0.0, %v10695
  %v10697 = vpop.f32.mrb[0].mxu0
  %v10698 = vadd.f32 0.0, %v10697
  %v10699 = vpop.f32.mrb[0].mxu0
  %v10700 = vadd.f32 0.0, %v10699
  %10701 = vmatprep.mubr.bf16.mxu0 0
  %10702 = vmatmul.mubr.bf16.gmra.mrb[0].mxu0 %v9742
  %v10703 = vpop.f32.mrb[0].mxu0
  %v10704 = vadd.f32 0.0, %v10703
  %v10705 = vpop.f32.mrb[0].mxu0
  %v10706 = vadd.f32 0.0, %v10705
  %v10707 = vpop.f32.mrb[0].mxu0
  %v10708 = vadd.f32 0.0, %v10707
  %v10709 = vpop.f32.mrb[0].mxu0
  %v10710 = vadd.f32 0.0, %v10709
  %10711 = vmatprep.mubr.bf16.mxu0 0
  %10712 = vmatmul.mubr.bf16.gmra.mrb[0].mxu0 %v9743
  %v10713 = vpop.f32.mrb[0].mxu0
  %v10714 = vadd.f32 0.0, %v10713
  %v10715 = vpop.f32.mrb[0].mxu0
  %v10716 = vadd.f32 0.0, %v10715
  %v10717 = vpop.f32.mrb[0].mxu0
  %v10718 = vadd.f32 0.0, %v10717
  %v10719 = vpop.f32.mrb[0].mxu0
  %v10720 = vadd.f32 0.0, %v10719
  %10721 = vmatprep.mubr.bf16.mxu0 0
  %10722 = vmatmul.mubr.bf16.gmra.mrb[0].mxu0 %v9744
  %v10723 = vpop.f32.mrb[0].mxu0
  %v10724 = vadd.f32 0.0, %v10723
  %v10725 = vpop.f32.mrb[0].mxu0
  %v10726 = vadd.f32 0.0, %v10725
  %v10727 = vpop.f32.mrb[0].mxu0
  %v10728 = vadd.f32 0.0, %v10727
  %v10729 = vpop.f32.mrb[0].mxu0
  %v10730 = vadd.f32 0.0, %v10729
  %10731 = vmatprep.mubr.bf16.mxu0 0
  %10732 = vmatmul.mubr.bf16.gmra.mrb[0].mxu0 %v9745
  %v10733 = vpop.f32.mrb[0].mxu0
  %v10734 = vadd.f32 0.0, %v10733
  %v10735 = vpop.f32.mrb[0].mxu0
  %v10736 = vadd.f32 0.0, %v10735
  %v10737 = vpop.f32.mrb[0].mxu0
  %v10738 = vadd.f32 0.0, %v10737
  %v10739 = vpop.f32.mrb[0].mxu0
  %v10740 = vadd.f32 0.0, %v10739
  %10741 = vmatprep.mubr.bf16.mxu0 0
  %10742 = vmatmul.mubr.bf16.gmra.mrb[0].mxu0 %v9746
  %v10743 = vpop.f32.mrb[0].mxu0
  %v10744 = vadd.f32 0.0, %v10743
  %v10745 = vpop.f32.mrb[0].mxu0
  %v10746 = vadd.f32 0.0, %v10745
  %v10747 = vpop.f32.mrb[0].mxu0
  %v10748 = vadd.f32 0.0, %v10747
  %v10749 = vpop.f32.mrb[0].mxu0
  %v10750 = vadd.f32 0.0, %v10749
  %10751 = vmatprep.mubr.bf16.mxu0 0
  %10752 = vmatmul.mubr.bf16.gmra.mrb[0].mxu0 %v9747
  %v10753 = vpop.f32.mrb[0].mxu0
  %v10754 = vadd.f32 0.0, %v10753
  %v10755 = vpop.f32.mrb[0].mxu0
  %v10756 = vadd.f32 0.0, %v10755
  %v10757 = vpop.f32.mrb[0].mxu0
  %v10758 = vadd.f32 0.0, %v10757
  %v10759 = vpop.f32.mrb[0].mxu0
  %v10760 = vadd.f32 0.0, %v10759
  %10761 = vmatprep.mubr.bf16.mxu0 0
  %10762 = vmatmul.mubr.bf16.gmra.mrb[0].mxu0 %v9748
  %v10763 = vpop.f32.mrb[0].mxu0
  %v10764 = vadd.f32 0.0, %v10763
  %v10765 = vpop.f32.mrb[0].mxu0
  %v10766 = vadd.f32 0.0, %v10765
  %v10767 = vpop.f32.mrb[0].mxu0
  %v10768 = vadd.f32 0.0, %v10767
  %v10769 = vpop.f32.mrb[0].mxu0
  %v10770 = vadd.f32 0.0, %v10769
  %10771 = vmatprep.mubr.bf16.mxu0 0
  %10772 = vmatmul.mubr.bf16.gmra.mrb[0].mxu0 %v9749
  %v10773 = vpop.f32.mrb[0].mxu0
  %v10774 = vadd.f32 0.0, %v10773
  %v10775 = vpop.f32.mrb[0].mxu0
  %v10776 = vadd.f32 0.0, %v10775
  %v10777 = vpop.f32.mrb[0].mxu0
  %v10778 = vadd.f32 0.0, %v10777
  %v10779 = vpop.f32.mrb[0].mxu0
  %v10780 = vadd.f32 0.0, %v10779
  %10781 = vmatprep.mubr.bf16.mxu0 0
  %10782 = vmatmul.mubr.bf16.gmra.mrb[0].mxu0 %v9750
  %v10783 = vpop.f32.mrb[0].mxu0
  %v10784 = vadd.f32 0.0, %v10783
  %v10785 = vpop.f32.mrb[0].mxu0
  %v10786 = vadd.f32 0.0, %v10785
  %v10787 = vpop.f32.mrb[0].mxu0
  %v10788 = vpop.f32.mrb[0].mxu0
  %10789 = vdwg.mxu0
  %v10790 = vld [vmem:[%s14] sm:$0x3]
  %v10791 = vld [vmem:[%s15] sm:$0x3]
  %v10792 = vadd.f32 %v10684, %v10688
  %v10793 = vadd.f32 %v10792, %v10694
  %v10794 = vadd.f32 %v10793, %v10698
  %v10795 = vadd.f32 %v10794, %v10704
  %v10796 = vadd.f32 %v10795, %v10708
  %v10797 = vadd.f32 %v10796, %v10714
  %v10798 = vadd.f32 %v10797, %v10718
  %v10799 = vadd.f32 %v10798, %v10724
  %v10800 = vadd.f32 %v10799, %v10728
  %v10801 = vadd.f32 %v10800, %v10734
  %v10802 = vadd.f32 %v10801, %v10738
  %v10803 = vadd.f32 %v10802, %v10744
  %v10804 = vadd.f32 %v10803, %v10748
  %v10805 = vadd.f32 %v10804, %v10754
  %v10806 = vadd.f32 %v10805, %v10758
  %v10807 = vadd.f32 %v10806, %v10764
  %v10808 = vadd.f32 %v10807, %v10768
  %v10809 = vadd.f32 %v10808, %v10774
  %v10810 = vadd.f32 %v10809, %v10778
  %v10811 = vadd.f32 %v10810, %v10784
  %v10812 = vrot.slane %v10811, 4
  %v10813 = vadd.f32 %v10811, %v10812
  %v10814 = vrot.slane %v10813, 2
  %v10815 = vadd.f32 %v10813, %v10814
  %v10816 = vrot.slane %v10815, 1
  %v10817 = vadd.f32 %v10815, %v10816
  %v10818 = vadd.f32 %v10686, %v10690
  %v10819 = vadd.f32 %v10818, %v10696
  %v10820 = vadd.f32 %v10819, %v10700
  %v10821 = vadd.f32 %v10820, %v10706
  %v10822 = vadd.f32 %v10821, %v10710
  %v10823 = vadd.f32 %v10822, %v10716
  %v10824 = vadd.f32 %v10823, %v10720
  %v10825 = vadd.f32 %v10824, %v10726
  %v10826 = vadd.f32 %v10825, %v10730
  %v10827 = vadd.f32 %v10826, %v10736
  %v10828 = vadd.f32 %v10827, %v10740
  %v10829 = vadd.f32 %v10828, %v10746
  %v10830 = vadd.f32 %v10829, %v10750
  %v10831 = vadd.f32 %v10830, %v10756
  %v10832 = vadd.f32 %v10831, %v10760
  %v10833 = vadd.f32 %v10832, %v10766
  %v10834 = vadd.f32 %v10833, %v10770
  %v10835 = vadd.f32 %v10834, %v10776
  %v10836 = vadd.f32 %v10835, %v10780
  %v10837 = vadd.f32 %v10836, %v10786
  %v10838 = vrot.slane %v10837, 4
  %v10839 = vadd.f32 %v10837, %v10838
  %v10840 = vrot.slane %v10839, 2
  %v10841 = vadd.f32 %v10839, %v10840
  %v10842 = vrot.slane %v10841, 1
  %v10843 = vadd.f32 %v10841, %v10842
  %v10844 = vmul.f32 %v10817, 0.0061728396
  %v10845 = vmul.f32 %v10843, 0.0061728396
  %v10846 = vsub.f32 %v10684, %v10844
  %v10847 = vsub.f32 %v10686, %v10845
  %v10848 = vsub.f32 %v10688, %v10844
  %v10849 = vsub.f32 %v10690, %v10845
  %v10850 = vsub.f32 %v10694, %v10844
  %v10851 = vsub.f32 %v10696, %v10845
  %v10852 = vsub.f32 %v10698, %v10844
  %v10853 = vsub.f32 %v10700, %v10845
  %v10854 = vsub.f32 %v10704, %v10844
  %v10855 = vsub.f32 %v10706, %v10845
  %v10856 = vsub.f32 %v10708, %v10844
  %v10857 = vsub.f32 %v10710, %v10845
  %v10858 = vsub.f32 %v10714, %v10844
  %v10859 = vsub.f32 %v10716, %v10845
  %v10860 = vsub.f32 %v10718, %v10844
  %v10861 = vsub.f32 %v10720, %v10845
  %v10862 = vsub.f32 %v10724, %v10844
  %v10863 = vsub.f32 %v10726, %v10845
  %v10864 = vsub.f32 %v10728, %v10844
  %v10865 = vsub.f32 %v10730, %v10845
  %v10866 = vsub.f32 %v10734, %v10844
  %v10867 = vsub.f32 %v10736, %v10845
  %v10868 = vsub.f32 %v10738, %v10844
  %v10869 = vsub.f32 %v10740, %v10845
  %v10870 = vsub.f32 %v10744, %v10844
  %v10871 = vsub.f32 %v10746, %v10845
  %v10872 = vsub.f32 %v10748, %v10844
  %v10873 = vsub.f32 %v10750, %v10845
  %v10874 = vsub.f32 %v10754, %v10844
  %v10875 = vsub.f32 %v10756, %v10845
  %v10876 = vsub.f32 %v10758, %v10844
  %v10877 = vsub.f32 %v10760, %v10845
  %v10878 = vsub.f32 %v10764, %v10844
  %v10879 = vsub.f32 %v10766, %v10845
  %v10880 = vsub.f32 %v10768, %v10844
  %v10881 = vsub.f32 %v10770, %v10845
  %v10882 = vsub.f32 %v10774, %v10844
  %v10883 = vsub.f32 %v10776, %v10845
  %v10884 = vsub.f32 %v10778, %v10844
  %v10885 = vsub.f32 %v10780, %v10845
  %v10886 = vsub.f32 %v10784, %v10844
  %v10887 = vsub.f32 %v10786, %v10845
  %v10888 = vmul.f32 %v10846, %v427
  %v10889 = vmul.f32 %v10847, %v427
  %v10890 = vmul.f32 %v10848, %v432
  %v10891 = vmul.f32 %v10849, %v432
  %v10892 = vmul.f32 %v10850, %v437
  %v10893 = vmul.f32 %v10851, %v437
  %v10894 = vmul.f32 %v10852, %v442
  %v10895 = vmul.f32 %v10853, %v442
  %v10896 = vmul.f32 %v10854, %v447
  %v10897 = vmul.f32 %v10855, %v447
  %v10898 = vmul.f32 %v10856, %v452
  %v10899 = vmul.f32 %v10857, %v452
  %v10900 = vmul.f32 %v10858, %v457
  %v10901 = vmul.f32 %v10859, %v457
  %v10902 = vmul.f32 %v10860, %v462
  %v10903 = vmul.f32 %v10861, %v462
  %v10904 = vmul.f32 %v10862, %v467
  %v10905 = vmul.f32 %v10863, %v467
  %v10906 = vmul.f32 %v10864, %v472
  %v10907 = vmul.f32 %v10865, %v472
  %v10908 = vmul.f32 %v10866, %v477
  %v10909 = vmul.f32 %v10867, %v477
  %v10910 = vmul.f32 %v10868, %v482
  %v10911 = vmul.f32 %v10869, %v482
  %v10912 = vmul.f32 %v10870, %v487
  %v10913 = vmul.f32 %v10871, %v487
  %v10914 = vmul.f32 %v10872, %v492
  %v10915 = vmul.f32 %v10873, %v492
  %v10916 = vmul.f32 %v10874, %v497
  %v10917 = vmul.f32 %v10875, %v497
  %v10918 = vmul.f32 %v10876, %v502
  %v10919 = vmul.f32 %v10877, %v502
  %v10920 = vmul.f32 %v10878, %v507
  %v10921 = vmul.f32 %v10879, %v507
  %v10922 = vmul.f32 %v10880, %v512
  %v10923 = vmul.f32 %v10881, %v512
  %v10924 = vmul.f32 %v10882, %v517
  %v10925 = vmul.f32 %v10883, %v517
  %v10926 = vmul.f32 %v10884, %v522
  %v10927 = vmul.f32 %v10885, %v522
  %v10928 = vmul.f32 %v10886, %v527
  %v10929 = vmul.f32 %v10887, %v527
  %v10930 = vmul.f32 %v10888, %v10888
  %v10931 = vmul.f32 %v10889, %v10889
  %v10932 = vmul.f32 %v10890, %v10890
  %v10933 = vmul.f32 %v10891, %v10891
  %v10934 = vmul.f32 %v10892, %v10892
  %v10935 = vmul.f32 %v10893, %v10893
  %v10936 = vmul.f32 %v10894, %v10894
  %v10937 = vmul.f32 %v10895, %v10895
  %v10938 = vmul.f32 %v10896, %v10896
  %v10939 = vmul.f32 %v10897, %v10897
  %v10940 = vmul.f32 %v10898, %v10898
  %v10941 = vmul.f32 %v10899, %v10899
  %v10942 = vmul.f32 %v10900, %v10900
  %v10943 = vmul.f32 %v10901, %v10901
  %v10944 = vmul.f32 %v10902, %v10902
  %v10945 = vmul.f32 %v10903, %v10903
  %v10946 = vmul.f32 %v10904, %v10904
  %v10947 = vmul.f32 %v10905, %v10905
  %v10948 = vmul.f32 %v10906, %v10906
  %v10949 = vmul.f32 %v10907, %v10907
  %v10950 = vmul.f32 %v10908, %v10908
  %v10951 = vmul.f32 %v10909, %v10909
  %v10952 = vmul.f32 %v10910, %v10910
  %v10953 = vmul.f32 %v10911, %v10911
  %v10954 = vmul.f32 %v10912, %v10912
  %v10955 = vmul.f32 %v10913, %v10913
  %v10956 = vmul.f32 %v10914, %v10914
  %v10957 = vmul.f32 %v10915, %v10915
  %v10958 = vmul.f32 %v10916, %v10916
  %v10959 = vmul.f32 %v10917, %v10917
  %v10960 = vmul.f32 %v10918, %v10918
  %v10961 = vmul.f32 %v10919, %v10919
  %v10962 = vmul.f32 %v10920, %v10920
  %v10963 = vmul.f32 %v10921, %v10921
  %v10964 = vmul.f32 %v10922, %v10922
  %v10965 = vmul.f32 %v10923, %v10923
  %v10966 = vmul.f32 %v10924, %v10924
  %v10967 = vmul.f32 %v10925, %v10925
  %v10968 = vmul.f32 %v10926, %v10926
  %v10969 = vmul.f32 %v10927, %v10927
  %v10970 = vmul.f32 %v10928, %v10928
  %v10971 = vmul.f32 %v10929, %v10929
  %v10972 = vadd.f32 %v10930, %v10932
  %v10973 = vadd.f32 %v10972, %v10934
  %v10974 = vadd.f32 %v10973, %v10936
  %v10975 = vadd.f32 %v10974, %v10938
  %v10976 = vadd.f32 %v10975, %v10940
  %v10977 = vadd.f32 %v10976, %v10942
  %v10978 = vadd.f32 %v10977, %v10944
  %v10979 = vadd.f32 %v10978, %v10946
  %v10980 = vadd.f32 %v10979, %v10948
  %v10981 = vadd.f32 %v10980, %v10950
  %v10982 = vadd.f32 %v10981, %v10952
  %v10983 = vadd.f32 %v10982, %v10954
  %v10984 = vadd.f32 %v10983, %v10956
  %v10985 = vadd.f32 %v10984, %v10958
  %v10986 = vadd.f32 %v10985, %v10960
  %v10987 = vadd.f32 %v10986, %v10962
  %v10988 = vadd.f32 %v10987, %v10964
  %v10989 = vadd.f32 %v10988, %v10966
  %v10990 = vadd.f32 %v10989, %v10968
  %v10991 = vadd.f32 %v10990, %v10970
  %v10992 = vrot.slane %v10991, 4
  %v10993 = vadd.f32 %v10991, %v10992
  %v10994 = vrot.slane %v10993, 2
  %v10995 = vadd.f32 %v10993, %v10994
  %v10996 = vrot.slane %v10995, 1
  %v10997 = vadd.f32 %v10995, %v10996
  %v10998 = vadd.f32 %v10931, %v10933
  %v10999 = vadd.f32 %v10998, %v10935
  %v11000 = vadd.f32 %v10999, %v10937
  %v11001 = vadd.f32 %v11000, %v10939
  %v11002 = vadd.f32 %v11001, %v10941
  %v11003 = vadd.f32 %v11002, %v10943
  %v11004 = vadd.f32 %v11003, %v10945
  %v11005 = vadd.f32 %v11004, %v10947
  %v11006 = vadd.f32 %v11005, %v10949
  %v11007 = vadd.f32 %v11006, %v10951
  %v11008 = vadd.f32 %v11007, %v10953
  %v11009 = vadd.f32 %v11008, %v10955
  %v11010 = vadd.f32 %v11009, %v10957
  %v11011 = vadd.f32 %v11010, %v10959
  %v11012 = vadd.f32 %v11011, %v10961
  %v11013 = vadd.f32 %v11012, %v10963
  %v11014 = vadd.f32 %v11013, %v10965
  %v11015 = vadd.f32 %v11014, %v10967
  %v11016 = vadd.f32 %v11015, %v10969
  %v11017 = vadd.f32 %v11016, %v10971
  %v11018 = vrot.slane %v11017, 4
  %v11019 = vadd.f32 %v11017, %v11018
  %v11020 = vrot.slane %v11019, 2
  %v11021 = vadd.f32 %v11019, %v11020
  %v11022 = vrot.slane %v11021, 1
  %v11023 = vadd.f32 %v11021, %v11022
  %v11024 = vmul.f32 %v10997, 0.0061728396
  %v11025 = vmul.f32 %v11023, 0.0061728396
  %v11026 = vadd.f32 %v11024, 1e-05
  %v11027 = vadd.f32 %v11025, 1e-05
  %v11028 = vrsqrt.pop %v11026
  %v11029 = vrsqrt.pop %v11027
  %v11030 = vmul.f32 %v10846, %v11028
  %v11031 = vmul.f32 %v10847, %v11029
  %v11032 = vmul.f32 %v10848, %v11028
  %v11033 = vmul.f32 %v10849, %v11029
  %v11034 = vmul.f32 %v10850, %v11028
  %v11035 = vmul.f32 %v10851, %v11029
  %v11036 = vmul.f32 %v10852, %v11028
  %v11037 = vmul.f32 %v10853, %v11029
  %v11038 = vmul.f32 %v10854, %v11028
  %v11039 = vmul.f32 %v10855, %v11029
  %v11040 = vmul.f32 %v10856, %v11028
  %v11041 = vmul.f32 %v10857, %v11029
  %v11042 = vmul.f32 %v10858, %v11028
  %v11043 = vmul.f32 %v10859, %v11029
  %v11044 = vmul.f32 %v10860, %v11028
  %v11045 = vmul.f32 %v10861, %v11029
  %v11046 = vmul.f32 %v10862, %v11028
  %v11047 = vmul.f32 %v10863, %v11029
  %v11048 = vmul.f32 %v10864, %v11028
  %v11049 = vmul.f32 %v10865, %v11029
  %v11050 = vmul.f32 %v10866, %v11028
  %v11051 = vmul.f32 %v10867, %v11029
  %v11052 = vmul.f32 %v10868, %v11028
  %v11053 = vmul.f32 %v10869, %v11029
  %v11054 = vmul.f32 %v10870, %v11028
  %v11055 = vmul.f32 %v10871, %v11029
  %v11056 = vmul.f32 %v10872, %v11028
  %v11057 = vmul.f32 %v10873, %v11029
  %v11058 = vmul.f32 %v10874, %v11028
  %v11059 = vmul.f32 %v10875, %v11029
  %v11060 = vmul.f32 %v10876, %v11028
  %v11061 = vmul.f32 %v10877, %v11029
  %v11062 = vmul.f32 %v10878, %v11028
  %v11063 = vmul.f32 %v10879, %v11029
  %v11064 = vmul.f32 %v10880, %v11028
  %v11065 = vmul.f32 %v10881, %v11029
  %v11066 = vmul.f32 %v10882, %v11028
  %v11067 = vmul.f32 %v10883, %v11029
  %v11068 = vmul.f32 %v10884, %v11028
  %v11069 = vmul.f32 %v10885, %v11029
  %v11070 = vmul.f32 %v10886, %v11028
  %v11071 = vmul.f32 %v10887, %v11029
  %v11073 = vlaneseq
  %v11074 = vshrl.u32 %v11073, 7
  %v11075 = vsub.s32 0, %v11074
  %v11076 = vrot.slane %v10790, %v11075
  %v11077 = vlaneseq
  %v11078 = vshrl.u32 %v11077, 7
  %v11079 = vsub.s32 1, %v11078
  %v11080 = vrot.slane %v10790, %v11079
  %v11083 = vmul.f32 %v11030, %v11076
  %v11084 = vmul.f32 %v11031, %v11080
  %v11085 = vmul.f32 %v11032, %v11076
  %v11086 = vmul.f32 %v11033, %v11080
  %v11087 = vmul.f32 %v11034, %v11076
  %v11088 = vmul.f32 %v11035, %v11080
  %v11089 = vmul.f32 %v11036, %v11076
  %v11090 = vmul.f32 %v11037, %v11080
  %v11091 = vmul.f32 %v11038, %v11076
  %v11092 = vmul.f32 %v11039, %v11080
  %v11093 = vmul.f32 %v11040, %v11076
  %v11094 = vmul.f32 %v11041, %v11080
  %v11095 = vmul.f32 %v11042, %v11076
  %v11096 = vmul.f32 %v11043, %v11080
  %v11097 = vmul.f32 %v11044, %v11076
  %v11098 = vmul.f32 %v11045, %v11080
  %v11099 = vmul.f32 %v11046, %v11076
  %v11100 = vmul.f32 %v11047, %v11080
  %v11101 = vmul.f32 %v11048, %v11076
  %v11102 = vmul.f32 %v11049, %v11080
  %v11103 = vmul.f32 %v11050, %v11076
  %v11104 = vmul.f32 %v11051, %v11080
  %v11105 = vmul.f32 %v11052, %v11076
  %v11106 = vmul.f32 %v11053, %v11080
  %v11107 = vmul.f32 %v11054, %v11076
  %v11108 = vmul.f32 %v11055, %v11080
  %v11109 = vmul.f32 %v11056, %v11076
  %v11110 = vmul.f32 %v11057, %v11080
  %v11111 = vmul.f32 %v11058, %v11076
  %v11112 = vmul.f32 %v11059, %v11080
  %v11113 = vmul.f32 %v11060, %v11076
  %v11114 = vmul.f32 %v11061, %v11080
  %v11115 = vmul.f32 %v11062, %v11076
  %v11116 = vmul.f32 %v11063, %v11080
  %v11117 = vmul.f32 %v11064, %v11076
  %v11118 = vmul.f32 %v11065, %v11080
  %v11119 = vmul.f32 %v11066, %v11076
  %v11120 = vmul.f32 %v11067, %v11080
  %v11121 = vmul.f32 %v11068, %v11076
  %v11122 = vmul.f32 %v11069, %v11080
  %v11123 = vmul.f32 %v11070, %v11076
  %v11124 = vmul.f32 %v11071, %v11080
  %v11126 = vlaneseq
  %v11127 = vshrl.u32 %v11126, 7
  %v11128 = vsub.s32 0, %v11127
  %v11129 = vrot.slane %v10791, %v11128
  %v11130 = vlaneseq
  %v11131 = vshrl.u32 %v11130, 7
  %v11132 = vsub.s32 1, %v11131
  %v11133 = vrot.slane %v10791, %v11132
  %v11136 = vadd.f32 %v11083, %v11129
  %v11137 = vadd.f32 %v11084, %v11133
  %v11138 = vadd.f32 %v11085, %v11129
  %v11139 = vadd.f32 %v11086, %v11133
  %v11140 = vadd.f32 %v11087, %v11129
  %v11141 = vadd.f32 %v11088, %v11133
  %v11142 = vadd.f32 %v11089, %v11129
  %v11143 = vadd.f32 %v11090, %v11133
  %v11144 = vadd.f32 %v11091, %v11129
  %v11145 = vadd.f32 %v11092, %v11133
  %v11146 = vadd.f32 %v11093, %v11129
  %v11147 = vadd.f32 %v11094, %v11133
  %v11148 = vadd.f32 %v11095, %v11129
  %v11149 = vadd.f32 %v11096, %v11133
  %v11150 = vadd.f32 %v11097, %v11129
  %v11151 = vadd.f32 %v11098, %v11133
  %v11152 = vadd.f32 %v11099, %v11129
  %v11153 = vadd.f32 %v11100, %v11133
  %v11154 = vadd.f32 %v11101, %v11129
  %v11155 = vadd.f32 %v11102, %v11133
  %v11156 = vadd.f32 %v11103, %v11129
  %v11157 = vadd.f32 %v11104, %v11133
  %v11158 = vadd.f32 %v11105, %v11129
  %v11159 = vadd.f32 %v11106, %v11133
  %v11160 = vadd.f32 %v11107, %v11129
  %v11161 = vadd.f32 %v11108, %v11133
  %v11162 = vadd.f32 %v11109, %v11129
  %v11163 = vadd.f32 %v11110, %v11133
  %v11164 = vadd.f32 %v11111, %v11129
  %v11165 = vadd.f32 %v11112, %v11133
  %v11166 = vadd.f32 %v11113, %v11129
  %v11167 = vadd.f32 %v11114, %v11133
  %v11168 = vadd.f32 %v11115, %v11129
  %v11169 = vadd.f32 %v11116, %v11133
  %v11170 = vadd.f32 %v11117, %v11129
  %v11171 = vadd.f32 %v11118, %v11133
  %v11172 = vadd.f32 %v11119, %v11129
  %v11173 = vadd.f32 %v11120, %v11133
  %v11174 = vadd.f32 %v11121, %v11129
  %v11175 = vadd.f32 %v11122, %v11133
  %v11176 = vadd.f32 %v11123, %v11129
  %v11177 = vadd.f32 %v11124, %v11133
  %v11178 = vmax.f32 %v11136, 0.0
  %v11179 = vmax.f32 %v11137, 0.0
  %v11180 = vmax.f32 %v11138, 0.0
  %v11181 = vmax.f32 %v11139, 0.0
  %v11182 = vmax.f32 %v11140, 0.0
  %v11183 = vmax.f32 %v11141, 0.0
  %v11184 = vmax.f32 %v11142, 0.0
  %v11185 = vmax.f32 %v11143, 0.0
  %v11186 = vmax.f32 %v11144, 0.0
  %v11187 = vmax.f32 %v11145, 0.0
  %v11188 = vmax.f32 %v11146, 0.0
  %v11189 = vmax.f32 %v11147, 0.0
  %v11190 = vmax.f32 %v11148, 0.0
  %v11191 = vmax.f32 %v11149, 0.0
  %v11192 = vmax.f32 %v11150, 0.0
  %v11193 = vmax.f32 %v11151, 0.0
  %v11194 = vmax.f32 %v11152, 0.0
  %v11195 = vmax.f32 %v11153, 0.0
  %v11196 = vmax.f32 %v11154, 0.0
  %v11197 = vmax.f32 %v11155, 0.0
  %v11198 = vmax.f32 %v11156, 0.0
  %v11199 = vmax.f32 %v11157, 0.0
  %v11200 = vmax.f32 %v11158, 0.0
  %v11201 = vmax.f32 %v11159, 0.0
  %v11202 = vmax.f32 %v11160, 0.0
  %v11203 = vmax.f32 %v11161, 0.0
  %v11204 = vmax.f32 %v11162, 0.0
  %v11205 = vmax.f32 %v11163, 0.0
  %v11206 = vmax.f32 %v11164, 0.0
  %v11207 = vmax.f32 %v11165, 0.0
  %v11208 = vmax.f32 %v11166, 0.0
  %v11209 = vmax.f32 %v11167, 0.0
  %v11210 = vmax.f32 %v11168, 0.0
  %v11211 = vmax.f32 %v11169, 0.0
  %v11212 = vmax.f32 %v11170, 0.0
  %v11213 = vmax.f32 %v11171, 0.0
  %v11214 = vmax.f32 %v11172, 0.0
  %v11215 = vmax.f32 %v11173, 0.0
  %v11216 = vmax.f32 %v11174, 0.0
  %v11217 = vmax.f32 %v11175, 0.0
  %v11218 = vmax.f32 %v11176, 0.0
  %v11219 = vmax.f32 %v11177, 0.0
  %v11220 = vld [vmem:[%s23] sm:$0xff]
  %v11221 = vld [vmem:[%s16] sm:$0xff]
  %v11222 = vld [vmem:[%s16 + $0x8] sm:$0xff]
  %v11223 = vld [vmem:[%s16 + $0x10] sm:$0xff]
  %v11224 = vld [vmem:[%s16 + $0x18] sm:$0xff]
  %v11225 = vld [vmem:[%s16 + $0x20] sm:$0xff]
  %v11226 = vld [vmem:[%s16 + $0x28] sm:$0xff]
  %v11227 = vld [vmem:[%s16 + $0x30] sm:$0xff]
  %v11228 = vld [vmem:[%s16 + $0x38] sm:$0xff]
  %v11229 = vld [vmem:[%s16 + $0x40] sm:$0xff]
  %v11230 = vld [vmem:[%s16 + $0x48] sm:$0xff]
  %v11231 = vld [vmem:[%s16 + $0x50] sm:$0xff]
  %v11232 = vld [vmem:[%s16 + $0x58] sm:$0xff]
  %v11233 = vld [vmem:[%s16 + $0x60] sm:$0xff]
  %v11234 = vld [vmem:[%s16 + $0x68] sm:$0xff]
  %v11235 = vld [vmem:[%s16 + $0x70] sm:$0xff]
  %v11236 = vld [vmem:[%s16 + $0x78] sm:$0xff]
  %v11237 = vld [vmem:[%s16 + $0x80] sm:$0xff]
  %v11238 = vld [vmem:[%s16 + $0x88] sm:$0xff]
  %v11239 = vld [vmem:[%s16 + $0x90] sm:$0xff]
  %v11240 = vld [vmem:[%s16 + $0x98] sm:$0xff]
  %v11241 = vld [vmem:[%s16 + $0xa0] sm:$0xff]
  %v11242 = vmul.f32 %v10131, %v11221
  %v11243 = vmul.f32 %v10132, %v11222
  %v11244 = vmul.f32 %v10133, %v11223
  %v11245 = vmul.f32 %v10134, %v11224
  %v11246 = vmul.f32 %v10135, %v11225
  %v11247 = vmul.f32 %v10136, %v11226
  %v11248 = vmul.f32 %v10137, %v11227
  %v11249 = vmul.f32 %v10138, %v11228
  %v11250 = vmul.f32 %v10139, %v11229
  %v11251 = vmul.f32 %v10140, %v11230
  %v11252 = vmul.f32 %v10141, %v11231
  %v11253 = vmul.f32 %v10142, %v11232
  %v11254 = vmul.f32 %v10143, %v11233
  %v11255 = vmul.f32 %v10144, %v11234
  %v11256 = vmul.f32 %v10145, %v11235
  %v11257 = vmul.f32 %v10146, %v11236
  %v11258 = vmul.f32 %v10147, %v11237
  %v11259 = vmul.f32 %v10148, %v11238
  %v11260 = vmul.f32 %v10149, %v11239
  %v11261 = vmul.f32 %v10150, %v11240
  %v11262 = vmul.f32 %v10151, %v11241
  %v11263 = vld [vmem:[%s17] sm:$0xff]
  %v11264 = vld [vmem:[%s17 + $0x8] sm:$0xff]
  %v11265 = vld [vmem:[%s17 + $0x10] sm:$0xff]
  %v11266 = vld [vmem:[%s17 + $0x18] sm:$0xff]
  %v11267 = vld [vmem:[%s17 + $0x20] sm:$0xff]
  %v11268 = vld [vmem:[%s17 + $0x28] sm:$0xff]
  %v11269 = vld [vmem:[%s17 + $0x30] sm:$0xff]
  %v11270 = vld [vmem:[%s17 + $0x38] sm:$0xff]
  %v11271 = vld [vmem:[%s17 + $0x40] sm:$0xff]
  %v11272 = vld [vmem:[%s17 + $0x48] sm:$0xff]
  %v11273 = vld [vmem:[%s17 + $0x50] sm:$0xff]
  %v11274 = vld [vmem:[%s17 + $0x58] sm:$0xff]
  %v11275 = vld [vmem:[%s17 + $0x60] sm:$0xff]
  %v11276 = vld [vmem:[%s17 + $0x68] sm:$0xff]
  %v11277 = vld [vmem:[%s17 + $0x70] sm:$0xff]
  %v11278 = vld [vmem:[%s17 + $0x78] sm:$0xff]
  %v11279 = vld [vmem:[%s17 + $0x80] sm:$0xff]
  %v11280 = vld [vmem:[%s17 + $0x88] sm:$0xff]
  %v11281 = vld [vmem:[%s17 + $0x90] sm:$0xff]
  %v11282 = vld [vmem:[%s17 + $0x98] sm:$0xff]
  %v11283 = vld [vmem:[%s17 + $0xa0] sm:$0xff]
  %v11284 = vmul.f32 %v10532, %v11263
  %v11285 = vmul.f32 %v10533, %v11264
  %v11286 = vmul.f32 %v10534, %v11265
  %v11287 = vmul.f32 %v10535, %v11266
  %v11288 = vmul.f32 %v10536, %v11267
  %v11289 = vmul.f32 %v10537, %v11268
  %v11290 = vmul.f32 %v10538, %v11269
  %v11291 = vmul.f32 %v10539, %v11270
  %v11292 = vmul.f32 %v10540, %v11271
  %v11293 = vmul.f32 %v10541, %v11272
  %v11294 = vmul.f32 %v10542, %v11273
  %v11295 = vmul.f32 %v10543, %v11274
  %v11296 = vmul.f32 %v10544, %v11275
  %v11297 = vmul.f32 %v10545, %v11276
  %v11298 = vmul.f32 %v10546, %v11277
  %v11299 = vmul.f32 %v10547, %v11278
  %v11300 = vmul.f32 %v10548, %v11279
  %v11301 = vmul.f32 %v10549, %v11280
  %v11302 = vmul.f32 %v10550, %v11281
  %v11303 = vmul.f32 %v10551, %v11282
  %v11304 = vmul.f32 %v10552, %v11283
  %v11305 = vadd.f32 %v11242, %v11284
  %v11306 = vadd.f32 %v11243, %v11285
  %v11307 = vadd.f32 %v11244, %v11286
  %v11308 = vadd.f32 %v11245, %v11287
  %v11309 = vadd.f32 %v11246, %v11288
  %v11310 = vadd.f32 %v11247, %v11289
  %v11311 = vadd.f32 %v11248, %v11290
  %v11312 = vadd.f32 %v11249, %v11291
  %v11313 = vadd.f32 %v11250, %v11292
  %v11314 = vadd.f32 %v11251, %v11293
  %v11315 = vadd.f32 %v11252, %v11294
  %v11316 = vadd.f32 %v11253, %v11295
  %v11317 = vadd.f32 %v11254, %v11296
  %v11318 = vadd.f32 %v11255, %v11297
  %v11319 = vadd.f32 %v11256, %v11298
  %v11320 = vadd.f32 %v11257, %v11299
  %v11321 = vadd.f32 %v11258, %v11300
  %v11322 = vadd.f32 %v11259, %v11301
  %v11323 = vadd.f32 %v11260, %v11302
  %v11324 = vadd.f32 %v11261, %v11303
  %v11325 = vadd.f32 %v11262, %v11304
  %v11326 = vpack.c.bf16 %v11306, %v11305
  %v11327 = vpack.c.bf16 %v11308, %v11307
  %v11328 = vpack.c.bf16 %v11310, %v11309
  %v11329 = vpack.c.bf16 %v11312, %v11311
  %v11330 = vpack.c.bf16 %v11314, %v11313
  %v11331 = vpack.c.bf16 %v11316, %v11315
  %v11332 = vpack.c.bf16 %v11318, %v11317
  %v11333 = vpack.c.bf16 %v11320, %v11319
  %v11334 = vpack.c.bf16 %v11322, %v11321
  %v11335 = vpack.c.bf16 %v11324, %v11323
  %v11336 = vpack.c.bf16 %v11325, %v11325
  %v11337 = vld [vmem:[%s18] sm:$0x1]
  %v11339 = vlaneseq
  %v11340 = vshrl.u32 %v11339, 7
  %v11341 = vsub.s32 0, %v11340
  %v11342 = vrot.slane %v11337, %v11341
  %v11345 = vunpack.c.l.b16 %v11220
  %v11346 = vunpack.c.h.b16 %v11220
  %v11347 = vpack.c.b16 %v11345, %v11345
  %v11348 = vpack.c.b16 %v11346, %v11346
  %vm11350 = vcmask 326656
  %v11352 = vsel %vm11350, %v11348, 0
  %vm11354 = vcmask 1043456
  %v11356 = vsel %vm11354, %v11336, 0
  %11358 = vmatprep.subr.bf16.mxu0 0
  %11359 = vmatpush1.bf16.msra.mxu0 %v11326
  %11360 = vmatprep.subr.bf16.mxu0 0
  %11361 = vmatpush1.bf16.msra.mxu0 %v11327
  %11362 = vmatprep.subr.bf16.mxu0 0
  %11363 = vmatpush1.bf16.msra.mxu0 %v11328
  %11364 = vmatprep.subr.bf16.mxu0 0
  %11365 = vmatpush1.bf16.msra.mxu0 %v11329
  %11366 = vmatprep.subr.bf16.mxu0 0
  %11367 = vmatpush1.bf16.msra.mxu0 %v11330
  %11368 = vmatprep.subr.bf16.mxu0 0
  %11369 = vmatpush1.bf16.msra.mxu0 %v11331
  %11370 = vmatprep.subr.bf16.mxu0 0
  %11371 = vmatpush1.bf16.msra.mxu0 %v11332
  %11372 = vmatprep.subr.bf16.mxu0 0
  %11373 = vmatpush1.bf16.msra.mxu0 %v11333
  %11374 = vmatprep.subr.bf16.mxu0 0
  %11375 = vmatpush1.bf16.msra.mxu0 %v11334
  %11376 = vmatprep.subr.bf16.mxu0 0
  %11377 = vmatpush1.bf16.msra.mxu0 %v11335
  %11378 = vmatprep.subr.bf16.mxu0 0
  %11379 = vmatpush1.bf16.msra.mxu0 %v11356
  %11380 = vmatprep.subr.bf16.mxu0 0
  %11381 = vmatpush1.bf16.msra.mxu0 0
  %11382 = vmatprep.subr.bf16.mxu0 0
  %11383 = vmatpush1.bf16.msra.mxu0 0
  %11384 = vmatprep.subr.bf16.mxu0 0
  %11385 = vmatpush1.bf16.msra.mxu0 0
  %11386 = vmatprep.subr.bf16.mxu0 0
  %11387 = vmatpush1.bf16.msra.mxu0 0
  %11388 = vmatprep.subr.bf16.mxu0 0
  %11389 = vmatpush1.bf16.msra.mxu0 0
  %11390 = vmatprep.mubr.bf16.mxu0 %v11352
  %11391 = vmatmul.mubr.bf16.gmra.mrb[0].mxu0 %v11347
  %v11392 = vpop.f32.mrb[0].mxu0
  %v11393 = vadd.f32 %v11342, %v11392
  %v11394 = vpop.f32.mrb[0].mxu0
  %v11395 = vpop.f32.mrb[0].mxu0
  %v11396 = vpop.f32.mrb[0].mxu0
  %11397 = vdwg.mxu0
  %11398 = vst [vmem:[%s24] sm:$0xff] %v11393
  %v11399 = vld [vmem:[%s19] sm:$0xff]
  %v11400 = vld [vmem:[%s19 + $0x8] sm:$0xff]
  %v11401 = vld [vmem:[%s19 + $0x10] sm:$0xff]
  %v11402 = vld [vmem:[%s19 + $0x18] sm:$0xff]
  %v11403 = vld [vmem:[%s19 + $0x20] sm:$0xff]
  %v11404 = vld [vmem:[%s19 + $0x28] sm:$0xff]
  %v11405 = vld [vmem:[%s19 + $0x30] sm:$0xff]
  %v11406 = vld [vmem:[%s19 + $0x38] sm:$0xff]
  %v11407 = vld [vmem:[%s19 + $0x40] sm:$0xff]
  %v11408 = vld [vmem:[%s19 + $0x48] sm:$0xff]
  %v11409 = vld [vmem:[%s19 + $0x50] sm:$0xff]
  %v11410 = vld [vmem:[%s19 + $0x58] sm:$0xff]
  %v11411 = vld [vmem:[%s19 + $0x60] sm:$0xff]
  %v11412 = vld [vmem:[%s19 + $0x68] sm:$0xff]
  %v11413 = vld [vmem:[%s19 + $0x70] sm:$0xff]
  %v11414 = vld [vmem:[%s19 + $0x78] sm:$0xff]
  %v11415 = vld [vmem:[%s19 + $0x80] sm:$0xff]
  %v11416 = vld [vmem:[%s19 + $0x88] sm:$0xff]
  %v11417 = vld [vmem:[%s19 + $0x90] sm:$0xff]
  %v11418 = vld [vmem:[%s19 + $0x98] sm:$0xff]
  %v11419 = vld [vmem:[%s19 + $0xa0] sm:$0xff]
  %v11420 = vld [vmem:[%s19 + $0xa8] sm:$0xff]
  %v11421 = vld [vmem:[%s19 + $0xb0] sm:$0xff]
  %v11422 = vld [vmem:[%s19 + $0xb8] sm:$0xff]
  %v11423 = vld [vmem:[%s19 + $0xc0] sm:$0xff]
  %v11424 = vld [vmem:[%s19 + $0xc8] sm:$0xff]
  %v11425 = vld [vmem:[%s19 + $0xd0] sm:$0xff]
  %v11426 = vld [vmem:[%s19 + $0xd8] sm:$0xff]
  %v11427 = vld [vmem:[%s19 + $0xe0] sm:$0xff]
  %v11428 = vld [vmem:[%s19 + $0xe8] sm:$0xff]
  %v11429 = vld [vmem:[%s19 + $0xf0] sm:$0xff]
  %v11430 = vld [vmem:[%s19 + $0xf8] sm:$0xff]
  %v11431 = vld [vmem:[%s19 + $0x100] sm:$0xff]
  %v11432 = vld [vmem:[%s19 + $0x108] sm:$0xff]
  %v11433 = vld [vmem:[%s19 + $0x110] sm:$0xff]
  %v11434 = vld [vmem:[%s19 + $0x118] sm:$0xff]
  %v11435 = vld [vmem:[%s19 + $0x120] sm:$0xff]
  %v11436 = vld [vmem:[%s19 + $0x128] sm:$0xff]
  %v11437 = vld [vmem:[%s19 + $0x130] sm:$0xff]
  %v11438 = vld [vmem:[%s19 + $0x138] sm:$0xff]
  %v11439 = vld [vmem:[%s19 + $0x140] sm:$0xff]
  %v11440 = vld [vmem:[%s19 + $0x148] sm:$0xff]
  %v11441 = vmul.f32 %v11178, %v11399
  %v11442 = vmul.f32 %v11179, %v11400
  %v11443 = vmul.f32 %v11180, %v11401
  %v11444 = vmul.f32 %v11181, %v11402
  %v11445 = vmul.f32 %v11182, %v11403
  %v11446 = vmul.f32 %v11183, %v11404
  %v11447 = vmul.f32 %v11184, %v11405
  %v11448 = vmul.f32 %v11185, %v11406
  %v11449 = vmul.f32 %v11186, %v11407
  %v11450 = vmul.f32 %v11187, %v11408
  %v11451 = vmul.f32 %v11188, %v11409
  %v11452 = vmul.f32 %v11189, %v11410
  %v11453 = vmul.f32 %v11190, %v11411
  %v11454 = vmul.f32 %v11191, %v11412
  %v11455 = vmul.f32 %v11192, %v11413
  %v11456 = vmul.f32 %v11193, %v11414
  %v11457 = vmul.f32 %v11194, %v11415
  %v11458 = vmul.f32 %v11195, %v11416
  %v11459 = vmul.f32 %v11196, %v11417
  %v11460 = vmul.f32 %v11197, %v11418
  %v11461 = vmul.f32 %v11198, %v11419
  %v11462 = vmul.f32 %v11199, %v11420
  %v11463 = vmul.f32 %v11200, %v11421
  %v11464 = vmul.f32 %v11201, %v11422
  %v11465 = vmul.f32 %v11202, %v11423
  %v11466 = vmul.f32 %v11203, %v11424
  %v11467 = vmul.f32 %v11204, %v11425
  %v11468 = vmul.f32 %v11205, %v11426
  %v11469 = vmul.f32 %v11206, %v11427
  %v11470 = vmul.f32 %v11207, %v11428
  %v11471 = vmul.f32 %v11208, %v11429
  %v11472 = vmul.f32 %v11209, %v11430
  %v11473 = vmul.f32 %v11210, %v11431
  %v11474 = vmul.f32 %v11211, %v11432
  %v11475 = vmul.f32 %v11212, %v11433
  %v11476 = vmul.f32 %v11213, %v11434
  %v11477 = vmul.f32 %v11214, %v11435
  %v11478 = vmul.f32 %v11215, %v11436
  %v11479 = vmul.f32 %v11216, %v11437
  %v11480 = vmul.f32 %v11217, %v11438
  %v11481 = vmul.f32 %v11218, %v11439
  %v11482 = vmul.f32 %v11219, %v11440
  %v11483 = vpack.c.bf16 %v11443, %v11441
  %v11484 = vpack.c.bf16 %v11444, %v11442
  %v11485 = vpack.c.bf16 %v11447, %v11445
  %v11486 = vpack.c.bf16 %v11448, %v11446
  %v11487 = vpack.c.bf16 %v11451, %v11449
  %v11488 = vpack.c.bf16 %v11452, %v11450
  %v11489 = vpack.c.bf16 %v11455, %v11453
  %v11490 = vpack.c.bf16 %v11456, %v11454
  %v11491 = vpack.c.bf16 %v11459, %v11457
  %v11492 = vpack.c.bf16 %v11460, %v11458
  %v11493 = vpack.c.bf16 %v11463, %v11461
  %v11494 = vpack.c.bf16 %v11464, %v11462
  %v11495 = vpack.c.bf16 %v11467, %v11465
  %v11496 = vpack.c.bf16 %v11468, %v11466
  %v11497 = vpack.c.bf16 %v11471, %v11469
  %v11498 = vpack.c.bf16 %v11472, %v11470
  %v11499 = vpack.c.bf16 %v11475, %v11473
  %v11500 = vpack.c.bf16 %v11476, %v11474
  %v11501 = vpack.c.bf16 %v11479, %v11477
  %v11502 = vpack.c.bf16 %v11480, %v11478
  %v11503 = vpack.c.bf16 %v11481, %v11481
  %v11504 = vpack.c.bf16 %v11482, %v11482
  %v11505 = vld [vmem:[%s20] sm:$0x3]
  %v11507 = vlaneseq
  %v11508 = vshrl.u32 %v11507, 7
  %v11509 = vsub.s32 0, %v11508
  %v11510 = vrot.slane %v11505, %v11509
  %v11511 = vlaneseq
  %v11512 = vshrl.u32 %v11511, 7
  %v11513 = vsub.s32 1, %v11512
  %v11514 = vrot.slane %v11505, %v11513
  %v11518 = vsel %vm11354, %v11503, 0
  %v11521 = vsel %vm11354, %v11504, 0
  %11523 = vmatprep.subr.bf16.mxu0 %v11484
  %11524 = vmatpush1.bf16.msra.mxu0 %v11483
  %11525 = vmatprep.subr.bf16.mxu0 %v11486
  %11526 = vmatpush1.bf16.msra.mxu0 %v11485
  %11527 = vmatprep.subr.bf16.mxu0 %v11488
  %11528 = vmatpush1.bf16.msra.mxu0 %v11487
  %11529 = vmatprep.subr.bf16.mxu0 %v11490
  %11530 = vmatpush1.bf16.msra.mxu0 %v11489
  %11531 = vmatprep.subr.bf16.mxu0 %v11492
  %11532 = vmatpush1.bf16.msra.mxu0 %v11491
  %11533 = vmatprep.subr.bf16.mxu0 %v11494
  %11534 = vmatpush1.bf16.msra.mxu0 %v11493
  %11535 = vmatprep.subr.bf16.mxu0 %v11496
  %11536 = vmatpush1.bf16.msra.mxu0 %v11495
  %11537 = vmatprep.subr.bf16.mxu0 %v11498
  %11538 = vmatpush1.bf16.msra.mxu0 %v11497
  %11539 = vmatprep.subr.bf16.mxu0 %v11500
  %11540 = vmatpush1.bf16.msra.mxu0 %v11499
  %11541 = vmatprep.subr.bf16.mxu0 %v11502
  %11542 = vmatpush1.bf16.msra.mxu0 %v11501
  %11543 = vmatprep.subr.bf16.mxu0 %v11521
  %11544 = vmatpush1.bf16.msra.mxu0 %v11518
  %11545 = vmatprep.subr.bf16.mxu0 0
  %11546 = vmatpush1.bf16.msra.mxu0 0
  %11547 = vmatprep.subr.bf16.mxu0 0
  %11548 = vmatpush1.bf16.msra.mxu0 0
  %11549 = vmatprep.subr.bf16.mxu0 0
  %11550 = vmatpush1.bf16.msra.mxu0 0
  %11551 = vmatprep.subr.bf16.mxu0 0
  %11552 = vmatpush1.bf16.msra.mxu0 0
  %11553 = vmatprep.subr.bf16.mxu0 0
  %11554 = vmatpush1.bf16.msra.mxu0 0
  %11555 = vmatprep.mubr.bf16.mxu0 %v11352
  %11556 = vmatmul.mubr.bf16.gmra.mrb[0].mxu0 %v11347
  %v11557 = vpop.f32.mrb[0].mxu0
  %v11558 = vadd.f32 %v11510, %v11557
  %v11559 = vpop.f32.mrb[0].mxu0
  %v11560 = vadd.f32 %v11514, %v11559
  %v11561 = vpop.f32.mrb[0].mxu0
  %v11562 = vpop.f32.mrb[0].mxu0
  %11563 = vdwg.mxu0
  %v11564 = vmax.f32 %v11558, 0.0
  %v11565 = vmax.f32 %v11560, 0.0
  %v11566 = vpack.c.bf16 %v11564, %v11564
  %v11567 = vpack.c.bf16 %v11565, %v11565
  %v11568 = vld [vmem:[%s21] sm:$0xf]
  %v11569 = vld [vmem:[%s21 + $0x4] sm:$0xf]
  %v11570 = vld [vmem:[%s21 + $0x8] sm:$0xf]
  %v11571 = vld [vmem:[%s21 + $0xc] sm:$0xf]
  %v11572 = vld [vmem:[%s21 + $0x10] sm:$0xf]
  %v11573 = vld [vmem:[%s21 + $0x14] sm:$0xf]
  %v11574 = vld [vmem:[%s21 + $0x18] sm:$0xf]
  %v11575 = vld [vmem:[%s21 + $0x1c] sm:$0xf]
  %v11576 = vld [vmem:[%s21 + $0x20] sm:$0xf]
  %v11577 = vld [vmem:[%s21 + $0x24] sm:$0xf]
  %v11578 = vld [vmem:[%s21 + $0x28] sm:$0xf]
  %v11579 = vld [vmem:[%s21 + $0x2c] sm:$0xf]
  %v11580 = vld [vmem:[%s21 + $0x30] sm:$0xf]
  %v11581 = vld [vmem:[%s21 + $0x34] sm:$0xf]
  %v11582 = vld [vmem:[%s21 + $0x38] sm:$0xf]
  %v11583 = vld [vmem:[%s21 + $0x3c] sm:$0xf]
  %v11584 = vld [vmem:[%s21 + $0x40] sm:$0xf]
  %v11585 = vld [vmem:[%s21 + $0x44] sm:$0xf]
  %v11586 = vld [vmem:[%s21 + $0x48] sm:$0xf]
  %v11587 = vld [vmem:[%s21 + $0x4c] sm:$0xf]
  %v11588 = vld [vmem:[%s21 + $0x50] sm:$0xf]
  %v11589 = vld [vmem:[%s21 + $0x54] sm:$0xf]
  %v11590 = vld [vmem:[%s21 + $0x58] sm:$0xf]
  %v11591 = vld [vmem:[%s21 + $0x5c] sm:$0xf]
  %v11592 = vld [vmem:[%s21 + $0x60] sm:$0xf]
  %v11593 = vld [vmem:[%s21 + $0x64] sm:$0xf]
  %v11594 = vld [vmem:[%s21 + $0x68] sm:$0xf]
  %v11595 = vld [vmem:[%s21 + $0x6c] sm:$0xf]
  %v11596 = vld [vmem:[%s21 + $0x70] sm:$0xf]
  %v11597 = vld [vmem:[%s21 + $0x74] sm:$0xf]
  %v11598 = vld [vmem:[%s21 + $0x78] sm:$0xf]
  %v11599 = vld [vmem:[%s21 + $0x7c] sm:$0xf]
  %v11600 = vld [vmem:[%s22] sm:$0x1]
  %v11602 = vlaneseq
  %v11603 = vshrl.u32 %v11602, 7
  %v11604 = vsub.s32 0, %v11603
  %v11605 = vrot.slane %v11600, %v11604
  %v11639 = vunpack.c.l.b16 %v11568
  %v11640 = vunpack.c.l.b16 %v11569
  %v11641 = vunpack.c.l.b16 %v11570
  %v11642 = vunpack.c.l.b16 %v11571
  %v11643 = vunpack.c.l.b16 %v11572
  %v11644 = vunpack.c.l.b16 %v11573
  %v11645 = vunpack.c.l.b16 %v11574
  %v11646 = vunpack.c.l.b16 %v11575
  %v11647 = vunpack.c.l.b16 %v11576
  %v11648 = vunpack.c.l.b16 %v11577
  %v11649 = vunpack.c.l.b16 %v11578
  %v11650 = vunpack.c.l.b16 %v11579
  %v11651 = vunpack.c.l.b16 %v11580
  %v11652 = vunpack.c.l.b16 %v11581
  %v11653 = vunpack.c.l.b16 %v11582
  %v11654 = vunpack.c.l.b16 %v11583
  %v11655 = vunpack.c.l.b16 %v11584
  %v11656 = vunpack.c.l.b16 %v11585
  %v11657 = vunpack.c.l.b16 %v11586
  %v11658 = vunpack.c.l.b16 %v11587
  %v11659 = vunpack.c.l.b16 %v11588
  %v11660 = vunpack.c.l.b16 %v11589
  %v11661 = vunpack.c.l.b16 %v11590
  %v11662 = vunpack.c.l.b16 %v11591
  %v11663 = vunpack.c.l.b16 %v11592
  %v11664 = vunpack.c.l.b16 %v11593
  %v11665 = vunpack.c.l.b16 %v11594
  %v11666 = vunpack.c.l.b16 %v11595
  %v11667 = vunpack.c.l.b16 %v11596
  %v11668 = vunpack.c.l.b16 %v11597
  %v11669 = vunpack.c.l.b16 %v11598
  %v11670 = vunpack.c.l.b16 %v11599
  %v11671 = vpack.c.b16 %v11640, %v11639
  %v11672 = vpack.c.b16 %v11642, %v11641
  %v11673 = vpack.c.b16 %v11644, %v11643
  %v11674 = vpack.c.b16 %v11646, %v11645
  %v11675 = vpack.c.b16 %v11648, %v11647
  %v11676 = vpack.c.b16 %v11650, %v11649
  %v11677 = vpack.c.b16 %v11652, %v11651
  %v11678 = vpack.c.b16 %v11654, %v11653
  %v11679 = vpack.c.b16 %v11656, %v11655
  %v11680 = vpack.c.b16 %v11658, %v11657
  %v11681 = vpack.c.b16 %v11660, %v11659
  %v11682 = vpack.c.b16 %v11662, %v11661
  %v11683 = vpack.c.b16 %v11664, %v11663
  %v11684 = vpack.c.b16 %v11666, %v11665
  %v11685 = vpack.c.b16 %v11668, %v11667
  %v11686 = vpack.c.b16 %v11670, %v11669
  %11703 = vmatprep.subr.bf16.mxu0 0
  %11704 = vmatpush1.bf16.msra.mxu0 %v11671
  %11705 = vmatprep.subr.bf16.mxu0 0
  %11706 = vmatpush1.bf16.msra.mxu0 %v11672
  %11707 = vmatprep.subr.bf16.mxu0 0
  %11708 = vmatpush1.bf16.msra.mxu0 %v11673
  %11709 = vmatprep.subr.bf16.mxu0 0
  %11710 = vmatpush1.bf16.msra.mxu0 %v11674
  %11711 = vmatprep.subr.bf16.mxu0 0
  %11712 = vmatpush1.bf16.msra.mxu0 %v11675
  %11713 = vmatprep.subr.bf16.mxu0 0
  %11714 = vmatpush1.bf16.msra.mxu0 %v11676
  %11715 = vmatprep.subr.bf16.mxu0 0
  %11716 = vmatpush1.bf16.msra.mxu0 %v11677
  %11717 = vmatprep.subr.bf16.mxu0 0
  %11718 = vmatpush1.bf16.msra.mxu0 %v11678
  %11719 = vmatprep.subr.bf16.mxu0 0
  %11720 = vmatpush1.bf16.msra.mxu0 %v11679
  %11721 = vmatprep.subr.bf16.mxu0 0
  %11722 = vmatpush1.bf16.msra.mxu0 %v11680
  %11723 = vmatprep.subr.bf16.mxu0 0
  %11724 = vmatpush1.bf16.msra.mxu0 %v11681
  %11725 = vmatprep.subr.bf16.mxu0 0
  %11726 = vmatpush1.bf16.msra.mxu0 %v11682
  %11727 = vmatprep.subr.bf16.mxu0 0
  %11728 = vmatpush1.bf16.msra.mxu0 %v11683
  %11729 = vmatprep.subr.bf16.mxu0 0
  %11730 = vmatpush1.bf16.msra.mxu0 %v11684
  %11731 = vmatprep.subr.bf16.mxu0 0
  %11732 = vmatpush1.bf16.msra.mxu0 %v11685
  %11733 = vmatprep.subr.bf16.mxu0 0
  %11734 = vmatpush1.bf16.msra.mxu0 %v11686
  %11735 = vmatprep.mubr.bf16.mxu0 %v11567
  %11736 = vmatmul.mubr.bf16.gmra.mrb[0].mxu0 %v11566
  %v11737 = vpop.f32.mrb[0].mxu0
  %v11738 = vadd.f32 %v11605, %v11737
  %v11739 = vpop.f32.mrb[0].mxu0
  %v11740 = vpop.f32.mrb[0].mxu0
  %v11741 = vpop.f32.mrb[0].mxu0
  %11742 = vdwg.mxu0
  %v11743 = vtanh.pop %v11738
  %11744 = vst [vmem:[%s25] sm:$0xff] %v11743
  // Predicated region
  $region105: #{ppo_forward.1} parent=0 // pred_check
    _
  $region106: #{ppo_forward.1} parent=0 // pred_check_branch
    %11746 = sbr.rel (0) target = $region108
  $region107: #{ppo_forward.1} parent=0 // pred_region
    _
  $region108: #{ppo_forward.1} parent=0 // pred_fallthru
    _
  // Predicated region
  $region109: #{ppo_forward.1} parent=0 // pred_check
    _
  $region110: #{ppo_forward.1} parent=0 // pred_check_branch
    %11748 = sbr.rel (0) target = $region112
  $region111: #{ppo_forward.1} parent=0 // pred_region
    _
  $region112: #{ppo_forward.1} parent=0 // pred_fallthru
    _
  // Predicated region
  $region113: #{ppo_forward.1} parent=0 // pred_check
    _
  $region114: #{ppo_forward.1} parent=0 // pred_check_branch
    %11750 = sbr.rel (0) target = $region116
  $region115: #{ppo_forward.1} parent=0 // pred_region
    _
  $region116: #{ppo_forward.1} parent=0 // pred_fallthru
    _
  // Predicated region
  $region117: #{ppo_forward.1} parent=0 // pred_check
    _
  $region118: #{ppo_forward.1} parent=0 // pred_check_branch
    %11752 = sbr.rel (0) target = $region120
  $region119: #{ppo_forward.1} parent=0 // pred_region
    _
  $region120: #{ppo_forward.1} parent=0 // pred_fallthru
    _

</llo_original>
